<compile_context>
chip_gen: v5e
topology: v5e:2x2
jax: 0.10.0
libtpu: 0.0.40
codegen_flags: <defaults>
</compile_context>

<pallas_src>
import functools

import jax
import jax.numpy as jnp
from jax import lax
from jax.experimental import pallas as pl
from jax.experimental.pallas import tpu as pltpu

K = 4          # every ConvTranspose2d in the DCGAN generator uses a 4x4 kernel
BN_EPS = 1e-5  # nn.BatchNorm2d default

# Per-output-phase taps for ConvTranspose2d(k=4, stride=2, pad=1).
#   even outputs: out[2p]   = xpad[p]  *w[3] + xpad[p+1]*w[1]
#   odd  outputs: out[2p+1] = xpad[p+1]*w[2] + xpad[p+2]*w[0]
# where xpad = x zero-padded by 1 on each spatial side.  Entries are (pad_offset, k_idx).
_PHASE_TAPS = {0: ((0, 3), (1, 1)), 1: ((1, 2), (2, 0))}


def _round_up(x, m):
    return (x + m - 1) // m * m


# ---------------------------------------------------------------- batched tiled matmul
def _bmm_kernel(a_ref, w_ref, o_ref, acc_ref, *, activation):
    k = pl.program_id(3)

    @pl.when(k == 0)
    def _():
        acc_ref[...] = jnp.zeros_like(acc_ref)

    acc_ref[...] += jnp.dot(a_ref[0], w_ref[0], preferred_element_type=jnp.float32)

    @pl.when(k == pl.num_programs(3) - 1)
    def _():
        y = acc_ref[...]
        if activation == "tanh":
            y = jnp.tanh(y)          # EUP slot is idle while MXU-bound -> ~free
        o_ref[0] = y


def pallas_bmm(a, w, activation=None):
    """Batched matmul (P, M, Kd) @ (P, Kd, N) -> (P, M, N) f32.

    bf16 MXU inputs, f32 accumulation.  M/N/K tiled; N padded to a multiple of 128 so
    stores stay lane-dense; padding sliced off before returning.
    """
    P, M, Kd = a.shape
    P2, Kd2, N = w.shape
    assert P == P2 and Kd == Kd2

    Np = _round_up(N, 128)
    tn = 256 if Np % 256 == 0 else 128
    Kp = _round_up(Kd, 128)
    tk = 512 if Kp % 512 == 0 else (256 if Kp % 256 == 0 else 128)
    # late (memory-bound) layers have small K/N -> use a larger M tile
    tm_cap = 1024 if (Kp <= 1024 and Np <= 256) else 512
    tm = min(_round_up(M, 8), tm_cap)
    Mp = _round_up(M, tm)

    a_p = jnp.pad(a.astype(jnp.bfloat16), ((0, 0), (0, Mp - M), (0, Kp - Kd)))
    w_p = jnp.pad(w.astype(jnp.bfloat16), ((0, 0), (0, Kp - Kd), (0, Np - N)))

    grid = (P, Mp // tm, Np // tn, Kp // tk)

    # double-buffered bf16 inputs + double-buffered f32 output + f32 accumulator
    vmem_need = 2 * (tm * tk * 2 + tk * tn * 2) + 2 * tm * tn * 4 + tm * tn * 4
    vmem_limit = min(max(int(vmem_need * 2), 16 << 20), 48 << 20)  # <= v7x 64 MiB phys

    cost = pl.CostEstimate(
        flops=2 * P * Mp * Kp * Np,
        transcendentals=(P * Mp * Np if activation == "tanh" else 0),
        bytes_accessed=P * (Mp * Kp * 2 + Kp * Np * 2 + Mp * Np * 4),
    )

    out = pl.pallas_call(
        functools.partial(_bmm_kernel, activation=activation),
        out_shape=jax.ShapeDtypeStruct((P, Mp, Np), jnp.float32),
        grid=grid,
        in_specs=[pl.BlockSpec((1, tm, tk), lambda p, i, j, k: (p, i, k)),
                  pl.BlockSpec((1, tk, tn), lambda p, i, j, k: (p, k, j))],
        out_specs=pl.BlockSpec((1, tm, tn), lambda p, i, j, k: (p, i, j)),
        scratch_shapes=[pltpu.VMEM((tm, tn), jnp.float32)],
        compiler_params=pltpu.CompilerParams(
            dimension_semantics=("parallel", "parallel", "parallel", "arbitrary"),
            vmem_limit_bytes=vmem_limit),
        cost_estimate=cost,
    )(a_p, w_p)
    return out[:, :M, :N]


# ---------------------------------------------------------------- tiled two-pass BN+ReLU
def _bn_stats_kernel(x_ref, sum_ref, sq_ref):
    i = pl.program_id(0)
    x = x_ref[...]
    s = jnp.sum(x, axis=0, keepdims=True)
    q = jnp.sum(x * x, axis=0, keepdims=True)

    @pl.when(i == 0)
    def _():
        sum_ref[...] = s
        sq_ref[...] = q

    @pl.when(i > 0)
    def _():
        sum_ref[...] += s
        sq_ref[...] += q


def _bn_apply_kernel(x_ref, scale_ref, shift_ref, o_ref):
    y = x_ref[...] * scale_ref[...] + shift_ref[...]
    o_ref[...] = jnp.maximum(y, 0.0).astype(o_ref.dtype)


def _stat_tile(M):
    for t in (2048, 1024, 512, 256, 128, 64, 32, 16, 8):
        if M % t == 0:
            return t
    return M


def pallas_bn_relu(x, gamma, beta):
    """x: (M, C) f32, per-channel batch stats over the M rows.  Returns bf16 (M, C)."""
    Mtot, C = x.shape
    tile = _stat_tile(Mtot)
    grid = (Mtot // tile,)

    s, q = pl.pallas_call(
        _bn_stats_kernel,
        out_shape=(jax.ShapeDtypeStruct((1, C), jnp.float32),
                   jax.ShapeDtypeStruct((1, C), jnp.float32)),
        grid=grid,
        in_specs=[pl.BlockSpec((tile, C), lambda i: (i, 0))],
        out_specs=(pl.BlockSpec((1, C), lambda i: (0, 0)),
                   pl.BlockSpec((1, C), lambda i: (0, 0))),
        compiler_params=pltpu.CompilerParams(dimension_semantics=("arbitrary",)),
    )(x)

    mean = s / Mtot
    var = jnp.maximum(q / Mtot - mean * mean, 0.0)       # biased var (PyTorch BN norm)
    scale = gamma.reshape(1, -1) * lax.rsqrt(var + BN_EPS)
    shift = beta.reshape(1, -1) - mean * scale

    return pl.pallas_call(
        _bn_apply_kernel,
        out_shape=jax.ShapeDtypeStruct((Mtot, C), jnp.bfloat16),
        grid=grid,
        in_specs=[pl.BlockSpec((tile, C), lambda i: (i, 0)),
                  pl.BlockSpec((1, C), lambda i: (0, 0)),
                  pl.BlockSpec((1, C), lambda i: (0, 0))],
        out_specs=pl.BlockSpec((tile, C), lambda i: (i, 0)),
        compiler_params=pltpu.CompilerParams(dimension_semantics=("parallel",)),
    )(x, scale, shift)


# ---------------------------------------------------------------- plain-JAX glue
def _phase_im2col(xp, H, W, ph, pw):
    """2x2-tap patches for output phase (ph, pw); xp is x padded by 1 per spatial side."""
    C = xp.shape[-1]
    cols = []
    for ro, _ in _PHASE_TAPS[ph]:
        for co, _ in _PHASE_TAPS[pw]:
            cols.append(xp[:, ro:ro + H, co:co + W, :])
    p = jnp.stack(cols, axis=3)                       # (B, H, W, 4, C)
    return p.reshape(-1, 4 * C)                       # rows = (b, h, w), cols = (tap, c)


def _phase_weight(w, ph, pw):
    """PyTorch weight (Cin, Cout, 4, 4) -> (4*Cin, Cout) for output phase (ph, pw)."""
    rows = []
    for _, kh in _PHASE_TAPS[ph]:
        for _, kw in _PHASE_TAPS[pw]:
            rows.append(w[:, :, kh, kw])              # (Cin, Cout)
    return jnp.stack(rows, axis=0).reshape(4 * w.shape[0], w.shape[1])


def generator_forward(z, params):
    """z: (B, nz, 1, 1) NCHW -> (B, nc, 64, 64) NCHW (5-layer DCGAN generator)."""
    B, nz = z.shape[0], z.shape[1]

    # --- layer 0: ConvTranspose2d(nz, c0, 4, 1, 0) on a 1x1 input == dense matmul
    w0 = params["w0"]                                              # (nz, c0, 4, 4)
    c0 = w0.shape[1]
    wm0 = w0.transpose(0, 2, 3, 1).reshape(nz, K * K * c0)         # cols = (kh, kw, co)
    a0 = z.reshape(B, nz).astype(jnp.float32)
    y0 = pallas_bmm(a0[None], wm0[None])[0]                        # (B, 16*c0) f32
    y0 = pallas_bn_relu(y0.reshape(B * K * K, c0),
                        params["gamma0"], params["beta0"])          # bf16
    x = y0.reshape(B, K, K, c0)                                     # NHWC, 4x4

    # --- layers 1..4: ConvTranspose2d(cin, cout, 4, 2, 1) via 2x2 phase decomposition
    for idx in range(1, 5):
        w = params[f"w{idx}"]                                       # (cin, cout, 4, 4)
        cout = w.shape[1]
        Bh, H, W, _ = x.shape
        xp = jnp.pad(x, ((0, 0), (1, 1), (1, 1), (0, 0)))
        patches = jnp.stack([_phase_im2col(xp, H, W, ph, pw)
                             for ph in (0, 1) for pw in (0, 1)], axis=0)  # (4, BHW, 4*cin)
        wmats = jnp.stack([_phase_weight(w, ph, pw)
                           for ph in (0, 1) for pw in (0, 1)], axis=0)    # (4, 4*cin, cout)

        is_last = idx == 4
        y = pallas_bmm(patches, wmats, activation="tanh" if is_last else None)
        if not is_last:
            y = pallas_bn_relu(y.reshape(4 * Bh * H * W, cout),
                               params[f"gamma{idx}"], params[f"beta{idx}"])
        # interleave the 4 phase outputs: (ph, pw, B, H, W, C) -> (B, 2H, 2W, C)
        y = y.reshape(2, 2, Bh, H, W, cout)
        x = y.transpose(2, 3, 0, 4, 1, 5).reshape(Bh, 2 * H, 2 * W, cout)

    return x.transpose(0, 3, 1, 2)                                  # NCHW, f32


# ---------------------------------------------------------------- pure-JAX reference
def _convt_ref(x, w, stride, pad):
    w_conv = jnp.flip(w, (-2, -1)).transpose(1, 0, 2, 3)            # (Cout, Cin, K, K)
    return lax.conv_general_dilated(
        x, w_conv, window_strides=(1, 1),
        padding=[(K - 1 - pad, K - 1 - pad)] * 2,
        lhs_dilation=(stride, stride),
        dimension_numbers=("NCHW", "OIHW", "NCHW"),
        precision=lax.Precision.HIGHEST)


def generator_ref(z, params, layer_cfg):
    x = z.astype(jnp.float32)
    for idx, (stride, pad, has_bn) in enumerate(layer_cfg):
        x = _convt_ref(x, params[f"w{idx}"], stride, pad)
        if has_bn:
            mean = jnp.mean(x, axis=(0, 2, 3), keepdims=True)
            var = jnp.mean((x - mean) ** 2, axis=(0, 2, 3), keepdims=True)
            g = params[f"gamma{idx}"].reshape(1, -1, 1, 1)
            b = params[f"beta{idx}"].reshape(1, -1, 1, 1)
            x = jnp.maximum((x - mean) * lax.rsqrt(var + BN_EPS) * g + b, 0.0)
        else:
            x = jnp.tanh(x)
    return x


# ---------------------------------------------------------------- main
if __name__ == "__main__":
    # Small, shape-consistent instantiation of Generator(nz, ngf, nc).
    B, nz, ngf, nc = 2, 16, 8, 3
    # (stride, padding, has_batchnorm) per ConvTranspose2d layer (used by the reference).
    layer_cfg = [(1, 0, True), (2, 1, True), (2, 1, True), (2, 1, True), (2, 1, False)]
    chans = [nz, ngf * 8, ngf * 4, ngf * 2, ngf, nc]

    key = jax.random.PRNGKey(0)
    params = {}
    for i, (cin, cout) in enumerate(zip(chans[:-1], chans[1:])):
        key, kw, kg, kb = jax.random.split(key, 4)
        params[f"w{i}"] = 0.02 * jax.random.normal(kw, (cin, cout, K, K), jnp.float32)
        if layer_cfg[i][2]:
            params[f"gamma{i}"] = 1.0 + 0.1 * jax.random.normal(kg, (cout,), jnp.float32)
            params[f"beta{i}"] = 0.1 * jax.random.normal(kb, (cout,), jnp.float32)

    key, kz = jax.random.split(key)
    z = jax.random.normal(kz, (B, nz, 1, 1), jnp.float32)

    fwd = jax.jit(generator_forward)
    out = jax.block_until_ready(fwd(z, params))
    assert out.shape == (B, nc, 64, 64), out.shape

    ref = jax.block_until_ready(generator_ref(z, params, layer_cfg))
    max_err = float(jnp.max(jnp.abs(out - ref)))
    assert jnp.isfinite(out).all()
    assert max_err < 2e-2, f"max abs err {max_err}"

    print("KERNEL_OK")
</pallas_src>

<mosaic_0001>
module attributes {stable_mosaic.version = 11 : i64} {
  func.func @_bmm_kernel(%arg0: i32, %arg1: i32, %arg2: i32, %arg3: i32, %arg4: memref<1x8x128xbf16, #tpu.memory_space<vmem>>, %arg5: memref<1x128x256xbf16, #tpu.memory_space<vmem>>, %arg6: memref<1x8x256xf32, #tpu.memory_space<vmem>>, %arg7: memref<8x256xf32, #tpu.memory_space<vmem>>) attributes {dimension_semantics = [#tpu.dimension_semantics<parallel>, #tpu.dimension_semantics<parallel>, #tpu.dimension_semantics<parallel>, #tpu.dimension_semantics<arbitrary>], iteration_bounds = array<i64: 1, 1, 4, 1>, scalar_prefetch = 0 : i64, scratch_operands = 1 : i64, tpu.core_type = #tpu.core_type<tc>, window_params = [{transform_indices = @transform_0, window_bounds = array<i64: 1, 8, 128>}, {transform_indices = @transform_1, window_bounds = array<i64: 1, 128, 256>}, {transform_indices = @transform_2, window_bounds = array<i64: 1, 8, 256>}]} {
    %c0_i32 = arith.constant 0 : i32
    %0 = arith.cmpi eq, %arg3, %c0_i32 : i32
    %1 = arith.extui %0 : i1 to i32
    %c0_i32_0 = arith.constant 0 : i32
    %2 = arith.cmpi ne, %1, %c0_i32_0 : i32
    scf.if %2 {
      %cst_12 = arith.constant 0.000000e+00 : f32
      %14 = vector.broadcast %cst_12 : f32 to vector<8x256xf32>
      %c0_13 = arith.constant 0 : index
      %c0_14 = arith.constant 0 : index
      %15 = vector.load %arg7[%c0_13, %c0_14] : memref<8x256xf32, #tpu.memory_space<vmem>>, vector<8x256xf32>
      tpu.vector_store %arg7[%c0_13, %c0_14], %14 {strides = array<i32>} : memref<8x256xf32, #tpu.memory_space<vmem>>, vector<8x256xf32>,
    } else {
    }
    %c0 = arith.constant 0 : index
    %c0_1 = arith.constant 0 : index
    %3 = vector.load %arg7[%c0, %c0_1] : memref<8x256xf32, #tpu.memory_space<vmem>>, vector<8x256xf32>
    %c0_2 = arith.constant 0 : index
    %c0_3 = arith.constant 0 : index
    %c0_4 = arith.constant 0 : index
    %4 = vector.load %arg4[%c0_2, %c0_3, %c0_4] : memref<1x8x128xbf16, #tpu.memory_space<vmem>>, vector<1x8x128xbf16>
    %5 = vector.shape_cast %4 : vector<1x8x128xbf16> to vector<8x128xbf16>
    %c0_5 = arith.constant 0 : index
    %c0_6 = arith.constant 0 : index
    %c0_7 = arith.constant 0 : index
    %6 = vector.load %arg5[%c0_5, %c0_6, %c0_7] : memref<1x128x256xbf16, #tpu.memory_space<vmem>>, vector<1x128x256xbf16>
    %7 = vector.shape_cast %6 : vector<1x128x256xbf16> to vector<128x256xbf16>
    %cst = arith.constant dense<0.000000e+00> : vector<8x256xf32>
    %8 = tpu.matmul %5, %7, %cst {dimension_numbers = #tpu.dot_dimension_numbers<[1], [0], [0], [1], [0, 0, 1, 1], [], []>} : vector<8x128xbf16>, vector<128x256xbf16>, vector<8x256xf32> -> vector<8x256xf32>
    %9 = arith.addf %3, %8 : vector<8x256xf32>
    %c0_8 = arith.constant 0 : index
    %c0_9 = arith.constant 0 : index
    %10 = vector.load %arg7[%c0_8, %c0_9] : memref<8x256xf32, #tpu.memory_space<vmem>>, vector<8x256xf32>
    tpu.vector_store %arg7[%c0_8, %c0_9], %9 {strides = array<i32>} : memref<8x256xf32, #tpu.memory_space<vmem>>, vector<8x256xf32>,
    %c0_i32_10 = arith.constant 0 : i32
    %11 = arith.cmpi eq, %arg3, %c0_i32_10 : i32
    %12 = arith.extui %11 : i1 to i32
    %c0_i32_11 = arith.constant 0 : i32
    %13 = arith.cmpi ne, %12, %c0_i32_11 : i32
    scf.if %13 {
      %c0_12 = arith.constant 0 : index
      %c0_13 = arith.constant 0 : index
      %14 = vector.load %arg7[%c0_12, %c0_13] : memref<8x256xf32, #tpu.memory_space<vmem>>, vector<8x256xf32>
      %c0_14 = arith.constant 0 : index
      %c0_15 = arith.constant 0 : index
      %c0_16 = arith.constant 0 : index
      %15 = vector.load %arg6[%c0_14, %c0_15, %c0_16] : memref<1x8x256xf32, #tpu.memory_space<vmem>>, vector<1x8x256xf32>
      %16 = vector.shape_cast %15 : vector<1x8x256xf32> to vector<8x256xf32>
      %17 = vector.shape_cast %14 : vector<8x256xf32> to vector<1x8x256xf32>
      tpu.vector_store %arg6[%c0_14, %c0_15, %c0_16], %17 {strides = array<i32>} : memref<1x8x256xf32, #tpu.memory_space<vmem>>, vector<1x8x256xf32>,
    } else {
    }
    return
  }
  func.func @transform_0(%arg0: i32, %arg1: i32, %arg2: i32, %arg3: i32) -> (i32, i32, i32) {
    %c0_i32 = arith.constant 0 : i32
    return %arg0, %arg1, %arg3 : i32, i32, i32
  }
  func.func @transform_1(%arg0: i32, %arg1: i32, %arg2: i32, %arg3: i32) -> (i32, i32, i32) {
    %c0_i32 = arith.constant 0 : i32
    return %arg0, %arg3, %arg2 : i32, i32, i32
  }
  func.func @transform_2(%arg0: i32, %arg1: i32, %arg2: i32, %arg3: i32) -> (i32, i32, i32) {
    %c0_i32 = arith.constant 0 : i32
    return %arg0, %arg1, %arg2 : i32, i32, i32
  }
}

module attributes {stable_mosaic.version = 11 : i64} {
  func.func @_bn_stats_kernel(%arg0: i32, %arg1: memref<32x64xf32, #tpu.memory_space<vmem>>, %arg2: memref<1x64xf32, #tpu.memory_space<vmem>>, %arg3: memref<1x64xf32, #tpu.memory_space<vmem>>) attributes {dimension_semantics = [#tpu.dimension_semantics<arbitrary>], iteration_bounds = array<i64: 1>, scalar_prefetch = 0 : i64, scratch_operands = 0 : i64, tpu.core_type = #tpu.core_type<tc>, window_params = [{transform_indices = @transform_0, window_bounds = array<i64: 32, 64>}, {pipeline_mode = #tpu.pipeline_mode<synchronous>, transform_indices = @transform_1, window_bounds = array<i64: 1, 64>}, {pipeline_mode = #tpu.pipeline_mode<synchronous>, transform_indices = @transform_2, window_bounds = array<i64: 1, 64>}]} {
    %c0 = arith.constant 0 : index
    %c0_0 = arith.constant 0 : index
    %0 = vector.load %arg1[%c0, %c0_0] : memref<32x64xf32, #tpu.memory_space<vmem>>, vector<32x64xf32>
    %cst = arith.constant dense<0.000000e+00> : vector<64xf32>
    %1 = vector.multi_reduction <add>, %0, %cst [0] : vector<32x64xf32> to vector<64xf32>
    %2 = vector.shape_cast %1 : vector<64xf32> to vector<1x64xf32>
    %3 = arith.mulf %0, %0 : vector<32x64xf32>
    %cst_1 = arith.constant dense<0.000000e+00> : vector<64xf32>
    %4 = vector.multi_reduction <add>, %3, %cst_1 [0] : vector<32x64xf32> to vector<64xf32>
    %5 = vector.shape_cast %4 : vector<64xf32> to vector<1x64xf32>
    %c0_i32 = arith.constant 0 : i32
    %6 = arith.cmpi eq, %arg0, %c0_i32 : i32
    %7 = arith.extui %6 : i1 to i32
    %c0_i32_2 = arith.constant 0 : i32
    %8 = arith.cmpi ne, %7, %c0_i32_2 : i32
    scf.if %8 {
      %c0_5 = arith.constant 0 : index
      %c0_6 = arith.constant 0 : index
      %12 = vector.load %arg2[%c0_5, %c0_6] : memref<1x64xf32, #tpu.memory_space<vmem>>, vector<1x64xf32>
      tpu.vector_store %arg2[%c0_5, %c0_6], %2 {strides = array<i32>} : memref<1x64xf32, #tpu.memory_space<vmem>>, vector<1x64xf32>,
      %c0_7 = arith.constant 0 : index
      %c0_8 = arith.constant 0 : index
      %13 = vector.load %arg3[%c0_7, %c0_8] : memref<1x64xf32, #tpu.memory_space<vmem>>, vector<1x64xf32>
      tpu.vector_store %arg3[%c0_7, %c0_8], %5 {strides = array<i32>} : memref<1x64xf32, #tpu.memory_space<vmem>>, vector<1x64xf32>,
    } else {
    }
    %c0_i32_3 = arith.constant 0 : i32
    %9 = arith.cmpi sgt, %arg0, %c0_i32_3 : i32
    %10 = arith.extui %9 : i1 to i32
    %c0_i32_4 = arith.constant 0 : i32
    %11 = arith.cmpi ne, %10, %c0_i32_4 : i32
    scf.if %11 {
      %c0_5 = arith.constant 0 : index
      %c0_6 = arith.constant 0 : index
      %12 = vector.load %arg2[%c0_5, %c0_6] : memref<1x64xf32, #tpu.memory_space<vmem>>, vector<1x64xf32>
      %13 = arith.addf %12, %2 : vector<1x64xf32>
      %c0_7 = arith.constant 0 : index
      %c0_8 = arith.constant 0 : index
      %14 = vector.load %arg2[%c0_7, %c0_8] : memref<1x64xf32, #tpu.memory_space<vmem>>, vector<1x64xf32>
      tpu.vector_store %arg2[%c0_7, %c0_8], %13 {strides = array<i32>} : memref<1x64xf32, #tpu.memory_space<vmem>>, vector<1x64xf32>,
      %c0_9 = arith.constant 0 : index
      %c0_10 = arith.constant 0 : index
      %15 = vector.load %arg3[%c0_9, %c0_10] : memref<1x64xf32, #tpu.memory_space<vmem>>, vector<1x64xf32>
      %16 = arith.addf %15, %5 : vector<1x64xf32>
      %c0_11 = arith.constant 0 : index
      %c0_12 = arith.constant 0 : index
      %17 = vector.load %arg3[%c0_11, %c0_12] : memref<1x64xf32, #tpu.memory_space<vmem>>, vector<1x64xf32>
      tpu.vector_store %arg3[%c0_11, %c0_12], %16 {strides = array<i32>} : memref<1x64xf32, #tpu.memory_space<vmem>>, vector<1x64xf32>,
    } else {
    }
    return
  }
  func.func @transform_0(%arg0: i32) -> (i32, i32) {
    %c0_i32 = arith.constant 0 : i32
    %c0_i32_0 = arith.constant 0 : i32
    return %arg0, %c0_i32 : i32, i32
  }
  func.func @transform_1(%arg0: i32) -> (i32, i32) {
    %c0_i32 = arith.constant 0 : i32
    %c0_i32_0 = arith.constant 0 : i32
    %c0_i32_1 = arith.constant 0 : i32
    return %c0_i32, %c0_i32_0 : i32, i32
  }
  func.func @transform_2(%arg0: i32) -> (i32, i32) {
    %c0_i32 = arith.constant 0 : i32
    %c0_i32_0 = arith.constant 0 : i32
    %c0_i32_1 = arith.constant 0 : i32
    return %c0_i32, %c0_i32_0 : i32, i32
  }
}

module attributes {stable_mosaic.version = 11 : i64} {
  func.func @_bn_apply_kernel(%arg0: i32, %arg1: memref<32x64xf32, #tpu.memory_space<vmem>>, %arg2: memref<1x64xf32, #tpu.memory_space<vmem>>, %arg3: memref<1x64xf32, #tpu.memory_space<vmem>>, %arg4: memref<32x64xbf16, #tpu.memory_space<vmem>>) attributes {dimension_semantics = [#tpu.dimension_semantics<parallel>], iteration_bounds = array<i64: 1>, scalar_prefetch = 0 : i64, scratch_operands = 0 : i64, tpu.core_type = #tpu.core_type<tc>, window_params = [{transform_indices = @transform_0, window_bounds = array<i64: 32, 64>}, {pipeline_mode = #tpu.pipeline_mode<synchronous>, transform_indices = @transform_1, window_bounds = array<i64: 1, 64>}, {pipeline_mode = #tpu.pipeline_mode<synchronous>, transform_indices = @transform_2, window_bounds = array<i64: 1, 64>}, {transform_indices = @transform_3, window_bounds = array<i64: 32, 64>}]} {
    %c0 = arith.constant 0 : index
    %c0_0 = arith.constant 0 : index
    %0 = vector.load %arg1[%c0, %c0_0] : memref<32x64xf32, #tpu.memory_space<vmem>>, vector<32x64xf32>
    %c0_1 = arith.constant 0 : index
    %c0_2 = arith.constant 0 : index
    %1 = vector.load %arg2[%c0_1, %c0_2] : memref<1x64xf32, #tpu.memory_space<vmem>>, vector<1x64xf32>
    %2 = vector.broadcast %1 : vector<1x64xf32> to vector<32x64xf32>
    %3 = arith.mulf %0, %2 : vector<32x64xf32>
    %c0_3 = arith.constant 0 : index
    %c0_4 = arith.constant 0 : index
    %4 = vector.load %arg3[%c0_3, %c0_4] : memref<1x64xf32, #tpu.memory_space<vmem>>, vector<1x64xf32>
    %5 = vector.broadcast %4 : vector<1x64xf32> to vector<32x64xf32>
    %6 = arith.addf %3, %5 : vector<32x64xf32>
    %cst = arith.constant 0.000000e+00 : f32
    %7 = vector.broadcast %cst : f32 to vector<32x64xf32>
    %8 = arith.maximumf %6, %7 : vector<32x64xf32>
    %9 = arith.truncf %8 : vector<32x64xf32> to vector<32x64xbf16>
    %c0_5 = arith.constant 0 : index
    %c0_6 = arith.constant 0 : index
    %10 = vector.load %arg4[%c0_5, %c0_6] : memref<32x64xbf16, #tpu.memory_space<vmem>>, vector<32x64xbf16>
    tpu.vector_store %arg4[%c0_5, %c0_6], %9 {strides = array<i32>} : memref<32x64xbf16, #tpu.memory_space<vmem>>, vector<32x64xbf16>,
    return
  }
  func.func @transform_0(%arg0: i32) -> (i32, i32) {
    %c0_i32 = arith.constant 0 : i32
    %c0_i32_0 = arith.constant 0 : i32
    return %arg0, %c0_i32 : i32, i32
  }
  func.func @transform_1(%arg0: i32) -> (i32, i32) {
    %c0_i32 = arith.constant 0 : i32
    %c0_i32_0 = arith.constant 0 : i32
    %c0_i32_1 = arith.constant 0 : i32
    return %c0_i32, %c0_i32_0 : i32, i32
  }
  func.func @transform_2(%arg0: i32) -> (i32, i32) {
    %c0_i32 = arith.constant 0 : i32
    %c0_i32_0 = arith.constant 0 : i32
    %c0_i32_1 = arith.constant 0 : i32
    return %c0_i32, %c0_i32_0 : i32, i32
  }
  func.func @transform_3(%arg0: i32) -> (i32, i32) {
    %c0_i32 = arith.constant 0 : i32
    %c0_i32_0 = arith.constant 0 : i32
    return %arg0, %c0_i32 : i32, i32
  }
}

module attributes {stable_mosaic.version = 11 : i64} {
  func.func @_bmm_kernel(%arg0: i32, %arg1: i32, %arg2: i32, %arg3: i32, %arg4: memref<1x32x256xbf16, #tpu.memory_space<vmem>>, %arg5: memref<1x256x128xbf16, #tpu.memory_space<vmem>>, %arg6: memref<1x32x128xf32, #tpu.memory_space<vmem>>, %arg7: memref<32x128xf32, #tpu.memory_space<vmem>>) attributes {dimension_semantics = [#tpu.dimension_semantics<parallel>, #tpu.dimension_semantics<parallel>, #tpu.dimension_semantics<parallel>, #tpu.dimension_semantics<arbitrary>], iteration_bounds = array<i64: 4, 1, 1, 1>, scalar_prefetch = 0 : i64, scratch_operands = 1 : i64, tpu.core_type = #tpu.core_type<tc>, window_params = [{transform_indices = @transform_0, window_bounds = array<i64: 1, 32, 256>}, {transform_indices = @transform_1, window_bounds = array<i64: 1, 256, 128>}, {transform_indices = @transform_2, window_bounds = array<i64: 1, 32, 128>}]} {
    %c0_i32 = arith.constant 0 : i32
    %0 = arith.cmpi eq, %arg3, %c0_i32 : i32
    %1 = arith.extui %0 : i1 to i32
    %c0_i32_0 = arith.constant 0 : i32
    %2 = arith.cmpi ne, %1, %c0_i32_0 : i32
    scf.if %2 {
      %cst_12 = arith.constant 0.000000e+00 : f32
      %14 = vector.broadcast %cst_12 : f32 to vector<32x128xf32>
      %c0_13 = arith.constant 0 : index
      %c0_14 = arith.constant 0 : index
      %15 = vector.load %arg7[%c0_13, %c0_14] : memref<32x128xf32, #tpu.memory_space<vmem>>, vector<32x128xf32>
      tpu.vector_store %arg7[%c0_13, %c0_14], %14 {strides = array<i32>} : memref<32x128xf32, #tpu.memory_space<vmem>>, vector<32x128xf32>,
    } else {
    }
    %c0 = arith.constant 0 : index
    %c0_1 = arith.constant 0 : index
    %3 = vector.load %arg7[%c0, %c0_1] : memref<32x128xf32, #tpu.memory_space<vmem>>, vector<32x128xf32>
    %c0_2 = arith.constant 0 : index
    %c0_3 = arith.constant 0 : index
    %c0_4 = arith.constant 0 : index
    %4 = vector.load %arg4[%c0_2, %c0_3, %c0_4] : memref<1x32x256xbf16, #tpu.memory_space<vmem>>, vector<1x32x256xbf16>
    %5 = vector.shape_cast %4 : vector<1x32x256xbf16> to vector<32x256xbf16>
    %c0_5 = arith.constant 0 : index
    %c0_6 = arith.constant 0 : index
    %c0_7 = arith.constant 0 : index
    %6 = vector.load %arg5[%c0_5, %c0_6, %c0_7] : memref<1x256x128xbf16, #tpu.memory_space<vmem>>, vector<1x256x128xbf16>
    %7 = vector.shape_cast %6 : vector<1x256x128xbf16> to vector<256x128xbf16>
    %cst = arith.constant dense<0.000000e+00> : vector<32x128xf32>
    %8 = tpu.matmul %5, %7, %cst {dimension_numbers = #tpu.dot_dimension_numbers<[1], [0], [0], [1], [0, 0, 1, 1], [], []>} : vector<32x256xbf16>, vector<256x128xbf16>, vector<32x128xf32> -> vector<32x128xf32>
    %9 = arith.addf %3, %8 : vector<32x128xf32>
    %c0_8 = arith.constant 0 : index
    %c0_9 = arith.constant 0 : index
    %10 = vector.load %arg7[%c0_8, %c0_9] : memref<32x128xf32, #tpu.memory_space<vmem>>, vector<32x128xf32>
    tpu.vector_store %arg7[%c0_8, %c0_9], %9 {strides = array<i32>} : memref<32x128xf32, #tpu.memory_space<vmem>>, vector<32x128xf32>,
    %c0_i32_10 = arith.constant 0 : i32
    %11 = arith.cmpi eq, %arg3, %c0_i32_10 : i32
    %12 = arith.extui %11 : i1 to i32
    %c0_i32_11 = arith.constant 0 : i32
    %13 = arith.cmpi ne, %12, %c0_i32_11 : i32
    scf.if %13 {
      %c0_12 = arith.constant 0 : index
      %c0_13 = arith.constant 0 : index
      %14 = vector.load %arg7[%c0_12, %c0_13] : memref<32x128xf32, #tpu.memory_space<vmem>>, vector<32x128xf32>
      %c0_14 = arith.constant 0 : index
      %c0_15 = arith.constant 0 : index
      %c0_16 = arith.constant 0 : index
      %15 = vector.load %arg6[%c0_14, %c0_15, %c0_16] : memref<1x32x128xf32, #tpu.memory_space<vmem>>, vector<1x32x128xf32>
      %16 = vector.shape_cast %15 : vector<1x32x128xf32> to vector<32x128xf32>
      %17 = vector.shape_cast %14 : vector<32x128xf32> to vector<1x32x128xf32>
      tpu.vector_store %arg6[%c0_14, %c0_15, %c0_16], %17 {strides = array<i32>} : memref<1x32x128xf32, #tpu.memory_space<vmem>>, vector<1x32x128xf32>,
    } else {
    }
    return
  }
  func.func @transform_0(%arg0: i32, %arg1: i32, %arg2: i32, %arg3: i32) -> (i32, i32, i32) {
    %c0_i32 = arith.constant 0 : i32
    return %arg0, %arg1, %arg3 : i32, i32, i32
  }
  func.func @transform_1(%arg0: i32, %arg1: i32, %arg2: i32, %arg3: i32) -> (i32, i32, i32) {
    %c0_i32 = arith.constant 0 : i32
    return %arg0, %arg3, %arg2 : i32, i32, i32
  }
  func.func @transform_2(%arg0: i32, %arg1: i32, %arg2: i32, %arg3: i32) -> (i32, i32, i32) {
    %c0_i32 = arith.constant 0 : i32
    return %arg0, %arg1, %arg2 : i32, i32, i32
  }
}

module attributes {stable_mosaic.version = 11 : i64} {
  func.func @_bn_stats_kernel(%arg0: i32, %arg1: memref<128x32xf32, #tpu.memory_space<vmem>>, %arg2: memref<1x32xf32, #tpu.memory_space<vmem>>, %arg3: memref<1x32xf32, #tpu.memory_space<vmem>>) attributes {dimension_semantics = [#tpu.dimension_semantics<arbitrary>], iteration_bounds = array<i64: 1>, scalar_prefetch = 0 : i64, scratch_operands = 0 : i64, tpu.core_type = #tpu.core_type<tc>, window_params = [{transform_indices = @transform_0, window_bounds = array<i64: 128, 32>}, {pipeline_mode = #tpu.pipeline_mode<synchronous>, transform_indices = @transform_1, window_bounds = array<i64: 1, 32>}, {pipeline_mode = #tpu.pipeline_mode<synchronous>, transform_indices = @transform_2, window_bounds = array<i64: 1, 32>}]} {
    %c0 = arith.constant 0 : index
    %c0_0 = arith.constant 0 : index
    %0 = vector.load %arg1[%c0, %c0_0] : memref<128x32xf32, #tpu.memory_space<vmem>>, vector<128x32xf32>
    %cst = arith.constant dense<0.000000e+00> : vector<32xf32>
    %1 = vector.multi_reduction <add>, %0, %cst [0] : vector<128x32xf32> to vector<32xf32>
    %2 = vector.shape_cast %1 : vector<32xf32> to vector<1x32xf32>
    %3 = arith.mulf %0, %0 : vector<128x32xf32>
    %cst_1 = arith.constant dense<0.000000e+00> : vector<32xf32>
    %4 = vector.multi_reduction <add>, %3, %cst_1 [0] : vector<128x32xf32> to vector<32xf32>
    %5 = vector.shape_cast %4 : vector<32xf32> to vector<1x32xf32>
    %c0_i32 = arith.constant 0 : i32
    %6 = arith.cmpi eq, %arg0, %c0_i32 : i32
    %7 = arith.extui %6 : i1 to i32
    %c0_i32_2 = arith.constant 0 : i32
    %8 = arith.cmpi ne, %7, %c0_i32_2 : i32
    scf.if %8 {
      %c0_5 = arith.constant 0 : index
      %c0_6 = arith.constant 0 : index
      %12 = vector.load %arg2[%c0_5, %c0_6] : memref<1x32xf32, #tpu.memory_space<vmem>>, vector<1x32xf32>
      tpu.vector_store %arg2[%c0_5, %c0_6], %2 {strides = array<i32>} : memref<1x32xf32, #tpu.memory_space<vmem>>, vector<1x32xf32>,
      %c0_7 = arith.constant 0 : index
      %c0_8 = arith.constant 0 : index
      %13 = vector.load %arg3[%c0_7, %c0_8] : memref<1x32xf32, #tpu.memory_space<vmem>>, vector<1x32xf32>
      tpu.vector_store %arg3[%c0_7, %c0_8], %5 {strides = array<i32>} : memref<1x32xf32, #tpu.memory_space<vmem>>, vector<1x32xf32>,
    } else {
    }
    %c0_i32_3 = arith.constant 0 : i32
    %9 = arith.cmpi sgt, %arg0, %c0_i32_3 : i32
    %10 = arith.extui %9 : i1 to i32
    %c0_i32_4 = arith.constant 0 : i32
    %11 = arith.cmpi ne, %10, %c0_i32_4 : i32
    scf.if %11 {
      %c0_5 = arith.constant 0 : index
      %c0_6 = arith.constant 0 : index
      %12 = vector.load %arg2[%c0_5, %c0_6] : memref<1x32xf32, #tpu.memory_space<vmem>>, vector<1x32xf32>
      %13 = arith.addf %12, %2 : vector<1x32xf32>
      %c0_7 = arith.constant 0 : index
      %c0_8 = arith.constant 0 : index
      %14 = vector.load %arg2[%c0_7, %c0_8] : memref<1x32xf32, #tpu.memory_space<vmem>>, vector<1x32xf32>
      tpu.vector_store %arg2[%c0_7, %c0_8], %13 {strides = array<i32>} : memref<1x32xf32, #tpu.memory_space<vmem>>, vector<1x32xf32>,
      %c0_9 = arith.constant 0 : index
      %c0_10 = arith.constant 0 : index
      %15 = vector.load %arg3[%c0_9, %c0_10] : memref<1x32xf32, #tpu.memory_space<vmem>>, vector<1x32xf32>
      %16 = arith.addf %15, %5 : vector<1x32xf32>
      %c0_11 = arith.constant 0 : index
      %c0_12 = arith.constant 0 : index
      %17 = vector.load %arg3[%c0_11, %c0_12] : memref<1x32xf32, #tpu.memory_space<vmem>>, vector<1x32xf32>
      tpu.vector_store %arg3[%c0_11, %c0_12], %16 {strides = array<i32>} : memref<1x32xf32, #tpu.memory_space<vmem>>, vector<1x32xf32>,
    } else {
    }
    return
  }
  func.func @transform_0(%arg0: i32) -> (i32, i32) {
    %c0_i32 = arith.constant 0 : i32
    %c0_i32_0 = arith.constant 0 : i32
    return %arg0, %c0_i32 : i32, i32
  }
  func.func @transform_1(%arg0: i32) -> (i32, i32) {
    %c0_i32 = arith.constant 0 : i32
    %c0_i32_0 = arith.constant 0 : i32
    %c0_i32_1 = arith.constant 0 : i32
    return %c0_i32, %c0_i32_0 : i32, i32
  }
  func.func @transform_2(%arg0: i32) -> (i32, i32) {
    %c0_i32 = arith.constant 0 : i32
    %c0_i32_0 = arith.constant 0 : i32
    %c0_i32_1 = arith.constant 0 : i32
    return %c0_i32, %c0_i32_0 : i32, i32
  }
}

module attributes {stable_mosaic.version = 11 : i64} {
  func.func @_bn_apply_kernel(%arg0: i32, %arg1: memref<128x32xf32, #tpu.memory_space<vmem>>, %arg2: memref<1x32xf32, #tpu.memory_space<vmem>>, %arg3: memref<1x32xf32, #tpu.memory_space<vmem>>, %arg4: memref<128x32xbf16, #tpu.memory_space<vmem>>) attributes {dimension_semantics = [#tpu.dimension_semantics<parallel>], iteration_bounds = array<i64: 1>, scalar_prefetch = 0 : i64, scratch_operands = 0 : i64, tpu.core_type = #tpu.core_type<tc>, window_params = [{transform_indices = @transform_0, window_bounds = array<i64: 128, 32>}, {pipeline_mode = #tpu.pipeline_mode<synchronous>, transform_indices = @transform_1, window_bounds = array<i64: 1, 32>}, {pipeline_mode = #tpu.pipeline_mode<synchronous>, transform_indices = @transform_2, window_bounds = array<i64: 1, 32>}, {transform_indices = @transform_3, window_bounds = array<i64: 128, 32>}]} {
    %c0 = arith.constant 0 : index
    %c0_0 = arith.constant 0 : index
    %0 = vector.load %arg1[%c0, %c0_0] : memref<128x32xf32, #tpu.memory_space<vmem>>, vector<128x32xf32>
    %c0_1 = arith.constant 0 : index
    %c0_2 = arith.constant 0 : index
    %1 = vector.load %arg2[%c0_1, %c0_2] : memref<1x32xf32, #tpu.memory_space<vmem>>, vector<1x32xf32>
    %2 = vector.broadcast %1 : vector<1x32xf32> to vector<128x32xf32>
    %3 = arith.mulf %0, %2 : vector<128x32xf32>
    %c0_3 = arith.constant 0 : index
    %c0_4 = arith.constant 0 : index
    %4 = vector.load %arg3[%c0_3, %c0_4] : memref<1x32xf32, #tpu.memory_space<vmem>>, vector<1x32xf32>
    %5 = vector.broadcast %4 : vector<1x32xf32> to vector<128x32xf32>
    %6 = arith.addf %3, %5 : vector<128x32xf32>
    %cst = arith.constant 0.000000e+00 : f32
    %7 = vector.broadcast %cst : f32 to vector<128x32xf32>
    %8 = arith.maximumf %6, %7 : vector<128x32xf32>
    %9 = arith.truncf %8 : vector<128x32xf32> to vector<128x32xbf16>
    %c0_5 = arith.constant 0 : index
    %c0_6 = arith.constant 0 : index
    %10 = vector.load %arg4[%c0_5, %c0_6] : memref<128x32xbf16, #tpu.memory_space<vmem>>, vector<128x32xbf16>
    tpu.vector_store %arg4[%c0_5, %c0_6], %9 {strides = array<i32>} : memref<128x32xbf16, #tpu.memory_space<vmem>>, vector<128x32xbf16>,
    return
  }
  func.func @transform_0(%arg0: i32) -> (i32, i32) {
    %c0_i32 = arith.constant 0 : i32
    %c0_i32_0 = arith.constant 0 : i32
    return %arg0, %c0_i32 : i32, i32
  }
  func.func @transform_1(%arg0: i32) -> (i32, i32) {
    %c0_i32 = arith.constant 0 : i32
    %c0_i32_0 = arith.constant 0 : i32
    %c0_i32_1 = arith.constant 0 : i32
    return %c0_i32, %c0_i32_0 : i32, i32
  }
  func.func @transform_2(%arg0: i32) -> (i32, i32) {
    %c0_i32 = arith.constant 0 : i32
    %c0_i32_0 = arith.constant 0 : i32
    %c0_i32_1 = arith.constant 0 : i32
    return %c0_i32, %c0_i32_0 : i32, i32
  }
  func.func @transform_3(%arg0: i32) -> (i32, i32) {
    %c0_i32 = arith.constant 0 : i32
    %c0_i32_0 = arith.constant 0 : i32
    return %arg0, %c0_i32 : i32, i32
  }
}

module attributes {stable_mosaic.version = 11 : i64} {
  func.func @_bmm_kernel(%arg0: i32, %arg1: i32, %arg2: i32, %arg3: i32, %arg4: memref<1x128x128xbf16, #tpu.memory_space<vmem>>, %arg5: memref<1x128x128xbf16, #tpu.memory_space<vmem>>, %arg6: memref<1x128x128xf32, #tpu.memory_space<vmem>>, %arg7: memref<128x128xf32, #tpu.memory_space<vmem>>) attributes {dimension_semantics = [#tpu.dimension_semantics<parallel>, #tpu.dimension_semantics<parallel>, #tpu.dimension_semantics<parallel>, #tpu.dimension_semantics<arbitrary>], iteration_bounds = array<i64: 4, 1, 1, 1>, scalar_prefetch = 0 : i64, scratch_operands = 1 : i64, tpu.core_type = #tpu.core_type<tc>, window_params = [{transform_indices = @transform_0, window_bounds = array<i64: 1, 128, 128>}, {transform_indices = @transform_1, window_bounds = array<i64: 1, 128, 128>}, {transform_indices = @transform_2, window_bounds = array<i64: 1, 128, 128>}]} {
    %c0_i32 = arith.constant 0 : i32
    %0 = arith.cmpi eq, %arg3, %c0_i32 : i32
    %1 = arith.extui %0 : i1 to i32
    %c0_i32_0 = arith.constant 0 : i32
    %2 = arith.cmpi ne, %1, %c0_i32_0 : i32
    scf.if %2 {
      %cst_12 = arith.constant 0.000000e+00 : f32
      %14 = vector.broadcast %cst_12 : f32 to vector<128x128xf32>
      %c0_13 = arith.constant 0 : index
      %c0_14 = arith.constant 0 : index
      %15 = vector.load %arg7[%c0_13, %c0_14] : memref<128x128xf32, #tpu.memory_space<vmem>>, vector<128x128xf32>
      tpu.vector_store %arg7[%c0_13, %c0_14], %14 {strides = array<i32>} : memref<128x128xf32, #tpu.memory_space<vmem>>, vector<128x128xf32>,
    } else {
    }
    %c0 = arith.constant 0 : index
    %c0_1 = arith.constant 0 : index
    %3 = vector.load %arg7[%c0, %c0_1] : memref<128x128xf32, #tpu.memory_space<vmem>>, vector<128x128xf32>
    %c0_2 = arith.constant 0 : index
    %c0_3 = arith.constant 0 : index
    %c0_4 = arith.constant 0 : index
    %4 = vector.load %arg4[%c0_2, %c0_3, %c0_4] : memref<1x128x128xbf16, #tpu.memory_space<vmem>>, vector<1x128x128xbf16>
    %5 = vector.shape_cast %4 : vector<1x128x128xbf16> to vector<128x128xbf16>
    %c0_5 = arith.constant 0 : index
    %c0_6 = arith.constant 0 : index
    %c0_7 = arith.constant 0 : index
    %6 = vector.load %arg5[%c0_5, %c0_6, %c0_7] : memref<1x128x128xbf16, #tpu.memory_space<vmem>>, vector<1x128x128xbf16>
    %7 = vector.shape_cast %6 : vector<1x128x128xbf16> to vector<128x128xbf16>
    %cst = arith.constant dense<0.000000e+00> : vector<128x128xf32>
    %8 = tpu.matmul %5, %7, %cst {dimension_numbers = #tpu.dot_dimension_numbers<[1], [0], [0], [1], [0, 0, 1, 1], [], []>} : vector<128x128xbf16>, vector<128x128xbf16>, vector<128x128xf32> -> vector<128x128xf32>
    %9 = arith.addf %3, %8 : vector<128x128xf32>
    %c0_8 = arith.constant 0 : index
    %c0_9 = arith.constant 0 : index
    %10 = vector.load %arg7[%c0_8, %c0_9] : memref<128x128xf32, #tpu.memory_space<vmem>>, vector<128x128xf32>
    tpu.vector_store %arg7[%c0_8, %c0_9], %9 {strides = array<i32>} : memref<128x128xf32, #tpu.memory_space<vmem>>, vector<128x128xf32>,
    %c0_i32_10 = arith.constant 0 : i32
    %11 = arith.cmpi eq, %arg3, %c0_i32_10 : i32
    %12 = arith.extui %11 : i1 to i32
    %c0_i32_11 = arith.constant 0 : i32
    %13 = arith.cmpi ne, %12, %c0_i32_11 : i32
    scf.if %13 {
      %c0_12 = arith.constant 0 : index
      %c0_13 = arith.constant 0 : index
      %14 = vector.load %arg7[%c0_12, %c0_13] : memref<128x128xf32, #tpu.memory_space<vmem>>, vector<128x128xf32>
      %c0_14 = arith.constant 0 : index
      %c0_15 = arith.constant 0 : index
      %c0_16 = arith.constant 0 : index
      %15 = vector.load %arg6[%c0_14, %c0_15, %c0_16] : memref<1x128x128xf32, #tpu.memory_space<vmem>>, vector<1x128x128xf32>
      %16 = vector.shape_cast %15 : vector<1x128x128xf32> to vector<128x128xf32>
      %17 = vector.shape_cast %14 : vector<128x128xf32> to vector<1x128x128xf32>
      tpu.vector_store %arg6[%c0_14, %c0_15, %c0_16], %17 {strides = array<i32>} : memref<1x128x128xf32, #tpu.memory_space<vmem>>, vector<1x128x128xf32>,
    } else {
    }
    return
  }
  func.func @transform_0(%arg0: i32, %arg1: i32, %arg2: i32, %arg3: i32) -> (i32, i32, i32) {
    %c0_i32 = arith.constant 0 : i32
    return %arg0, %arg1, %arg3 : i32, i32, i32
  }
  func.func @transform_1(%arg0: i32, %arg1: i32, %arg2: i32, %arg3: i32) -> (i32, i32, i32) {
    %c0_i32 = arith.constant 0 : i32
    return %arg0, %arg3, %arg2 : i32, i32, i32
  }
  func.func @transform_2(%arg0: i32, %arg1: i32, %arg2: i32, %arg3: i32) -> (i32, i32, i32) {
    %c0_i32 = arith.constant 0 : i32
    return %arg0, %arg1, %arg2 : i32, i32, i32
  }
}

module attributes {stable_mosaic.version = 11 : i64} {
  func.func @_bn_stats_kernel(%arg0: i32, %arg1: memref<512x16xf32, #tpu.memory_space<vmem>>, %arg2: memref<1x16xf32, #tpu.memory_space<vmem>>, %arg3: memref<1x16xf32, #tpu.memory_space<vmem>>) attributes {dimension_semantics = [#tpu.dimension_semantics<arbitrary>], iteration_bounds = array<i64: 1>, scalar_prefetch = 0 : i64, scratch_operands = 0 : i64, tpu.core_type = #tpu.core_type<tc>, window_params = [{transform_indices = @transform_0, window_bounds = array<i64: 512, 16>}, {pipeline_mode = #tpu.pipeline_mode<synchronous>, transform_indices = @transform_1, window_bounds = array<i64: 1, 16>}, {pipeline_mode = #tpu.pipeline_mode<synchronous>, transform_indices = @transform_2, window_bounds = array<i64: 1, 16>}]} {
    %c0 = arith.constant 0 : index
    %c0_0 = arith.constant 0 : index
    %0 = vector.load %arg1[%c0, %c0_0] : memref<512x16xf32, #tpu.memory_space<vmem>>, vector<512x16xf32>
    %cst = arith.constant dense<0.000000e+00> : vector<16xf32>
    %1 = vector.multi_reduction <add>, %0, %cst [0] : vector<512x16xf32> to vector<16xf32>
    %2 = vector.shape_cast %1 : vector<16xf32> to vector<1x16xf32>
    %3 = arith.mulf %0, %0 : vector<512x16xf32>
    %cst_1 = arith.constant dense<0.000000e+00> : vector<16xf32>
    %4 = vector.multi_reduction <add>, %3, %cst_1 [0] : vector<512x16xf32> to vector<16xf32>
    %5 = vector.shape_cast %4 : vector<16xf32> to vector<1x16xf32>
    %c0_i32 = arith.constant 0 : i32
    %6 = arith.cmpi eq, %arg0, %c0_i32 : i32
    %7 = arith.extui %6 : i1 to i32
    %c0_i32_2 = arith.constant 0 : i32
    %8 = arith.cmpi ne, %7, %c0_i32_2 : i32
    scf.if %8 {
      %c0_5 = arith.constant 0 : index
      %c0_6 = arith.constant 0 : index
      %12 = vector.load %arg2[%c0_5, %c0_6] : memref<1x16xf32, #tpu.memory_space<vmem>>, vector<1x16xf32>
      tpu.vector_store %arg2[%c0_5, %c0_6], %2 {strides = array<i32>} : memref<1x16xf32, #tpu.memory_space<vmem>>, vector<1x16xf32>,
      %c0_7 = arith.constant 0 : index
      %c0_8 = arith.constant 0 : index
      %13 = vector.load %arg3[%c0_7, %c0_8] : memref<1x16xf32, #tpu.memory_space<vmem>>, vector<1x16xf32>
      tpu.vector_store %arg3[%c0_7, %c0_8], %5 {strides = array<i32>} : memref<1x16xf32, #tpu.memory_space<vmem>>, vector<1x16xf32>,
    } else {
    }
    %c0_i32_3 = arith.constant 0 : i32
    %9 = arith.cmpi sgt, %arg0, %c0_i32_3 : i32
    %10 = arith.extui %9 : i1 to i32
    %c0_i32_4 = arith.constant 0 : i32
    %11 = arith.cmpi ne, %10, %c0_i32_4 : i32
    scf.if %11 {
      %c0_5 = arith.constant 0 : index
      %c0_6 = arith.constant 0 : index
      %12 = vector.load %arg2[%c0_5, %c0_6] : memref<1x16xf32, #tpu.memory_space<vmem>>, vector<1x16xf32>
      %13 = arith.addf %12, %2 : vector<1x16xf32>
      %c0_7 = arith.constant 0 : index
      %c0_8 = arith.constant 0 : index
      %14 = vector.load %arg2[%c0_7, %c0_8] : memref<1x16xf32, #tpu.memory_space<vmem>>, vector<1x16xf32>
      tpu.vector_store %arg2[%c0_7, %c0_8], %13 {strides = array<i32>} : memref<1x16xf32, #tpu.memory_space<vmem>>, vector<1x16xf32>,
      %c0_9 = arith.constant 0 : index
      %c0_10 = arith.constant 0 : index
      %15 = vector.load %arg3[%c0_9, %c0_10] : memref<1x16xf32, #tpu.memory_space<vmem>>, vector<1x16xf32>
      %16 = arith.addf %15, %5 : vector<1x16xf32>
      %c0_11 = arith.constant 0 : index
      %c0_12 = arith.constant 0 : index
      %17 = vector.load %arg3[%c0_11, %c0_12] : memref<1x16xf32, #tpu.memory_space<vmem>>, vector<1x16xf32>
      tpu.vector_store %arg3[%c0_11, %c0_12], %16 {strides = array<i32>} : memref<1x16xf32, #tpu.memory_space<vmem>>, vector<1x16xf32>,
    } else {
    }
    return
  }
  func.func @transform_0(%arg0: i32) -> (i32, i32) {
    %c0_i32 = arith.constant 0 : i32
    %c0_i32_0 = arith.constant 0 : i32
    return %arg0, %c0_i32 : i32, i32
  }
  func.func @transform_1(%arg0: i32) -> (i32, i32) {
    %c0_i32 = arith.constant 0 : i32
    %c0_i32_0 = arith.constant 0 : i32
    %c0_i32_1 = arith.constant 0 : i32
    return %c0_i32, %c0_i32_0 : i32, i32
  }
  func.func @transform_2(%arg0: i32) -> (i32, i32) {
    %c0_i32 = arith.constant 0 : i32
    %c0_i32_0 = arith.constant 0 : i32
    %c0_i32_1 = arith.constant 0 : i32
    return %c0_i32, %c0_i32_0 : i32, i32
  }
}

module attributes {stable_mosaic.version = 11 : i64} {
  func.func @_bn_apply_kernel(%arg0: i32, %arg1: memref<512x16xf32, #tpu.memory_space<vmem>>, %arg2: memref<1x16xf32, #tpu.memory_space<vmem>>, %arg3: memref<1x16xf32, #tpu.memory_space<vmem>>, %arg4: memref<512x16xbf16, #tpu.memory_space<vmem>>) attributes {dimension_semantics = [#tpu.dimension_semantics<parallel>], iteration_bounds = array<i64: 1>, scalar_prefetch = 0 : i64, scratch_operands = 0 : i64, tpu.core_type = #tpu.core_type<tc>, window_params = [{transform_indices = @transform_0, window_bounds = array<i64: 512, 16>}, {pipeline_mode = #tpu.pipeline_mode<synchronous>, transform_indices = @transform_1, window_bounds = array<i64: 1, 16>}, {pipeline_mode = #tpu.pipeline_mode<synchronous>, transform_indices = @transform_2, window_bounds = array<i64: 1, 16>}, {transform_indices = @transform_3, window_bounds = array<i64: 512, 16>}]} {
    %c0 = arith.constant 0 : index
    %c0_0 = arith.constant 0 : index
    %0 = vector.load %arg1[%c0, %c0_0] : memref<512x16xf32, #tpu.memory_space<vmem>>, vector<512x16xf32>
    %c0_1 = arith.constant 0 : index
    %c0_2 = arith.constant 0 : index
    %1 = vector.load %arg2[%c0_1, %c0_2] : memref<1x16xf32, #tpu.memory_space<vmem>>, vector<1x16xf32>
    %2 = vector.broadcast %1 : vector<1x16xf32> to vector<512x16xf32>
    %3 = arith.mulf %0, %2 : vector<512x16xf32>
    %c0_3 = arith.constant 0 : index
    %c0_4 = arith.constant 0 : index
    %4 = vector.load %arg3[%c0_3, %c0_4] : memref<1x16xf32, #tpu.memory_space<vmem>>, vector<1x16xf32>
    %5 = vector.broadcast %4 : vector<1x16xf32> to vector<512x16xf32>
    %6 = arith.addf %3, %5 : vector<512x16xf32>
    %cst = arith.constant 0.000000e+00 : f32
    %7 = vector.broadcast %cst : f32 to vector<512x16xf32>
    %8 = arith.maximumf %6, %7 : vector<512x16xf32>
    %9 = arith.truncf %8 : vector<512x16xf32> to vector<512x16xbf16>
    %c0_5 = arith.constant 0 : index
    %c0_6 = arith.constant 0 : index
    %10 = vector.load %arg4[%c0_5, %c0_6] : memref<512x16xbf16, #tpu.memory_space<vmem>>, vector<512x16xbf16>
    tpu.vector_store %arg4[%c0_5, %c0_6], %9 {strides = array<i32>} : memref<512x16xbf16, #tpu.memory_space<vmem>>, vector<512x16xbf16>,
    return
  }
  func.func @transform_0(%arg0: i32) -> (i32, i32) {
    %c0_i32 = arith.constant 0 : i32
    %c0_i32_0 = arith.constant 0 : i32
    return %arg0, %c0_i32 : i32, i32
  }
  func.func @transform_1(%arg0: i32) -> (i32, i32) {
    %c0_i32 = arith.constant 0 : i32
    %c0_i32_0 = arith.constant 0 : i32
    %c0_i32_1 = arith.constant 0 : i32
    return %c0_i32, %c0_i32_0 : i32, i32
  }
  func.func @transform_2(%arg0: i32) -> (i32, i32) {
    %c0_i32 = arith.constant 0 : i32
    %c0_i32_0 = arith.constant 0 : i32
    %c0_i32_1 = arith.constant 0 : i32
    return %c0_i32, %c0_i32_0 : i32, i32
  }
  func.func @transform_3(%arg0: i32) -> (i32, i32) {
    %c0_i32 = arith.constant 0 : i32
    %c0_i32_0 = arith.constant 0 : i32
    return %arg0, %c0_i32 : i32, i32
  }
}

module attributes {stable_mosaic.version = 11 : i64} {
  func.func @_bmm_kernel(%arg0: i32, %arg1: i32, %arg2: i32, %arg3: i32, %arg4: memref<1x512x128xbf16, #tpu.memory_space<vmem>>, %arg5: memref<1x128x128xbf16, #tpu.memory_space<vmem>>, %arg6: memref<1x512x128xf32, #tpu.memory_space<vmem>>, %arg7: memref<512x128xf32, #tpu.memory_space<vmem>>) attributes {dimension_semantics = [#tpu.dimension_semantics<parallel>, #tpu.dimension_semantics<parallel>, #tpu.dimension_semantics<parallel>, #tpu.dimension_semantics<arbitrary>], iteration_bounds = array<i64: 4, 1, 1, 1>, scalar_prefetch = 0 : i64, scratch_operands = 1 : i64, tpu.core_type = #tpu.core_type<tc>, window_params = [{transform_indices = @transform_0, window_bounds = array<i64: 1, 512, 128>}, {transform_indices = @transform_1, window_bounds = array<i64: 1, 128, 128>}, {transform_indices = @transform_2, window_bounds = array<i64: 1, 512, 128>}]} {
    %c0_i32 = arith.constant 0 : i32
    %0 = arith.cmpi eq, %arg3, %c0_i32 : i32
    %1 = arith.extui %0 : i1 to i32
    %c0_i32_0 = arith.constant 0 : i32
    %2 = arith.cmpi ne, %1, %c0_i32_0 : i32
    scf.if %2 {
      %cst_12 = arith.constant 0.000000e+00 : f32
      %14 = vector.broadcast %cst_12 : f32 to vector<512x128xf32>
      %c0_13 = arith.constant 0 : index
      %c0_14 = arith.constant 0 : index
      %15 = vector.load %arg7[%c0_13, %c0_14] : memref<512x128xf32, #tpu.memory_space<vmem>>, vector<512x128xf32>
      tpu.vector_store %arg7[%c0_13, %c0_14], %14 {strides = array<i32>} : memref<512x128xf32, #tpu.memory_space<vmem>>, vector<512x128xf32>,
    } else {
    }
    %c0 = arith.constant 0 : index
    %c0_1 = arith.constant 0 : index
    %3 = vector.load %arg7[%c0, %c0_1] : memref<512x128xf32, #tpu.memory_space<vmem>>, vector<512x128xf32>
    %c0_2 = arith.constant 0 : index
    %c0_3 = arith.constant 0 : index
    %c0_4 = arith.constant 0 : index
    %4 = vector.load %arg4[%c0_2, %c0_3, %c0_4] : memref<1x512x128xbf16, #tpu.memory_space<vmem>>, vector<1x512x128xbf16>
    %5 = vector.shape_cast %4 : vector<1x512x128xbf16> to vector<512x128xbf16>
    %c0_5 = arith.constant 0 : index
    %c0_6 = arith.constant 0 : index
    %c0_7 = arith.constant 0 : index
    %6 = vector.load %arg5[%c0_5, %c0_6, %c0_7] : memref<1x128x128xbf16, #tpu.memory_space<vmem>>, vector<1x128x128xbf16>
    %7 = vector.shape_cast %6 : vector<1x128x128xbf16> to vector<128x128xbf16>
    %cst = arith.constant dense<0.000000e+00> : vector<512x128xf32>
    %8 = tpu.matmul %5, %7, %cst {dimension_numbers = #tpu.dot_dimension_numbers<[1], [0], [0], [1], [0, 0, 1, 1], [], []>} : vector<512x128xbf16>, vector<128x128xbf16>, vector<512x128xf32> -> vector<512x128xf32>
    %9 = arith.addf %3, %8 : vector<512x128xf32>
    %c0_8 = arith.constant 0 : index
    %c0_9 = arith.constant 0 : index
    %10 = vector.load %arg7[%c0_8, %c0_9] : memref<512x128xf32, #tpu.memory_space<vmem>>, vector<512x128xf32>
    tpu.vector_store %arg7[%c0_8, %c0_9], %9 {strides = array<i32>} : memref<512x128xf32, #tpu.memory_space<vmem>>, vector<512x128xf32>,
    %c0_i32_10 = arith.constant 0 : i32
    %11 = arith.cmpi eq, %arg3, %c0_i32_10 : i32
    %12 = arith.extui %11 : i1 to i32
    %c0_i32_11 = arith.constant 0 : i32
    %13 = arith.cmpi ne, %12, %c0_i32_11 : i32
    scf.if %13 {
      %c0_12 = arith.constant 0 : index
      %c0_13 = arith.constant 0 : index
      %14 = vector.load %arg7[%c0_12, %c0_13] : memref<512x128xf32, #tpu.memory_space<vmem>>, vector<512x128xf32>
      %c0_14 = arith.constant 0 : index
      %c0_15 = arith.constant 0 : index
      %c0_16 = arith.constant 0 : index
      %15 = vector.load %arg6[%c0_14, %c0_15, %c0_16] : memref<1x512x128xf32, #tpu.memory_space<vmem>>, vector<1x512x128xf32>
      %16 = vector.shape_cast %15 : vector<1x512x128xf32> to vector<512x128xf32>
      %17 = vector.shape_cast %14 : vector<512x128xf32> to vector<1x512x128xf32>
      tpu.vector_store %arg6[%c0_14, %c0_15, %c0_16], %17 {strides = array<i32>} : memref<1x512x128xf32, #tpu.memory_space<vmem>>, vector<1x512x128xf32>,
    } else {
    }
    return
  }
  func.func @transform_0(%arg0: i32, %arg1: i32, %arg2: i32, %arg3: i32) -> (i32, i32, i32) {
    %c0_i32 = arith.constant 0 : i32
    return %arg0, %arg1, %arg3 : i32, i32, i32
  }
  func.func @transform_1(%arg0: i32, %arg1: i32, %arg2: i32, %arg3: i32) -> (i32, i32, i32) {
    %c0_i32 = arith.constant 0 : i32
    return %arg0, %arg3, %arg2 : i32, i32, i32
  }
  func.func @transform_2(%arg0: i32, %arg1: i32, %arg2: i32, %arg3: i32) -> (i32, i32, i32) {
    %c0_i32 = arith.constant 0 : i32
    return %arg0, %arg1, %arg2 : i32, i32, i32
  }
}

module attributes {stable_mosaic.version = 11 : i64} {
  func.func @_bn_stats_kernel(%arg0: i32, %arg1: memref<2048x8xf32, #tpu.memory_space<vmem>>, %arg2: memref<1x8xf32, #tpu.memory_space<vmem>>, %arg3: memref<1x8xf32, #tpu.memory_space<vmem>>) attributes {dimension_semantics = [#tpu.dimension_semantics<arbitrary>], iteration_bounds = array<i64: 1>, scalar_prefetch = 0 : i64, scratch_operands = 0 : i64, tpu.core_type = #tpu.core_type<tc>, window_params = [{transform_indices = @transform_0, window_bounds = array<i64: 2048, 8>}, {pipeline_mode = #tpu.pipeline_mode<synchronous>, transform_indices = @transform_1, window_bounds = array<i64: 1, 8>}, {pipeline_mode = #tpu.pipeline_mode<synchronous>, transform_indices = @transform_2, window_bounds = array<i64: 1, 8>}]} {
    %c0 = arith.constant 0 : index
    %c0_0 = arith.constant 0 : index
    %0 = vector.load %arg1[%c0, %c0_0] : memref<2048x8xf32, #tpu.memory_space<vmem>>, vector<2048x8xf32>
    %cst = arith.constant dense<0.000000e+00> : vector<8xf32>
    %1 = vector.multi_reduction <add>, %0, %cst [0] : vector<2048x8xf32> to vector<8xf32>
    %2 = vector.shape_cast %1 : vector<8xf32> to vector<1x8xf32>
    %3 = arith.mulf %0, %0 : vector<2048x8xf32>
    %cst_1 = arith.constant dense<0.000000e+00> : vector<8xf32>
    %4 = vector.multi_reduction <add>, %3, %cst_1 [0] : vector<2048x8xf32> to vector<8xf32>
    %5 = vector.shape_cast %4 : vector<8xf32> to vector<1x8xf32>
    %c0_i32 = arith.constant 0 : i32
    %6 = arith.cmpi eq, %arg0, %c0_i32 : i32
    %7 = arith.extui %6 : i1 to i32
    %c0_i32_2 = arith.constant 0 : i32
    %8 = arith.cmpi ne, %7, %c0_i32_2 : i32
    scf.if %8 {
      %c0_5 = arith.constant 0 : index
      %c0_6 = arith.constant 0 : index
      %12 = vector.load %arg2[%c0_5, %c0_6] : memref<1x8xf32, #tpu.memory_space<vmem>>, vector<1x8xf32>
      tpu.vector_store %arg2[%c0_5, %c0_6], %2 {strides = array<i32>} : memref<1x8xf32, #tpu.memory_space<vmem>>, vector<1x8xf32>,
      %c0_7 = arith.constant 0 : index
      %c0_8 = arith.constant 0 : index
      %13 = vector.load %arg3[%c0_7, %c0_8] : memref<1x8xf32, #tpu.memory_space<vmem>>, vector<1x8xf32>
      tpu.vector_store %arg3[%c0_7, %c0_8], %5 {strides = array<i32>} : memref<1x8xf32, #tpu.memory_space<vmem>>, vector<1x8xf32>,
    } else {
    }
    %c0_i32_3 = arith.constant 0 : i32
    %9 = arith.cmpi sgt, %arg0, %c0_i32_3 : i32
    %10 = arith.extui %9 : i1 to i32
    %c0_i32_4 = arith.constant 0 : i32
    %11 = arith.cmpi ne, %10, %c0_i32_4 : i32
    scf.if %11 {
      %c0_5 = arith.constant 0 : index
      %c0_6 = arith.constant 0 : index
      %12 = vector.load %arg2[%c0_5, %c0_6] : memref<1x8xf32, #tpu.memory_space<vmem>>, vector<1x8xf32>
      %13 = arith.addf %12, %2 : vector<1x8xf32>
      %c0_7 = arith.constant 0 : index
      %c0_8 = arith.constant 0 : index
      %14 = vector.load %arg2[%c0_7, %c0_8] : memref<1x8xf32, #tpu.memory_space<vmem>>, vector<1x8xf32>
      tpu.vector_store %arg2[%c0_7, %c0_8], %13 {strides = array<i32>} : memref<1x8xf32, #tpu.memory_space<vmem>>, vector<1x8xf32>,
      %c0_9 = arith.constant 0 : index
      %c0_10 = arith.constant 0 : index
      %15 = vector.load %arg3[%c0_9, %c0_10] : memref<1x8xf32, #tpu.memory_space<vmem>>, vector<1x8xf32>
      %16 = arith.addf %15, %5 : vector<1x8xf32>
      %c0_11 = arith.constant 0 : index
      %c0_12 = arith.constant 0 : index
      %17 = vector.load %arg3[%c0_11, %c0_12] : memref<1x8xf32, #tpu.memory_space<vmem>>, vector<1x8xf32>
      tpu.vector_store %arg3[%c0_11, %c0_12], %16 {strides = array<i32>} : memref<1x8xf32, #tpu.memory_space<vmem>>, vector<1x8xf32>,
    } else {
    }
    return
  }
  func.func @transform_0(%arg0: i32) -> (i32, i32) {
    %c0_i32 = arith.constant 0 : i32
    %c0_i32_0 = arith.constant 0 : i32
    return %arg0, %c0_i32 : i32, i32
  }
  func.func @transform_1(%arg0: i32) -> (i32, i32) {
    %c0_i32 = arith.constant 0 : i32
    %c0_i32_0 = arith.constant 0 : i32
    %c0_i32_1 = arith.constant 0 : i32
    return %c0_i32, %c0_i32_0 : i32, i32
  }
  func.func @transform_2(%arg0: i32) -> (i32, i32) {
    %c0_i32 = arith.constant 0 : i32
    %c0_i32_0 = arith.constant 0 : i32
    %c0_i32_1 = arith.constant 0 : i32
    return %c0_i32, %c0_i32_0 : i32, i32
  }
}

module attributes {stable_mosaic.version = 11 : i64} {
  func.func @_bn_apply_kernel(%arg0: i32, %arg1: memref<2048x8xf32, #tpu.memory_space<vmem>>, %arg2: memref<1x8xf32, #tpu.memory_space<vmem>>, %arg3: memref<1x8xf32, #tpu.memory_space<vmem>>, %arg4: memref<2048x8xbf16, #tpu.memory_space<vmem>>) attributes {dimension_semantics = [#tpu.dimension_semantics<parallel>], iteration_bounds = array<i64: 1>, scalar_prefetch = 0 : i64, scratch_operands = 0 : i64, tpu.core_type = #tpu.core_type<tc>, window_params = [{transform_indices = @transform_0, window_bounds = array<i64: 2048, 8>}, {pipeline_mode = #tpu.pipeline_mode<synchronous>, transform_indices = @transform_1, window_bounds = array<i64: 1, 8>}, {pipeline_mode = #tpu.pipeline_mode<synchronous>, transform_indices = @transform_2, window_bounds = array<i64: 1, 8>}, {transform_indices = @transform_3, window_bounds = array<i64: 2048, 8>}]} {
    %c0 = arith.constant 0 : index
    %c0_0 = arith.constant 0 : index
    %0 = vector.load %arg1[%c0, %c0_0] : memref<2048x8xf32, #tpu.memory_space<vmem>>, vector<2048x8xf32>
    %c0_1 = arith.constant 0 : index
    %c0_2 = arith.constant 0 : index
    %1 = vector.load %arg2[%c0_1, %c0_2] : memref<1x8xf32, #tpu.memory_space<vmem>>, vector<1x8xf32>
    %2 = vector.broadcast %1 : vector<1x8xf32> to vector<2048x8xf32>
    %3 = arith.mulf %0, %2 : vector<2048x8xf32>
    %c0_3 = arith.constant 0 : index
    %c0_4 = arith.constant 0 : index
    %4 = vector.load %arg3[%c0_3, %c0_4] : memref<1x8xf32, #tpu.memory_space<vmem>>, vector<1x8xf32>
    %5 = vector.broadcast %4 : vector<1x8xf32> to vector<2048x8xf32>
    %6 = arith.addf %3, %5 : vector<2048x8xf32>
    %cst = arith.constant 0.000000e+00 : f32
    %7 = vector.broadcast %cst : f32 to vector<2048x8xf32>
    %8 = arith.maximumf %6, %7 : vector<2048x8xf32>
    %9 = arith.truncf %8 : vector<2048x8xf32> to vector<2048x8xbf16>
    %c0_5 = arith.constant 0 : index
    %c0_6 = arith.constant 0 : index
    %10 = vector.load %arg4[%c0_5, %c0_6] : memref<2048x8xbf16, #tpu.memory_space<vmem>>, vector<2048x8xbf16>
    tpu.vector_store %arg4[%c0_5, %c0_6], %9 {strides = array<i32>} : memref<2048x8xbf16, #tpu.memory_space<vmem>>, vector<2048x8xbf16>,
    return
  }
  func.func @transform_0(%arg0: i32) -> (i32, i32) {
    %c0_i32 = arith.constant 0 : i32
    %c0_i32_0 = arith.constant 0 : i32
    return %arg0, %c0_i32 : i32, i32
  }
  func.func @transform_1(%arg0: i32) -> (i32, i32) {
    %c0_i32 = arith.constant 0 : i32
    %c0_i32_0 = arith.constant 0 : i32
    %c0_i32_1 = arith.constant 0 : i32
    return %c0_i32, %c0_i32_0 : i32, i32
  }
  func.func @transform_2(%arg0: i32) -> (i32, i32) {
    %c0_i32 = arith.constant 0 : i32
    %c0_i32_0 = arith.constant 0 : i32
    %c0_i32_1 = arith.constant 0 : i32
    return %c0_i32, %c0_i32_0 : i32, i32
  }
  func.func @transform_3(%arg0: i32) -> (i32, i32) {
    %c0_i32 = arith.constant 0 : i32
    %c0_i32_0 = arith.constant 0 : i32
    return %arg0, %c0_i32 : i32, i32
  }
}

module attributes {stable_mosaic.version = 11 : i64} {
  func.func @_bmm_kernel(%arg0: i32, %arg1: i32, %arg2: i32, %arg3: i32, %arg4: memref<1x1024x128xbf16, #tpu.memory_space<vmem>>, %arg5: memref<1x128x128xbf16, #tpu.memory_space<vmem>>, %arg6: memref<1x1024x128xf32, #tpu.memory_space<vmem>>, %arg7: memref<1024x128xf32, #tpu.memory_space<vmem>>) attributes {dimension_semantics = [#tpu.dimension_semantics<parallel>, #tpu.dimension_semantics<parallel>, #tpu.dimension_semantics<parallel>, #tpu.dimension_semantics<arbitrary>], iteration_bounds = array<i64: 4, 2, 1, 1>, scalar_prefetch = 0 : i64, scratch_operands = 1 : i64, tpu.core_type = #tpu.core_type<tc>, window_params = [{transform_indices = @transform_0, window_bounds = array<i64: 1, 1024, 128>}, {transform_indices = @transform_1, window_bounds = array<i64: 1, 128, 128>}, {transform_indices = @transform_2, window_bounds = array<i64: 1, 1024, 128>}]} {
    %c0_i32 = arith.constant 0 : i32
    %0 = arith.cmpi eq, %arg3, %c0_i32 : i32
    %1 = arith.extui %0 : i1 to i32
    %c0_i32_0 = arith.constant 0 : i32
    %2 = arith.cmpi ne, %1, %c0_i32_0 : i32
    scf.if %2 {
      %cst_12 = arith.constant 0.000000e+00 : f32
      %14 = vector.broadcast %cst_12 : f32 to vector<1024x128xf32>
      %c0_13 = arith.constant 0 : index
      %c0_14 = arith.constant 0 : index
      %15 = vector.load %arg7[%c0_13, %c0_14] : memref<1024x128xf32, #tpu.memory_space<vmem>>, vector<1024x128xf32>
      tpu.vector_store %arg7[%c0_13, %c0_14], %14 {strides = array<i32>} : memref<1024x128xf32, #tpu.memory_space<vmem>>, vector<1024x128xf32>,
    } else {
    }
    %c0 = arith.constant 0 : index
    %c0_1 = arith.constant 0 : index
    %3 = vector.load %arg7[%c0, %c0_1] : memref<1024x128xf32, #tpu.memory_space<vmem>>, vector<1024x128xf32>
    %c0_2 = arith.constant 0 : index
    %c0_3 = arith.constant 0 : index
    %c0_4 = arith.constant 0 : index
    %4 = vector.load %arg4[%c0_2, %c0_3, %c0_4] : memref<1x1024x128xbf16, #tpu.memory_space<vmem>>, vector<1x1024x128xbf16>
    %5 = vector.shape_cast %4 : vector<1x1024x128xbf16> to vector<1024x128xbf16>
    %c0_5 = arith.constant 0 : index
    %c0_6 = arith.constant 0 : index
    %c0_7 = arith.constant 0 : index
    %6 = vector.load %arg5[%c0_5, %c0_6, %c0_7] : memref<1x128x128xbf16, #tpu.memory_space<vmem>>, vector<1x128x128xbf16>
    %7 = vector.shape_cast %6 : vector<1x128x128xbf16> to vector<128x128xbf16>
    %cst = arith.constant dense<0.000000e+00> : vector<1024x128xf32>
    %8 = tpu.matmul %5, %7, %cst {dimension_numbers = #tpu.dot_dimension_numbers<[1], [0], [0], [1], [0, 0, 1, 1], [], []>} : vector<1024x128xbf16>, vector<128x128xbf16>, vector<1024x128xf32> -> vector<1024x128xf32>
    %9 = arith.addf %3, %8 : vector<1024x128xf32>
    %c0_8 = arith.constant 0 : index
    %c0_9 = arith.constant 0 : index
    %10 = vector.load %arg7[%c0_8, %c0_9] : memref<1024x128xf32, #tpu.memory_space<vmem>>, vector<1024x128xf32>
    tpu.vector_store %arg7[%c0_8, %c0_9], %9 {strides = array<i32>} : memref<1024x128xf32, #tpu.memory_space<vmem>>, vector<1024x128xf32>,
    %c0_i32_10 = arith.constant 0 : i32
    %11 = arith.cmpi eq, %arg3, %c0_i32_10 : i32
    %12 = arith.extui %11 : i1 to i32
    %c0_i32_11 = arith.constant 0 : i32
    %13 = arith.cmpi ne, %12, %c0_i32_11 : i32
    scf.if %13 {
      %c0_12 = arith.constant 0 : index
      %c0_13 = arith.constant 0 : index
      %14 = vector.load %arg7[%c0_12, %c0_13] : memref<1024x128xf32, #tpu.memory_space<vmem>>, vector<1024x128xf32>
      %15 = math.tanh %14 : vector<1024x128xf32>
      %c0_14 = arith.constant 0 : index
      %c0_15 = arith.constant 0 : index
      %c0_16 = arith.constant 0 : index
      %16 = vector.load %arg6[%c0_14, %c0_15, %c0_16] : memref<1x1024x128xf32, #tpu.memory_space<vmem>>, vector<1x1024x128xf32>
      %17 = vector.shape_cast %16 : vector<1x1024x128xf32> to vector<1024x128xf32>
      %18 = vector.shape_cast %15 : vector<1024x128xf32> to vector<1x1024x128xf32>
      tpu.vector_store %arg6[%c0_14, %c0_15, %c0_16], %18 {strides = array<i32>} : memref<1x1024x128xf32, #tpu.memory_space<vmem>>, vector<1x1024x128xf32>,
    } else {
    }
    return
  }
  func.func @transform_0(%arg0: i32, %arg1: i32, %arg2: i32, %arg3: i32) -> (i32, i32, i32) {
    %c0_i32 = arith.constant 0 : i32
    return %arg0, %arg1, %arg3 : i32, i32, i32
  }
  func.func @transform_1(%arg0: i32, %arg1: i32, %arg2: i32, %arg3: i32) -> (i32, i32, i32) {
    %c0_i32 = arith.constant 0 : i32
    return %arg0, %arg3, %arg2 : i32, i32, i32
  }
  func.func @transform_2(%arg0: i32, %arg1: i32, %arg2: i32, %arg3: i32) -> (i32, i32, i32) {
    %c0_i32 = arith.constant 0 : i32
    return %arg0, %arg1, %arg2 : i32, i32, i32
  }
}

</mosaic_0001>

<llo_original>
// kernel: squeeze.65
$region0: #{squeeze.65}
  %s0 = inlined_call_operand.vmem [shape: f32[1,2,1024], index: 0, kind: input, shape index: {}]
  %s1 = inlined_call_operand.vmem [shape: f32[32,64], index: 1, kind: output, shape index: {}]
  $region1: #{squeeze.65} parent=0
    #allocation0 [shape = 'u8[32768]{0}', space=vmem, size = 0x8000, scoped, tag = 'scoped mem for input reshape']
    %s3 = ssub.s32 4, 1
    %s4 = scalar_lea.vmem %s0, 14
    %v5 = vld [vmem:[%s4] sm:%s3]
    %s6 = scalar_lea.vmem [#allocation0], 56
    %7 = vst [vmem:[%s6] sm:%s3] %v5
    %s8 = scalar_lea.vmem %s0, 12
    %v9 = vld [vmem:[%s8] sm:%s3]
    %s10 = scalar_lea.vmem [#allocation0], 48
    %11 = vst [vmem:[%s10] sm:%s3] %v9
    %s12 = scalar_lea.vmem %s0, 10
    %v13 = vld [vmem:[%s12] sm:%s3]
    %s14 = scalar_lea.vmem [#allocation0], 40
    %15 = vst [vmem:[%s14] sm:%s3] %v13
    %s16 = scalar_lea.vmem %s0, 8
    %v17 = vld [vmem:[%s16] sm:%s3]
    %s18 = scalar_lea.vmem [#allocation0], 32
    %19 = vst [vmem:[%s18] sm:%s3] %v17
    %s20 = scalar_lea.vmem %s0, 6
    %v21 = vld [vmem:[%s20] sm:%s3]
    %s22 = scalar_lea.vmem [#allocation0], 24
    %23 = vst [vmem:[%s22] sm:%s3] %v21
    %s24 = scalar_lea.vmem %s0, 4
    %v25 = vld [vmem:[%s24] sm:%s3]
    %s26 = scalar_lea.vmem [#allocation0], 16
    %27 = vst [vmem:[%s26] sm:%s3] %v25
    %s28 = scalar_lea.vmem %s0, 2
    %v29 = vld [vmem:[%s28] sm:%s3]
    %s30 = scalar_lea.vmem [#allocation0], 8
    %31 = vst [vmem:[%s30] sm:%s3] %v29
    %v32 = vld [vmem:[%s0] sm:%s3]
    %33 = vst [vmem:[#allocation0] sm:%s3] %v32
    %v34 = vld [vmem:[#allocation0] sm:$0x3]
    %vm35 = vcmask 523264
    %36 = vst.msk [vmem:[%s1] ss:$16 sm:$0x3] %vm35, %v34
    %s37 = scalar_lea.vmem [#allocation0], 8
    %v38 = vld [vmem:[%s37] sm:$0x3]
    %vm39 = vcmask 523264
    %s40 = scalar_lea.vmem %s1, 2
    %41 = vst.msk [vmem:[%s40] ss:$16 sm:$0x3] %vm39, %v38
    %s42 = scalar_lea.vmem [#allocation0], 16
    %v43 = vld [vmem:[%s42] sm:$0x3]
    %vm44 = vcmask 523264
    %s45 = scalar_lea.vmem %s1, 4
    %46 = vst.msk [vmem:[%s45] ss:$16 sm:$0x3] %vm44, %v43
    %s47 = scalar_lea.vmem [#allocation0], 24
    %v48 = vld [vmem:[%s47] sm:$0x3]
    %vm49 = vcmask 523264
    %s50 = scalar_lea.vmem %s1, 6
    %51 = vst.msk [vmem:[%s50] ss:$16 sm:$0x3] %vm49, %v48
    %s52 = scalar_lea.vmem [#allocation0], 32
    %v53 = vld [vmem:[%s52] sm:$0x3]
    %vm54 = vcmask 523264
    %s55 = scalar_lea.vmem %s1, 8
    %56 = vst.msk [vmem:[%s55] ss:$16 sm:$0x3] %vm54, %v53
    %s57 = scalar_lea.vmem [#allocation0], 40
    %v58 = vld [vmem:[%s57] sm:$0x3]
    %vm59 = vcmask 523264
    %s60 = scalar_lea.vmem %s1, 10
    %61 = vst.msk [vmem:[%s60] ss:$16 sm:$0x3] %vm59, %v58
    %s62 = scalar_lea.vmem [#allocation0], 48
    %v63 = vld [vmem:[%s62] sm:$0x3]
    %vm64 = vcmask 523264
    %s65 = scalar_lea.vmem %s1, 12
    %66 = vst.msk [vmem:[%s65] ss:$16 sm:$0x3] %vm64, %v63
    %s67 = scalar_lea.vmem [#allocation0], 56
    %v68 = vld [vmem:[%s67] sm:$0x3]
    %vm69 = vcmask 523264
    %s70 = scalar_lea.vmem %s1, 14
    %71 = vst.msk [vmem:[%s70] ss:$16 sm:$0x3] %vm69, %v68
    %v72 = vld [vmem:[#allocation0] ss:$8 sm:$0xf]
    %v73 = vld [vmem:[#allocation0] ss:$8 sm:$0xf0]
    %vm74 = vcmask 1047556
    %v75 = vsel %vm74, %v73, %v72
    %76 = vrot.lane.b32.xlu0 %v75, 64
    %v77 = vpop.permute.xlu0 %76
    %vm78 = vcmask 523264
    %s79 = scalar_lea.vmem %s1, 1
    %80 = vst.msk [vmem:[%s79] ss:$2 sm:$0xff] %vm78, %v77
    %s81 = scalar_lea.vmem [#allocation0], 1
    %v82 = vld [vmem:[%s81] ss:$8 sm:$0xf]
    %s83 = scalar_lea.vmem [#allocation0], 1
    %v84 = vld [vmem:[%s83] ss:$8 sm:$0xf0]
    %vm85 = vcmask 1047556
    %v86 = vsel %vm85, %v84, %v82
    %87 = vrot.lane.b32.xlu0 %v86, 64
    %v88 = vpop.permute.xlu0 %87
    %vm89 = vcmask 523264
    %s90 = scalar_lea.vmem %s1, 17
    %91 = vst.msk [vmem:[%s90] ss:$2 sm:$0xff] %vm89, %v88

// kernel: generator_forward.15
$region0: #{generator_forward.15}
  #allocation0 [shape = 'u32[]', space=smem, size = 0x4, offset = 0x4, fixed_abs, tag = 'smem constant byte address 0x4 - core index']
  #allocation1 [shape = 'u32[72,128]{1,0:T(1,128)}', space=vmem, size = 0x9000, scoped, tag = 'internal scratch']
  %s0 = inlined_call_operand.vmem [shape: f32[32,64], index: 0, kind: input, shape index: {}]
  %s1 = inlined_call_operand.vmem [shape: f32[1,64], index: 1, kind: input, shape index: {}]
  %s2 = inlined_call_operand.vmem [shape: f32[1,64], index: 2, kind: input, shape index: {}]
  %s3 = inlined_call_operand.vmem [shape: bf16[32,64], index: 3, kind: output, shape index: {}]
  %s4 = sld [smem:[#allocation0]]
  $region22: #{generator_forward.15} parent=0
    _
  %s6 = ssub.s32 1, %s4
  %s7 = scalar_select 0, %s6, %s4
  // Predicated region
  $region2: #{generator_forward.15} parent=0 // pred_check
    _
  $region3: #{generator_forward.15} parent=0 // pred_check_branch
    %9 = sbr.rel (0) target = $region5
  $region4: #{generator_forward.15} parent=0 // pred_region
    _
  $region5: #{generator_forward.15} parent=0 // pred_fallthru
    _
  // Predicated region
  $region6: #{generator_forward.15} parent=0 // pred_check
    _
  $region7: #{generator_forward.15} parent=0 // pred_check_branch
    %11 = sbr.rel (0) target = $region9
  $region8: #{generator_forward.15} parent=0 // pred_region
    _
  $region9: #{generator_forward.15} parent=0 // pred_fallthru
    _
  // Predicated region
  $region10: #{generator_forward.15} parent=0 // pred_check
    _
  $region11: #{generator_forward.15} parent=0 // pred_check_branch
    %13 = sbr.rel (0) target = $region13
  $region12: #{generator_forward.15} parent=0 // pred_region
    _
  $region13: #{generator_forward.15} parent=0 // pred_fallthru
    _
  %v14 = vld [vmem:[%s0] sm:$0xff]
  %v15 = vld [vmem:[%s0 + $0x8] sm:$0xff]
  %v16 = vld [vmem:[%s0 + $0x10] sm:$0xff]
  %v17 = vld [vmem:[%s0 + $0x18] sm:$0xff]
  %v18 = vld [vmem:[%s1] sm:$0x1]
  %v20 = vperm.slane %v18, 0
  %v22 = vmul.f32 %v14, %v20
  %v23 = vmul.f32 %v15, %v20
  %v24 = vmul.f32 %v16, %v20
  %v25 = vmul.f32 %v17, %v20
  %v26 = vld [vmem:[%s2] sm:$0x1]
  %v28 = vperm.slane %v26, 0
  %v30 = vadd.f32 %v22, %v28
  %v31 = vadd.f32 %v23, %v28
  %v32 = vadd.f32 %v24, %v28
  %v33 = vadd.f32 %v25, %v28
  %v34 = vmax.f32 %v30, 0.0
  %v35 = vmax.f32 %v31, 0.0
  %v36 = vmax.f32 %v32, 0.0
  %v37 = vmax.f32 %v33, 0.0
  %v38 = vpack.c.bf16 %v34, %v34
  %v39 = vpack.c.bf16 %v35, %v35
  %v40 = vpack.c.bf16 %v36, %v36
  %v41 = vpack.c.bf16 %v37, %v37
  %vm42 = vcmask 519168
  %43 = vst.msk [vmem:[%s3] sm:$0xf] %vm42, %v38
  %44 = vst.msk [vmem:[%s3 + $0x4] sm:$0xf] %vm42, %v39
  %45 = vst.msk [vmem:[%s3 + $0x8] sm:$0xf] %vm42, %v40
  %46 = vst.msk [vmem:[%s3 + $0xc] sm:$0xf] %vm42, %v41
  // Predicated region
  $region14: #{generator_forward.15} parent=0 // pred_check
    _
  $region15: #{generator_forward.15} parent=0 // pred_check_branch
    %48 = sbr.rel (0) target = $region17
  $region16: #{generator_forward.15} parent=0 // pred_region
    _
  $region17: #{generator_forward.15} parent=0 // pred_fallthru
    _
  // Predicated region
  $region18: #{generator_forward.15} parent=0 // pred_check
    _
  $region19: #{generator_forward.15} parent=0 // pred_check_branch
    %50 = sbr.rel (0) target = $region21
  $region20: #{generator_forward.15} parent=0 // pred_region
    _
  $region21: #{generator_forward.15} parent=0 // pred_fallthru
    _

// kernel: generator_forward.14
$region0: #{generator_forward.14}
  #allocation0 [shape = 'u32[]', space=smem, size = 0x4, offset = 0x4, fixed_abs, tag = 'smem constant byte address 0x4 - core index']
  #allocation1 [shape = 'u32[72,128]{1,0:T(1,128)}', space=vmem, size = 0x9000, scoped, tag = 'internal scratch']
  %s0 = inlined_call_operand.vmem [shape: f32[32,64], index: 0, kind: input, shape index: {}]
  %s1 = inlined_call_operand.vmem [shape: f32[1,64], index: 1, kind: output, shape index: {0}]
  %s2 = inlined_call_operand.vmem [shape: f32[1,64], index: 2, kind: output, shape index: {1}]
  %3 = xla_tuple %s1, %s2
  %s4 = sld [smem:[#allocation0]]
  $region30: #{generator_forward.14} parent=0
    _
  %s6 = ssub.s32 1, %s4
  %s7 = scalar_select 0, %s6, %s4
  // Predicated region
  $region2: #{generator_forward.14} parent=0 // pred_check
    _
  $region3: #{generator_forward.14} parent=0 // pred_check_branch
    %9 = sbr.rel (0) target = $region5
  $region4: #{generator_forward.14} parent=0 // pred_region
    _
  $region5: #{generator_forward.14} parent=0 // pred_fallthru
    _
  %v10 = vld [vmem:[%s0] sm:$0xff]
  %v11 = vld [vmem:[%s0 + $0x8] sm:$0xff]
  %v12 = vld [vmem:[%s0 + $0x10] sm:$0xff]
  %v13 = vld [vmem:[%s0 + $0x18] sm:$0xff]
  %vm14 = vcmask 523264
  %v15 = vsel %vm14, %v10, 0.0
  %v16 = vsel %vm14, %v11, 0.0
  %v17 = vadd.f32 %v15, %v16
  %v18 = vsel %vm14, %v12, 0.0
  %v19 = vadd.f32 %v17, %v18
  %v20 = vsel %vm14, %v13, 0.0
  %v21 = vadd.f32 %v19, %v20
  %v22 = vrot.slane %v21, 4
  %v23 = vadd.f32 %v21, %v22
  %v24 = vrot.slane %v23, 2
  %v25 = vadd.f32 %v23, %v24
  %v26 = vrot.slane %v25, 1
  %v27 = vadd.f32 %v25, %v26
  %v28 = vmul.f32 %v10, %v10
  %v29 = vmul.f32 %v11, %v11
  %v30 = vmul.f32 %v12, %v12
  %v31 = vmul.f32 %v13, %v13
  %v32 = vsel %vm14, %v28, 0.0
  %v33 = vsel %vm14, %v29, 0.0
  %v34 = vadd.f32 %v32, %v33
  %v35 = vsel %vm14, %v30, 0.0
  %v36 = vadd.f32 %v34, %v35
  %v37 = vsel %vm14, %v31, 0.0
  %v38 = vadd.f32 %v36, %v37
  %v39 = vrot.slane %v38, 4
  %v40 = vadd.f32 %v38, %v39
  %v41 = vrot.slane %v40, 2
  %v42 = vadd.f32 %v40, %v41
  %v43 = vrot.slane %v42, 1
  %v44 = vadd.f32 %v42, %v43
  %p45 = scmp.eq.s32.totalorder 0, 0
  // Predicated region
  $region6: #{generator_forward.14} parent=0 // pred_check
    %p46 = pneg %p45
  $region7: #{generator_forward.14} parent=0 // pred_check_branch
    %48 = sbr.rel (%p46) target = $region9
  $region8: #{generator_forward.14} parent=0 // pred_region
    %vm49 = vcmask 516096
    %50 = vst.msk [vmem:[%s1] sm:$0x1] %vm49, %v27
    %51 = vst.msk [vmem:[%s2] sm:$0x1] %vm49, %v44
  $region9: #{generator_forward.14} parent=0 // pred_fallthru
    _
  %p52 = scmp.gt.s32.totalorder 0, 0
  // Predicated region
  $region10: #{generator_forward.14} parent=0 // pred_check
    %p53 = pneg %p52
  $region11: #{generator_forward.14} parent=0 // pred_check_branch
    %55 = sbr.rel (%p53) target = $region13
  $region12: #{generator_forward.14} parent=0 // pred_region
    %v56 = vld [vmem:[%s1] sm:$0x1]
    %v57 = vadd.f32 %v56, %v27
    %vm58 = vcmask 516096
    %59 = vst.msk [vmem:[%s1] sm:$0x1] %vm58, %v57
    %v60 = vld [vmem:[%s2] sm:$0x1]
    %v61 = vadd.f32 %v60, %v44
    %62 = vst.msk [vmem:[%s2] sm:$0x1] %vm58, %v61
  $region13: #{generator_forward.14} parent=0 // pred_fallthru
    _
  // Predicated region
  $region14: #{generator_forward.14} parent=0 // pred_check
    _
  $region15: #{generator_forward.14} parent=0 // pred_check_branch
    %64 = sbr.rel (0) target = $region17
  $region16: #{generator_forward.14} parent=0 // pred_region
    _
  $region17: #{generator_forward.14} parent=0 // pred_fallthru
    _
  // Predicated region
  $region18: #{generator_forward.14} parent=0 // pred_check
    _
  $region19: #{generator_forward.14} parent=0 // pred_check_branch
    %66 = sbr.rel (0) target = $region21
  $region20: #{generator_forward.14} parent=0 // pred_region
    _
  $region21: #{generator_forward.14} parent=0 // pred_fallthru
    _
  // Predicated region
  $region22: #{generator_forward.14} parent=0 // pred_check
    _
  $region23: #{generator_forward.14} parent=0 // pred_check_branch
    %68 = sbr.rel (0) target = $region25
  $region24: #{generator_forward.14} parent=0 // pred_region
    _
  $region25: #{generator_forward.14} parent=0 // pred_fallthru
    _
  // Predicated region
  $region26: #{generator_forward.14} parent=0 // pred_check
    _
  $region27: #{generator_forward.14} parent=0 // pred_check_branch
    %70 = sbr.rel (0) target = $region29
  $region28: #{generator_forward.14} parent=0 // pred_region
    _
  $region29: #{generator_forward.14} parent=0 // pred_fallthru
    _

// kernel: generator_forward.13
$region0: #{generator_forward.13}
  #allocation0 [shape = 'u32[]', space=smem, size = 0x4, offset = 0x4, fixed_abs, tag = 'smem constant byte address 0x4 - core index']
  #allocation1 [shape = 'u32[72,128]{1,0:T(1,128)}', space=vmem, size = 0x9000, scoped, tag = 'internal scratch']
  #allocation2 [shape = 'f32[8,256]{1,0:T(8,128)}', space=vmem, size = 0x2000, scoped, tag = 'scratch operand']
  %s0 = inlined_call_operand.vmem [shape: bf16[1,8,128], index: 0, kind: input, shape index: {}]
  %s1 = inlined_call_operand.vmem [shape: bf16[1,128,1024], index: 1, kind: input, shape index: {}]
  %s2 = inlined_call_operand.vmem [shape: f32[1,8,1024], index: 2, kind: output, shape index: {}]
  %s3 = sld [smem:[#allocation0]]
  $region87: #{generator_forward.13} parent=0
    _
  %s5 = ssub.s32 1, %s3
  %s6 = scalar_select 0, %s5, %s3
  $region1: #{generator_forward.13} parent=0
    #allocation3 [shape = 'u8[131072]{0}', space=vmem, size = 0x20000, scoped, tag = 'input window, operand 1']
    loop: start=0, step=1, limit=6
    $region2: #{generator_forward.13} parent=1 // loop_pre_header
      _
    $region3: #{generator_forward.13} parent=1 // loop_header
      %s8 = sphi 0, %s12
      %p9 = scmp.ge.s32.totalorder %s8, 6
      %s15 = sphi 0, %s41
      %s16 = sphi 0, %s37
      %s17 = sphi 0, %s33
      %s18 = sphi 0, %s29
      %s19 = sphi 0, %s15
      %s20 = sphi 0, %s16
      %s21 = sphi 0, %s17
      %s22 = sphi 0, %s18
      %s23 = sphi 0, %s19
      %s24 = sphi 0, %s20
      %s25 = sphi 0, %s21
      %s26 = sphi 0, %s22
      %s48 = sphi 0, %s50
      %s51 = sphi 0, %s48
      %s52 = sphi 0, %s51
      %s68 = sphi 0, %s52
      %s78 = sphi 0, %s80
      %s81 = sphi 0, %s78
      %s82 = sphi 0, %s81
      %s98 = sphi 0, %s82
      %s108 = sphi 0, %s110
      %s111 = sphi 0, %s108
      %s112 = sphi 0, %s111
      %s128 = sphi 0, %s112
    $region4: #{generator_forward.13} parent=1 // loop_header_branch
      %11 = sbr.rel (%p9) target = $region8
    $region5: #{generator_forward.13} parent=1 // loop_body
      %s13 = ssub.s32 %s8, 1
      %s14 = ssub.s32 %s8, 2
      %s27 = sadd.s32 1, %s18
      %p28 = scmp.ge.s32.totalorder %s27, 1
      %s29 = scalar_select %p28, 0, %s27
      %s30 = sadd.s32 1, %s17
      %s31 = scalar_select %p28, %s30, %s17
      %p32 = scmp.ge.s32.totalorder %s31, 4
      %s33 = scalar_select %p32, 0, %s31
      %s34 = sadd.s32 1, %s16
      %s35 = scalar_select %p32, %s34, %s16
      %p36 = scmp.ge.s32.totalorder %s35, 1
      %s37 = scalar_select %p36, 0, %s35
      %s38 = sadd.s32 1, %s15
      %s39 = scalar_select %p36, %s38, %s15
      %p40 = scmp.ge.s32.totalorder %s39, 1
      %s41 = scalar_select %p40, 0, %s39
      %s42 = ssub.s32 %s15, %s41
      %s43 = ssub.s32 %s16, %s37
      %s44 = sor.u32 %s42, %s43
      %s45 = ssub.s32 %s18, %s29
      %s46 = sor.u32 %s44, %s45
      %p47 = scmp.eq.s32.totalorder %s46, 0
      %s49 = sadd.s32 %s48, 1
      %s50 = scalar_select %p47, %s48, %s49
      %p53 = pneg %p47
      %p54 = scmp.eq.s32.totalorder %s8, 3
      %p55 = por %p53, %p54
      %p56 = scmp.ne.s32.totalorder %s48, %s51
      %p57 = scmp.eq.s32.totalorder %s8, 0
      %p58 = por %p56, %p57
      %p59 = scmp.ne.s32.totalorder %s48, %s51
      %p60 = scmp.eq.s32.totalorder %s13, 3
      %p61 = por %p59, %p60
      %p62 = scmp.ne.s32.totalorder %s51, %s52
      %p63 = scmp.eq.s32.totalorder %s13, 0
      %p64 = por %p62, %p63
      %p65 = scmp.ne.s32.totalorder %s51, %s52
      %p66 = scmp.eq.s32.totalorder %s14, 3
      %p67 = por %p65, %p66
      %p69 = scmp.ne.s32.totalorder %s52, %s68
      %p70 = scmp.eq.s32.totalorder %s14, 0
      %p71 = por %p69, %p70
      %s72 = ssub.s32 %s15, %s41
      %s73 = ssub.s32 %s18, %s29
      %s74 = sor.u32 %s72, %s73
      %s75 = ssub.s32 %s17, %s33
      %s76 = sor.u32 %s74, %s75
      %p77 = scmp.eq.s32.totalorder %s76, 0
      %s79 = sadd.s32 %s78, 1
      %s80 = scalar_select %p77, %s78, %s79
      %p83 = pneg %p77
      %p84 = scmp.eq.s32.totalorder %s8, 3
      %p85 = por %p83, %p84
      %p86 = scmp.ne.s32.totalorder %s78, %s81
      %p87 = scmp.eq.s32.totalorder %s8, 0
      %p88 = por %p86, %p87
      %p89 = scmp.ne.s32.totalorder %s78, %s81
      %p90 = scmp.eq.s32.totalorder %s13, 3
      %p91 = por %p89, %p90
      %p92 = scmp.ne.s32.totalorder %s81, %s82
      %p93 = scmp.eq.s32.totalorder %s13, 0
      %p94 = por %p92, %p93
      %p95 = scmp.ne.s32.totalorder %s81, %s82
      %p96 = scmp.eq.s32.totalorder %s14, 3
      %p97 = por %p95, %p96
      %p99 = scmp.ne.s32.totalorder %s82, %s98
      %p100 = scmp.eq.s32.totalorder %s14, 0
      %p101 = por %p99, %p100
      %s102 = ssub.s32 %s15, %s41
      %s103 = ssub.s32 %s16, %s37
      %s104 = sor.u32 %s102, %s103
      %s105 = ssub.s32 %s17, %s33
      %s106 = sor.u32 %s104, %s105
      %p107 = scmp.eq.s32.totalorder %s106, 0
      %s109 = sadd.s32 %s108, 1
      %s110 = scalar_select %p107, %s108, %s109
      %p113 = pneg %p107
      %p114 = scmp.eq.s32.totalorder %s8, 3
      %p115 = por %p113, %p114
      %p116 = scmp.ne.s32.totalorder %s108, %s111
      %p117 = scmp.eq.s32.totalorder %s8, 0
      %p118 = por %p116, %p117
      %p119 = scmp.ne.s32.totalorder %s108, %s111
      %p120 = scmp.eq.s32.totalorder %s13, 3
      %p121 = por %p119, %p120
      %p122 = scmp.ne.s32.totalorder %s111, %s112
      %p123 = scmp.eq.s32.totalorder %s13, 0
      %p124 = por %p122, %p123
      %p125 = scmp.ne.s32.totalorder %s111, %s112
      %p126 = scmp.eq.s32.totalorder %s14, 3
      %p127 = por %p125, %p126
      %p129 = scmp.ne.s32.totalorder %s112, %s128
      %p130 = scmp.eq.s32.totalorder %s14, 0
      %p131 = por %p129, %p130
      %p132 = scmp.le.s32.totalorder 1, %s8
      %p133 = scmp.lt.s32.totalorder %s8, 5
      %p134 = pnand %p132, %p133
      %p135 = pneg %p134
      // Predicated region
      $region9: #{generator_forward.13} parent=5 // pred_check
        _
      $region10: #{generator_forward.13} parent=5 // pred_check_branch
        %137 = sbr.rel (%p134) target = $region12
      $region11: #{generator_forward.13} parent=5 // pred_region
        %s138 = ssub.s32 %s8, 1
        // Predicated region
        $region13: #{generator_forward.13} parent=11 // pred_check
          %p139 = pneg %p64
        $region14: #{generator_forward.13} parent=11 // pred_check_branch
          %141 = sbr.rel (%p139) target = $region16
        $region15: #{generator_forward.13} parent=11 // pred_region
          %p142 = scmp.lt.s32.totalorder %s19, 0
          %s143 = scalar_select %p142, %s19, 0
          %p144 = scmp.lt.s32.totalorder %s20, 0
          %s145 = scalar_select %p144, %s20, 0
          %p146 = scmp.lt.s32.totalorder %s22, 0
          %s147 = scalar_select %p146, %s22, 0
          %s148 = sadd.s32 %s147, %s145
          %s149 = sadd.s32 %s148, %s143
          %s150 = smul.addr %s149, 4
          %s151 = scalar_lea.vmem %s0, %s150
        $region16: #{generator_forward.13} parent=11 // pred_fallthru
          _
      $region12: #{generator_forward.13} parent=5 // pred_fallthru
        _
      %p152 = scmp.lt.s32.totalorder %s8, 4
      // Predicated region
      $region17: #{generator_forward.13} parent=5 // pred_check
        %p153 = pneg %p152
      $region18: #{generator_forward.13} parent=5 // pred_check_branch
        %155 = sbr.rel (%p153) target = $region20
      $region19: #{generator_forward.13} parent=5 // pred_region
        // Predicated region
        $region21: #{generator_forward.13} parent=19 // pred_check
          %p156 = pneg %p88
        $region22: #{generator_forward.13} parent=19 // pred_check_branch
          %158 = sbr.rel (%p156) target = $region24
        $region23: #{generator_forward.13} parent=19 // pred_region
          %s159 = sand.u32 %s78, 1
          %s160 = sand.u32 %s78, 1
          %s161 = smul.addr %s160, 128
          %s162 = scalar_lea.vmem [#allocation3], %s161
          %s163 = smul.u32 16, %s18
          %s164 = smul.u32 2, %s17
          %s165 = smul.addr %s163, 8
          %s166 = sadd.s32 %s164, %s165
          %s167 = smul.addr %s15, 128
          %s168 = sadd.s32 %s166, %s167
          %s169 = smul.addr %s168, 4
          %s170 = scalar_lea.vmem %s1, %s169
          // Predicated region
          $region25: #{generator_forward.13} parent=23 // pred_check
            _
          $region26: #{generator_forward.13} parent=23 // pred_check_branch
            %172 = sbr.rel (0) target = $region28
          $region27: #{generator_forward.13} parent=23 // pred_region
            // Predicated region
            $region29: #{generator_forward.13} parent=27 // pred_check
              _
            $region30: #{generator_forward.13} parent=27 // pred_check_branch
              %174 = sbr.rel (0) target = $region32
            $region31: #{generator_forward.13} parent=27 // pred_region
              // Predicated region
              $region44: #{generator_forward.13} parent=31 // pred_check
                _
              $region45: #{generator_forward.13} parent=31 // pred_check_branch
                %220 = sbr.rel (0) target = $region47
              $region46: #{generator_forward.13} parent=31 // pred_region
                loop: start=0, step=1, limit=1
                $region48: #{generator_forward.13} parent=46 // loop_pre_header
                  _
                $region49: #{generator_forward.13} parent=46 // loop_header
                  %s222 = sphi 0, %s226
                  %p223 = scmp.ge.s32.totalorder %s222, 1
                  %s227 = sphi %s170, %s170
                  %s228 = sphi %s162, %s162
                $region50: #{generator_forward.13} parent=46 // loop_header_branch
                  %225 = sbr.rel (%p223) target = $region54
                $region51: #{generator_forward.13} parent=46 // loop_body
                  %v229 = vld [vmem:[%s227] sm:$0xff]
                  %230 = vst [vmem:[%s228] sm:$0xff] %v229
                  %v231 = vld [vmem:[%s227 + $0x20] sm:$0xff]
                  %232 = vst [vmem:[%s228 + $0x8] sm:$0xff] %v231
                  %v233 = vld [vmem:[%s227 + $0x40] sm:$0xff]
                  %234 = vst [vmem:[%s228 + $0x10] sm:$0xff] %v233
                  %v235 = vld [vmem:[%s227 + $0x60] sm:$0xff]
                  %236 = vst [vmem:[%s228 + $0x18] sm:$0xff] %v235
                  %v237 = vld [vmem:[%s227 + $0x80] sm:$0xff]
                  %238 = vst [vmem:[%s228 + $0x20] sm:$0xff] %v237
                  %v239 = vld [vmem:[%s227 + $0xa0] sm:$0xff]
                  %240 = vst [vmem:[%s228 + $0x28] sm:$0xff] %v239
                  %v241 = vld [vmem:[%s227 + $0xc0] sm:$0xff]
                  %242 = vst [vmem:[%s228 + $0x30] sm:$0xff] %v241
                  %v243 = vld [vmem:[%s227 + $0xe0] sm:$0xff]
                  %244 = vst [vmem:[%s228 + $0x38] sm:$0xff] %v243
                  %v245 = vld [vmem:[%s227 + $0x100] sm:$0xff]
                  %246 = vst [vmem:[%s228 + $0x40] sm:$0xff] %v245
                  %v247 = vld [vmem:[%s227 + $0x120] sm:$0xff]
                  %248 = vst [vmem:[%s228 + $0x48] sm:$0xff] %v247
                  %v249 = vld [vmem:[%s227 + $0x140] sm:$0xff]
                  %250 = vst [vmem:[%s228 + $0x50] sm:$0xff] %v249
                  %v251 = vld [vmem:[%s227 + $0x160] sm:$0xff]
                  %252 = vst [vmem:[%s228 + $0x58] sm:$0xff] %v251
                  %v253 = vld [vmem:[%s227 + $0x180] sm:$0xff]
                  %254 = vst [vmem:[%s228 + $0x60] sm:$0xff] %v253
                  %v255 = vld [vmem:[%s227 + $0x1a0] sm:$0xff]
                  %256 = vst [vmem:[%s228 + $0x68] sm:$0xff] %v255
                  %v257 = vld [vmem:[%s227 + $0x1c0] sm:$0xff]
                  %258 = vst [vmem:[%s228 + $0x70] sm:$0xff] %v257
                  %v259 = vld [vmem:[%s227 + $0x1e0] sm:$0xff]
                  %260 = vst [vmem:[%s228 + $0x78] sm:$0xff] %v259
                $region52: #{generator_forward.13} parent=46 // loop_footer
                  %s226 = sadd.s32 1, %s222
                $region53: #{generator_forward.13} parent=46 // loop_footer_branch
                  %221 = sbr.rel target = $region49
                $region54: #{generator_forward.13} parent=46 // loop_exit
                  _
              $region47: #{generator_forward.13} parent=31 // pred_fallthru
                _
              // Predicated region
              $region55: #{generator_forward.13} parent=31 // pred_check
                _
              $region56: #{generator_forward.13} parent=31 // pred_check_branch
                %262 = sbr.rel target = $region58
              $region57: #{generator_forward.13} parent=31 // pred_region
                _
              $region58: #{generator_forward.13} parent=31 // pred_fallthru
                _
            $region32: #{generator_forward.13} parent=27 // pred_fallthru
              _
            // Predicated region
            $region33: #{generator_forward.13} parent=27 // pred_check
              _
            $region34: #{generator_forward.13} parent=27 // pred_check_branch
              %176 = sbr.rel target = $region36
            $region35: #{generator_forward.13} parent=27 // pred_region
              %s178 = ssub.s32 256, 1
              loop: start=0, step=1, limit=1
              $region37: #{generator_forward.13} parent=35 // loop_pre_header
                _
              $region38: #{generator_forward.13} parent=35 // loop_header
                %s180 = sphi 0, %s184
                %p181 = scmp.ge.s32.totalorder %s180, 1
                %s185 = sphi %s170, %s170
                %s186 = sphi %s162, %s162
              $region39: #{generator_forward.13} parent=35 // loop_header_branch
                %183 = sbr.rel (%p181) target = $region43
              $region40: #{generator_forward.13} parent=35 // loop_body
                %v187 = vld [vmem:[%s185] sm:%s178]
                %188 = vst [vmem:[%s186] sm:%s178] %v187
                %v189 = vld [vmem:[%s185 + $0x20] sm:%s178]
                %190 = vst [vmem:[%s186 + $0x8] sm:%s178] %v189
                %v191 = vld [vmem:[%s185 + $0x40] sm:%s178]
                %192 = vst [vmem:[%s186 + $0x10] sm:%s178] %v191
                %v193 = vld [vmem:[%s185 + $0x60] sm:%s178]
                %194 = vst [vmem:[%s186 + $0x18] sm:%s178] %v193
                %v195 = vld [vmem:[%s185 + $0x80] sm:%s178]
                %196 = vst [vmem:[%s186 + $0x20] sm:%s178] %v195
                %v197 = vld [vmem:[%s185 + $0xa0] sm:%s178]
                %198 = vst [vmem:[%s186 + $0x28] sm:%s178] %v197
                %v199 = vld [vmem:[%s185 + $0xc0] sm:%s178]
                %200 = vst [vmem:[%s186 + $0x30] sm:%s178] %v199
                %v201 = vld [vmem:[%s185 + $0xe0] sm:%s178]
                %202 = vst [vmem:[%s186 + $0x38] sm:%s178] %v201
                %v203 = vld [vmem:[%s185 + $0x100] sm:%s178]
                %204 = vst [vmem:[%s186 + $0x40] sm:%s178] %v203
                %v205 = vld [vmem:[%s185 + $0x120] sm:%s178]
                %206 = vst [vmem:[%s186 + $0x48] sm:%s178] %v205
                %v207 = vld [vmem:[%s185 + $0x140] sm:%s178]
                %208 = vst [vmem:[%s186 + $0x50] sm:%s178] %v207
                %v209 = vld [vmem:[%s185 + $0x160] sm:%s178]
                %210 = vst [vmem:[%s186 + $0x58] sm:%s178] %v209
                %v211 = vld [vmem:[%s185 + $0x180] sm:%s178]
                %212 = vst [vmem:[%s186 + $0x60] sm:%s178] %v211
                %v213 = vld [vmem:[%s185 + $0x1a0] sm:%s178]
                %214 = vst [vmem:[%s186 + $0x68] sm:%s178] %v213
                %v215 = vld [vmem:[%s185 + $0x1c0] sm:%s178]
                %216 = vst [vmem:[%s186 + $0x70] sm:%s178] %v215
                %v217 = vld [vmem:[%s185 + $0x1e0] sm:%s178]
                %218 = vst [vmem:[%s186 + $0x78] sm:%s178] %v217
              $region41: #{generator_forward.13} parent=35 // loop_footer
                %s184 = sadd.s32 1, %s180
              $region42: #{generator_forward.13} parent=35 // loop_footer_branch
                %179 = sbr.rel target = $region38
              $region43: #{generator_forward.13} parent=35 // loop_exit
                _
            $region36: #{generator_forward.13} parent=27 // pred_fallthru
              _
          $region28: #{generator_forward.13} parent=23 // pred_fallthru
            _
          %263 = vnop
        $region24: #{generator_forward.13} parent=19 // pred_fallthru
          _
      $region20: #{generator_forward.13} parent=5 // pred_fallthru
        _
      %p264 = scmp.le.s32.totalorder 1, %s8
      %p265 = scmp.lt.s32.totalorder %s8, 5
      %p266 = pnand %p264, %p265
      %p267 = pneg %p266
      // Predicated region
      $region59: #{generator_forward.13} parent=5 // pred_check
        _
      $region60: #{generator_forward.13} parent=5 // pred_check_branch
        %269 = sbr.rel (%p266) target = $region62
      $region61: #{generator_forward.13} parent=5 // pred_region
        %s270 = ssub.s32 %s8, 1
        %s271 = sand.u32 %s81, 1
        %s272 = sand.u32 %s81, 1
        %s273 = smul.addr %s272, 128
        %s274 = scalar_lea.vmem [#allocation3], %s273
        // Predicated region
        $region63: #{generator_forward.13} parent=61 // pred_check
          %p275 = pneg %p94
        $region64: #{generator_forward.13} parent=61 // pred_check_branch
          %277 = sbr.rel (%p275) target = $region66
        $region65: #{generator_forward.13} parent=61 // pred_region
          _
        $region66: #{generator_forward.13} parent=61 // pred_fallthru
          _
        %p278 = scmp.lt.s32.totalorder %s19, 0
        %s279 = scalar_select %p278, %s19, 0
        %p280 = scmp.lt.s32.totalorder %s20, 0
        %s281 = scalar_select %p280, %s20, 0
        %p282 = scmp.lt.s32.totalorder %s22, 0
        %s283 = scalar_select %p282, %s22, 0
        %s284 = sadd.s32 %s283, %s281
        %s285 = sadd.s32 %s284, %s279
        %s286 = smul.addr %s285, 4
        %s287 = scalar_lea.vmem %s0, %s286
        %p288 = pneg %p64
        %p289 = pneg %p61
        %s290 = sand.u32 %s81, 1
        %s291 = sand.u32 %s81, 1
        %s292 = smul.addr %s291, 128
        %s293 = scalar_lea.vmem [#allocation3], %s292
        %p294 = pneg %p94
        %p295 = pneg %p91
        %p296 = pneg %p124
        %p297 = pneg %p121
        %s298 = smul.u32 2, %s21
        %p299 = scmp.lt.s32.totalorder %s19, 0
        %s300 = scalar_select %p299, %s19, 0
        %p301 = scmp.lt.s32.totalorder %s20, 0
        %s302 = scalar_select %p301, %s20, 0
        %p303 = scmp.lt.s32.totalorder %s298, 7
        %s304 = scalar_select %p303, %s298, 7
        %s305 = smul.addr %s302, 8
        %s306 = sadd.s32 %s304, %s305
        %s307 = smul.addr %s300, 8
        %s308 = sadd.s32 %s306, %s307
        %s309 = smul.addr %s308, 8
        %s310 = scalar_lea.vmem %s2, %s309
        %p311 = scmp.lt.s32.totalorder %s19, 0
        %s312 = scalar_select %p311, %s19, 0
        %p313 = scmp.lt.s32.totalorder %s20, 0
        %s314 = scalar_select %p313, %s20, 0
        %p315 = scmp.lt.s32.totalorder %s22, 0
        %s316 = scalar_select %p315, %s22, 0
        %s317 = sadd.s32 %s316, %s314
        %s318 = sadd.s32 %s317, %s312
        %s319 = smul.addr %s318, 4
        %s320 = scalar_lea.vmem %s0, %s319
        %s321 = smul.u32 16, %s22
        %s322 = smul.u32 2, %s21
        %s323 = smul.u32 2, %s21
        %p324 = scmp.lt.s32.totalorder %s19, 0
        %s325 = scalar_select %p324, %s19, 0
        %p326 = scmp.lt.s32.totalorder %s20, 0
        %s327 = scalar_select %p326, %s20, 0
        %p328 = scmp.lt.s32.totalorder %s323, 7
        %s329 = scalar_select %p328, %s323, 7
        %s330 = smul.addr %s327, 8
        %s331 = sadd.s32 %s329, %s330
        %s332 = smul.addr %s325, 8
        %s333 = sadd.s32 %s331, %s332
        %s334 = smul.addr %s333, 8
        %s335 = scalar_lea.vmem %s2, %s334
        %s336 = smul.u32 2, %s21
        %p337 = scmp.eq.s32.totalorder %s22, 0
        // Predicated region
        $region67: #{generator_forward.13} parent=61 // pred_check
          %p338 = pneg %p337
        $region68: #{generator_forward.13} parent=61 // pred_check_branch
          %340 = sbr.rel (%p338) target = $region70
        $region69: #{generator_forward.13} parent=61 // pred_region
          %341 = vst [vmem:[#allocation2] sm:$0xff] 0.0
          %342 = vst [vmem:[#allocation2 + $0x8] sm:$0xff] 0.0
        $region70: #{generator_forward.13} parent=61 // pred_fallthru
          _
        %v343 = vld [vmem:[#allocation2] sm:$0xff]
        %v344 = vld [vmem:[#allocation2 + $0x8] sm:$0xff]
        %v345 = vld [vmem:[%s320] sm:$0xf]
        %v346 = vld [vmem:[%s274] sm:$0xff]
        %v347 = vld [vmem:[%s274 + $0x8] sm:$0xff]
        %v348 = vld [vmem:[%s274 + $0x10] sm:$0xff]
        %v349 = vld [vmem:[%s274 + $0x18] sm:$0xff]
        %v350 = vld [vmem:[%s274 + $0x20] sm:$0xff]
        %v351 = vld [vmem:[%s274 + $0x28] sm:$0xff]
        %v352 = vld [vmem:[%s274 + $0x30] sm:$0xff]
        %v353 = vld [vmem:[%s274 + $0x38] sm:$0xff]
        %v354 = vld [vmem:[%s274 + $0x40] sm:$0xff]
        %v355 = vld [vmem:[%s274 + $0x48] sm:$0xff]
        %v356 = vld [vmem:[%s274 + $0x50] sm:$0xff]
        %v357 = vld [vmem:[%s274 + $0x58] sm:$0xff]
        %v358 = vld [vmem:[%s274 + $0x60] sm:$0xff]
        %v359 = vld [vmem:[%s274 + $0x68] sm:$0xff]
        %v360 = vld [vmem:[%s274 + $0x70] sm:$0xff]
        %v361 = vld [vmem:[%s274 + $0x78] sm:$0xff]
        %v378 = vunpack.c.l.b16 %v346
        %v379 = vunpack.c.h.b16 %v346
        %v380 = vunpack.c.l.b16 %v347
        %v381 = vunpack.c.h.b16 %v347
        %v382 = vunpack.c.l.b16 %v348
        %v383 = vunpack.c.h.b16 %v348
        %v384 = vunpack.c.l.b16 %v349
        %v385 = vunpack.c.h.b16 %v349
        %v386 = vunpack.c.l.b16 %v350
        %v387 = vunpack.c.h.b16 %v350
        %v388 = vunpack.c.l.b16 %v351
        %v389 = vunpack.c.h.b16 %v351
        %v390 = vunpack.c.l.b16 %v352
        %v391 = vunpack.c.h.b16 %v352
        %v392 = vunpack.c.l.b16 %v353
        %v393 = vunpack.c.h.b16 %v353
        %v394 = vunpack.c.l.b16 %v354
        %v395 = vunpack.c.h.b16 %v354
        %v396 = vunpack.c.l.b16 %v355
        %v397 = vunpack.c.h.b16 %v355
        %v398 = vunpack.c.l.b16 %v356
        %v399 = vunpack.c.h.b16 %v356
        %v400 = vunpack.c.l.b16 %v357
        %v401 = vunpack.c.h.b16 %v357
        %v402 = vunpack.c.l.b16 %v358
        %v403 = vunpack.c.h.b16 %v358
        %v404 = vunpack.c.l.b16 %v359
        %v405 = vunpack.c.h.b16 %v359
        %v406 = vunpack.c.l.b16 %v360
        %v407 = vunpack.c.h.b16 %v360
        %v408 = vunpack.c.l.b16 %v361
        %v409 = vunpack.c.h.b16 %v361
        %v410 = vpack.c.b16 %v380, %v378
        %v411 = vpack.c.b16 %v381, %v379
        %v412 = vpack.c.b16 %v384, %v382
        %v413 = vpack.c.b16 %v385, %v383
        %v414 = vpack.c.b16 %v388, %v386
        %v415 = vpack.c.b16 %v389, %v387
        %v416 = vpack.c.b16 %v392, %v390
        %v417 = vpack.c.b16 %v393, %v391
        %v418 = vpack.c.b16 %v396, %v394
        %v419 = vpack.c.b16 %v397, %v395
        %v420 = vpack.c.b16 %v400, %v398
        %v421 = vpack.c.b16 %v401, %v399
        %v422 = vpack.c.b16 %v404, %v402
        %v423 = vpack.c.b16 %v405, %v403
        %v424 = vpack.c.b16 %v408, %v406
        %v425 = vpack.c.b16 %v409, %v407
        %442 = vmatpush.bf16.msra.mxu0 %v424
        %443 = vmatpush.bf16.msra.mxu0 %v422
        %444 = vmatpush.bf16.msra.mxu0 %v420
        %445 = vmatpush.bf16.msra.mxu0 %v418
        %446 = vmatpush.bf16.msra.mxu0 %v416
        %447 = vmatpush.bf16.msra.mxu0 %v414
        %448 = vmatpush.bf16.msra.mxu0 %v412
        %449 = vmatpush.bf16.msra.mxu0 %v410
        %450 = vmatmul.bf16.gmra.mxu0 %v345
        %v451 = vpop.f32.mrf.mxu0
        %v452 = vadd.f32 0.0, %v451
        %v453 = vpop.f32.mrf.mxu0
        %454 = vdwg.mxu0
        %455 = vmatpush.bf16.msra.mxu0 %v425
        %456 = vmatpush.bf16.msra.mxu0 %v423
        %457 = vmatpush.bf16.msra.mxu0 %v421
        %458 = vmatpush.bf16.msra.mxu0 %v419
        %459 = vmatpush.bf16.msra.mxu0 %v417
        %460 = vmatpush.bf16.msra.mxu0 %v415
        %461 = vmatpush.bf16.msra.mxu0 %v413
        %462 = vmatpush.bf16.msra.mxu0 %v411
        %463 = vmatmul.bf16.gmra.mxu0 %v345
        %v464 = vpop.f32.mrf.mxu0
        %v465 = vadd.f32 0.0, %v464
        %v466 = vpop.f32.mrf.mxu0
        %467 = vdwg.mxu0
        %v468 = vadd.f32 %v343, %v452
        %v469 = vadd.f32 %v344, %v465
        %470 = vst [vmem:[#allocation2] sm:$0xff] %v468
        %471 = vst [vmem:[#allocation2 + $0x8] sm:$0xff] %v469
        // Predicated region
        $region71: #{generator_forward.13} parent=61 // pred_check
          %p472 = pneg %p337
        $region72: #{generator_forward.13} parent=61 // pred_check_branch
          %474 = sbr.rel (%p472) target = $region74
        $region73: #{generator_forward.13} parent=61 // pred_region
          %v475 = vld [vmem:[#allocation2] sm:$0xff]
          %v476 = vld [vmem:[#allocation2 + $0x8] sm:$0xff]
          %477 = vst [vmem:[%s335] sm:$0xff] %v475
          %478 = vst [vmem:[%s335 + $0x8] sm:$0xff] %v476
        $region74: #{generator_forward.13} parent=61 // pred_fallthru
          _
        %s479 = smul.u32 2, %s21
        %p480 = scmp.lt.s32.totalorder %s19, 0
        %s481 = scalar_select %p480, %s19, 0
        %p482 = scmp.lt.s32.totalorder %s20, 0
        %s483 = scalar_select %p482, %s20, 0
        %p484 = scmp.lt.s32.totalorder %s479, 7
        %s485 = scalar_select %p484, %s479, 7
        %s486 = smul.addr %s483, 8
        %s487 = sadd.s32 %s485, %s486
        %s488 = smul.addr %s481, 8
        %s489 = sadd.s32 %s487, %s488
        %s490 = smul.addr %s489, 8
        %s491 = scalar_lea.vmem %s2, %s490
        // Predicated region
        $region75: #{generator_forward.13} parent=61 // pred_check
          %p492 = pneg %p121
        $region76: #{generator_forward.13} parent=61 // pred_check_branch
          %494 = sbr.rel (%p492) target = $region78
        $region77: #{generator_forward.13} parent=61 // pred_region
          %s495 = smul.u32 2, %s21
        $region78: #{generator_forward.13} parent=61 // pred_fallthru
          _
      $region62: #{generator_forward.13} parent=5 // pred_fallthru
        _
      %p496 = scmp.le.s32.totalorder 2, %s8
      // Predicated region
      $region79: #{generator_forward.13} parent=5 // pred_check
        %p497 = pneg %p496
      $region80: #{generator_forward.13} parent=5 // pred_check_branch
        %499 = sbr.rel (%p497) target = $region82
      $region81: #{generator_forward.13} parent=5 // pred_region
        %s500 = ssub.s32 %s8, 2
        // Predicated region
        $region83: #{generator_forward.13} parent=81 // pred_check
          %p501 = pneg %p127
        $region84: #{generator_forward.13} parent=81 // pred_check_branch
          %503 = sbr.rel (%p501) target = $region86
        $region85: #{generator_forward.13} parent=81 // pred_region
          %s504 = smul.u32 2, %s25
          %p505 = scmp.lt.s32.totalorder %s23, 0
          %s506 = scalar_select %p505, %s23, 0
          %p507 = scmp.lt.s32.totalorder %s24, 0
          %s508 = scalar_select %p507, %s24, 0
          %p509 = scmp.lt.s32.totalorder %s504, 7
          %s510 = scalar_select %p509, %s504, 7
          %s511 = smul.addr %s508, 8
          %s512 = sadd.s32 %s510, %s511
          %s513 = smul.addr %s506, 8
          %s514 = sadd.s32 %s512, %s513
          %s515 = smul.addr %s514, 8
          %s516 = scalar_lea.vmem %s2, %s515
        $region86: #{generator_forward.13} parent=81 // pred_fallthru
          _
      $region82: #{generator_forward.13} parent=5 // pred_fallthru
        _
    $region6: #{generator_forward.13} parent=1 // loop_footer
      %s12 = sadd.s32 1, %s8
    $region7: #{generator_forward.13} parent=1 // loop_footer_branch
      %7 = sbr.rel target = $region3
    $region8: #{generator_forward.13} parent=1 // loop_exit
      _

// kernel: generator_forward.16
$region0: #{generator_forward.16}
  #allocation0 [shape = 'u32[]', space=smem, size = 0x4, offset = 0x4, fixed_abs, tag = 'smem constant byte address 0x4 - core index']
  #allocation1 [shape = 'u32[72,128]{1,0:T(1,128)}', space=vmem, size = 0x9000, scoped, tag = 'internal scratch']
  #allocation2 [shape = 'f32[32,128]{1,0:T(8,128)}', space=vmem, size = 0x4000, scoped, tag = 'scratch operand']
  %s0 = inlined_call_operand.vmem [shape: bf16[4,32,256], index: 0, kind: input, shape index: {}]
  %s1 = inlined_call_operand.vmem [shape: bf16[4,256,128], index: 1, kind: input, shape index: {}]
  %s2 = inlined_call_operand.vmem [shape: f32[4,32,128], index: 2, kind: output, shape index: {}]
  %s3 = sld [smem:[#allocation0]]
  $region49: #{generator_forward.16} parent=0
    _
  %s5 = ssub.s32 1, %s3
  %s6 = scalar_select 0, %s5, %s3
  loop: start=0, step=1, limit=6
  $region2: #{generator_forward.16} parent=0 // loop_pre_header
    _
  $region3: #{generator_forward.16} parent=0 // loop_header
    %s8 = sphi 0, %s12
    %p9 = scmp.ge.s32.totalorder %s8, 6
    %s15 = sphi 0, %s41
    %s16 = sphi 0, %s37
    %s17 = sphi 0, %s33
    %s18 = sphi 0, %s29
    %s19 = sphi 0, %s15
    %s20 = sphi 0, %s16
    %s21 = sphi 0, %s17
    %s22 = sphi 0, %s18
    %s23 = sphi 0, %s19
    %s24 = sphi 0, %s20
    %s25 = sphi 0, %s21
    %s26 = sphi 0, %s22
    %s48 = sphi 0, %s50
    %s51 = sphi 0, %s48
    %s52 = sphi 0, %s51
    %s68 = sphi 0, %s52
    %s78 = sphi 0, %s80
    %s81 = sphi 0, %s78
    %s82 = sphi 0, %s81
    %s98 = sphi 0, %s82
    %s108 = sphi 0, %s110
    %s111 = sphi 0, %s108
    %s112 = sphi 0, %s111
    %s128 = sphi 0, %s112
  $region4: #{generator_forward.16} parent=0 // loop_header_branch
    %11 = sbr.rel (%p9) target = $region8
  $region5: #{generator_forward.16} parent=0 // loop_body
    %s13 = ssub.s32 %s8, 1
    %s14 = ssub.s32 %s8, 2
    %s27 = sadd.s32 1, %s18
    %p28 = scmp.ge.s32.totalorder %s27, 1
    %s29 = scalar_select %p28, 0, %s27
    %s30 = sadd.s32 1, %s17
    %s31 = scalar_select %p28, %s30, %s17
    %p32 = scmp.ge.s32.totalorder %s31, 1
    %s33 = scalar_select %p32, 0, %s31
    %s34 = sadd.s32 1, %s16
    %s35 = scalar_select %p32, %s34, %s16
    %p36 = scmp.ge.s32.totalorder %s35, 1
    %s37 = scalar_select %p36, 0, %s35
    %s38 = sadd.s32 1, %s15
    %s39 = scalar_select %p36, %s38, %s15
    %p40 = scmp.ge.s32.totalorder %s39, 4
    %s41 = scalar_select %p40, 0, %s39
    %s42 = ssub.s32 %s15, %s41
    %s43 = ssub.s32 %s16, %s37
    %s44 = sor.u32 %s42, %s43
    %s45 = ssub.s32 %s18, %s29
    %s46 = sor.u32 %s44, %s45
    %p47 = scmp.eq.s32.totalorder %s46, 0
    %s49 = sadd.s32 %s48, 1
    %s50 = scalar_select %p47, %s48, %s49
    %p53 = pneg %p47
    %p54 = scmp.eq.s32.totalorder %s8, 3
    %p55 = por %p53, %p54
    %p56 = scmp.ne.s32.totalorder %s48, %s51
    %p57 = scmp.eq.s32.totalorder %s8, 0
    %p58 = por %p56, %p57
    %p59 = scmp.ne.s32.totalorder %s48, %s51
    %p60 = scmp.eq.s32.totalorder %s13, 3
    %p61 = por %p59, %p60
    %p62 = scmp.ne.s32.totalorder %s51, %s52
    %p63 = scmp.eq.s32.totalorder %s13, 0
    %p64 = por %p62, %p63
    %p65 = scmp.ne.s32.totalorder %s51, %s52
    %p66 = scmp.eq.s32.totalorder %s14, 3
    %p67 = por %p65, %p66
    %p69 = scmp.ne.s32.totalorder %s52, %s68
    %p70 = scmp.eq.s32.totalorder %s14, 0
    %p71 = por %p69, %p70
    %s72 = ssub.s32 %s15, %s41
    %s73 = ssub.s32 %s18, %s29
    %s74 = sor.u32 %s72, %s73
    %s75 = ssub.s32 %s17, %s33
    %s76 = sor.u32 %s74, %s75
    %p77 = scmp.eq.s32.totalorder %s76, 0
    %s79 = sadd.s32 %s78, 1
    %s80 = scalar_select %p77, %s78, %s79
    %p83 = pneg %p77
    %p84 = scmp.eq.s32.totalorder %s8, 3
    %p85 = por %p83, %p84
    %p86 = scmp.ne.s32.totalorder %s78, %s81
    %p87 = scmp.eq.s32.totalorder %s8, 0
    %p88 = por %p86, %p87
    %p89 = scmp.ne.s32.totalorder %s78, %s81
    %p90 = scmp.eq.s32.totalorder %s13, 3
    %p91 = por %p89, %p90
    %p92 = scmp.ne.s32.totalorder %s81, %s82
    %p93 = scmp.eq.s32.totalorder %s13, 0
    %p94 = por %p92, %p93
    %p95 = scmp.ne.s32.totalorder %s81, %s82
    %p96 = scmp.eq.s32.totalorder %s14, 3
    %p97 = por %p95, %p96
    %p99 = scmp.ne.s32.totalorder %s82, %s98
    %p100 = scmp.eq.s32.totalorder %s14, 0
    %p101 = por %p99, %p100
    %s102 = ssub.s32 %s15, %s41
    %s103 = ssub.s32 %s16, %s37
    %s104 = sor.u32 %s102, %s103
    %s105 = ssub.s32 %s17, %s33
    %s106 = sor.u32 %s104, %s105
    %p107 = scmp.eq.s32.totalorder %s106, 0
    %s109 = sadd.s32 %s108, 1
    %s110 = scalar_select %p107, %s108, %s109
    %p113 = pneg %p107
    %p114 = scmp.eq.s32.totalorder %s8, 3
    %p115 = por %p113, %p114
    %p116 = scmp.ne.s32.totalorder %s108, %s111
    %p117 = scmp.eq.s32.totalorder %s8, 0
    %p118 = por %p116, %p117
    %p119 = scmp.ne.s32.totalorder %s108, %s111
    %p120 = scmp.eq.s32.totalorder %s13, 3
    %p121 = por %p119, %p120
    %p122 = scmp.ne.s32.totalorder %s111, %s112
    %p123 = scmp.eq.s32.totalorder %s13, 0
    %p124 = por %p122, %p123
    %p125 = scmp.ne.s32.totalorder %s111, %s112
    %p126 = scmp.eq.s32.totalorder %s14, 3
    %p127 = por %p125, %p126
    %p129 = scmp.ne.s32.totalorder %s112, %s128
    %p130 = scmp.eq.s32.totalorder %s14, 0
    %p131 = por %p129, %p130
    %p132 = scmp.le.s32.totalorder 1, %s8
    %p133 = scmp.lt.s32.totalorder %s8, 5
    %p134 = pnand %p132, %p133
    %p135 = pneg %p134
    // Predicated region
    $region9: #{generator_forward.16} parent=5 // pred_check
      _
    $region10: #{generator_forward.16} parent=5 // pred_check_branch
      %137 = sbr.rel (%p134) target = $region12
    $region11: #{generator_forward.16} parent=5 // pred_region
      %s138 = ssub.s32 %s8, 1
    $region12: #{generator_forward.16} parent=5 // pred_fallthru
      _
    %p139 = scmp.lt.s32.totalorder %s8, 4
    // Predicated region
    $region13: #{generator_forward.16} parent=5 // pred_check
      %p140 = pneg %p139
    $region14: #{generator_forward.16} parent=5 // pred_check_branch
      %142 = sbr.rel (%p140) target = $region16
    $region15: #{generator_forward.16} parent=5 // pred_region
      // Predicated region
      $region17: #{generator_forward.16} parent=15 // pred_check
        %p143 = pneg %p58
      $region18: #{generator_forward.16} parent=15 // pred_check_branch
        %145 = sbr.rel (%p143) target = $region20
      $region19: #{generator_forward.16} parent=15 // pred_region
        %s146 = smul.u32 4, %s16
        %s147 = smul.u32 2, %s18
        %p148 = scmp.lt.s32.totalorder %s15, 3
        %s149 = scalar_select %p148, %s15, 3
        %p150 = scmp.lt.s32.totalorder %s146, 3
        %s151 = scalar_select %p150, %s146, 3
        %p152 = scmp.lt.s32.totalorder %s147, 1
        %s153 = scalar_select %p152, %s147, 1
        %s154 = smul.addr %s151, 2
        %s155 = sadd.s32 %s153, %s154
        %s156 = smul.addr %s149, 8
        %s157 = sadd.s32 %s155, %s156
        %s158 = smul.addr %s157, 4
        %s159 = scalar_lea.vmem %s0, %s158
        %s160 = smul.u32 4, %s16
        %s161 = smul.u32 2, %s18
      $region20: #{generator_forward.16} parent=15 // pred_fallthru
        _
      // Predicated region
      $region21: #{generator_forward.16} parent=15 // pred_check
        %p162 = pneg %p88
      $region22: #{generator_forward.16} parent=15 // pred_check_branch
        %164 = sbr.rel (%p162) target = $region24
      $region23: #{generator_forward.16} parent=15 // pred_region
        %s165 = smul.u32 32, %s18
        %p166 = scmp.lt.s32.totalorder %s15, 3
        %s167 = scalar_select %p166, %s15, 3
        %p168 = scmp.lt.s32.totalorder %s165, 31
        %s169 = scalar_select %p168, %s165, 31
        %p170 = scmp.lt.s32.totalorder %s17, 0
        %s171 = scalar_select %p170, %s17, 0
        %s172 = sadd.s32 %s171, %s169
        %s173 = smul.addr %s167, 32
        %s174 = sadd.s32 %s172, %s173
        %s175 = smul.addr %s174, 4
        %s176 = scalar_lea.vmem %s1, %s175
        %s177 = smul.u32 32, %s18
      $region24: #{generator_forward.16} parent=15 // pred_fallthru
        _
    $region16: #{generator_forward.16} parent=5 // pred_fallthru
      _
    %p178 = scmp.le.s32.totalorder 1, %s8
    %p179 = scmp.lt.s32.totalorder %s8, 5
    %p180 = pnand %p178, %p179
    %p181 = pneg %p180
    // Predicated region
    $region25: #{generator_forward.16} parent=5 // pred_check
      _
    $region26: #{generator_forward.16} parent=5 // pred_check_branch
      %183 = sbr.rel (%p180) target = $region28
    $region27: #{generator_forward.16} parent=5 // pred_region
      %s184 = ssub.s32 %s8, 1
      %s185 = smul.u32 4, %s20
      %s186 = smul.u32 2, %s22
      %p187 = scmp.lt.s32.totalorder %s19, 3
      %s188 = scalar_select %p187, %s19, 3
      %p189 = scmp.lt.s32.totalorder %s185, 3
      %s190 = scalar_select %p189, %s185, 3
      %p191 = scmp.lt.s32.totalorder %s186, 1
      %s192 = scalar_select %p191, %s186, 1
      %s193 = smul.addr %s190, 2
      %s194 = sadd.s32 %s192, %s193
      %s195 = smul.addr %s188, 8
      %s196 = sadd.s32 %s194, %s195
      %s197 = smul.addr %s196, 4
      %s198 = scalar_lea.vmem %s0, %s197
      %p199 = pneg %p64
      %p200 = pneg %p61
      %s201 = smul.u32 32, %s22
      %p202 = scmp.lt.s32.totalorder %s19, 3
      %s203 = scalar_select %p202, %s19, 3
      %p204 = scmp.lt.s32.totalorder %s201, 31
      %s205 = scalar_select %p204, %s201, 31
      %p206 = scmp.lt.s32.totalorder %s21, 0
      %s207 = scalar_select %p206, %s21, 0
      %s208 = sadd.s32 %s207, %s205
      %s209 = smul.addr %s203, 32
      %s210 = sadd.s32 %s208, %s209
      %s211 = smul.addr %s210, 4
      %s212 = scalar_lea.vmem %s1, %s211
      %p213 = pneg %p94
      %p214 = pneg %p91
      %p215 = pneg %p124
      %p216 = pneg %p121
      %s217 = smul.u32 4, %s20
      %p218 = scmp.lt.s32.totalorder %s19, 3
      %s219 = scalar_select %p218, %s19, 3
      %p220 = scmp.lt.s32.totalorder %s217, 3
      %s221 = scalar_select %p220, %s217, 3
      %p222 = scmp.lt.s32.totalorder %s21, 0
      %s223 = scalar_select %p222, %s21, 0
      %s224 = sadd.s32 %s223, %s221
      %s225 = smul.addr %s219, 4
      %s226 = sadd.s32 %s224, %s225
      %s227 = smul.addr %s226, 8
      %s228 = scalar_lea.vmem %s2, %s227
      %s229 = smul.u32 4, %s20
      %s230 = smul.u32 2, %s22
      %p231 = scmp.lt.s32.totalorder %s19, 3
      %s232 = scalar_select %p231, %s19, 3
      %p233 = scmp.lt.s32.totalorder %s229, 3
      %s234 = scalar_select %p233, %s229, 3
      %p235 = scmp.lt.s32.totalorder %s230, 1
      %s236 = scalar_select %p235, %s230, 1
      %s237 = smul.addr %s234, 2
      %s238 = sadd.s32 %s236, %s237
      %s239 = smul.addr %s232, 8
      %s240 = sadd.s32 %s238, %s239
      %s241 = smul.addr %s240, 4
      %s242 = scalar_lea.vmem %s0, %s241
      %s243 = smul.u32 4, %s20
      %s244 = smul.u32 2, %s22
      %s245 = smul.u32 32, %s22
      %p246 = scmp.lt.s32.totalorder %s19, 3
      %s247 = scalar_select %p246, %s19, 3
      %p248 = scmp.lt.s32.totalorder %s245, 31
      %s249 = scalar_select %p248, %s245, 31
      %p250 = scmp.lt.s32.totalorder %s21, 0
      %s251 = scalar_select %p250, %s21, 0
      %s252 = sadd.s32 %s251, %s249
      %s253 = smul.addr %s247, 32
      %s254 = sadd.s32 %s252, %s253
      %s255 = smul.addr %s254, 4
      %s256 = scalar_lea.vmem %s1, %s255
      %s257 = smul.u32 32, %s22
      %s258 = smul.u32 4, %s20
      %p259 = scmp.lt.s32.totalorder %s19, 3
      %s260 = scalar_select %p259, %s19, 3
      %p261 = scmp.lt.s32.totalorder %s258, 3
      %s262 = scalar_select %p261, %s258, 3
      %p263 = scmp.lt.s32.totalorder %s21, 0
      %s264 = scalar_select %p263, %s21, 0
      %s265 = sadd.s32 %s264, %s262
      %s266 = smul.addr %s260, 4
      %s267 = sadd.s32 %s265, %s266
      %s268 = smul.addr %s267, 8
      %s269 = scalar_lea.vmem %s2, %s268
      %s270 = smul.u32 4, %s20
      %p271 = scmp.eq.s32.totalorder %s22, 0
      // Predicated region
      $region29: #{generator_forward.16} parent=27 // pred_check
        %p272 = pneg %p271
      $region30: #{generator_forward.16} parent=27 // pred_check_branch
        %274 = sbr.rel (%p272) target = $region32
      $region31: #{generator_forward.16} parent=27 // pred_region
        %275 = vst [vmem:[#allocation2] sm:$0xff] 0.0
        %276 = vst [vmem:[#allocation2 + $0x8] sm:$0xff] 0.0
        %277 = vst [vmem:[#allocation2 + $0x10] sm:$0xff] 0.0
        %278 = vst [vmem:[#allocation2 + $0x18] sm:$0xff] 0.0
      $region32: #{generator_forward.16} parent=27 // pred_fallthru
        _
      %v279 = vld [vmem:[#allocation2] sm:$0xff]
      %v280 = vld [vmem:[#allocation2 + $0x8] sm:$0xff]
      %v281 = vld [vmem:[#allocation2 + $0x10] sm:$0xff]
      %v282 = vld [vmem:[#allocation2 + $0x18] sm:$0xff]
      %v283 = vld [vmem:[%s242] sm:$0xff]
      %v284 = vld [vmem:[%s242 + $0x8] sm:$0xff]
      %v285 = vld [vmem:[%s242 + $0x10] sm:$0xff]
      %v286 = vld [vmem:[%s242 + $0x18] sm:$0xff]
      %v287 = vld [vmem:[%s256] sm:$0xf]
      %v288 = vld [vmem:[%s256 + $0x4] sm:$0xf]
      %v289 = vld [vmem:[%s256 + $0x8] sm:$0xf]
      %v290 = vld [vmem:[%s256 + $0xc] sm:$0xf]
      %v291 = vld [vmem:[%s256 + $0x10] sm:$0xf]
      %v292 = vld [vmem:[%s256 + $0x14] sm:$0xf]
      %v293 = vld [vmem:[%s256 + $0x18] sm:$0xf]
      %v294 = vld [vmem:[%s256 + $0x1c] sm:$0xf]
      %v295 = vld [vmem:[%s256 + $0x20] sm:$0xf]
      %v296 = vld [vmem:[%s256 + $0x24] sm:$0xf]
      %v297 = vld [vmem:[%s256 + $0x28] sm:$0xf]
      %v298 = vld [vmem:[%s256 + $0x2c] sm:$0xf]
      %v299 = vld [vmem:[%s256 + $0x30] sm:$0xf]
      %v300 = vld [vmem:[%s256 + $0x34] sm:$0xf]
      %v301 = vld [vmem:[%s256 + $0x38] sm:$0xf]
      %v302 = vld [vmem:[%s256 + $0x3c] sm:$0xf]
      %v303 = vld [vmem:[%s256 + $0x40] sm:$0xf]
      %v304 = vld [vmem:[%s256 + $0x44] sm:$0xf]
      %v305 = vld [vmem:[%s256 + $0x48] sm:$0xf]
      %v306 = vld [vmem:[%s256 + $0x4c] sm:$0xf]
      %v307 = vld [vmem:[%s256 + $0x50] sm:$0xf]
      %v308 = vld [vmem:[%s256 + $0x54] sm:$0xf]
      %v309 = vld [vmem:[%s256 + $0x58] sm:$0xf]
      %v310 = vld [vmem:[%s256 + $0x5c] sm:$0xf]
      %v311 = vld [vmem:[%s256 + $0x60] sm:$0xf]
      %v312 = vld [vmem:[%s256 + $0x64] sm:$0xf]
      %v313 = vld [vmem:[%s256 + $0x68] sm:$0xf]
      %v314 = vld [vmem:[%s256 + $0x6c] sm:$0xf]
      %v315 = vld [vmem:[%s256 + $0x70] sm:$0xf]
      %v316 = vld [vmem:[%s256 + $0x74] sm:$0xf]
      %v317 = vld [vmem:[%s256 + $0x78] sm:$0xf]
      %v318 = vld [vmem:[%s256 + $0x7c] sm:$0xf]
      %v323 = vunpack.c.l.b16 %v283
      %v324 = vunpack.c.h.b16 %v283
      %v325 = vunpack.c.l.b16 %v284
      %v326 = vunpack.c.h.b16 %v284
      %v327 = vunpack.c.l.b16 %v285
      %v328 = vunpack.c.h.b16 %v285
      %v329 = vunpack.c.l.b16 %v286
      %v330 = vunpack.c.h.b16 %v286
      %v331 = vpack.c.b16 %v325, %v323
      %v332 = vpack.c.b16 %v326, %v324
      %v333 = vpack.c.b16 %v329, %v327
      %v334 = vpack.c.b16 %v330, %v328
      %v371 = vunpack.c.l.b16 %v287
      %v372 = vunpack.c.l.b16 %v288
      %v373 = vunpack.c.l.b16 %v289
      %v374 = vunpack.c.l.b16 %v290
      %v375 = vunpack.c.l.b16 %v291
      %v376 = vunpack.c.l.b16 %v292
      %v377 = vunpack.c.l.b16 %v293
      %v378 = vunpack.c.l.b16 %v294
      %v379 = vunpack.c.l.b16 %v295
      %v380 = vunpack.c.l.b16 %v296
      %v381 = vunpack.c.l.b16 %v297
      %v382 = vunpack.c.l.b16 %v298
      %v383 = vunpack.c.l.b16 %v299
      %v384 = vunpack.c.l.b16 %v300
      %v385 = vunpack.c.l.b16 %v301
      %v386 = vunpack.c.l.b16 %v302
      %v387 = vunpack.c.l.b16 %v303
      %v388 = vunpack.c.l.b16 %v304
      %v389 = vunpack.c.l.b16 %v305
      %v390 = vunpack.c.l.b16 %v306
      %v391 = vunpack.c.l.b16 %v307
      %v392 = vunpack.c.l.b16 %v308
      %v393 = vunpack.c.l.b16 %v309
      %v394 = vunpack.c.l.b16 %v310
      %v395 = vunpack.c.l.b16 %v311
      %v396 = vunpack.c.l.b16 %v312
      %v397 = vunpack.c.l.b16 %v313
      %v398 = vunpack.c.l.b16 %v314
      %v399 = vunpack.c.l.b16 %v315
      %v400 = vunpack.c.l.b16 %v316
      %v401 = vunpack.c.l.b16 %v317
      %v402 = vunpack.c.l.b16 %v318
      %v403 = vpack.c.b16 %v372, %v371
      %v404 = vpack.c.b16 %v374, %v373
      %v405 = vpack.c.b16 %v376, %v375
      %v406 = vpack.c.b16 %v378, %v377
      %v407 = vpack.c.b16 %v380, %v379
      %v408 = vpack.c.b16 %v382, %v381
      %v409 = vpack.c.b16 %v384, %v383
      %v410 = vpack.c.b16 %v386, %v385
      %v411 = vpack.c.b16 %v388, %v387
      %v412 = vpack.c.b16 %v390, %v389
      %v413 = vpack.c.b16 %v392, %v391
      %v414 = vpack.c.b16 %v394, %v393
      %v415 = vpack.c.b16 %v396, %v395
      %v416 = vpack.c.b16 %v398, %v397
      %v417 = vpack.c.b16 %v400, %v399
      %v418 = vpack.c.b16 %v402, %v401
      %435 = vmatpush.bf16.msra.mxu0 %v410
      %436 = vmatpush.bf16.msra.mxu0 %v409
      %437 = vmatpush.bf16.msra.mxu0 %v408
      %438 = vmatpush.bf16.msra.mxu0 %v407
      %439 = vmatpush.bf16.msra.mxu0 %v406
      %440 = vmatpush.bf16.msra.mxu0 %v405
      %441 = vmatpush.bf16.msra.mxu0 %v404
      %442 = vmatpush.bf16.msra.mxu0 %v403
      %443 = vmatmul.bf16.gmra.mxu0 %v331
      %v444 = vpop.f32.mrf.mxu0
      %v445 = vadd.f32 0.0, %v444
      %v446 = vpop.f32.mrf.mxu0
      %v447 = vadd.f32 0.0, %v446
      %448 = vmatmul.bf16.gmra.mxu0 %v333
      %v449 = vpop.f32.mrf.mxu0
      %v450 = vadd.f32 0.0, %v449
      %v451 = vpop.f32.mrf.mxu0
      %v452 = vadd.f32 0.0, %v451
      %453 = vdwg.mxu0
      %454 = vmatpush.bf16.msra.mxu0 %v418
      %455 = vmatpush.bf16.msra.mxu0 %v417
      %456 = vmatpush.bf16.msra.mxu0 %v416
      %457 = vmatpush.bf16.msra.mxu0 %v415
      %458 = vmatpush.bf16.msra.mxu0 %v414
      %459 = vmatpush.bf16.msra.mxu0 %v413
      %460 = vmatpush.bf16.msra.mxu0 %v412
      %461 = vmatpush.bf16.msra.mxu0 %v411
      %462 = vmatmul.bf16.gmra.mxu0 %v332
      %v463 = vpop.f32.mrf.mxu0
      %v464 = vadd.f32 %v445, %v463
      %v465 = vpop.f32.mrf.mxu0
      %v466 = vadd.f32 %v447, %v465
      %467 = vmatmul.bf16.gmra.mxu0 %v334
      %v468 = vpop.f32.mrf.mxu0
      %v469 = vadd.f32 %v450, %v468
      %v470 = vpop.f32.mrf.mxu0
      %v471 = vadd.f32 %v452, %v470
      %472 = vdwg.mxu0
      %v473 = vadd.f32 %v279, %v464
      %v474 = vadd.f32 %v280, %v466
      %v475 = vadd.f32 %v281, %v469
      %v476 = vadd.f32 %v282, %v471
      %477 = vst [vmem:[#allocation2] sm:$0xff] %v473
      %478 = vst [vmem:[#allocation2 + $0x8] sm:$0xff] %v474
      %479 = vst [vmem:[#allocation2 + $0x10] sm:$0xff] %v475
      %480 = vst [vmem:[#allocation2 + $0x18] sm:$0xff] %v476
      // Predicated region
      $region33: #{generator_forward.16} parent=27 // pred_check
        %p481 = pneg %p271
      $region34: #{generator_forward.16} parent=27 // pred_check_branch
        %483 = sbr.rel (%p481) target = $region36
      $region35: #{generator_forward.16} parent=27 // pred_region
        %v484 = vld [vmem:[#allocation2] sm:$0xff]
        %v485 = vld [vmem:[#allocation2 + $0x8] sm:$0xff]
        %v486 = vld [vmem:[#allocation2 + $0x10] sm:$0xff]
        %v487 = vld [vmem:[#allocation2 + $0x18] sm:$0xff]
        %488 = vst [vmem:[%s269] sm:$0xff] %v484
        %489 = vst [vmem:[%s269 + $0x8] sm:$0xff] %v485
        %490 = vst [vmem:[%s269 + $0x10] sm:$0xff] %v486
        %491 = vst [vmem:[%s269 + $0x18] sm:$0xff] %v487
      $region36: #{generator_forward.16} parent=27 // pred_fallthru
        _
      %s492 = smul.u32 4, %s20
      %p493 = scmp.lt.s32.totalorder %s19, 3
      %s494 = scalar_select %p493, %s19, 3
      %p495 = scmp.lt.s32.totalorder %s492, 3
      %s496 = scalar_select %p495, %s492, 3
      %p497 = scmp.lt.s32.totalorder %s21, 0
      %s498 = scalar_select %p497, %s21, 0
      %s499 = sadd.s32 %s498, %s496
      %s500 = smul.addr %s494, 4
      %s501 = sadd.s32 %s499, %s500
      %s502 = smul.addr %s501, 8
      %s503 = scalar_lea.vmem %s2, %s502
      // Predicated region
      $region37: #{generator_forward.16} parent=27 // pred_check
        %p504 = pneg %p121
      $region38: #{generator_forward.16} parent=27 // pred_check_branch
        %506 = sbr.rel (%p504) target = $region40
      $region39: #{generator_forward.16} parent=27 // pred_region
        %s507 = smul.u32 4, %s20
      $region40: #{generator_forward.16} parent=27 // pred_fallthru
        _
    $region28: #{generator_forward.16} parent=5 // pred_fallthru
      _
    %p508 = scmp.le.s32.totalorder 2, %s8
    // Predicated region
    $region41: #{generator_forward.16} parent=5 // pred_check
      %p509 = pneg %p508
    $region42: #{generator_forward.16} parent=5 // pred_check_branch
      %511 = sbr.rel (%p509) target = $region44
    $region43: #{generator_forward.16} parent=5 // pred_region
      %s512 = ssub.s32 %s8, 2
      // Predicated region
      $region45: #{generator_forward.16} parent=43 // pred_check
        %p513 = pneg %p127
      $region46: #{generator_forward.16} parent=43 // pred_check_branch
        %515 = sbr.rel (%p513) target = $region48
      $region47: #{generator_forward.16} parent=43 // pred_region
        %s516 = smul.u32 4, %s24
        %p517 = scmp.lt.s32.totalorder %s23, 3
        %s518 = scalar_select %p517, %s23, 3
        %p519 = scmp.lt.s32.totalorder %s516, 3
        %s520 = scalar_select %p519, %s516, 3
        %p521 = scmp.lt.s32.totalorder %s25, 0
        %s522 = scalar_select %p521, %s25, 0
        %s523 = sadd.s32 %s522, %s520
        %s524 = smul.addr %s518, 4
        %s525 = sadd.s32 %s523, %s524
        %s526 = smul.addr %s525, 8
        %s527 = scalar_lea.vmem %s2, %s526
      $region48: #{generator_forward.16} parent=43 // pred_fallthru
        _
    $region44: #{generator_forward.16} parent=5 // pred_fallthru
      _
  $region6: #{generator_forward.16} parent=0 // loop_footer
    %s12 = sadd.s32 1, %s8
  $region7: #{generator_forward.16} parent=0 // loop_footer_branch
    %7 = sbr.rel target = $region3
  $region8: #{generator_forward.16} parent=0 // loop_exit
    _

// kernel: generator_forward.17
$region0: #{generator_forward.17}
  #allocation0 [shape = 'u32[]', space=smem, size = 0x4, offset = 0x4, fixed_abs, tag = 'smem constant byte address 0x4 - core index']
  #allocation1 [shape = 'u32[72,128]{1,0:T(1,128)}', space=vmem, size = 0x9000, scoped, tag = 'internal scratch']
  %s0 = inlined_call_operand.vmem [shape: f32[128,32], index: 0, kind: input, shape index: {}]
  %s1 = inlined_call_operand.vmem [shape: f32[1,32], index: 1, kind: output, shape index: {0}]
  %s2 = inlined_call_operand.vmem [shape: f32[1,32], index: 2, kind: output, shape index: {1}]
  %3 = xla_tuple %s1, %s2
  %s4 = sld [smem:[#allocation0]]
  $region30: #{generator_forward.17} parent=0
    _
  %s6 = ssub.s32 1, %s4
  %s7 = scalar_select 0, %s6, %s4
  // Predicated region
  $region2: #{generator_forward.17} parent=0 // pred_check
    _
  $region3: #{generator_forward.17} parent=0 // pred_check_branch
    %9 = sbr.rel (0) target = $region5
  $region4: #{generator_forward.17} parent=0 // pred_region
    _
  $region5: #{generator_forward.17} parent=0 // pred_fallthru
    _
  %v10 = vld [vmem:[%s0] sm:$0xff]
  %v11 = vld [vmem:[%s0 + $0x8] sm:$0xff]
  %v12 = vld [vmem:[%s0 + $0x10] sm:$0xff]
  %v13 = vld [vmem:[%s0 + $0x18] sm:$0xff]
  %v14 = vld [vmem:[%s0 + $0x20] sm:$0xff]
  %v15 = vld [vmem:[%s0 + $0x28] sm:$0xff]
  %v16 = vld [vmem:[%s0 + $0x30] sm:$0xff]
  %v17 = vld [vmem:[%s0 + $0x38] sm:$0xff]
  %v18 = vld [vmem:[%s0 + $0x40] sm:$0xff]
  %v19 = vld [vmem:[%s0 + $0x48] sm:$0xff]
  %v20 = vld [vmem:[%s0 + $0x50] sm:$0xff]
  %v21 = vld [vmem:[%s0 + $0x58] sm:$0xff]
  %v22 = vld [vmem:[%s0 + $0x60] sm:$0xff]
  %v23 = vld [vmem:[%s0 + $0x68] sm:$0xff]
  %v24 = vld [vmem:[%s0 + $0x70] sm:$0xff]
  %v25 = vld [vmem:[%s0 + $0x78] sm:$0xff]
  %vm26 = vcmask 261120
  %v27 = vsel %vm26, %v10, 0.0
  %v28 = vsel %vm26, %v11, 0.0
  %v29 = vadd.f32 %v27, %v28
  %v30 = vsel %vm26, %v12, 0.0
  %v31 = vadd.f32 %v29, %v30
  %v32 = vsel %vm26, %v13, 0.0
  %v33 = vadd.f32 %v31, %v32
  %v34 = vsel %vm26, %v14, 0.0
  %v35 = vadd.f32 %v33, %v34
  %v36 = vsel %vm26, %v15, 0.0
  %v37 = vadd.f32 %v35, %v36
  %v38 = vsel %vm26, %v16, 0.0
  %v39 = vadd.f32 %v37, %v38
  %v40 = vsel %vm26, %v17, 0.0
  %v41 = vadd.f32 %v39, %v40
  %v42 = vsel %vm26, %v18, 0.0
  %v43 = vadd.f32 %v41, %v42
  %v44 = vsel %vm26, %v19, 0.0
  %v45 = vadd.f32 %v43, %v44
  %v46 = vsel %vm26, %v20, 0.0
  %v47 = vadd.f32 %v45, %v46
  %v48 = vsel %vm26, %v21, 0.0
  %v49 = vadd.f32 %v47, %v48
  %v50 = vsel %vm26, %v22, 0.0
  %v51 = vadd.f32 %v49, %v50
  %v52 = vsel %vm26, %v23, 0.0
  %v53 = vadd.f32 %v51, %v52
  %v54 = vsel %vm26, %v24, 0.0
  %v55 = vadd.f32 %v53, %v54
  %v56 = vsel %vm26, %v25, 0.0
  %v57 = vadd.f32 %v55, %v56
  %v58 = vrot.slane %v57, 4
  %v59 = vadd.f32 %v57, %v58
  %v60 = vrot.slane %v59, 2
  %v61 = vadd.f32 %v59, %v60
  %v62 = vrot.slane %v61, 1
  %v63 = vadd.f32 %v61, %v62
  %v64 = vmul.f32 %v10, %v10
  %v65 = vmul.f32 %v11, %v11
  %v66 = vmul.f32 %v12, %v12
  %v67 = vmul.f32 %v13, %v13
  %v68 = vmul.f32 %v14, %v14
  %v69 = vmul.f32 %v15, %v15
  %v70 = vmul.f32 %v16, %v16
  %v71 = vmul.f32 %v17, %v17
  %v72 = vmul.f32 %v18, %v18
  %v73 = vmul.f32 %v19, %v19
  %v74 = vmul.f32 %v20, %v20
  %v75 = vmul.f32 %v21, %v21
  %v76 = vmul.f32 %v22, %v22
  %v77 = vmul.f32 %v23, %v23
  %v78 = vmul.f32 %v24, %v24
  %v79 = vmul.f32 %v25, %v25
  %v80 = vsel %vm26, %v64, 0.0
  %v81 = vsel %vm26, %v65, 0.0
  %v82 = vadd.f32 %v80, %v81
  %v83 = vsel %vm26, %v66, 0.0
  %v84 = vadd.f32 %v82, %v83
  %v85 = vsel %vm26, %v67, 0.0
  %v86 = vadd.f32 %v84, %v85
  %v87 = vsel %vm26, %v68, 0.0
  %v88 = vadd.f32 %v86, %v87
  %v89 = vsel %vm26, %v69, 0.0
  %v90 = vadd.f32 %v88, %v89
  %v91 = vsel %vm26, %v70, 0.0
  %v92 = vadd.f32 %v90, %v91
  %v93 = vsel %vm26, %v71, 0.0
  %v94 = vadd.f32 %v92, %v93
  %v95 = vsel %vm26, %v72, 0.0
  %v96 = vadd.f32 %v94, %v95
  %v97 = vsel %vm26, %v73, 0.0
  %v98 = vadd.f32 %v96, %v97
  %v99 = vsel %vm26, %v74, 0.0
  %v100 = vadd.f32 %v98, %v99
  %v101 = vsel %vm26, %v75, 0.0
  %v102 = vadd.f32 %v100, %v101
  %v103 = vsel %vm26, %v76, 0.0
  %v104 = vadd.f32 %v102, %v103
  %v105 = vsel %vm26, %v77, 0.0
  %v106 = vadd.f32 %v104, %v105
  %v107 = vsel %vm26, %v78, 0.0
  %v108 = vadd.f32 %v106, %v107
  %v109 = vsel %vm26, %v79, 0.0
  %v110 = vadd.f32 %v108, %v109
  %v111 = vrot.slane %v110, 4
  %v112 = vadd.f32 %v110, %v111
  %v113 = vrot.slane %v112, 2
  %v114 = vadd.f32 %v112, %v113
  %v115 = vrot.slane %v114, 1
  %v116 = vadd.f32 %v114, %v115
  %p117 = scmp.eq.s32.totalorder 0, 0
  // Predicated region
  $region6: #{generator_forward.17} parent=0 // pred_check
    %p118 = pneg %p117
  $region7: #{generator_forward.17} parent=0 // pred_check_branch
    %120 = sbr.rel (%p118) target = $region9
  $region8: #{generator_forward.17} parent=0 // pred_region
    %vm121 = vcmask 253952
    %122 = vst.msk [vmem:[%s1] sm:$0x1] %vm121, %v63
    %123 = vst.msk [vmem:[%s2] sm:$0x1] %vm121, %v116
  $region9: #{generator_forward.17} parent=0 // pred_fallthru
    _
  %p124 = scmp.gt.s32.totalorder 0, 0
  // Predicated region
  $region10: #{generator_forward.17} parent=0 // pred_check
    %p125 = pneg %p124
  $region11: #{generator_forward.17} parent=0 // pred_check_branch
    %127 = sbr.rel (%p125) target = $region13
  $region12: #{generator_forward.17} parent=0 // pred_region
    %v128 = vld [vmem:[%s1] sm:$0x1]
    %v129 = vadd.f32 %v128, %v63
    %vm130 = vcmask 253952
    %131 = vst.msk [vmem:[%s1] sm:$0x1] %vm130, %v129
    %v132 = vld [vmem:[%s2] sm:$0x1]
    %v133 = vadd.f32 %v132, %v116
    %134 = vst.msk [vmem:[%s2] sm:$0x1] %vm130, %v133
  $region13: #{generator_forward.17} parent=0 // pred_fallthru
    _
  // Predicated region
  $region14: #{generator_forward.17} parent=0 // pred_check
    _
  $region15: #{generator_forward.17} parent=0 // pred_check_branch
    %136 = sbr.rel (0) target = $region17
  $region16: #{generator_forward.17} parent=0 // pred_region
    _
  $region17: #{generator_forward.17} parent=0 // pred_fallthru
    _
  // Predicated region
  $region18: #{generator_forward.17} parent=0 // pred_check
    _
  $region19: #{generator_forward.17} parent=0 // pred_check_branch
    %138 = sbr.rel (0) target = $region21
  $region20: #{generator_forward.17} parent=0 // pred_region
    _
  $region21: #{generator_forward.17} parent=0 // pred_fallthru
    _
  // Predicated region
  $region22: #{generator_forward.17} parent=0 // pred_check
    _
  $region23: #{generator_forward.17} parent=0 // pred_check_branch
    %140 = sbr.rel (0) target = $region25
  $region24: #{generator_forward.17} parent=0 // pred_region
    _
  $region25: #{generator_forward.17} parent=0 // pred_fallthru
    _
  // Predicated region
  $region26: #{generator_forward.17} parent=0 // pred_check
    _
  $region27: #{generator_forward.17} parent=0 // pred_check_branch
    %142 = sbr.rel (0) target = $region29
  $region28: #{generator_forward.17} parent=0 // pred_region
    _
  $region29: #{generator_forward.17} parent=0 // pred_fallthru
    _

// kernel: generator_forward.18
$region0: #{generator_forward.18}
  #allocation0 [shape = 'u32[]', space=smem, size = 0x4, offset = 0x4, fixed_abs, tag = 'smem constant byte address 0x4 - core index']
  #allocation1 [shape = 'u32[72,128]{1,0:T(1,128)}', space=vmem, size = 0x9000, scoped, tag = 'internal scratch']
  %s0 = inlined_call_operand.vmem [shape: f32[128,32], index: 0, kind: input, shape index: {}]
  %s1 = inlined_call_operand.vmem [shape: f32[1,32], index: 1, kind: input, shape index: {}]
  %s2 = inlined_call_operand.vmem [shape: f32[1,32], index: 2, kind: input, shape index: {}]
  %s3 = inlined_call_operand.vmem [shape: bf16[128,32], index: 3, kind: output, shape index: {}]
  %s4 = sld [smem:[#allocation0]]
  $region22: #{generator_forward.18} parent=0
    _
  %s6 = ssub.s32 1, %s4
  %s7 = scalar_select 0, %s6, %s4
  // Predicated region
  $region2: #{generator_forward.18} parent=0 // pred_check
    _
  $region3: #{generator_forward.18} parent=0 // pred_check_branch
    %9 = sbr.rel (0) target = $region5
  $region4: #{generator_forward.18} parent=0 // pred_region
    _
  $region5: #{generator_forward.18} parent=0 // pred_fallthru
    _
  // Predicated region
  $region6: #{generator_forward.18} parent=0 // pred_check
    _
  $region7: #{generator_forward.18} parent=0 // pred_check_branch
    %11 = sbr.rel (0) target = $region9
  $region8: #{generator_forward.18} parent=0 // pred_region
    _
  $region9: #{generator_forward.18} parent=0 // pred_fallthru
    _
  // Predicated region
  $region10: #{generator_forward.18} parent=0 // pred_check
    _
  $region11: #{generator_forward.18} parent=0 // pred_check_branch
    %13 = sbr.rel (0) target = $region13
  $region12: #{generator_forward.18} parent=0 // pred_region
    _
  $region13: #{generator_forward.18} parent=0 // pred_fallthru
    _
  %v14 = vld [vmem:[%s0] sm:$0xff]
  %v15 = vld [vmem:[%s0 + $0x8] sm:$0xff]
  %v16 = vld [vmem:[%s0 + $0x10] sm:$0xff]
  %v17 = vld [vmem:[%s0 + $0x18] sm:$0xff]
  %v18 = vld [vmem:[%s0 + $0x20] sm:$0xff]
  %v19 = vld [vmem:[%s0 + $0x28] sm:$0xff]
  %v20 = vld [vmem:[%s0 + $0x30] sm:$0xff]
  %v21 = vld [vmem:[%s0 + $0x38] sm:$0xff]
  %v22 = vld [vmem:[%s0 + $0x40] sm:$0xff]
  %v23 = vld [vmem:[%s0 + $0x48] sm:$0xff]
  %v24 = vld [vmem:[%s0 + $0x50] sm:$0xff]
  %v25 = vld [vmem:[%s0 + $0x58] sm:$0xff]
  %v26 = vld [vmem:[%s0 + $0x60] sm:$0xff]
  %v27 = vld [vmem:[%s0 + $0x68] sm:$0xff]
  %v28 = vld [vmem:[%s0 + $0x70] sm:$0xff]
  %v29 = vld [vmem:[%s0 + $0x78] sm:$0xff]
  %v30 = vld [vmem:[%s1] sm:$0x1]
  %v32 = vperm.slane %v30, 0
  %v34 = vmul.f32 %v14, %v32
  %v35 = vmul.f32 %v15, %v32
  %v36 = vmul.f32 %v16, %v32
  %v37 = vmul.f32 %v17, %v32
  %v38 = vmul.f32 %v18, %v32
  %v39 = vmul.f32 %v19, %v32
  %v40 = vmul.f32 %v20, %v32
  %v41 = vmul.f32 %v21, %v32
  %v42 = vmul.f32 %v22, %v32
  %v43 = vmul.f32 %v23, %v32
  %v44 = vmul.f32 %v24, %v32
  %v45 = vmul.f32 %v25, %v32
  %v46 = vmul.f32 %v26, %v32
  %v47 = vmul.f32 %v27, %v32
  %v48 = vmul.f32 %v28, %v32
  %v49 = vmul.f32 %v29, %v32
  %v50 = vld [vmem:[%s2] sm:$0x1]
  %v52 = vperm.slane %v50, 0
  %v54 = vadd.f32 %v34, %v52
  %v55 = vadd.f32 %v35, %v52
  %v56 = vadd.f32 %v36, %v52
  %v57 = vadd.f32 %v37, %v52
  %v58 = vadd.f32 %v38, %v52
  %v59 = vadd.f32 %v39, %v52
  %v60 = vadd.f32 %v40, %v52
  %v61 = vadd.f32 %v41, %v52
  %v62 = vadd.f32 %v42, %v52
  %v63 = vadd.f32 %v43, %v52
  %v64 = vadd.f32 %v44, %v52
  %v65 = vadd.f32 %v45, %v52
  %v66 = vadd.f32 %v46, %v52
  %v67 = vadd.f32 %v47, %v52
  %v68 = vadd.f32 %v48, %v52
  %v69 = vadd.f32 %v49, %v52
  %v70 = vmax.f32 %v54, 0.0
  %v71 = vmax.f32 %v55, 0.0
  %v72 = vmax.f32 %v56, 0.0
  %v73 = vmax.f32 %v57, 0.0
  %v74 = vmax.f32 %v58, 0.0
  %v75 = vmax.f32 %v59, 0.0
  %v76 = vmax.f32 %v60, 0.0
  %v77 = vmax.f32 %v61, 0.0
  %v78 = vmax.f32 %v62, 0.0
  %v79 = vmax.f32 %v63, 0.0
  %v80 = vmax.f32 %v64, 0.0
  %v81 = vmax.f32 %v65, 0.0
  %v82 = vmax.f32 %v66, 0.0
  %v83 = vmax.f32 %v67, 0.0
  %v84 = vmax.f32 %v68, 0.0
  %v85 = vmax.f32 %v69, 0.0
  %v86 = vpack.c.bf16 %v70, %v70
  %v87 = vpack.c.bf16 %v71, %v71
  %v88 = vpack.c.bf16 %v72, %v72
  %v89 = vpack.c.bf16 %v73, %v73
  %v90 = vpack.c.bf16 %v74, %v74
  %v91 = vpack.c.bf16 %v75, %v75
  %v92 = vpack.c.bf16 %v76, %v76
  %v93 = vpack.c.bf16 %v77, %v77
  %v94 = vpack.c.bf16 %v78, %v78
  %v95 = vpack.c.bf16 %v79, %v79
  %v96 = vpack.c.bf16 %v80, %v80
  %v97 = vpack.c.bf16 %v81, %v81
  %v98 = vpack.c.bf16 %v82, %v82
  %v99 = vpack.c.bf16 %v83, %v83
  %v100 = vpack.c.bf16 %v84, %v84
  %v101 = vpack.c.bf16 %v85, %v85
  %vm102 = vcmask 257024
  %103 = vst.msk [vmem:[%s3] sm:$0xf] %vm102, %v86
  %104 = vst.msk [vmem:[%s3 + $0x4] sm:$0xf] %vm102, %v87
  %105 = vst.msk [vmem:[%s3 + $0x8] sm:$0xf] %vm102, %v88
  %106 = vst.msk [vmem:[%s3 + $0xc] sm:$0xf] %vm102, %v89
  %107 = vst.msk [vmem:[%s3 + $0x10] sm:$0xf] %vm102, %v90
  %108 = vst.msk [vmem:[%s3 + $0x14] sm:$0xf] %vm102, %v91
  %109 = vst.msk [vmem:[%s3 + $0x18] sm:$0xf] %vm102, %v92
  %110 = vst.msk [vmem:[%s3 + $0x1c] sm:$0xf] %vm102, %v93
  %111 = vst.msk [vmem:[%s3 + $0x20] sm:$0xf] %vm102, %v94
  %112 = vst.msk [vmem:[%s3 + $0x24] sm:$0xf] %vm102, %v95
  %113 = vst.msk [vmem:[%s3 + $0x28] sm:$0xf] %vm102, %v96
  %114 = vst.msk [vmem:[%s3 + $0x2c] sm:$0xf] %vm102, %v97
  %115 = vst.msk [vmem:[%s3 + $0x30] sm:$0xf] %vm102, %v98
  %116 = vst.msk [vmem:[%s3 + $0x34] sm:$0xf] %vm102, %v99
  %117 = vst.msk [vmem:[%s3 + $0x38] sm:$0xf] %vm102, %v100
  %118 = vst.msk [vmem:[%s3 + $0x3c] sm:$0xf] %vm102, %v101
  // Predicated region
  $region14: #{generator_forward.18} parent=0 // pred_check
    _
  $region15: #{generator_forward.18} parent=0 // pred_check_branch
    %120 = sbr.rel (0) target = $region17
  $region16: #{generator_forward.18} parent=0 // pred_region
    _
  $region17: #{generator_forward.18} parent=0 // pred_fallthru
    _
  // Predicated region
  $region18: #{generator_forward.18} parent=0 // pred_check
    _
  $region19: #{generator_forward.18} parent=0 // pred_check_branch
    %122 = sbr.rel (0) target = $region21
  $region20: #{generator_forward.18} parent=0 // pred_region
    _
  $region21: #{generator_forward.18} parent=0 // pred_fallthru
    _

// kernel: generator_forward.19
$region0: #{generator_forward.19}
  #allocation0 [shape = 'u32[]', space=smem, size = 0x4, offset = 0x4, fixed_abs, tag = 'smem constant byte address 0x4 - core index']
  #allocation1 [shape = 'u32[72,128]{1,0:T(1,128)}', space=vmem, size = 0x9000, scoped, tag = 'internal scratch']
  #allocation2 [shape = 'f32[128,128]{1,0:T(8,128)}', space=vmem, size = 0x10000, scoped, tag = 'scratch operand']
  %s0 = inlined_call_operand.vmem [shape: bf16[4,128,128], index: 0, kind: input, shape index: {}]
  %s1 = inlined_call_operand.vmem [shape: bf16[4,128,128], index: 1, kind: input, shape index: {}]
  %s2 = inlined_call_operand.vmem [shape: f32[4,128,128], index: 2, kind: output, shape index: {}]
  %s3 = sld [smem:[#allocation0]]
  $region49: #{generator_forward.19} parent=0
    _
  %s5 = ssub.s32 1, %s3
  %s6 = scalar_select 0, %s5, %s3
  loop: start=0, step=1, limit=6
  $region2: #{generator_forward.19} parent=0 // loop_pre_header
    _
  $region3: #{generator_forward.19} parent=0 // loop_header
    %s8 = sphi 0, %s12
    %p9 = scmp.ge.s32.totalorder %s8, 6
    %s15 = sphi 0, %s41
    %s16 = sphi 0, %s37
    %s17 = sphi 0, %s33
    %s18 = sphi 0, %s29
    %s19 = sphi 0, %s15
    %s20 = sphi 0, %s16
    %s21 = sphi 0, %s17
    %s22 = sphi 0, %s18
    %s23 = sphi 0, %s19
    %s24 = sphi 0, %s20
    %s25 = sphi 0, %s21
    %s26 = sphi 0, %s22
    %s48 = sphi 0, %s50
    %s51 = sphi 0, %s48
    %s52 = sphi 0, %s51
    %s68 = sphi 0, %s52
    %s78 = sphi 0, %s80
    %s81 = sphi 0, %s78
    %s82 = sphi 0, %s81
    %s98 = sphi 0, %s82
    %s108 = sphi 0, %s110
    %s111 = sphi 0, %s108
    %s112 = sphi 0, %s111
    %s128 = sphi 0, %s112
  $region4: #{generator_forward.19} parent=0 // loop_header_branch
    %11 = sbr.rel (%p9) target = $region8
  $region5: #{generator_forward.19} parent=0 // loop_body
    %s13 = ssub.s32 %s8, 1
    %s14 = ssub.s32 %s8, 2
    %s27 = sadd.s32 1, %s18
    %p28 = scmp.ge.s32.totalorder %s27, 1
    %s29 = scalar_select %p28, 0, %s27
    %s30 = sadd.s32 1, %s17
    %s31 = scalar_select %p28, %s30, %s17
    %p32 = scmp.ge.s32.totalorder %s31, 1
    %s33 = scalar_select %p32, 0, %s31
    %s34 = sadd.s32 1, %s16
    %s35 = scalar_select %p32, %s34, %s16
    %p36 = scmp.ge.s32.totalorder %s35, 1
    %s37 = scalar_select %p36, 0, %s35
    %s38 = sadd.s32 1, %s15
    %s39 = scalar_select %p36, %s38, %s15
    %p40 = scmp.ge.s32.totalorder %s39, 4
    %s41 = scalar_select %p40, 0, %s39
    %s42 = ssub.s32 %s15, %s41
    %s43 = ssub.s32 %s16, %s37
    %s44 = sor.u32 %s42, %s43
    %s45 = ssub.s32 %s18, %s29
    %s46 = sor.u32 %s44, %s45
    %p47 = scmp.eq.s32.totalorder %s46, 0
    %s49 = sadd.s32 %s48, 1
    %s50 = scalar_select %p47, %s48, %s49
    %p53 = pneg %p47
    %p54 = scmp.eq.s32.totalorder %s8, 3
    %p55 = por %p53, %p54
    %p56 = scmp.ne.s32.totalorder %s48, %s51
    %p57 = scmp.eq.s32.totalorder %s8, 0
    %p58 = por %p56, %p57
    %p59 = scmp.ne.s32.totalorder %s48, %s51
    %p60 = scmp.eq.s32.totalorder %s13, 3
    %p61 = por %p59, %p60
    %p62 = scmp.ne.s32.totalorder %s51, %s52
    %p63 = scmp.eq.s32.totalorder %s13, 0
    %p64 = por %p62, %p63
    %p65 = scmp.ne.s32.totalorder %s51, %s52
    %p66 = scmp.eq.s32.totalorder %s14, 3
    %p67 = por %p65, %p66
    %p69 = scmp.ne.s32.totalorder %s52, %s68
    %p70 = scmp.eq.s32.totalorder %s14, 0
    %p71 = por %p69, %p70
    %s72 = ssub.s32 %s15, %s41
    %s73 = ssub.s32 %s18, %s29
    %s74 = sor.u32 %s72, %s73
    %s75 = ssub.s32 %s17, %s33
    %s76 = sor.u32 %s74, %s75
    %p77 = scmp.eq.s32.totalorder %s76, 0
    %s79 = sadd.s32 %s78, 1
    %s80 = scalar_select %p77, %s78, %s79
    %p83 = pneg %p77
    %p84 = scmp.eq.s32.totalorder %s8, 3
    %p85 = por %p83, %p84
    %p86 = scmp.ne.s32.totalorder %s78, %s81
    %p87 = scmp.eq.s32.totalorder %s8, 0
    %p88 = por %p86, %p87
    %p89 = scmp.ne.s32.totalorder %s78, %s81
    %p90 = scmp.eq.s32.totalorder %s13, 3
    %p91 = por %p89, %p90
    %p92 = scmp.ne.s32.totalorder %s81, %s82
    %p93 = scmp.eq.s32.totalorder %s13, 0
    %p94 = por %p92, %p93
    %p95 = scmp.ne.s32.totalorder %s81, %s82
    %p96 = scmp.eq.s32.totalorder %s14, 3
    %p97 = por %p95, %p96
    %p99 = scmp.ne.s32.totalorder %s82, %s98
    %p100 = scmp.eq.s32.totalorder %s14, 0
    %p101 = por %p99, %p100
    %s102 = ssub.s32 %s15, %s41
    %s103 = ssub.s32 %s16, %s37
    %s104 = sor.u32 %s102, %s103
    %s105 = ssub.s32 %s17, %s33
    %s106 = sor.u32 %s104, %s105
    %p107 = scmp.eq.s32.totalorder %s106, 0
    %s109 = sadd.s32 %s108, 1
    %s110 = scalar_select %p107, %s108, %s109
    %p113 = pneg %p107
    %p114 = scmp.eq.s32.totalorder %s8, 3
    %p115 = por %p113, %p114
    %p116 = scmp.ne.s32.totalorder %s108, %s111
    %p117 = scmp.eq.s32.totalorder %s8, 0
    %p118 = por %p116, %p117
    %p119 = scmp.ne.s32.totalorder %s108, %s111
    %p120 = scmp.eq.s32.totalorder %s13, 3
    %p121 = por %p119, %p120
    %p122 = scmp.ne.s32.totalorder %s111, %s112
    %p123 = scmp.eq.s32.totalorder %s13, 0
    %p124 = por %p122, %p123
    %p125 = scmp.ne.s32.totalorder %s111, %s112
    %p126 = scmp.eq.s32.totalorder %s14, 3
    %p127 = por %p125, %p126
    %p129 = scmp.ne.s32.totalorder %s112, %s128
    %p130 = scmp.eq.s32.totalorder %s14, 0
    %p131 = por %p129, %p130
    %p132 = scmp.le.s32.totalorder 1, %s8
    %p133 = scmp.lt.s32.totalorder %s8, 5
    %p134 = pnand %p132, %p133
    %p135 = pneg %p134
    // Predicated region
    $region9: #{generator_forward.19} parent=5 // pred_check
      _
    $region10: #{generator_forward.19} parent=5 // pred_check_branch
      %137 = sbr.rel (%p134) target = $region12
    $region11: #{generator_forward.19} parent=5 // pred_region
      %s138 = ssub.s32 %s8, 1
    $region12: #{generator_forward.19} parent=5 // pred_fallthru
      _
    %p139 = scmp.lt.s32.totalorder %s8, 4
    // Predicated region
    $region13: #{generator_forward.19} parent=5 // pred_check
      %p140 = pneg %p139
    $region14: #{generator_forward.19} parent=5 // pred_check_branch
      %142 = sbr.rel (%p140) target = $region16
    $region15: #{generator_forward.19} parent=5 // pred_region
      // Predicated region
      $region17: #{generator_forward.19} parent=15 // pred_check
        %p143 = pneg %p58
      $region18: #{generator_forward.19} parent=15 // pred_check_branch
        %145 = sbr.rel (%p143) target = $region20
      $region19: #{generator_forward.19} parent=15 // pred_region
        %s146 = smul.u32 16, %s16
        %p147 = scmp.lt.s32.totalorder %s15, 3
        %s148 = scalar_select %p147, %s15, 3
        %p149 = scmp.lt.s32.totalorder %s146, 15
        %s150 = scalar_select %p149, %s146, 15
        %p151 = scmp.lt.s32.totalorder %s18, 0
        %s152 = scalar_select %p151, %s18, 0
        %s153 = sadd.s32 %s152, %s150
        %s154 = smul.addr %s148, 16
        %s155 = sadd.s32 %s153, %s154
        %s156 = smul.addr %s155, 4
        %s157 = scalar_lea.vmem %s0, %s156
        %s158 = smul.u32 16, %s16
      $region20: #{generator_forward.19} parent=15 // pred_fallthru
        _
      // Predicated region
      $region21: #{generator_forward.19} parent=15 // pred_check
        %p159 = pneg %p88
      $region22: #{generator_forward.19} parent=15 // pred_check_branch
        %161 = sbr.rel (%p159) target = $region24
      $region23: #{generator_forward.19} parent=15 // pred_region
        %s162 = smul.u32 16, %s18
        %p163 = scmp.lt.s32.totalorder %s15, 3
        %s164 = scalar_select %p163, %s15, 3
        %p165 = scmp.lt.s32.totalorder %s162, 15
        %s166 = scalar_select %p165, %s162, 15
        %p167 = scmp.lt.s32.totalorder %s17, 0
        %s168 = scalar_select %p167, %s17, 0
        %s169 = sadd.s32 %s168, %s166
        %s170 = smul.addr %s164, 16
        %s171 = sadd.s32 %s169, %s170
        %s172 = smul.addr %s171, 4
        %s173 = scalar_lea.vmem %s1, %s172
        %s174 = smul.u32 16, %s18
      $region24: #{generator_forward.19} parent=15 // pred_fallthru
        _
    $region16: #{generator_forward.19} parent=5 // pred_fallthru
      _
    %p175 = scmp.le.s32.totalorder 1, %s8
    %p176 = scmp.lt.s32.totalorder %s8, 5
    %p177 = pnand %p175, %p176
    %p178 = pneg %p177
    // Predicated region
    $region25: #{generator_forward.19} parent=5 // pred_check
      _
    $region26: #{generator_forward.19} parent=5 // pred_check_branch
      %180 = sbr.rel (%p177) target = $region28
    $region27: #{generator_forward.19} parent=5 // pred_region
      %s181 = ssub.s32 %s8, 1
      %s182 = smul.u32 16, %s20
      %p183 = scmp.lt.s32.totalorder %s19, 3
      %s184 = scalar_select %p183, %s19, 3
      %p185 = scmp.lt.s32.totalorder %s182, 15
      %s186 = scalar_select %p185, %s182, 15
      %p187 = scmp.lt.s32.totalorder %s22, 0
      %s188 = scalar_select %p187, %s22, 0
      %s189 = sadd.s32 %s188, %s186
      %s190 = smul.addr %s184, 16
      %s191 = sadd.s32 %s189, %s190
      %s192 = smul.addr %s191, 4
      %s193 = scalar_lea.vmem %s0, %s192
      %p194 = pneg %p64
      %p195 = pneg %p61
      %s196 = smul.u32 16, %s22
      %p197 = scmp.lt.s32.totalorder %s19, 3
      %s198 = scalar_select %p197, %s19, 3
      %p199 = scmp.lt.s32.totalorder %s196, 15
      %s200 = scalar_select %p199, %s196, 15
      %p201 = scmp.lt.s32.totalorder %s21, 0
      %s202 = scalar_select %p201, %s21, 0
      %s203 = sadd.s32 %s202, %s200
      %s204 = smul.addr %s198, 16
      %s205 = sadd.s32 %s203, %s204
      %s206 = smul.addr %s205, 4
      %s207 = scalar_lea.vmem %s1, %s206
      %p208 = pneg %p94
      %p209 = pneg %p91
      %p210 = pneg %p124
      %p211 = pneg %p121
      %s212 = smul.u32 16, %s20
      %p213 = scmp.lt.s32.totalorder %s19, 3
      %s214 = scalar_select %p213, %s19, 3
      %p215 = scmp.lt.s32.totalorder %s212, 15
      %s216 = scalar_select %p215, %s212, 15
      %p217 = scmp.lt.s32.totalorder %s21, 0
      %s218 = scalar_select %p217, %s21, 0
      %s219 = sadd.s32 %s218, %s216
      %s220 = smul.addr %s214, 16
      %s221 = sadd.s32 %s219, %s220
      %s222 = smul.addr %s221, 8
      %s223 = scalar_lea.vmem %s2, %s222
      %s224 = smul.u32 16, %s20
      %p225 = scmp.lt.s32.totalorder %s19, 3
      %s226 = scalar_select %p225, %s19, 3
      %p227 = scmp.lt.s32.totalorder %s224, 15
      %s228 = scalar_select %p227, %s224, 15
      %p229 = scmp.lt.s32.totalorder %s22, 0
      %s230 = scalar_select %p229, %s22, 0
      %s231 = sadd.s32 %s230, %s228
      %s232 = smul.addr %s226, 16
      %s233 = sadd.s32 %s231, %s232
      %s234 = smul.addr %s233, 4
      %s235 = scalar_lea.vmem %s0, %s234
      %s236 = smul.u32 16, %s20
      %s237 = smul.u32 16, %s22
      %p238 = scmp.lt.s32.totalorder %s19, 3
      %s239 = scalar_select %p238, %s19, 3
      %p240 = scmp.lt.s32.totalorder %s237, 15
      %s241 = scalar_select %p240, %s237, 15
      %p242 = scmp.lt.s32.totalorder %s21, 0
      %s243 = scalar_select %p242, %s21, 0
      %s244 = sadd.s32 %s243, %s241
      %s245 = smul.addr %s239, 16
      %s246 = sadd.s32 %s244, %s245
      %s247 = smul.addr %s246, 4
      %s248 = scalar_lea.vmem %s1, %s247
      %s249 = smul.u32 16, %s22
      %s250 = smul.u32 16, %s20
      %p251 = scmp.lt.s32.totalorder %s19, 3
      %s252 = scalar_select %p251, %s19, 3
      %p253 = scmp.lt.s32.totalorder %s250, 15
      %s254 = scalar_select %p253, %s250, 15
      %p255 = scmp.lt.s32.totalorder %s21, 0
      %s256 = scalar_select %p255, %s21, 0
      %s257 = sadd.s32 %s256, %s254
      %s258 = smul.addr %s252, 16
      %s259 = sadd.s32 %s257, %s258
      %s260 = smul.addr %s259, 8
      %s261 = scalar_lea.vmem %s2, %s260
      %s262 = smul.u32 16, %s20
      %p263 = scmp.eq.s32.totalorder %s22, 0
      // Predicated region
      $region29: #{generator_forward.19} parent=27 // pred_check
        %p264 = pneg %p263
      $region30: #{generator_forward.19} parent=27 // pred_check_branch
        %266 = sbr.rel (%p264) target = $region32
      $region31: #{generator_forward.19} parent=27 // pred_region
        %267 = vst [vmem:[#allocation2] sm:$0xff] 0.0
        %268 = vst [vmem:[#allocation2 + $0x8] sm:$0xff] 0.0
        %269 = vst [vmem:[#allocation2 + $0x10] sm:$0xff] 0.0
        %270 = vst [vmem:[#allocation2 + $0x18] sm:$0xff] 0.0
        %271 = vst [vmem:[#allocation2 + $0x20] sm:$0xff] 0.0
        %272 = vst [vmem:[#allocation2 + $0x28] sm:$0xff] 0.0
        %273 = vst [vmem:[#allocation2 + $0x30] sm:$0xff] 0.0
        %274 = vst [vmem:[#allocation2 + $0x38] sm:$0xff] 0.0
        %275 = vst [vmem:[#allocation2 + $0x40] sm:$0xff] 0.0
        %276 = vst [vmem:[#allocation2 + $0x48] sm:$0xff] 0.0
        %277 = vst [vmem:[#allocation2 + $0x50] sm:$0xff] 0.0
        %278 = vst [vmem:[#allocation2 + $0x58] sm:$0xff] 0.0
        %279 = vst [vmem:[#allocation2 + $0x60] sm:$0xff] 0.0
        %280 = vst [vmem:[#allocation2 + $0x68] sm:$0xff] 0.0
        %281 = vst [vmem:[#allocation2 + $0x70] sm:$0xff] 0.0
        %282 = vst [vmem:[#allocation2 + $0x78] sm:$0xff] 0.0
      $region32: #{generator_forward.19} parent=27 // pred_fallthru
        _
      %v283 = vld [vmem:[#allocation2] sm:$0xff]
      %v284 = vld [vmem:[#allocation2 + $0x8] sm:$0xff]
      %v285 = vld [vmem:[#allocation2 + $0x10] sm:$0xff]
      %v286 = vld [vmem:[#allocation2 + $0x18] sm:$0xff]
      %v287 = vld [vmem:[#allocation2 + $0x20] sm:$0xff]
      %v288 = vld [vmem:[#allocation2 + $0x28] sm:$0xff]
      %v289 = vld [vmem:[#allocation2 + $0x30] sm:$0xff]
      %v290 = vld [vmem:[#allocation2 + $0x38] sm:$0xff]
      %v291 = vld [vmem:[#allocation2 + $0x40] sm:$0xff]
      %v292 = vld [vmem:[#allocation2 + $0x48] sm:$0xff]
      %v293 = vld [vmem:[#allocation2 + $0x50] sm:$0xff]
      %v294 = vld [vmem:[#allocation2 + $0x58] sm:$0xff]
      %v295 = vld [vmem:[#allocation2 + $0x60] sm:$0xff]
      %v296 = vld [vmem:[#allocation2 + $0x68] sm:$0xff]
      %v297 = vld [vmem:[#allocation2 + $0x70] sm:$0xff]
      %v298 = vld [vmem:[#allocation2 + $0x78] sm:$0xff]
      %v299 = vld [vmem:[%s235] sm:$0xf]
      %v300 = vld [vmem:[%s235 + $0x4] sm:$0xf]
      %v301 = vld [vmem:[%s235 + $0x8] sm:$0xf]
      %v302 = vld [vmem:[%s235 + $0xc] sm:$0xf]
      %v303 = vld [vmem:[%s235 + $0x10] sm:$0xf]
      %v304 = vld [vmem:[%s235 + $0x14] sm:$0xf]
      %v305 = vld [vmem:[%s235 + $0x18] sm:$0xf]
      %v306 = vld [vmem:[%s235 + $0x1c] sm:$0xf]
      %v307 = vld [vmem:[%s235 + $0x20] sm:$0xf]
      %v308 = vld [vmem:[%s235 + $0x24] sm:$0xf]
      %v309 = vld [vmem:[%s235 + $0x28] sm:$0xf]
      %v310 = vld [vmem:[%s235 + $0x2c] sm:$0xf]
      %v311 = vld [vmem:[%s235 + $0x30] sm:$0xf]
      %v312 = vld [vmem:[%s235 + $0x34] sm:$0xf]
      %v313 = vld [vmem:[%s235 + $0x38] sm:$0xf]
      %v314 = vld [vmem:[%s235 + $0x3c] sm:$0xf]
      %v315 = vld [vmem:[%s248] sm:$0xf]
      %v316 = vld [vmem:[%s248 + $0x4] sm:$0xf]
      %v317 = vld [vmem:[%s248 + $0x8] sm:$0xf]
      %v318 = vld [vmem:[%s248 + $0xc] sm:$0xf]
      %v319 = vld [vmem:[%s248 + $0x10] sm:$0xf]
      %v320 = vld [vmem:[%s248 + $0x14] sm:$0xf]
      %v321 = vld [vmem:[%s248 + $0x18] sm:$0xf]
      %v322 = vld [vmem:[%s248 + $0x1c] sm:$0xf]
      %v323 = vld [vmem:[%s248 + $0x20] sm:$0xf]
      %v324 = vld [vmem:[%s248 + $0x24] sm:$0xf]
      %v325 = vld [vmem:[%s248 + $0x28] sm:$0xf]
      %v326 = vld [vmem:[%s248 + $0x2c] sm:$0xf]
      %v327 = vld [vmem:[%s248 + $0x30] sm:$0xf]
      %v328 = vld [vmem:[%s248 + $0x34] sm:$0xf]
      %v329 = vld [vmem:[%s248 + $0x38] sm:$0xf]
      %v330 = vld [vmem:[%s248 + $0x3c] sm:$0xf]
      %v347 = vunpack.c.l.b16 %v299
      %v348 = vunpack.c.l.b16 %v300
      %v349 = vunpack.c.l.b16 %v301
      %v350 = vunpack.c.l.b16 %v302
      %v351 = vunpack.c.l.b16 %v303
      %v352 = vunpack.c.l.b16 %v304
      %v353 = vunpack.c.l.b16 %v305
      %v354 = vunpack.c.l.b16 %v306
      %v355 = vunpack.c.l.b16 %v307
      %v356 = vunpack.c.l.b16 %v308
      %v357 = vunpack.c.l.b16 %v309
      %v358 = vunpack.c.l.b16 %v310
      %v359 = vunpack.c.l.b16 %v311
      %v360 = vunpack.c.l.b16 %v312
      %v361 = vunpack.c.l.b16 %v313
      %v362 = vunpack.c.l.b16 %v314
      %v363 = vpack.c.b16 %v348, %v347
      %v364 = vpack.c.b16 %v350, %v349
      %v365 = vpack.c.b16 %v352, %v351
      %v366 = vpack.c.b16 %v354, %v353
      %v367 = vpack.c.b16 %v356, %v355
      %v368 = vpack.c.b16 %v358, %v357
      %v369 = vpack.c.b16 %v360, %v359
      %v370 = vpack.c.b16 %v362, %v361
      %v395 = vunpack.c.l.b16 %v315
      %v396 = vunpack.c.l.b16 %v316
      %v397 = vunpack.c.l.b16 %v317
      %v398 = vunpack.c.l.b16 %v318
      %v399 = vunpack.c.l.b16 %v319
      %v400 = vunpack.c.l.b16 %v320
      %v401 = vunpack.c.l.b16 %v321
      %v402 = vunpack.c.l.b16 %v322
      %v403 = vunpack.c.l.b16 %v323
      %v404 = vunpack.c.l.b16 %v324
      %v405 = vunpack.c.l.b16 %v325
      %v406 = vunpack.c.l.b16 %v326
      %v407 = vunpack.c.l.b16 %v327
      %v408 = vunpack.c.l.b16 %v328
      %v409 = vunpack.c.l.b16 %v329
      %v410 = vunpack.c.l.b16 %v330
      %v411 = vpack.c.b16 %v396, %v395
      %v412 = vpack.c.b16 %v398, %v397
      %v413 = vpack.c.b16 %v400, %v399
      %v414 = vpack.c.b16 %v402, %v401
      %v415 = vpack.c.b16 %v404, %v403
      %v416 = vpack.c.b16 %v406, %v405
      %v417 = vpack.c.b16 %v408, %v407
      %v418 = vpack.c.b16 %v410, %v409
      %427 = vmatpush.bf16.msra.mxu0 %v418
      %428 = vmatpush.bf16.msra.mxu0 %v417
      %429 = vmatpush.bf16.msra.mxu0 %v416
      %430 = vmatpush.bf16.msra.mxu0 %v415
      %431 = vmatpush.bf16.msra.mxu0 %v414
      %432 = vmatpush.bf16.msra.mxu0 %v413
      %433 = vmatpush.bf16.msra.mxu0 %v412
      %434 = vmatpush.bf16.msra.mxu0 %v411
      %435 = vmatmul.bf16.gmra.mxu0 %v363
      %v436 = vpop.f32.mrf.mxu0
      %v437 = vadd.f32 0.0, %v436
      %v438 = vpop.f32.mrf.mxu0
      %v439 = vadd.f32 0.0, %v438
      %440 = vmatmul.bf16.gmra.mxu0 %v364
      %v441 = vpop.f32.mrf.mxu0
      %v442 = vadd.f32 0.0, %v441
      %v443 = vpop.f32.mrf.mxu0
      %v444 = vadd.f32 0.0, %v443
      %445 = vmatmul.bf16.gmra.mxu0 %v365
      %v446 = vpop.f32.mrf.mxu0
      %v447 = vadd.f32 0.0, %v446
      %v448 = vpop.f32.mrf.mxu0
      %v449 = vadd.f32 0.0, %v448
      %450 = vmatmul.bf16.gmra.mxu0 %v366
      %v451 = vpop.f32.mrf.mxu0
      %v452 = vadd.f32 0.0, %v451
      %v453 = vpop.f32.mrf.mxu0
      %v454 = vadd.f32 0.0, %v453
      %455 = vmatmul.bf16.gmra.mxu0 %v367
      %v456 = vpop.f32.mrf.mxu0
      %v457 = vadd.f32 0.0, %v456
      %v458 = vpop.f32.mrf.mxu0
      %v459 = vadd.f32 0.0, %v458
      %460 = vmatmul.bf16.gmra.mxu0 %v368
      %v461 = vpop.f32.mrf.mxu0
      %v462 = vadd.f32 0.0, %v461
      %v463 = vpop.f32.mrf.mxu0
      %v464 = vadd.f32 0.0, %v463
      %465 = vmatmul.bf16.gmra.mxu0 %v369
      %v466 = vpop.f32.mrf.mxu0
      %v467 = vadd.f32 0.0, %v466
      %v468 = vpop.f32.mrf.mxu0
      %v469 = vadd.f32 0.0, %v468
      %470 = vmatmul.bf16.gmra.mxu0 %v370
      %v471 = vpop.f32.mrf.mxu0
      %v472 = vadd.f32 0.0, %v471
      %v473 = vpop.f32.mrf.mxu0
      %v474 = vadd.f32 0.0, %v473
      %475 = vdwg.mxu0
      %v476 = vadd.f32 %v283, %v437
      %v477 = vadd.f32 %v284, %v439
      %v478 = vadd.f32 %v285, %v442
      %v479 = vadd.f32 %v286, %v444
      %v480 = vadd.f32 %v287, %v447
      %v481 = vadd.f32 %v288, %v449
      %v482 = vadd.f32 %v289, %v452
      %v483 = vadd.f32 %v290, %v454
      %v484 = vadd.f32 %v291, %v457
      %v485 = vadd.f32 %v292, %v459
      %v486 = vadd.f32 %v293, %v462
      %v487 = vadd.f32 %v294, %v464
      %v488 = vadd.f32 %v295, %v467
      %v489 = vadd.f32 %v296, %v469
      %v490 = vadd.f32 %v297, %v472
      %v491 = vadd.f32 %v298, %v474
      %492 = vst [vmem:[#allocation2] sm:$0xff] %v476
      %493 = vst [vmem:[#allocation2 + $0x8] sm:$0xff] %v477
      %494 = vst [vmem:[#allocation2 + $0x10] sm:$0xff] %v478
      %495 = vst [vmem:[#allocation2 + $0x18] sm:$0xff] %v479
      %496 = vst [vmem:[#allocation2 + $0x20] sm:$0xff] %v480
      %497 = vst [vmem:[#allocation2 + $0x28] sm:$0xff] %v481
      %498 = vst [vmem:[#allocation2 + $0x30] sm:$0xff] %v482
      %499 = vst [vmem:[#allocation2 + $0x38] sm:$0xff] %v483
      %500 = vst [vmem:[#allocation2 + $0x40] sm:$0xff] %v484
      %501 = vst [vmem:[#allocation2 + $0x48] sm:$0xff] %v485
      %502 = vst [vmem:[#allocation2 + $0x50] sm:$0xff] %v486
      %503 = vst [vmem:[#allocation2 + $0x58] sm:$0xff] %v487
      %504 = vst [vmem:[#allocation2 + $0x60] sm:$0xff] %v488
      %505 = vst [vmem:[#allocation2 + $0x68] sm:$0xff] %v489
      %506 = vst [vmem:[#allocation2 + $0x70] sm:$0xff] %v490
      %507 = vst [vmem:[#allocation2 + $0x78] sm:$0xff] %v491
      // Predicated region
      $region33: #{generator_forward.19} parent=27 // pred_check
        %p508 = pneg %p263
      $region34: #{generator_forward.19} parent=27 // pred_check_branch
        %510 = sbr.rel (%p508) target = $region36
      $region35: #{generator_forward.19} parent=27 // pred_region
        %v511 = vld [vmem:[#allocation2] sm:$0xff]
        %v512 = vld [vmem:[#allocation2 + $0x8] sm:$0xff]
        %v513 = vld [vmem:[#allocation2 + $0x10] sm:$0xff]
        %v514 = vld [vmem:[#allocation2 + $0x18] sm:$0xff]
        %v515 = vld [vmem:[#allocation2 + $0x20] sm:$0xff]
        %v516 = vld [vmem:[#allocation2 + $0x28] sm:$0xff]
        %v517 = vld [vmem:[#allocation2 + $0x30] sm:$0xff]
        %v518 = vld [vmem:[#allocation2 + $0x38] sm:$0xff]
        %v519 = vld [vmem:[#allocation2 + $0x40] sm:$0xff]
        %v520 = vld [vmem:[#allocation2 + $0x48] sm:$0xff]
        %v521 = vld [vmem:[#allocation2 + $0x50] sm:$0xff]
        %v522 = vld [vmem:[#allocation2 + $0x58] sm:$0xff]
        %v523 = vld [vmem:[#allocation2 + $0x60] sm:$0xff]
        %v524 = vld [vmem:[#allocation2 + $0x68] sm:$0xff]
        %v525 = vld [vmem:[#allocation2 + $0x70] sm:$0xff]
        %v526 = vld [vmem:[#allocation2 + $0x78] sm:$0xff]
        %527 = vst [vmem:[%s261] sm:$0xff] %v511
        %528 = vst [vmem:[%s261 + $0x8] sm:$0xff] %v512
        %529 = vst [vmem:[%s261 + $0x10] sm:$0xff] %v513
        %530 = vst [vmem:[%s261 + $0x18] sm:$0xff] %v514
        %531 = vst [vmem:[%s261 + $0x20] sm:$0xff] %v515
        %532 = vst [vmem:[%s261 + $0x28] sm:$0xff] %v516
        %533 = vst [vmem:[%s261 + $0x30] sm:$0xff] %v517
        %534 = vst [vmem:[%s261 + $0x38] sm:$0xff] %v518
        %535 = vst [vmem:[%s261 + $0x40] sm:$0xff] %v519
        %536 = vst [vmem:[%s261 + $0x48] sm:$0xff] %v520
        %537 = vst [vmem:[%s261 + $0x50] sm:$0xff] %v521
        %538 = vst [vmem:[%s261 + $0x58] sm:$0xff] %v522
        %539 = vst [vmem:[%s261 + $0x60] sm:$0xff] %v523
        %540 = vst [vmem:[%s261 + $0x68] sm:$0xff] %v524
        %541 = vst [vmem:[%s261 + $0x70] sm:$0xff] %v525
        %542 = vst [vmem:[%s261 + $0x78] sm:$0xff] %v526
      $region36: #{generator_forward.19} parent=27 // pred_fallthru
        _
      %s543 = smul.u32 16, %s20
      %p544 = scmp.lt.s32.totalorder %s19, 3
      %s545 = scalar_select %p544, %s19, 3
      %p546 = scmp.lt.s32.totalorder %s543, 15
      %s547 = scalar_select %p546, %s543, 15
      %p548 = scmp.lt.s32.totalorder %s21, 0
      %s549 = scalar_select %p548, %s21, 0
      %s550 = sadd.s32 %s549, %s547
      %s551 = smul.addr %s545, 16
      %s552 = sadd.s32 %s550, %s551
      %s553 = smul.addr %s552, 8
      %s554 = scalar_lea.vmem %s2, %s553
      // Predicated region
      $region37: #{generator_forward.19} parent=27 // pred_check
        %p555 = pneg %p121
      $region38: #{generator_forward.19} parent=27 // pred_check_branch
        %557 = sbr.rel (%p555) target = $region40
      $region39: #{generator_forward.19} parent=27 // pred_region
        %s558 = smul.u32 16, %s20
      $region40: #{generator_forward.19} parent=27 // pred_fallthru
        _
    $region28: #{generator_forward.19} parent=5 // pred_fallthru
      _
    %p559 = scmp.le.s32.totalorder 2, %s8
    // Predicated region
    $region41: #{generator_forward.19} parent=5 // pred_check
      %p560 = pneg %p559
    $region42: #{generator_forward.19} parent=5 // pred_check_branch
      %562 = sbr.rel (%p560) target = $region44
    $region43: #{generator_forward.19} parent=5 // pred_region
      %s563 = ssub.s32 %s8, 2
      // Predicated region
      $region45: #{generator_forward.19} parent=43 // pred_check
        %p564 = pneg %p127
      $region46: #{generator_forward.19} parent=43 // pred_check_branch
        %566 = sbr.rel (%p564) target = $region48
      $region47: #{generator_forward.19} parent=43 // pred_region
        %s567 = smul.u32 16, %s24
        %p568 = scmp.lt.s32.totalorder %s23, 3
        %s569 = scalar_select %p568, %s23, 3
        %p570 = scmp.lt.s32.totalorder %s567, 15
        %s571 = scalar_select %p570, %s567, 15
        %p572 = scmp.lt.s32.totalorder %s25, 0
        %s573 = scalar_select %p572, %s25, 0
        %s574 = sadd.s32 %s573, %s571
        %s575 = smul.addr %s569, 16
        %s576 = sadd.s32 %s574, %s575
        %s577 = smul.addr %s576, 8
        %s578 = scalar_lea.vmem %s2, %s577
      $region48: #{generator_forward.19} parent=43 // pred_fallthru
        _
    $region44: #{generator_forward.19} parent=5 // pred_fallthru
      _
  $region6: #{generator_forward.19} parent=0 // loop_footer
    %s12 = sadd.s32 1, %s8
  $region7: #{generator_forward.19} parent=0 // loop_footer_branch
    %7 = sbr.rel target = $region3
  $region8: #{generator_forward.19} parent=0 // loop_exit
    _

// kernel: generator_forward.20
$region0: #{generator_forward.20}
  #allocation0 [shape = 'u32[]', space=smem, size = 0x4, offset = 0x4, fixed_abs, tag = 'smem constant byte address 0x4 - core index']
  #allocation1 [shape = 'u32[72,128]{1,0:T(1,128)}', space=vmem, size = 0x9000, scoped, tag = 'internal scratch']
  %s0 = inlined_call_operand.vmem [shape: f32[512,16], index: 0, kind: input, shape index: {}]
  %s1 = inlined_call_operand.vmem [shape: f32[1,16], index: 1, kind: output, shape index: {0}]
  %s2 = inlined_call_operand.vmem [shape: f32[1,16], index: 2, kind: output, shape index: {1}]
  %3 = xla_tuple %s1, %s2
  %s4 = sld [smem:[#allocation0]]
  $region30: #{generator_forward.20} parent=0
    _
  %s6 = ssub.s32 1, %s4
  %s7 = scalar_select 0, %s6, %s4
  // Predicated region
  $region2: #{generator_forward.20} parent=0 // pred_check
    _
  $region3: #{generator_forward.20} parent=0 // pred_check_branch
    %9 = sbr.rel (0) target = $region5
  $region4: #{generator_forward.20} parent=0 // pred_region
    _
  $region5: #{generator_forward.20} parent=0 // pred_fallthru
    _
  %v10 = vld [vmem:[%s0] sm:$0xff]
  %v11 = vld [vmem:[%s0 + $0x8] sm:$0xff]
  %v12 = vld [vmem:[%s0 + $0x10] sm:$0xff]
  %v13 = vld [vmem:[%s0 + $0x18] sm:$0xff]
  %v14 = vld [vmem:[%s0 + $0x20] sm:$0xff]
  %v15 = vld [vmem:[%s0 + $0x28] sm:$0xff]
  %v16 = vld [vmem:[%s0 + $0x30] sm:$0xff]
  %v17 = vld [vmem:[%s0 + $0x38] sm:$0xff]
  %v18 = vld [vmem:[%s0 + $0x40] sm:$0xff]
  %v19 = vld [vmem:[%s0 + $0x48] sm:$0xff]
  %v20 = vld [vmem:[%s0 + $0x50] sm:$0xff]
  %v21 = vld [vmem:[%s0 + $0x58] sm:$0xff]
  %v22 = vld [vmem:[%s0 + $0x60] sm:$0xff]
  %v23 = vld [vmem:[%s0 + $0x68] sm:$0xff]
  %v24 = vld [vmem:[%s0 + $0x70] sm:$0xff]
  %v25 = vld [vmem:[%s0 + $0x78] sm:$0xff]
  %v26 = vld [vmem:[%s0 + $0x80] sm:$0xff]
  %v27 = vld [vmem:[%s0 + $0x88] sm:$0xff]
  %v28 = vld [vmem:[%s0 + $0x90] sm:$0xff]
  %v29 = vld [vmem:[%s0 + $0x98] sm:$0xff]
  %v30 = vld [vmem:[%s0 + $0xa0] sm:$0xff]
  %v31 = vld [vmem:[%s0 + $0xa8] sm:$0xff]
  %v32 = vld [vmem:[%s0 + $0xb0] sm:$0xff]
  %v33 = vld [vmem:[%s0 + $0xb8] sm:$0xff]
  %v34 = vld [vmem:[%s0 + $0xc0] sm:$0xff]
  %v35 = vld [vmem:[%s0 + $0xc8] sm:$0xff]
  %v36 = vld [vmem:[%s0 + $0xd0] sm:$0xff]
  %v37 = vld [vmem:[%s0 + $0xd8] sm:$0xff]
  %v38 = vld [vmem:[%s0 + $0xe0] sm:$0xff]
  %v39 = vld [vmem:[%s0 + $0xe8] sm:$0xff]
  %v40 = vld [vmem:[%s0 + $0xf0] sm:$0xff]
  %v41 = vld [vmem:[%s0 + $0xf8] sm:$0xff]
  %v42 = vld [vmem:[%s0 + $0x100] sm:$0xff]
  %v43 = vld [vmem:[%s0 + $0x108] sm:$0xff]
  %v44 = vld [vmem:[%s0 + $0x110] sm:$0xff]
  %v45 = vld [vmem:[%s0 + $0x118] sm:$0xff]
  %v46 = vld [vmem:[%s0 + $0x120] sm:$0xff]
  %v47 = vld [vmem:[%s0 + $0x128] sm:$0xff]
  %v48 = vld [vmem:[%s0 + $0x130] sm:$0xff]
  %v49 = vld [vmem:[%s0 + $0x138] sm:$0xff]
  %v50 = vld [vmem:[%s0 + $0x140] sm:$0xff]
  %v51 = vld [vmem:[%s0 + $0x148] sm:$0xff]
  %v52 = vld [vmem:[%s0 + $0x150] sm:$0xff]
  %v53 = vld [vmem:[%s0 + $0x158] sm:$0xff]
  %v54 = vld [vmem:[%s0 + $0x160] sm:$0xff]
  %v55 = vld [vmem:[%s0 + $0x168] sm:$0xff]
  %v56 = vld [vmem:[%s0 + $0x170] sm:$0xff]
  %v57 = vld [vmem:[%s0 + $0x178] sm:$0xff]
  %v58 = vld [vmem:[%s0 + $0x180] sm:$0xff]
  %v59 = vld [vmem:[%s0 + $0x188] sm:$0xff]
  %v60 = vld [vmem:[%s0 + $0x190] sm:$0xff]
  %v61 = vld [vmem:[%s0 + $0x198] sm:$0xff]
  %v62 = vld [vmem:[%s0 + $0x1a0] sm:$0xff]
  %v63 = vld [vmem:[%s0 + $0x1a8] sm:$0xff]
  %v64 = vld [vmem:[%s0 + $0x1b0] sm:$0xff]
  %v65 = vld [vmem:[%s0 + $0x1b8] sm:$0xff]
  %v66 = vld [vmem:[%s0 + $0x1c0] sm:$0xff]
  %v67 = vld [vmem:[%s0 + $0x1c8] sm:$0xff]
  %v68 = vld [vmem:[%s0 + $0x1d0] sm:$0xff]
  %v69 = vld [vmem:[%s0 + $0x1d8] sm:$0xff]
  %v70 = vld [vmem:[%s0 + $0x1e0] sm:$0xff]
  %v71 = vld [vmem:[%s0 + $0x1e8] sm:$0xff]
  %v72 = vld [vmem:[%s0 + $0x1f0] sm:$0xff]
  %v73 = vld [vmem:[%s0 + $0x1f8] sm:$0xff]
  %vm74 = vcmask 130048
  %v75 = vsel %vm74, %v10, 0.0
  %v76 = vsel %vm74, %v11, 0.0
  %v77 = vadd.f32 %v75, %v76
  %v78 = vsel %vm74, %v12, 0.0
  %v79 = vadd.f32 %v77, %v78
  %v80 = vsel %vm74, %v13, 0.0
  %v81 = vadd.f32 %v79, %v80
  %v82 = vsel %vm74, %v14, 0.0
  %v83 = vadd.f32 %v81, %v82
  %v84 = vsel %vm74, %v15, 0.0
  %v85 = vadd.f32 %v83, %v84
  %v86 = vsel %vm74, %v16, 0.0
  %v87 = vadd.f32 %v85, %v86
  %v88 = vsel %vm74, %v17, 0.0
  %v89 = vadd.f32 %v87, %v88
  %v90 = vsel %vm74, %v18, 0.0
  %v91 = vadd.f32 %v89, %v90
  %v92 = vsel %vm74, %v19, 0.0
  %v93 = vadd.f32 %v91, %v92
  %v94 = vsel %vm74, %v20, 0.0
  %v95 = vadd.f32 %v93, %v94
  %v96 = vsel %vm74, %v21, 0.0
  %v97 = vadd.f32 %v95, %v96
  %v98 = vsel %vm74, %v22, 0.0
  %v99 = vadd.f32 %v97, %v98
  %v100 = vsel %vm74, %v23, 0.0
  %v101 = vadd.f32 %v99, %v100
  %v102 = vsel %vm74, %v24, 0.0
  %v103 = vadd.f32 %v101, %v102
  %v104 = vsel %vm74, %v25, 0.0
  %v105 = vadd.f32 %v103, %v104
  %v106 = vsel %vm74, %v26, 0.0
  %v107 = vadd.f32 %v105, %v106
  %v108 = vsel %vm74, %v27, 0.0
  %v109 = vadd.f32 %v107, %v108
  %v110 = vsel %vm74, %v28, 0.0
  %v111 = vadd.f32 %v109, %v110
  %v112 = vsel %vm74, %v29, 0.0
  %v113 = vadd.f32 %v111, %v112
  %v114 = vsel %vm74, %v30, 0.0
  %v115 = vadd.f32 %v113, %v114
  %v116 = vsel %vm74, %v31, 0.0
  %v117 = vadd.f32 %v115, %v116
  %v118 = vsel %vm74, %v32, 0.0
  %v119 = vadd.f32 %v117, %v118
  %v120 = vsel %vm74, %v33, 0.0
  %v121 = vadd.f32 %v119, %v120
  %v122 = vsel %vm74, %v34, 0.0
  %v123 = vadd.f32 %v121, %v122
  %v124 = vsel %vm74, %v35, 0.0
  %v125 = vadd.f32 %v123, %v124
  %v126 = vsel %vm74, %v36, 0.0
  %v127 = vadd.f32 %v125, %v126
  %v128 = vsel %vm74, %v37, 0.0
  %v129 = vadd.f32 %v127, %v128
  %v130 = vsel %vm74, %v38, 0.0
  %v131 = vadd.f32 %v129, %v130
  %v132 = vsel %vm74, %v39, 0.0
  %v133 = vadd.f32 %v131, %v132
  %v134 = vsel %vm74, %v40, 0.0
  %v135 = vadd.f32 %v133, %v134
  %v136 = vsel %vm74, %v41, 0.0
  %v137 = vadd.f32 %v135, %v136
  %v138 = vsel %vm74, %v42, 0.0
  %v139 = vadd.f32 %v137, %v138
  %v140 = vsel %vm74, %v43, 0.0
  %v141 = vadd.f32 %v139, %v140
  %v142 = vsel %vm74, %v44, 0.0
  %v143 = vadd.f32 %v141, %v142
  %v144 = vsel %vm74, %v45, 0.0
  %v145 = vadd.f32 %v143, %v144
  %v146 = vsel %vm74, %v46, 0.0
  %v147 = vadd.f32 %v145, %v146
  %v148 = vsel %vm74, %v47, 0.0
  %v149 = vadd.f32 %v147, %v148
  %v150 = vsel %vm74, %v48, 0.0
  %v151 = vadd.f32 %v149, %v150
  %v152 = vsel %vm74, %v49, 0.0
  %v153 = vadd.f32 %v151, %v152
  %v154 = vsel %vm74, %v50, 0.0
  %v155 = vadd.f32 %v153, %v154
  %v156 = vsel %vm74, %v51, 0.0
  %v157 = vadd.f32 %v155, %v156
  %v158 = vsel %vm74, %v52, 0.0
  %v159 = vadd.f32 %v157, %v158
  %v160 = vsel %vm74, %v53, 0.0
  %v161 = vadd.f32 %v159, %v160
  %v162 = vsel %vm74, %v54, 0.0
  %v163 = vadd.f32 %v161, %v162
  %v164 = vsel %vm74, %v55, 0.0
  %v165 = vadd.f32 %v163, %v164
  %v166 = vsel %vm74, %v56, 0.0
  %v167 = vadd.f32 %v165, %v166
  %v168 = vsel %vm74, %v57, 0.0
  %v169 = vadd.f32 %v167, %v168
  %v170 = vsel %vm74, %v58, 0.0
  %v171 = vadd.f32 %v169, %v170
  %v172 = vsel %vm74, %v59, 0.0
  %v173 = vadd.f32 %v171, %v172
  %v174 = vsel %vm74, %v60, 0.0
  %v175 = vadd.f32 %v173, %v174
  %v176 = vsel %vm74, %v61, 0.0
  %v177 = vadd.f32 %v175, %v176
  %v178 = vsel %vm74, %v62, 0.0
  %v179 = vadd.f32 %v177, %v178
  %v180 = vsel %vm74, %v63, 0.0
  %v181 = vadd.f32 %v179, %v180
  %v182 = vsel %vm74, %v64, 0.0
  %v183 = vadd.f32 %v181, %v182
  %v184 = vsel %vm74, %v65, 0.0
  %v185 = vadd.f32 %v183, %v184
  %v186 = vsel %vm74, %v66, 0.0
  %v187 = vadd.f32 %v185, %v186
  %v188 = vsel %vm74, %v67, 0.0
  %v189 = vadd.f32 %v187, %v188
  %v190 = vsel %vm74, %v68, 0.0
  %v191 = vadd.f32 %v189, %v190
  %v192 = vsel %vm74, %v69, 0.0
  %v193 = vadd.f32 %v191, %v192
  %v194 = vsel %vm74, %v70, 0.0
  %v195 = vadd.f32 %v193, %v194
  %v196 = vsel %vm74, %v71, 0.0
  %v197 = vadd.f32 %v195, %v196
  %v198 = vsel %vm74, %v72, 0.0
  %v199 = vadd.f32 %v197, %v198
  %v200 = vsel %vm74, %v73, 0.0
  %v201 = vadd.f32 %v199, %v200
  %v202 = vrot.slane %v201, 4
  %v203 = vadd.f32 %v201, %v202
  %v204 = vrot.slane %v203, 2
  %v205 = vadd.f32 %v203, %v204
  %v206 = vrot.slane %v205, 1
  %v207 = vadd.f32 %v205, %v206
  %v208 = vmul.f32 %v10, %v10
  %v209 = vmul.f32 %v11, %v11
  %v210 = vmul.f32 %v12, %v12
  %v211 = vmul.f32 %v13, %v13
  %v212 = vmul.f32 %v14, %v14
  %v213 = vmul.f32 %v15, %v15
  %v214 = vmul.f32 %v16, %v16
  %v215 = vmul.f32 %v17, %v17
  %v216 = vmul.f32 %v18, %v18
  %v217 = vmul.f32 %v19, %v19
  %v218 = vmul.f32 %v20, %v20
  %v219 = vmul.f32 %v21, %v21
  %v220 = vmul.f32 %v22, %v22
  %v221 = vmul.f32 %v23, %v23
  %v222 = vmul.f32 %v24, %v24
  %v223 = vmul.f32 %v25, %v25
  %v224 = vmul.f32 %v26, %v26
  %v225 = vmul.f32 %v27, %v27
  %v226 = vmul.f32 %v28, %v28
  %v227 = vmul.f32 %v29, %v29
  %v228 = vmul.f32 %v30, %v30
  %v229 = vmul.f32 %v31, %v31
  %v230 = vmul.f32 %v32, %v32
  %v231 = vmul.f32 %v33, %v33
  %v232 = vmul.f32 %v34, %v34
  %v233 = vmul.f32 %v35, %v35
  %v234 = vmul.f32 %v36, %v36
  %v235 = vmul.f32 %v37, %v37
  %v236 = vmul.f32 %v38, %v38
  %v237 = vmul.f32 %v39, %v39
  %v238 = vmul.f32 %v40, %v40
  %v239 = vmul.f32 %v41, %v41
  %v240 = vmul.f32 %v42, %v42
  %v241 = vmul.f32 %v43, %v43
  %v242 = vmul.f32 %v44, %v44
  %v243 = vmul.f32 %v45, %v45
  %v244 = vmul.f32 %v46, %v46
  %v245 = vmul.f32 %v47, %v47
  %v246 = vmul.f32 %v48, %v48
  %v247 = vmul.f32 %v49, %v49
  %v248 = vmul.f32 %v50, %v50
  %v249 = vmul.f32 %v51, %v51
  %v250 = vmul.f32 %v52, %v52
  %v251 = vmul.f32 %v53, %v53
  %v252 = vmul.f32 %v54, %v54
  %v253 = vmul.f32 %v55, %v55
  %v254 = vmul.f32 %v56, %v56
  %v255 = vmul.f32 %v57, %v57
  %v256 = vmul.f32 %v58, %v58
  %v257 = vmul.f32 %v59, %v59
  %v258 = vmul.f32 %v60, %v60
  %v259 = vmul.f32 %v61, %v61
  %v260 = vmul.f32 %v62, %v62
  %v261 = vmul.f32 %v63, %v63
  %v262 = vmul.f32 %v64, %v64
  %v263 = vmul.f32 %v65, %v65
  %v264 = vmul.f32 %v66, %v66
  %v265 = vmul.f32 %v67, %v67
  %v266 = vmul.f32 %v68, %v68
  %v267 = vmul.f32 %v69, %v69
  %v268 = vmul.f32 %v70, %v70
  %v269 = vmul.f32 %v71, %v71
  %v270 = vmul.f32 %v72, %v72
  %v271 = vmul.f32 %v73, %v73
  %v272 = vsel %vm74, %v208, 0.0
  %v273 = vsel %vm74, %v209, 0.0
  %v274 = vadd.f32 %v272, %v273
  %v275 = vsel %vm74, %v210, 0.0
  %v276 = vadd.f32 %v274, %v275
  %v277 = vsel %vm74, %v211, 0.0
  %v278 = vadd.f32 %v276, %v277
  %v279 = vsel %vm74, %v212, 0.0
  %v280 = vadd.f32 %v278, %v279
  %v281 = vsel %vm74, %v213, 0.0
  %v282 = vadd.f32 %v280, %v281
  %v283 = vsel %vm74, %v214, 0.0
  %v284 = vadd.f32 %v282, %v283
  %v285 = vsel %vm74, %v215, 0.0
  %v286 = vadd.f32 %v284, %v285
  %v287 = vsel %vm74, %v216, 0.0
  %v288 = vadd.f32 %v286, %v287
  %v289 = vsel %vm74, %v217, 0.0
  %v290 = vadd.f32 %v288, %v289
  %v291 = vsel %vm74, %v218, 0.0
  %v292 = vadd.f32 %v290, %v291
  %v293 = vsel %vm74, %v219, 0.0
  %v294 = vadd.f32 %v292, %v293
  %v295 = vsel %vm74, %v220, 0.0
  %v296 = vadd.f32 %v294, %v295
  %v297 = vsel %vm74, %v221, 0.0
  %v298 = vadd.f32 %v296, %v297
  %v299 = vsel %vm74, %v222, 0.0
  %v300 = vadd.f32 %v298, %v299
  %v301 = vsel %vm74, %v223, 0.0
  %v302 = vadd.f32 %v300, %v301
  %v303 = vsel %vm74, %v224, 0.0
  %v304 = vadd.f32 %v302, %v303
  %v305 = vsel %vm74, %v225, 0.0
  %v306 = vadd.f32 %v304, %v305
  %v307 = vsel %vm74, %v226, 0.0
  %v308 = vadd.f32 %v306, %v307
  %v309 = vsel %vm74, %v227, 0.0
  %v310 = vadd.f32 %v308, %v309
  %v311 = vsel %vm74, %v228, 0.0
  %v312 = vadd.f32 %v310, %v311
  %v313 = vsel %vm74, %v229, 0.0
  %v314 = vadd.f32 %v312, %v313
  %v315 = vsel %vm74, %v230, 0.0
  %v316 = vadd.f32 %v314, %v315
  %v317 = vsel %vm74, %v231, 0.0
  %v318 = vadd.f32 %v316, %v317
  %v319 = vsel %vm74, %v232, 0.0
  %v320 = vadd.f32 %v318, %v319
  %v321 = vsel %vm74, %v233, 0.0
  %v322 = vadd.f32 %v320, %v321
  %v323 = vsel %vm74, %v234, 0.0
  %v324 = vadd.f32 %v322, %v323
  %v325 = vsel %vm74, %v235, 0.0
  %v326 = vadd.f32 %v324, %v325
  %v327 = vsel %vm74, %v236, 0.0
  %v328 = vadd.f32 %v326, %v327
  %v329 = vsel %vm74, %v237, 0.0
  %v330 = vadd.f32 %v328, %v329
  %v331 = vsel %vm74, %v238, 0.0
  %v332 = vadd.f32 %v330, %v331
  %v333 = vsel %vm74, %v239, 0.0
  %v334 = vadd.f32 %v332, %v333
  %v335 = vsel %vm74, %v240, 0.0
  %v336 = vadd.f32 %v334, %v335
  %v337 = vsel %vm74, %v241, 0.0
  %v338 = vadd.f32 %v336, %v337
  %v339 = vsel %vm74, %v242, 0.0
  %v340 = vadd.f32 %v338, %v339
  %v341 = vsel %vm74, %v243, 0.0
  %v342 = vadd.f32 %v340, %v341
  %v343 = vsel %vm74, %v244, 0.0
  %v344 = vadd.f32 %v342, %v343
  %v345 = vsel %vm74, %v245, 0.0
  %v346 = vadd.f32 %v344, %v345
  %v347 = vsel %vm74, %v246, 0.0
  %v348 = vadd.f32 %v346, %v347
  %v349 = vsel %vm74, %v247, 0.0
  %v350 = vadd.f32 %v348, %v349
  %v351 = vsel %vm74, %v248, 0.0
  %v352 = vadd.f32 %v350, %v351
  %v353 = vsel %vm74, %v249, 0.0
  %v354 = vadd.f32 %v352, %v353
  %v355 = vsel %vm74, %v250, 0.0
  %v356 = vadd.f32 %v354, %v355
  %v357 = vsel %vm74, %v251, 0.0
  %v358 = vadd.f32 %v356, %v357
  %v359 = vsel %vm74, %v252, 0.0
  %v360 = vadd.f32 %v358, %v359
  %v361 = vsel %vm74, %v253, 0.0
  %v362 = vadd.f32 %v360, %v361
  %v363 = vsel %vm74, %v254, 0.0
  %v364 = vadd.f32 %v362, %v363
  %v365 = vsel %vm74, %v255, 0.0
  %v366 = vadd.f32 %v364, %v365
  %v367 = vsel %vm74, %v256, 0.0
  %v368 = vadd.f32 %v366, %v367
  %v369 = vsel %vm74, %v257, 0.0
  %v370 = vadd.f32 %v368, %v369
  %v371 = vsel %vm74, %v258, 0.0
  %v372 = vadd.f32 %v370, %v371
  %v373 = vsel %vm74, %v259, 0.0
  %v374 = vadd.f32 %v372, %v373
  %v375 = vsel %vm74, %v260, 0.0
  %v376 = vadd.f32 %v374, %v375
  %v377 = vsel %vm74, %v261, 0.0
  %v378 = vadd.f32 %v376, %v377
  %v379 = vsel %vm74, %v262, 0.0
  %v380 = vadd.f32 %v378, %v379
  %v381 = vsel %vm74, %v263, 0.0
  %v382 = vadd.f32 %v380, %v381
  %v383 = vsel %vm74, %v264, 0.0
  %v384 = vadd.f32 %v382, %v383
  %v385 = vsel %vm74, %v265, 0.0
  %v386 = vadd.f32 %v384, %v385
  %v387 = vsel %vm74, %v266, 0.0
  %v388 = vadd.f32 %v386, %v387
  %v389 = vsel %vm74, %v267, 0.0
  %v390 = vadd.f32 %v388, %v389
  %v391 = vsel %vm74, %v268, 0.0
  %v392 = vadd.f32 %v390, %v391
  %v393 = vsel %vm74, %v269, 0.0
  %v394 = vadd.f32 %v392, %v393
  %v395 = vsel %vm74, %v270, 0.0
  %v396 = vadd.f32 %v394, %v395
  %v397 = vsel %vm74, %v271, 0.0
  %v398 = vadd.f32 %v396, %v397
  %v399 = vrot.slane %v398, 4
  %v400 = vadd.f32 %v398, %v399
  %v401 = vrot.slane %v400, 2
  %v402 = vadd.f32 %v400, %v401
  %v403 = vrot.slane %v402, 1
  %v404 = vadd.f32 %v402, %v403
  %p405 = scmp.eq.s32.totalorder 0, 0
  // Predicated region
  $region6: #{generator_forward.20} parent=0 // pred_check
    %p406 = pneg %p405
  $region7: #{generator_forward.20} parent=0 // pred_check_branch
    %408 = sbr.rel (%p406) target = $region9
  $region8: #{generator_forward.20} parent=0 // pred_region
    %vm409 = vcmask 122880
    %410 = vst.msk [vmem:[%s1] sm:$0x1] %vm409, %v207
    %411 = vst.msk [vmem:[%s2] sm:$0x1] %vm409, %v404
  $region9: #{generator_forward.20} parent=0 // pred_fallthru
    _
  %p412 = scmp.gt.s32.totalorder 0, 0
  // Predicated region
  $region10: #{generator_forward.20} parent=0 // pred_check
    %p413 = pneg %p412
  $region11: #{generator_forward.20} parent=0 // pred_check_branch
    %415 = sbr.rel (%p413) target = $region13
  $region12: #{generator_forward.20} parent=0 // pred_region
    %v416 = vld [vmem:[%s1] sm:$0x1]
    %v417 = vadd.f32 %v416, %v207
    %vm418 = vcmask 122880
    %419 = vst.msk [vmem:[%s1] sm:$0x1] %vm418, %v417
    %v420 = vld [vmem:[%s2] sm:$0x1]
    %v421 = vadd.f32 %v420, %v404
    %422 = vst.msk [vmem:[%s2] sm:$0x1] %vm418, %v421
  $region13: #{generator_forward.20} parent=0 // pred_fallthru
    _
  // Predicated region
  $region14: #{generator_forward.20} parent=0 // pred_check
    _
  $region15: #{generator_forward.20} parent=0 // pred_check_branch
    %424 = sbr.rel (0) target = $region17
  $region16: #{generator_forward.20} parent=0 // pred_region
    _
  $region17: #{generator_forward.20} parent=0 // pred_fallthru
    _
  // Predicated region
  $region18: #{generator_forward.20} parent=0 // pred_check
    _
  $region19: #{generator_forward.20} parent=0 // pred_check_branch
    %426 = sbr.rel (0) target = $region21
  $region20: #{generator_forward.20} parent=0 // pred_region
    _
  $region21: #{generator_forward.20} parent=0 // pred_fallthru
    _
  // Predicated region
  $region22: #{generator_forward.20} parent=0 // pred_check
    _
  $region23: #{generator_forward.20} parent=0 // pred_check_branch
    %428 = sbr.rel (0) target = $region25
  $region24: #{generator_forward.20} parent=0 // pred_region
    _
  $region25: #{generator_forward.20} parent=0 // pred_fallthru
    _
  // Predicated region
  $region26: #{generator_forward.20} parent=0 // pred_check
    _
  $region27: #{generator_forward.20} parent=0 // pred_check_branch
    %430 = sbr.rel (0) target = $region29
  $region28: #{generator_forward.20} parent=0 // pred_region
    _
  $region29: #{generator_forward.20} parent=0 // pred_fallthru
    _

// kernel: generator_forward.21
$region0: #{generator_forward.21}
  #allocation0 [shape = 'u32[]', space=smem, size = 0x4, offset = 0x4, fixed_abs, tag = 'smem constant byte address 0x4 - core index']
  #allocation1 [shape = 'u32[72,128]{1,0:T(1,128)}', space=vmem, size = 0x9000, scoped, tag = 'internal scratch']
  %s0 = inlined_call_operand.vmem [shape: f32[512,16], index: 0, kind: input, shape index: {}]
  %s1 = inlined_call_operand.vmem [shape: f32[1,16], index: 1, kind: input, shape index: {}]
  %s2 = inlined_call_operand.vmem [shape: f32[1,16], index: 2, kind: input, shape index: {}]
  %s3 = inlined_call_operand.vmem [shape: bf16[512,16], index: 3, kind: output, shape index: {}]
  %s4 = sld [smem:[#allocation0]]
  $region22: #{generator_forward.21} parent=0
    _
  %s6 = ssub.s32 1, %s4
  %s7 = scalar_select 0, %s6, %s4
  // Predicated region
  $region2: #{generator_forward.21} parent=0 // pred_check
    _
  $region3: #{generator_forward.21} parent=0 // pred_check_branch
    %9 = sbr.rel (0) target = $region5
  $region4: #{generator_forward.21} parent=0 // pred_region
    _
  $region5: #{generator_forward.21} parent=0 // pred_fallthru
    _
  // Predicated region
  $region6: #{generator_forward.21} parent=0 // pred_check
    _
  $region7: #{generator_forward.21} parent=0 // pred_check_branch
    %11 = sbr.rel (0) target = $region9
  $region8: #{generator_forward.21} parent=0 // pred_region
    _
  $region9: #{generator_forward.21} parent=0 // pred_fallthru
    _
  // Predicated region
  $region10: #{generator_forward.21} parent=0 // pred_check
    _
  $region11: #{generator_forward.21} parent=0 // pred_check_branch
    %13 = sbr.rel (0) target = $region13
  $region12: #{generator_forward.21} parent=0 // pred_region
    _
  $region13: #{generator_forward.21} parent=0 // pred_fallthru
    _
  %v14 = vld [vmem:[%s0] sm:$0xff]
  %v15 = vld [vmem:[%s0 + $0x8] sm:$0xff]
  %v16 = vld [vmem:[%s0 + $0x10] sm:$0xff]
  %v17 = vld [vmem:[%s0 + $0x18] sm:$0xff]
  %v18 = vld [vmem:[%s0 + $0x20] sm:$0xff]
  %v19 = vld [vmem:[%s0 + $0x28] sm:$0xff]
  %v20 = vld [vmem:[%s0 + $0x30] sm:$0xff]
  %v21 = vld [vmem:[%s0 + $0x38] sm:$0xff]
  %v22 = vld [vmem:[%s0 + $0x40] sm:$0xff]
  %v23 = vld [vmem:[%s0 + $0x48] sm:$0xff]
  %v24 = vld [vmem:[%s0 + $0x50] sm:$0xff]
  %v25 = vld [vmem:[%s0 + $0x58] sm:$0xff]
  %v26 = vld [vmem:[%s0 + $0x60] sm:$0xff]
  %v27 = vld [vmem:[%s0 + $0x68] sm:$0xff]
  %v28 = vld [vmem:[%s0 + $0x70] sm:$0xff]
  %v29 = vld [vmem:[%s0 + $0x78] sm:$0xff]
  %v30 = vld [vmem:[%s0 + $0x80] sm:$0xff]
  %v31 = vld [vmem:[%s0 + $0x88] sm:$0xff]
  %v32 = vld [vmem:[%s0 + $0x90] sm:$0xff]
  %v33 = vld [vmem:[%s0 + $0x98] sm:$0xff]
  %v34 = vld [vmem:[%s0 + $0xa0] sm:$0xff]
  %v35 = vld [vmem:[%s0 + $0xa8] sm:$0xff]
  %v36 = vld [vmem:[%s0 + $0xb0] sm:$0xff]
  %v37 = vld [vmem:[%s0 + $0xb8] sm:$0xff]
  %v38 = vld [vmem:[%s0 + $0xc0] sm:$0xff]
  %v39 = vld [vmem:[%s0 + $0xc8] sm:$0xff]
  %v40 = vld [vmem:[%s0 + $0xd0] sm:$0xff]
  %v41 = vld [vmem:[%s0 + $0xd8] sm:$0xff]
  %v42 = vld [vmem:[%s0 + $0xe0] sm:$0xff]
  %v43 = vld [vmem:[%s0 + $0xe8] sm:$0xff]
  %v44 = vld [vmem:[%s0 + $0xf0] sm:$0xff]
  %v45 = vld [vmem:[%s0 + $0xf8] sm:$0xff]
  %v46 = vld [vmem:[%s0 + $0x100] sm:$0xff]
  %v47 = vld [vmem:[%s0 + $0x108] sm:$0xff]
  %v48 = vld [vmem:[%s0 + $0x110] sm:$0xff]
  %v49 = vld [vmem:[%s0 + $0x118] sm:$0xff]
  %v50 = vld [vmem:[%s0 + $0x120] sm:$0xff]
  %v51 = vld [vmem:[%s0 + $0x128] sm:$0xff]
  %v52 = vld [vmem:[%s0 + $0x130] sm:$0xff]
  %v53 = vld [vmem:[%s0 + $0x138] sm:$0xff]
  %v54 = vld [vmem:[%s0 + $0x140] sm:$0xff]
  %v55 = vld [vmem:[%s0 + $0x148] sm:$0xff]
  %v56 = vld [vmem:[%s0 + $0x150] sm:$0xff]
  %v57 = vld [vmem:[%s0 + $0x158] sm:$0xff]
  %v58 = vld [vmem:[%s0 + $0x160] sm:$0xff]
  %v59 = vld [vmem:[%s0 + $0x168] sm:$0xff]
  %v60 = vld [vmem:[%s0 + $0x170] sm:$0xff]
  %v61 = vld [vmem:[%s0 + $0x178] sm:$0xff]
  %v62 = vld [vmem:[%s0 + $0x180] sm:$0xff]
  %v63 = vld [vmem:[%s0 + $0x188] sm:$0xff]
  %v64 = vld [vmem:[%s0 + $0x190] sm:$0xff]
  %v65 = vld [vmem:[%s0 + $0x198] sm:$0xff]
  %v66 = vld [vmem:[%s0 + $0x1a0] sm:$0xff]
  %v67 = vld [vmem:[%s0 + $0x1a8] sm:$0xff]
  %v68 = vld [vmem:[%s0 + $0x1b0] sm:$0xff]
  %v69 = vld [vmem:[%s0 + $0x1b8] sm:$0xff]
  %v70 = vld [vmem:[%s0 + $0x1c0] sm:$0xff]
  %v71 = vld [vmem:[%s0 + $0x1c8] sm:$0xff]
  %v72 = vld [vmem:[%s0 + $0x1d0] sm:$0xff]
  %v73 = vld [vmem:[%s0 + $0x1d8] sm:$0xff]
  %v74 = vld [vmem:[%s0 + $0x1e0] sm:$0xff]
  %v75 = vld [vmem:[%s0 + $0x1e8] sm:$0xff]
  %v76 = vld [vmem:[%s0 + $0x1f0] sm:$0xff]
  %v77 = vld [vmem:[%s0 + $0x1f8] sm:$0xff]
  %v78 = vld [vmem:[%s1] sm:$0x1]
  %v80 = vperm.slane %v78, 0
  %v82 = vmul.f32 %v14, %v80
  %v83 = vmul.f32 %v15, %v80
  %v84 = vmul.f32 %v16, %v80
  %v85 = vmul.f32 %v17, %v80
  %v86 = vmul.f32 %v18, %v80
  %v87 = vmul.f32 %v19, %v80
  %v88 = vmul.f32 %v20, %v80
  %v89 = vmul.f32 %v21, %v80
  %v90 = vmul.f32 %v22, %v80
  %v91 = vmul.f32 %v23, %v80
  %v92 = vmul.f32 %v24, %v80
  %v93 = vmul.f32 %v25, %v80
  %v94 = vmul.f32 %v26, %v80
  %v95 = vmul.f32 %v27, %v80
  %v96 = vmul.f32 %v28, %v80
  %v97 = vmul.f32 %v29, %v80
  %v98 = vmul.f32 %v30, %v80
  %v99 = vmul.f32 %v31, %v80
  %v100 = vmul.f32 %v32, %v80
  %v101 = vmul.f32 %v33, %v80
  %v102 = vmul.f32 %v34, %v80
  %v103 = vmul.f32 %v35, %v80
  %v104 = vmul.f32 %v36, %v80
  %v105 = vmul.f32 %v37, %v80
  %v106 = vmul.f32 %v38, %v80
  %v107 = vmul.f32 %v39, %v80
  %v108 = vmul.f32 %v40, %v80
  %v109 = vmul.f32 %v41, %v80
  %v110 = vmul.f32 %v42, %v80
  %v111 = vmul.f32 %v43, %v80
  %v112 = vmul.f32 %v44, %v80
  %v113 = vmul.f32 %v45, %v80
  %v114 = vmul.f32 %v46, %v80
  %v115 = vmul.f32 %v47, %v80
  %v116 = vmul.f32 %v48, %v80
  %v117 = vmul.f32 %v49, %v80
  %v118 = vmul.f32 %v50, %v80
  %v119 = vmul.f32 %v51, %v80
  %v120 = vmul.f32 %v52, %v80
  %v121 = vmul.f32 %v53, %v80
  %v122 = vmul.f32 %v54, %v80
  %v123 = vmul.f32 %v55, %v80
  %v124 = vmul.f32 %v56, %v80
  %v125 = vmul.f32 %v57, %v80
  %v126 = vmul.f32 %v58, %v80
  %v127 = vmul.f32 %v59, %v80
  %v128 = vmul.f32 %v60, %v80
  %v129 = vmul.f32 %v61, %v80
  %v130 = vmul.f32 %v62, %v80
  %v131 = vmul.f32 %v63, %v80
  %v132 = vmul.f32 %v64, %v80
  %v133 = vmul.f32 %v65, %v80
  %v134 = vmul.f32 %v66, %v80
  %v135 = vmul.f32 %v67, %v80
  %v136 = vmul.f32 %v68, %v80
  %v137 = vmul.f32 %v69, %v80
  %v138 = vmul.f32 %v70, %v80
  %v139 = vmul.f32 %v71, %v80
  %v140 = vmul.f32 %v72, %v80
  %v141 = vmul.f32 %v73, %v80
  %v142 = vmul.f32 %v74, %v80
  %v143 = vmul.f32 %v75, %v80
  %v144 = vmul.f32 %v76, %v80
  %v145 = vmul.f32 %v77, %v80
  %v146 = vld [vmem:[%s2] sm:$0x1]
  %v148 = vperm.slane %v146, 0
  %v150 = vadd.f32 %v82, %v148
  %v151 = vadd.f32 %v83, %v148
  %v152 = vadd.f32 %v84, %v148
  %v153 = vadd.f32 %v85, %v148
  %v154 = vadd.f32 %v86, %v148
  %v155 = vadd.f32 %v87, %v148
  %v156 = vadd.f32 %v88, %v148
  %v157 = vadd.f32 %v89, %v148
  %v158 = vadd.f32 %v90, %v148
  %v159 = vadd.f32 %v91, %v148
  %v160 = vadd.f32 %v92, %v148
  %v161 = vadd.f32 %v93, %v148
  %v162 = vadd.f32 %v94, %v148
  %v163 = vadd.f32 %v95, %v148
  %v164 = vadd.f32 %v96, %v148
  %v165 = vadd.f32 %v97, %v148
  %v166 = vadd.f32 %v98, %v148
  %v167 = vadd.f32 %v99, %v148
  %v168 = vadd.f32 %v100, %v148
  %v169 = vadd.f32 %v101, %v148
  %v170 = vadd.f32 %v102, %v148
  %v171 = vadd.f32 %v103, %v148
  %v172 = vadd.f32 %v104, %v148
  %v173 = vadd.f32 %v105, %v148
  %v174 = vadd.f32 %v106, %v148
  %v175 = vadd.f32 %v107, %v148
  %v176 = vadd.f32 %v108, %v148
  %v177 = vadd.f32 %v109, %v148
  %v178 = vadd.f32 %v110, %v148
  %v179 = vadd.f32 %v111, %v148
  %v180 = vadd.f32 %v112, %v148
  %v181 = vadd.f32 %v113, %v148
  %v182 = vadd.f32 %v114, %v148
  %v183 = vadd.f32 %v115, %v148
  %v184 = vadd.f32 %v116, %v148
  %v185 = vadd.f32 %v117, %v148
  %v186 = vadd.f32 %v118, %v148
  %v187 = vadd.f32 %v119, %v148
  %v188 = vadd.f32 %v120, %v148
  %v189 = vadd.f32 %v121, %v148
  %v190 = vadd.f32 %v122, %v148
  %v191 = vadd.f32 %v123, %v148
  %v192 = vadd.f32 %v124, %v148
  %v193 = vadd.f32 %v125, %v148
  %v194 = vadd.f32 %v126, %v148
  %v195 = vadd.f32 %v127, %v148
  %v196 = vadd.f32 %v128, %v148
  %v197 = vadd.f32 %v129, %v148
  %v198 = vadd.f32 %v130, %v148
  %v199 = vadd.f32 %v131, %v148
  %v200 = vadd.f32 %v132, %v148
  %v201 = vadd.f32 %v133, %v148
  %v202 = vadd.f32 %v134, %v148
  %v203 = vadd.f32 %v135, %v148
  %v204 = vadd.f32 %v136, %v148
  %v205 = vadd.f32 %v137, %v148
  %v206 = vadd.f32 %v138, %v148
  %v207 = vadd.f32 %v139, %v148
  %v208 = vadd.f32 %v140, %v148
  %v209 = vadd.f32 %v141, %v148
  %v210 = vadd.f32 %v142, %v148
  %v211 = vadd.f32 %v143, %v148
  %v212 = vadd.f32 %v144, %v148
  %v213 = vadd.f32 %v145, %v148
  %v214 = vmax.f32 %v150, 0.0
  %v215 = vmax.f32 %v151, 0.0
  %v216 = vmax.f32 %v152, 0.0
  %v217 = vmax.f32 %v153, 0.0
  %v218 = vmax.f32 %v154, 0.0
  %v219 = vmax.f32 %v155, 0.0
  %v220 = vmax.f32 %v156, 0.0
  %v221 = vmax.f32 %v157, 0.0
  %v222 = vmax.f32 %v158, 0.0
  %v223 = vmax.f32 %v159, 0.0
  %v224 = vmax.f32 %v160, 0.0
  %v225 = vmax.f32 %v161, 0.0
  %v226 = vmax.f32 %v162, 0.0
  %v227 = vmax.f32 %v163, 0.0
  %v228 = vmax.f32 %v164, 0.0
  %v229 = vmax.f32 %v165, 0.0
  %v230 = vmax.f32 %v166, 0.0
  %v231 = vmax.f32 %v167, 0.0
  %v232 = vmax.f32 %v168, 0.0
  %v233 = vmax.f32 %v169, 0.0
  %v234 = vmax.f32 %v170, 0.0
  %v235 = vmax.f32 %v171, 0.0
  %v236 = vmax.f32 %v172, 0.0
  %v237 = vmax.f32 %v173, 0.0
  %v238 = vmax.f32 %v174, 0.0
  %v239 = vmax.f32 %v175, 0.0
  %v240 = vmax.f32 %v176, 0.0
  %v241 = vmax.f32 %v177, 0.0
  %v242 = vmax.f32 %v178, 0.0
  %v243 = vmax.f32 %v179, 0.0
  %v244 = vmax.f32 %v180, 0.0
  %v245 = vmax.f32 %v181, 0.0
  %v246 = vmax.f32 %v182, 0.0
  %v247 = vmax.f32 %v183, 0.0
  %v248 = vmax.f32 %v184, 0.0
  %v249 = vmax.f32 %v185, 0.0
  %v250 = vmax.f32 %v186, 0.0
  %v251 = vmax.f32 %v187, 0.0
  %v252 = vmax.f32 %v188, 0.0
  %v253 = vmax.f32 %v189, 0.0
  %v254 = vmax.f32 %v190, 0.0
  %v255 = vmax.f32 %v191, 0.0
  %v256 = vmax.f32 %v192, 0.0
  %v257 = vmax.f32 %v193, 0.0
  %v258 = vmax.f32 %v194, 0.0
  %v259 = vmax.f32 %v195, 0.0
  %v260 = vmax.f32 %v196, 0.0
  %v261 = vmax.f32 %v197, 0.0
  %v262 = vmax.f32 %v198, 0.0
  %v263 = vmax.f32 %v199, 0.0
  %v264 = vmax.f32 %v200, 0.0
  %v265 = vmax.f32 %v201, 0.0
  %v266 = vmax.f32 %v202, 0.0
  %v267 = vmax.f32 %v203, 0.0
  %v268 = vmax.f32 %v204, 0.0
  %v269 = vmax.f32 %v205, 0.0
  %v270 = vmax.f32 %v206, 0.0
  %v271 = vmax.f32 %v207, 0.0
  %v272 = vmax.f32 %v208, 0.0
  %v273 = vmax.f32 %v209, 0.0
  %v274 = vmax.f32 %v210, 0.0
  %v275 = vmax.f32 %v211, 0.0
  %v276 = vmax.f32 %v212, 0.0
  %v277 = vmax.f32 %v213, 0.0
  %v278 = vpack.c.bf16 %v214, %v214
  %v279 = vpack.c.bf16 %v215, %v215
  %v280 = vpack.c.bf16 %v216, %v216
  %v281 = vpack.c.bf16 %v217, %v217
  %v282 = vpack.c.bf16 %v218, %v218
  %v283 = vpack.c.bf16 %v219, %v219
  %v284 = vpack.c.bf16 %v220, %v220
  %v285 = vpack.c.bf16 %v221, %v221
  %v286 = vpack.c.bf16 %v222, %v222
  %v287 = vpack.c.bf16 %v223, %v223
  %v288 = vpack.c.bf16 %v224, %v224
  %v289 = vpack.c.bf16 %v225, %v225
  %v290 = vpack.c.bf16 %v226, %v226
  %v291 = vpack.c.bf16 %v227, %v227
  %v292 = vpack.c.bf16 %v228, %v228
  %v293 = vpack.c.bf16 %v229, %v229
  %v294 = vpack.c.bf16 %v230, %v230
  %v295 = vpack.c.bf16 %v231, %v231
  %v296 = vpack.c.bf16 %v232, %v232
  %v297 = vpack.c.bf16 %v233, %v233
  %v298 = vpack.c.bf16 %v234, %v234
  %v299 = vpack.c.bf16 %v235, %v235
  %v300 = vpack.c.bf16 %v236, %v236
  %v301 = vpack.c.bf16 %v237, %v237
  %v302 = vpack.c.bf16 %v238, %v238
  %v303 = vpack.c.bf16 %v239, %v239
  %v304 = vpack.c.bf16 %v240, %v240
  %v305 = vpack.c.bf16 %v241, %v241
  %v306 = vpack.c.bf16 %v242, %v242
  %v307 = vpack.c.bf16 %v243, %v243
  %v308 = vpack.c.bf16 %v244, %v244
  %v309 = vpack.c.bf16 %v245, %v245
  %v310 = vpack.c.bf16 %v246, %v246
  %v311 = vpack.c.bf16 %v247, %v247
  %v312 = vpack.c.bf16 %v248, %v248
  %v313 = vpack.c.bf16 %v249, %v249
  %v314 = vpack.c.bf16 %v250, %v250
  %v315 = vpack.c.bf16 %v251, %v251
  %v316 = vpack.c.bf16 %v252, %v252
  %v317 = vpack.c.bf16 %v253, %v253
  %v318 = vpack.c.bf16 %v254, %v254
  %v319 = vpack.c.bf16 %v255, %v255
  %v320 = vpack.c.bf16 %v256, %v256
  %v321 = vpack.c.bf16 %v257, %v257
  %v322 = vpack.c.bf16 %v258, %v258
  %v323 = vpack.c.bf16 %v259, %v259
  %v324 = vpack.c.bf16 %v260, %v260
  %v325 = vpack.c.bf16 %v261, %v261
  %v326 = vpack.c.bf16 %v262, %v262
  %v327 = vpack.c.bf16 %v263, %v263
  %v328 = vpack.c.bf16 %v264, %v264
  %v329 = vpack.c.bf16 %v265, %v265
  %v330 = vpack.c.bf16 %v266, %v266
  %v331 = vpack.c.bf16 %v267, %v267
  %v332 = vpack.c.bf16 %v268, %v268
  %v333 = vpack.c.bf16 %v269, %v269
  %v334 = vpack.c.bf16 %v270, %v270
  %v335 = vpack.c.bf16 %v271, %v271
  %v336 = vpack.c.bf16 %v272, %v272
  %v337 = vpack.c.bf16 %v273, %v273
  %v338 = vpack.c.bf16 %v274, %v274
  %v339 = vpack.c.bf16 %v275, %v275
  %v340 = vpack.c.bf16 %v276, %v276
  %v341 = vpack.c.bf16 %v277, %v277
  %vm342 = vcmask 125952
  %343 = vst.msk [vmem:[%s3] sm:$0xf] %vm342, %v278
  %344 = vst.msk [vmem:[%s3 + $0x4] sm:$0xf] %vm342, %v279
  %345 = vst.msk [vmem:[%s3 + $0x8] sm:$0xf] %vm342, %v280
  %346 = vst.msk [vmem:[%s3 + $0xc] sm:$0xf] %vm342, %v281
  %347 = vst.msk [vmem:[%s3 + $0x10] sm:$0xf] %vm342, %v282
  %348 = vst.msk [vmem:[%s3 + $0x14] sm:$0xf] %vm342, %v283
  %349 = vst.msk [vmem:[%s3 + $0x18] sm:$0xf] %vm342, %v284
  %350 = vst.msk [vmem:[%s3 + $0x1c] sm:$0xf] %vm342, %v285
  %351 = vst.msk [vmem:[%s3 + $0x20] sm:$0xf] %vm342, %v286
  %352 = vst.msk [vmem:[%s3 + $0x24] sm:$0xf] %vm342, %v287
  %353 = vst.msk [vmem:[%s3 + $0x28] sm:$0xf] %vm342, %v288
  %354 = vst.msk [vmem:[%s3 + $0x2c] sm:$0xf] %vm342, %v289
  %355 = vst.msk [vmem:[%s3 + $0x30] sm:$0xf] %vm342, %v290
  %356 = vst.msk [vmem:[%s3 + $0x34] sm:$0xf] %vm342, %v291
  %357 = vst.msk [vmem:[%s3 + $0x38] sm:$0xf] %vm342, %v292
  %358 = vst.msk [vmem:[%s3 + $0x3c] sm:$0xf] %vm342, %v293
  %359 = vst.msk [vmem:[%s3 + $0x40] sm:$0xf] %vm342, %v294
  %360 = vst.msk [vmem:[%s3 + $0x44] sm:$0xf] %vm342, %v295
  %361 = vst.msk [vmem:[%s3 + $0x48] sm:$0xf] %vm342, %v296
  %362 = vst.msk [vmem:[%s3 + $0x4c] sm:$0xf] %vm342, %v297
  %363 = vst.msk [vmem:[%s3 + $0x50] sm:$0xf] %vm342, %v298
  %364 = vst.msk [vmem:[%s3 + $0x54] sm:$0xf] %vm342, %v299
  %365 = vst.msk [vmem:[%s3 + $0x58] sm:$0xf] %vm342, %v300
  %366 = vst.msk [vmem:[%s3 + $0x5c] sm:$0xf] %vm342, %v301
  %367 = vst.msk [vmem:[%s3 + $0x60] sm:$0xf] %vm342, %v302
  %368 = vst.msk [vmem:[%s3 + $0x64] sm:$0xf] %vm342, %v303
  %369 = vst.msk [vmem:[%s3 + $0x68] sm:$0xf] %vm342, %v304
  %370 = vst.msk [vmem:[%s3 + $0x6c] sm:$0xf] %vm342, %v305
  %371 = vst.msk [vmem:[%s3 + $0x70] sm:$0xf] %vm342, %v306
  %372 = vst.msk [vmem:[%s3 + $0x74] sm:$0xf] %vm342, %v307
  %373 = vst.msk [vmem:[%s3 + $0x78] sm:$0xf] %vm342, %v308
  %374 = vst.msk [vmem:[%s3 + $0x7c] sm:$0xf] %vm342, %v309
  %375 = vst.msk [vmem:[%s3 + $0x80] sm:$0xf] %vm342, %v310
  %376 = vst.msk [vmem:[%s3 + $0x84] sm:$0xf] %vm342, %v311
  %377 = vst.msk [vmem:[%s3 + $0x88] sm:$0xf] %vm342, %v312
  %378 = vst.msk [vmem:[%s3 + $0x8c] sm:$0xf] %vm342, %v313
  %379 = vst.msk [vmem:[%s3 + $0x90] sm:$0xf] %vm342, %v314
  %380 = vst.msk [vmem:[%s3 + $0x94] sm:$0xf] %vm342, %v315
  %381 = vst.msk [vmem:[%s3 + $0x98] sm:$0xf] %vm342, %v316
  %382 = vst.msk [vmem:[%s3 + $0x9c] sm:$0xf] %vm342, %v317
  %383 = vst.msk [vmem:[%s3 + $0xa0] sm:$0xf] %vm342, %v318
  %384 = vst.msk [vmem:[%s3 + $0xa4] sm:$0xf] %vm342, %v319
  %385 = vst.msk [vmem:[%s3 + $0xa8] sm:$0xf] %vm342, %v320
  %386 = vst.msk [vmem:[%s3 + $0xac] sm:$0xf] %vm342, %v321
  %387 = vst.msk [vmem:[%s3 + $0xb0] sm:$0xf] %vm342, %v322
  %388 = vst.msk [vmem:[%s3 + $0xb4] sm:$0xf] %vm342, %v323
  %389 = vst.msk [vmem:[%s3 + $0xb8] sm:$0xf] %vm342, %v324
  %390 = vst.msk [vmem:[%s3 + $0xbc] sm:$0xf] %vm342, %v325
  %391 = vst.msk [vmem:[%s3 + $0xc0] sm:$0xf] %vm342, %v326
  %392 = vst.msk [vmem:[%s3 + $0xc4] sm:$0xf] %vm342, %v327
  %393 = vst.msk [vmem:[%s3 + $0xc8] sm:$0xf] %vm342, %v328
  %394 = vst.msk [vmem:[%s3 + $0xcc] sm:$0xf] %vm342, %v329
  %395 = vst.msk [vmem:[%s3 + $0xd0] sm:$0xf] %vm342, %v330
  %396 = vst.msk [vmem:[%s3 + $0xd4] sm:$0xf] %vm342, %v331
  %397 = vst.msk [vmem:[%s3 + $0xd8] sm:$0xf] %vm342, %v332
  %398 = vst.msk [vmem:[%s3 + $0xdc] sm:$0xf] %vm342, %v333
  %399 = vst.msk [vmem:[%s3 + $0xe0] sm:$0xf] %vm342, %v334
  %400 = vst.msk [vmem:[%s3 + $0xe4] sm:$0xf] %vm342, %v335
  %401 = vst.msk [vmem:[%s3 + $0xe8] sm:$0xf] %vm342, %v336
  %402 = vst.msk [vmem:[%s3 + $0xec] sm:$0xf] %vm342, %v337
  %403 = vst.msk [vmem:[%s3 + $0xf0] sm:$0xf] %vm342, %v338
  %404 = vst.msk [vmem:[%s3 + $0xf4] sm:$0xf] %vm342, %v339
  %405 = vst.msk [vmem:[%s3 + $0xf8] sm:$0xf] %vm342, %v340
  %406 = vst.msk [vmem:[%s3 + $0xfc] sm:$0xf] %vm342, %v341
  // Predicated region
  $region14: #{generator_forward.21} parent=0 // pred_check
    _
  $region15: #{generator_forward.21} parent=0 // pred_check_branch
    %408 = sbr.rel (0) target = $region17
  $region16: #{generator_forward.21} parent=0 // pred_region
    _
  $region17: #{generator_forward.21} parent=0 // pred_fallthru
    _
  // Predicated region
  $region18: #{generator_forward.21} parent=0 // pred_check
    _
  $region19: #{generator_forward.21} parent=0 // pred_check_branch
    %410 = sbr.rel (0) target = $region21
  $region20: #{generator_forward.21} parent=0 // pred_region
    _
  $region21: #{generator_forward.21} parent=0 // pred_fallthru
    _

// kernel: generator_forward.22
$region0: #{generator_forward.22}
  #allocation0 [shape = 'u32[]', space=smem, size = 0x4, offset = 0x4, fixed_abs, tag = 'smem constant byte address 0x4 - core index']
  #allocation1 [shape = 'u32[72,128]{1,0:T(1,128)}', space=vmem, size = 0x9000, scoped, tag = 'internal scratch']
  #allocation2 [shape = 'f32[512,128]{1,0:T(8,128)}', space=vmem, size = 0x40000, scoped, tag = 'scratch operand']
  %s0 = inlined_call_operand.vmem [shape: bf16[4,512,128], index: 0, kind: input, shape index: {}]
  %s1 = inlined_call_operand.vmem [shape: bf16[4,128,128], index: 1, kind: input, shape index: {}]
  %s2 = inlined_call_operand.vmem [shape: f32[4,512,128], index: 2, kind: output, shape index: {}]
  %s3 = sld [smem:[#allocation0]]
  $region49: #{generator_forward.22} parent=0
    _
  %s5 = ssub.s32 1, %s3
  %s6 = scalar_select 0, %s5, %s3
  loop: start=0, step=1, limit=6
  $region2: #{generator_forward.22} parent=0 // loop_pre_header
    _
  $region3: #{generator_forward.22} parent=0 // loop_header
    %s8 = sphi 0, %s12
    %p9 = scmp.ge.s32.totalorder %s8, 6
    %s15 = sphi 0, %s41
    %s16 = sphi 0, %s37
    %s17 = sphi 0, %s33
    %s18 = sphi 0, %s29
    %s19 = sphi 0, %s15
    %s20 = sphi 0, %s16
    %s21 = sphi 0, %s17
    %s22 = sphi 0, %s18
    %s23 = sphi 0, %s19
    %s24 = sphi 0, %s20
    %s25 = sphi 0, %s21
    %s26 = sphi 0, %s22
    %s48 = sphi 0, %s50
    %s51 = sphi 0, %s48
    %s52 = sphi 0, %s51
    %s68 = sphi 0, %s52
    %s78 = sphi 0, %s80
    %s81 = sphi 0, %s78
    %s82 = sphi 0, %s81
    %s98 = sphi 0, %s82
    %s108 = sphi 0, %s110
    %s111 = sphi 0, %s108
    %s112 = sphi 0, %s111
    %s128 = sphi 0, %s112
  $region4: #{generator_forward.22} parent=0 // loop_header_branch
    %11 = sbr.rel (%p9) target = $region8
  $region5: #{generator_forward.22} parent=0 // loop_body
    %s13 = ssub.s32 %s8, 1
    %s14 = ssub.s32 %s8, 2
    %s27 = sadd.s32 1, %s18
    %p28 = scmp.ge.s32.totalorder %s27, 1
    %s29 = scalar_select %p28, 0, %s27
    %s30 = sadd.s32 1, %s17
    %s31 = scalar_select %p28, %s30, %s17
    %p32 = scmp.ge.s32.totalorder %s31, 1
    %s33 = scalar_select %p32, 0, %s31
    %s34 = sadd.s32 1, %s16
    %s35 = scalar_select %p32, %s34, %s16
    %p36 = scmp.ge.s32.totalorder %s35, 1
    %s37 = scalar_select %p36, 0, %s35
    %s38 = sadd.s32 1, %s15
    %s39 = scalar_select %p36, %s38, %s15
    %p40 = scmp.ge.s32.totalorder %s39, 4
    %s41 = scalar_select %p40, 0, %s39
    %s42 = ssub.s32 %s15, %s41
    %s43 = ssub.s32 %s16, %s37
    %s44 = sor.u32 %s42, %s43
    %s45 = ssub.s32 %s18, %s29
    %s46 = sor.u32 %s44, %s45
    %p47 = scmp.eq.s32.totalorder %s46, 0
    %s49 = sadd.s32 %s48, 1
    %s50 = scalar_select %p47, %s48, %s49
    %p53 = pneg %p47
    %p54 = scmp.eq.s32.totalorder %s8, 3
    %p55 = por %p53, %p54
    %p56 = scmp.ne.s32.totalorder %s48, %s51
    %p57 = scmp.eq.s32.totalorder %s8, 0
    %p58 = por %p56, %p57
    %p59 = scmp.ne.s32.totalorder %s48, %s51
    %p60 = scmp.eq.s32.totalorder %s13, 3
    %p61 = por %p59, %p60
    %p62 = scmp.ne.s32.totalorder %s51, %s52
    %p63 = scmp.eq.s32.totalorder %s13, 0
    %p64 = por %p62, %p63
    %p65 = scmp.ne.s32.totalorder %s51, %s52
    %p66 = scmp.eq.s32.totalorder %s14, 3
    %p67 = por %p65, %p66
    %p69 = scmp.ne.s32.totalorder %s52, %s68
    %p70 = scmp.eq.s32.totalorder %s14, 0
    %p71 = por %p69, %p70
    %s72 = ssub.s32 %s15, %s41
    %s73 = ssub.s32 %s18, %s29
    %s74 = sor.u32 %s72, %s73
    %s75 = ssub.s32 %s17, %s33
    %s76 = sor.u32 %s74, %s75
    %p77 = scmp.eq.s32.totalorder %s76, 0
    %s79 = sadd.s32 %s78, 1
    %s80 = scalar_select %p77, %s78, %s79
    %p83 = pneg %p77
    %p84 = scmp.eq.s32.totalorder %s8, 3
    %p85 = por %p83, %p84
    %p86 = scmp.ne.s32.totalorder %s78, %s81
    %p87 = scmp.eq.s32.totalorder %s8, 0
    %p88 = por %p86, %p87
    %p89 = scmp.ne.s32.totalorder %s78, %s81
    %p90 = scmp.eq.s32.totalorder %s13, 3
    %p91 = por %p89, %p90
    %p92 = scmp.ne.s32.totalorder %s81, %s82
    %p93 = scmp.eq.s32.totalorder %s13, 0
    %p94 = por %p92, %p93
    %p95 = scmp.ne.s32.totalorder %s81, %s82
    %p96 = scmp.eq.s32.totalorder %s14, 3
    %p97 = por %p95, %p96
    %p99 = scmp.ne.s32.totalorder %s82, %s98
    %p100 = scmp.eq.s32.totalorder %s14, 0
    %p101 = por %p99, %p100
    %s102 = ssub.s32 %s15, %s41
    %s103 = ssub.s32 %s16, %s37
    %s104 = sor.u32 %s102, %s103
    %s105 = ssub.s32 %s17, %s33
    %s106 = sor.u32 %s104, %s105
    %p107 = scmp.eq.s32.totalorder %s106, 0
    %s109 = sadd.s32 %s108, 1
    %s110 = scalar_select %p107, %s108, %s109
    %p113 = pneg %p107
    %p114 = scmp.eq.s32.totalorder %s8, 3
    %p115 = por %p113, %p114
    %p116 = scmp.ne.s32.totalorder %s108, %s111
    %p117 = scmp.eq.s32.totalorder %s8, 0
    %p118 = por %p116, %p117
    %p119 = scmp.ne.s32.totalorder %s108, %s111
    %p120 = scmp.eq.s32.totalorder %s13, 3
    %p121 = por %p119, %p120
    %p122 = scmp.ne.s32.totalorder %s111, %s112
    %p123 = scmp.eq.s32.totalorder %s13, 0
    %p124 = por %p122, %p123
    %p125 = scmp.ne.s32.totalorder %s111, %s112
    %p126 = scmp.eq.s32.totalorder %s14, 3
    %p127 = por %p125, %p126
    %p129 = scmp.ne.s32.totalorder %s112, %s128
    %p130 = scmp.eq.s32.totalorder %s14, 0
    %p131 = por %p129, %p130
    %p132 = scmp.le.s32.totalorder 1, %s8
    %p133 = scmp.lt.s32.totalorder %s8, 5
    %p134 = pnand %p132, %p133
    %p135 = pneg %p134
    // Predicated region
    $region9: #{generator_forward.22} parent=5 // pred_check
      _
    $region10: #{generator_forward.22} parent=5 // pred_check_branch
      %137 = sbr.rel (%p134) target = $region12
    $region11: #{generator_forward.22} parent=5 // pred_region
      %s138 = ssub.s32 %s8, 1
    $region12: #{generator_forward.22} parent=5 // pred_fallthru
      _
    %p139 = scmp.lt.s32.totalorder %s8, 4
    // Predicated region
    $region13: #{generator_forward.22} parent=5 // pred_check
      %p140 = pneg %p139
    $region14: #{generator_forward.22} parent=5 // pred_check_branch
      %142 = sbr.rel (%p140) target = $region16
    $region15: #{generator_forward.22} parent=5 // pred_region
      // Predicated region
      $region17: #{generator_forward.22} parent=15 // pred_check
        %p143 = pneg %p58
      $region18: #{generator_forward.22} parent=15 // pred_check_branch
        %145 = sbr.rel (%p143) target = $region20
      $region19: #{generator_forward.22} parent=15 // pred_region
        %s146 = smul.u32 64, %s16
        %p147 = scmp.lt.s32.totalorder %s15, 3
        %s148 = scalar_select %p147, %s15, 3
        %p149 = scmp.lt.s32.totalorder %s146, 63
        %s150 = scalar_select %p149, %s146, 63
        %p151 = scmp.lt.s32.totalorder %s18, 0
        %s152 = scalar_select %p151, %s18, 0
        %s153 = sadd.s32 %s152, %s150
        %s154 = smul.addr %s148, 64
        %s155 = sadd.s32 %s153, %s154
        %s156 = smul.addr %s155, 4
        %s157 = scalar_lea.vmem %s0, %s156
        %s158 = smul.u32 64, %s16
      $region20: #{generator_forward.22} parent=15 // pred_fallthru
        _
      // Predicated region
      $region21: #{generator_forward.22} parent=15 // pred_check
        %p159 = pneg %p88
      $region22: #{generator_forward.22} parent=15 // pred_check_branch
        %161 = sbr.rel (%p159) target = $region24
      $region23: #{generator_forward.22} parent=15 // pred_region
        %s162 = smul.u32 16, %s18
        %p163 = scmp.lt.s32.totalorder %s15, 3
        %s164 = scalar_select %p163, %s15, 3
        %p165 = scmp.lt.s32.totalorder %s162, 15
        %s166 = scalar_select %p165, %s162, 15
        %p167 = scmp.lt.s32.totalorder %s17, 0
        %s168 = scalar_select %p167, %s17, 0
        %s169 = sadd.s32 %s168, %s166
        %s170 = smul.addr %s164, 16
        %s171 = sadd.s32 %s169, %s170
        %s172 = smul.addr %s171, 4
        %s173 = scalar_lea.vmem %s1, %s172
        %s174 = smul.u32 16, %s18
      $region24: #{generator_forward.22} parent=15 // pred_fallthru
        _
    $region16: #{generator_forward.22} parent=5 // pred_fallthru
      _
    %p175 = scmp.le.s32.totalorder 1, %s8
    %p176 = scmp.lt.s32.totalorder %s8, 5
    %p177 = pnand %p175, %p176
    %p178 = pneg %p177
    // Predicated region
    $region25: #{generator_forward.22} parent=5 // pred_check
      _
    $region26: #{generator_forward.22} parent=5 // pred_check_branch
      %180 = sbr.rel (%p177) target = $region28
    $region27: #{generator_forward.22} parent=5 // pred_region
      %s181 = ssub.s32 %s8, 1
      %s182 = smul.u32 64, %s20
      %p183 = scmp.lt.s32.totalorder %s19, 3
      %s184 = scalar_select %p183, %s19, 3
      %p185 = scmp.lt.s32.totalorder %s182, 63
      %s186 = scalar_select %p185, %s182, 63
      %p187 = scmp.lt.s32.totalorder %s22, 0
      %s188 = scalar_select %p187, %s22, 0
      %s189 = sadd.s32 %s188, %s186
      %s190 = smul.addr %s184, 64
      %s191 = sadd.s32 %s189, %s190
      %s192 = smul.addr %s191, 4
      %s193 = scalar_lea.vmem %s0, %s192
      %p194 = pneg %p64
      %p195 = pneg %p61
      %s196 = smul.u32 16, %s22
      %p197 = scmp.lt.s32.totalorder %s19, 3
      %s198 = scalar_select %p197, %s19, 3
      %p199 = scmp.lt.s32.totalorder %s196, 15
      %s200 = scalar_select %p199, %s196, 15
      %p201 = scmp.lt.s32.totalorder %s21, 0
      %s202 = scalar_select %p201, %s21, 0
      %s203 = sadd.s32 %s202, %s200
      %s204 = smul.addr %s198, 16
      %s205 = sadd.s32 %s203, %s204
      %s206 = smul.addr %s205, 4
      %s207 = scalar_lea.vmem %s1, %s206
      %p208 = pneg %p94
      %p209 = pneg %p91
      %p210 = pneg %p124
      %p211 = pneg %p121
      %s212 = smul.u32 64, %s20
      %p213 = scmp.lt.s32.totalorder %s19, 3
      %s214 = scalar_select %p213, %s19, 3
      %p215 = scmp.lt.s32.totalorder %s212, 63
      %s216 = scalar_select %p215, %s212, 63
      %p217 = scmp.lt.s32.totalorder %s21, 0
      %s218 = scalar_select %p217, %s21, 0
      %s219 = sadd.s32 %s218, %s216
      %s220 = smul.addr %s214, 64
      %s221 = sadd.s32 %s219, %s220
      %s222 = smul.addr %s221, 8
      %s223 = scalar_lea.vmem %s2, %s222
      %s224 = smul.u32 64, %s20
      %p225 = scmp.lt.s32.totalorder %s19, 3
      %s226 = scalar_select %p225, %s19, 3
      %p227 = scmp.lt.s32.totalorder %s224, 63
      %s228 = scalar_select %p227, %s224, 63
      %p229 = scmp.lt.s32.totalorder %s22, 0
      %s230 = scalar_select %p229, %s22, 0
      %s231 = sadd.s32 %s230, %s228
      %s232 = smul.addr %s226, 64
      %s233 = sadd.s32 %s231, %s232
      %s234 = smul.addr %s233, 4
      %s235 = scalar_lea.vmem %s0, %s234
      %s236 = smul.u32 64, %s20
      %s237 = smul.u32 16, %s22
      %p238 = scmp.lt.s32.totalorder %s19, 3
      %s239 = scalar_select %p238, %s19, 3
      %p240 = scmp.lt.s32.totalorder %s237, 15
      %s241 = scalar_select %p240, %s237, 15
      %p242 = scmp.lt.s32.totalorder %s21, 0
      %s243 = scalar_select %p242, %s21, 0
      %s244 = sadd.s32 %s243, %s241
      %s245 = smul.addr %s239, 16
      %s246 = sadd.s32 %s244, %s245
      %s247 = smul.addr %s246, 4
      %s248 = scalar_lea.vmem %s1, %s247
      %s249 = smul.u32 16, %s22
      %s250 = smul.u32 64, %s20
      %p251 = scmp.lt.s32.totalorder %s19, 3
      %s252 = scalar_select %p251, %s19, 3
      %p253 = scmp.lt.s32.totalorder %s250, 63
      %s254 = scalar_select %p253, %s250, 63
      %p255 = scmp.lt.s32.totalorder %s21, 0
      %s256 = scalar_select %p255, %s21, 0
      %s257 = sadd.s32 %s256, %s254
      %s258 = smul.addr %s252, 64
      %s259 = sadd.s32 %s257, %s258
      %s260 = smul.addr %s259, 8
      %s261 = scalar_lea.vmem %s2, %s260
      %s262 = smul.u32 64, %s20
      %p263 = scmp.eq.s32.totalorder %s22, 0
      // Predicated region
      $region29: #{generator_forward.22} parent=27 // pred_check
        %p264 = pneg %p263
      $region30: #{generator_forward.22} parent=27 // pred_check_branch
        %266 = sbr.rel (%p264) target = $region32
      $region31: #{generator_forward.22} parent=27 // pred_region
        %267 = vst [vmem:[#allocation2] sm:$0xff] 0.0
        %268 = vst [vmem:[#allocation2 + $0x8] sm:$0xff] 0.0
        %269 = vst [vmem:[#allocation2 + $0x10] sm:$0xff] 0.0
        %270 = vst [vmem:[#allocation2 + $0x18] sm:$0xff] 0.0
        %271 = vst [vmem:[#allocation2 + $0x20] sm:$0xff] 0.0
        %272 = vst [vmem:[#allocation2 + $0x28] sm:$0xff] 0.0
        %273 = vst [vmem:[#allocation2 + $0x30] sm:$0xff] 0.0
        %274 = vst [vmem:[#allocation2 + $0x38] sm:$0xff] 0.0
        %275 = vst [vmem:[#allocation2 + $0x40] sm:$0xff] 0.0
        %276 = vst [vmem:[#allocation2 + $0x48] sm:$0xff] 0.0
        %277 = vst [vmem:[#allocation2 + $0x50] sm:$0xff] 0.0
        %278 = vst [vmem:[#allocation2 + $0x58] sm:$0xff] 0.0
        %279 = vst [vmem:[#allocation2 + $0x60] sm:$0xff] 0.0
        %280 = vst [vmem:[#allocation2 + $0x68] sm:$0xff] 0.0
        %281 = vst [vmem:[#allocation2 + $0x70] sm:$0xff] 0.0
        %282 = vst [vmem:[#allocation2 + $0x78] sm:$0xff] 0.0
        %283 = vst [vmem:[#allocation2 + $0x80] sm:$0xff] 0.0
        %284 = vst [vmem:[#allocation2 + $0x88] sm:$0xff] 0.0
        %285 = vst [vmem:[#allocation2 + $0x90] sm:$0xff] 0.0
        %286 = vst [vmem:[#allocation2 + $0x98] sm:$0xff] 0.0
        %287 = vst [vmem:[#allocation2 + $0xa0] sm:$0xff] 0.0
        %288 = vst [vmem:[#allocation2 + $0xa8] sm:$0xff] 0.0
        %289 = vst [vmem:[#allocation2 + $0xb0] sm:$0xff] 0.0
        %290 = vst [vmem:[#allocation2 + $0xb8] sm:$0xff] 0.0
        %291 = vst [vmem:[#allocation2 + $0xc0] sm:$0xff] 0.0
        %292 = vst [vmem:[#allocation2 + $0xc8] sm:$0xff] 0.0
        %293 = vst [vmem:[#allocation2 + $0xd0] sm:$0xff] 0.0
        %294 = vst [vmem:[#allocation2 + $0xd8] sm:$0xff] 0.0
        %295 = vst [vmem:[#allocation2 + $0xe0] sm:$0xff] 0.0
        %296 = vst [vmem:[#allocation2 + $0xe8] sm:$0xff] 0.0
        %297 = vst [vmem:[#allocation2 + $0xf0] sm:$0xff] 0.0
        %298 = vst [vmem:[#allocation2 + $0xf8] sm:$0xff] 0.0
        %299 = vst [vmem:[#allocation2 + $0x100] sm:$0xff] 0.0
        %300 = vst [vmem:[#allocation2 + $0x108] sm:$0xff] 0.0
        %301 = vst [vmem:[#allocation2 + $0x110] sm:$0xff] 0.0
        %302 = vst [vmem:[#allocation2 + $0x118] sm:$0xff] 0.0
        %303 = vst [vmem:[#allocation2 + $0x120] sm:$0xff] 0.0
        %304 = vst [vmem:[#allocation2 + $0x128] sm:$0xff] 0.0
        %305 = vst [vmem:[#allocation2 + $0x130] sm:$0xff] 0.0
        %306 = vst [vmem:[#allocation2 + $0x138] sm:$0xff] 0.0
        %307 = vst [vmem:[#allocation2 + $0x140] sm:$0xff] 0.0
        %308 = vst [vmem:[#allocation2 + $0x148] sm:$0xff] 0.0
        %309 = vst [vmem:[#allocation2 + $0x150] sm:$0xff] 0.0
        %310 = vst [vmem:[#allocation2 + $0x158] sm:$0xff] 0.0
        %311 = vst [vmem:[#allocation2 + $0x160] sm:$0xff] 0.0
        %312 = vst [vmem:[#allocation2 + $0x168] sm:$0xff] 0.0
        %313 = vst [vmem:[#allocation2 + $0x170] sm:$0xff] 0.0
        %314 = vst [vmem:[#allocation2 + $0x178] sm:$0xff] 0.0
        %315 = vst [vmem:[#allocation2 + $0x180] sm:$0xff] 0.0
        %316 = vst [vmem:[#allocation2 + $0x188] sm:$0xff] 0.0
        %317 = vst [vmem:[#allocation2 + $0x190] sm:$0xff] 0.0
        %318 = vst [vmem:[#allocation2 + $0x198] sm:$0xff] 0.0
        %319 = vst [vmem:[#allocation2 + $0x1a0] sm:$0xff] 0.0
        %320 = vst [vmem:[#allocation2 + $0x1a8] sm:$0xff] 0.0
        %321 = vst [vmem:[#allocation2 + $0x1b0] sm:$0xff] 0.0
        %322 = vst [vmem:[#allocation2 + $0x1b8] sm:$0xff] 0.0
        %323 = vst [vmem:[#allocation2 + $0x1c0] sm:$0xff] 0.0
        %324 = vst [vmem:[#allocation2 + $0x1c8] sm:$0xff] 0.0
        %325 = vst [vmem:[#allocation2 + $0x1d0] sm:$0xff] 0.0
        %326 = vst [vmem:[#allocation2 + $0x1d8] sm:$0xff] 0.0
        %327 = vst [vmem:[#allocation2 + $0x1e0] sm:$0xff] 0.0
        %328 = vst [vmem:[#allocation2 + $0x1e8] sm:$0xff] 0.0
        %329 = vst [vmem:[#allocation2 + $0x1f0] sm:$0xff] 0.0
        %330 = vst [vmem:[#allocation2 + $0x1f8] sm:$0xff] 0.0
      $region32: #{generator_forward.22} parent=27 // pred_fallthru
        _
      %v331 = vld [vmem:[#allocation2] sm:$0xff]
      %v332 = vld [vmem:[#allocation2 + $0x8] sm:$0xff]
      %v333 = vld [vmem:[#allocation2 + $0x10] sm:$0xff]
      %v334 = vld [vmem:[#allocation2 + $0x18] sm:$0xff]
      %v335 = vld [vmem:[#allocation2 + $0x20] sm:$0xff]
      %v336 = vld [vmem:[#allocation2 + $0x28] sm:$0xff]
      %v337 = vld [vmem:[#allocation2 + $0x30] sm:$0xff]
      %v338 = vld [vmem:[#allocation2 + $0x38] sm:$0xff]
      %v339 = vld [vmem:[#allocation2 + $0x40] sm:$0xff]
      %v340 = vld [vmem:[#allocation2 + $0x48] sm:$0xff]
      %v341 = vld [vmem:[#allocation2 + $0x50] sm:$0xff]
      %v342 = vld [vmem:[#allocation2 + $0x58] sm:$0xff]
      %v343 = vld [vmem:[#allocation2 + $0x60] sm:$0xff]
      %v344 = vld [vmem:[#allocation2 + $0x68] sm:$0xff]
      %v345 = vld [vmem:[#allocation2 + $0x70] sm:$0xff]
      %v346 = vld [vmem:[#allocation2 + $0x78] sm:$0xff]
      %v347 = vld [vmem:[#allocation2 + $0x80] sm:$0xff]
      %v348 = vld [vmem:[#allocation2 + $0x88] sm:$0xff]
      %v349 = vld [vmem:[#allocation2 + $0x90] sm:$0xff]
      %v350 = vld [vmem:[#allocation2 + $0x98] sm:$0xff]
      %v351 = vld [vmem:[#allocation2 + $0xa0] sm:$0xff]
      %v352 = vld [vmem:[#allocation2 + $0xa8] sm:$0xff]
      %v353 = vld [vmem:[#allocation2 + $0xb0] sm:$0xff]
      %v354 = vld [vmem:[#allocation2 + $0xb8] sm:$0xff]
      %v355 = vld [vmem:[#allocation2 + $0xc0] sm:$0xff]
      %v356 = vld [vmem:[#allocation2 + $0xc8] sm:$0xff]
      %v357 = vld [vmem:[#allocation2 + $0xd0] sm:$0xff]
      %v358 = vld [vmem:[#allocation2 + $0xd8] sm:$0xff]
      %v359 = vld [vmem:[#allocation2 + $0xe0] sm:$0xff]
      %v360 = vld [vmem:[#allocation2 + $0xe8] sm:$0xff]
      %v361 = vld [vmem:[#allocation2 + $0xf0] sm:$0xff]
      %v362 = vld [vmem:[#allocation2 + $0xf8] sm:$0xff]
      %v363 = vld [vmem:[#allocation2 + $0x100] sm:$0xff]
      %v364 = vld [vmem:[#allocation2 + $0x108] sm:$0xff]
      %v365 = vld [vmem:[#allocation2 + $0x110] sm:$0xff]
      %v366 = vld [vmem:[#allocation2 + $0x118] sm:$0xff]
      %v367 = vld [vmem:[#allocation2 + $0x120] sm:$0xff]
      %v368 = vld [vmem:[#allocation2 + $0x128] sm:$0xff]
      %v369 = vld [vmem:[#allocation2 + $0x130] sm:$0xff]
      %v370 = vld [vmem:[#allocation2 + $0x138] sm:$0xff]
      %v371 = vld [vmem:[#allocation2 + $0x140] sm:$0xff]
      %v372 = vld [vmem:[#allocation2 + $0x148] sm:$0xff]
      %v373 = vld [vmem:[#allocation2 + $0x150] sm:$0xff]
      %v374 = vld [vmem:[#allocation2 + $0x158] sm:$0xff]
      %v375 = vld [vmem:[#allocation2 + $0x160] sm:$0xff]
      %v376 = vld [vmem:[#allocation2 + $0x168] sm:$0xff]
      %v377 = vld [vmem:[#allocation2 + $0x170] sm:$0xff]
      %v378 = vld [vmem:[#allocation2 + $0x178] sm:$0xff]
      %v379 = vld [vmem:[#allocation2 + $0x180] sm:$0xff]
      %v380 = vld [vmem:[#allocation2 + $0x188] sm:$0xff]
      %v381 = vld [vmem:[#allocation2 + $0x190] sm:$0xff]
      %v382 = vld [vmem:[#allocation2 + $0x198] sm:$0xff]
      %v383 = vld [vmem:[#allocation2 + $0x1a0] sm:$0xff]
      %v384 = vld [vmem:[#allocation2 + $0x1a8] sm:$0xff]
      %v385 = vld [vmem:[#allocation2 + $0x1b0] sm:$0xff]
      %v386 = vld [vmem:[#allocation2 + $0x1b8] sm:$0xff]
      %v387 = vld [vmem:[#allocation2 + $0x1c0] sm:$0xff]
      %v388 = vld [vmem:[#allocation2 + $0x1c8] sm:$0xff]
      %v389 = vld [vmem:[#allocation2 + $0x1d0] sm:$0xff]
      %v390 = vld [vmem:[#allocation2 + $0x1d8] sm:$0xff]
      %v391 = vld [vmem:[#allocation2 + $0x1e0] sm:$0xff]
      %v392 = vld [vmem:[#allocation2 + $0x1e8] sm:$0xff]
      %v393 = vld [vmem:[#allocation2 + $0x1f0] sm:$0xff]
      %v394 = vld [vmem:[#allocation2 + $0x1f8] sm:$0xff]
      %v395 = vld [vmem:[%s235] sm:$0xf]
      %v396 = vld [vmem:[%s235 + $0x4] sm:$0xf]
      %v397 = vld [vmem:[%s235 + $0x8] sm:$0xf]
      %v398 = vld [vmem:[%s235 + $0xc] sm:$0xf]
      %v399 = vld [vmem:[%s235 + $0x10] sm:$0xf]
      %v400 = vld [vmem:[%s235 + $0x14] sm:$0xf]
      %v401 = vld [vmem:[%s235 + $0x18] sm:$0xf]
      %v402 = vld [vmem:[%s235 + $0x1c] sm:$0xf]
      %v403 = vld [vmem:[%s235 + $0x20] sm:$0xf]
      %v404 = vld [vmem:[%s235 + $0x24] sm:$0xf]
      %v405 = vld [vmem:[%s235 + $0x28] sm:$0xf]
      %v406 = vld [vmem:[%s235 + $0x2c] sm:$0xf]
      %v407 = vld [vmem:[%s235 + $0x30] sm:$0xf]
      %v408 = vld [vmem:[%s235 + $0x34] sm:$0xf]
      %v409 = vld [vmem:[%s235 + $0x38] sm:$0xf]
      %v410 = vld [vmem:[%s235 + $0x3c] sm:$0xf]
      %v411 = vld [vmem:[%s235 + $0x40] sm:$0xf]
      %v412 = vld [vmem:[%s235 + $0x44] sm:$0xf]
      %v413 = vld [vmem:[%s235 + $0x48] sm:$0xf]
      %v414 = vld [vmem:[%s235 + $0x4c] sm:$0xf]
      %v415 = vld [vmem:[%s235 + $0x50] sm:$0xf]
      %v416 = vld [vmem:[%s235 + $0x54] sm:$0xf]
      %v417 = vld [vmem:[%s235 + $0x58] sm:$0xf]
      %v418 = vld [vmem:[%s235 + $0x5c] sm:$0xf]
      %v419 = vld [vmem:[%s235 + $0x60] sm:$0xf]
      %v420 = vld [vmem:[%s235 + $0x64] sm:$0xf]
      %v421 = vld [vmem:[%s235 + $0x68] sm:$0xf]
      %v422 = vld [vmem:[%s235 + $0x6c] sm:$0xf]
      %v423 = vld [vmem:[%s235 + $0x70] sm:$0xf]
      %v424 = vld [vmem:[%s235 + $0x74] sm:$0xf]
      %v425 = vld [vmem:[%s235 + $0x78] sm:$0xf]
      %v426 = vld [vmem:[%s235 + $0x7c] sm:$0xf]
      %v427 = vld [vmem:[%s235 + $0x80] sm:$0xf]
      %v428 = vld [vmem:[%s235 + $0x84] sm:$0xf]
      %v429 = vld [vmem:[%s235 + $0x88] sm:$0xf]
      %v430 = vld [vmem:[%s235 + $0x8c] sm:$0xf]
      %v431 = vld [vmem:[%s235 + $0x90] sm:$0xf]
      %v432 = vld [vmem:[%s235 + $0x94] sm:$0xf]
      %v433 = vld [vmem:[%s235 + $0x98] sm:$0xf]
      %v434 = vld [vmem:[%s235 + $0x9c] sm:$0xf]
      %v435 = vld [vmem:[%s235 + $0xa0] sm:$0xf]
      %v436 = vld [vmem:[%s235 + $0xa4] sm:$0xf]
      %v437 = vld [vmem:[%s235 + $0xa8] sm:$0xf]
      %v438 = vld [vmem:[%s235 + $0xac] sm:$0xf]
      %v439 = vld [vmem:[%s235 + $0xb0] sm:$0xf]
      %v440 = vld [vmem:[%s235 + $0xb4] sm:$0xf]
      %v441 = vld [vmem:[%s235 + $0xb8] sm:$0xf]
      %v442 = vld [vmem:[%s235 + $0xbc] sm:$0xf]
      %v443 = vld [vmem:[%s235 + $0xc0] sm:$0xf]
      %v444 = vld [vmem:[%s235 + $0xc4] sm:$0xf]
      %v445 = vld [vmem:[%s235 + $0xc8] sm:$0xf]
      %v446 = vld [vmem:[%s235 + $0xcc] sm:$0xf]
      %v447 = vld [vmem:[%s235 + $0xd0] sm:$0xf]
      %v448 = vld [vmem:[%s235 + $0xd4] sm:$0xf]
      %v449 = vld [vmem:[%s235 + $0xd8] sm:$0xf]
      %v450 = vld [vmem:[%s235 + $0xdc] sm:$0xf]
      %v451 = vld [vmem:[%s235 + $0xe0] sm:$0xf]
      %v452 = vld [vmem:[%s235 + $0xe4] sm:$0xf]
      %v453 = vld [vmem:[%s235 + $0xe8] sm:$0xf]
      %v454 = vld [vmem:[%s235 + $0xec] sm:$0xf]
      %v455 = vld [vmem:[%s235 + $0xf0] sm:$0xf]
      %v456 = vld [vmem:[%s235 + $0xf4] sm:$0xf]
      %v457 = vld [vmem:[%s235 + $0xf8] sm:$0xf]
      %v458 = vld [vmem:[%s235 + $0xfc] sm:$0xf]
      %v459 = vld [vmem:[%s248] sm:$0xf]
      %v460 = vld [vmem:[%s248 + $0x4] sm:$0xf]
      %v461 = vld [vmem:[%s248 + $0x8] sm:$0xf]
      %v462 = vld [vmem:[%s248 + $0xc] sm:$0xf]
      %v463 = vld [vmem:[%s248 + $0x10] sm:$0xf]
      %v464 = vld [vmem:[%s248 + $0x14] sm:$0xf]
      %v465 = vld [vmem:[%s248 + $0x18] sm:$0xf]
      %v466 = vld [vmem:[%s248 + $0x1c] sm:$0xf]
      %v467 = vld [vmem:[%s248 + $0x20] sm:$0xf]
      %v468 = vld [vmem:[%s248 + $0x24] sm:$0xf]
      %v469 = vld [vmem:[%s248 + $0x28] sm:$0xf]
      %v470 = vld [vmem:[%s248 + $0x2c] sm:$0xf]
      %v471 = vld [vmem:[%s248 + $0x30] sm:$0xf]
      %v472 = vld [vmem:[%s248 + $0x34] sm:$0xf]
      %v473 = vld [vmem:[%s248 + $0x38] sm:$0xf]
      %v474 = vld [vmem:[%s248 + $0x3c] sm:$0xf]
      %v539 = vunpack.c.l.b16 %v395
      %v540 = vunpack.c.l.b16 %v396
      %v541 = vunpack.c.l.b16 %v397
      %v542 = vunpack.c.l.b16 %v398
      %v543 = vunpack.c.l.b16 %v399
      %v544 = vunpack.c.l.b16 %v400
      %v545 = vunpack.c.l.b16 %v401
      %v546 = vunpack.c.l.b16 %v402
      %v547 = vunpack.c.l.b16 %v403
      %v548 = vunpack.c.l.b16 %v404
      %v549 = vunpack.c.l.b16 %v405
      %v550 = vunpack.c.l.b16 %v406
      %v551 = vunpack.c.l.b16 %v407
      %v552 = vunpack.c.l.b16 %v408
      %v553 = vunpack.c.l.b16 %v409
      %v554 = vunpack.c.l.b16 %v410
      %v555 = vunpack.c.l.b16 %v411
      %v556 = vunpack.c.l.b16 %v412
      %v557 = vunpack.c.l.b16 %v413
      %v558 = vunpack.c.l.b16 %v414
      %v559 = vunpack.c.l.b16 %v415
      %v560 = vunpack.c.l.b16 %v416
      %v561 = vunpack.c.l.b16 %v417
      %v562 = vunpack.c.l.b16 %v418
      %v563 = vunpack.c.l.b16 %v419
      %v564 = vunpack.c.l.b16 %v420
      %v565 = vunpack.c.l.b16 %v421
      %v566 = vunpack.c.l.b16 %v422
      %v567 = vunpack.c.l.b16 %v423
      %v568 = vunpack.c.l.b16 %v424
      %v569 = vunpack.c.l.b16 %v425
      %v570 = vunpack.c.l.b16 %v426
      %v571 = vunpack.c.l.b16 %v427
      %v572 = vunpack.c.l.b16 %v428
      %v573 = vunpack.c.l.b16 %v429
      %v574 = vunpack.c.l.b16 %v430
      %v575 = vunpack.c.l.b16 %v431
      %v576 = vunpack.c.l.b16 %v432
      %v577 = vunpack.c.l.b16 %v433
      %v578 = vunpack.c.l.b16 %v434
      %v579 = vunpack.c.l.b16 %v435
      %v580 = vunpack.c.l.b16 %v436
      %v581 = vunpack.c.l.b16 %v437
      %v582 = vunpack.c.l.b16 %v438
      %v583 = vunpack.c.l.b16 %v439
      %v584 = vunpack.c.l.b16 %v440
      %v585 = vunpack.c.l.b16 %v441
      %v586 = vunpack.c.l.b16 %v442
      %v587 = vunpack.c.l.b16 %v443
      %v588 = vunpack.c.l.b16 %v444
      %v589 = vunpack.c.l.b16 %v445
      %v590 = vunpack.c.l.b16 %v446
      %v591 = vunpack.c.l.b16 %v447
      %v592 = vunpack.c.l.b16 %v448
      %v593 = vunpack.c.l.b16 %v449
      %v594 = vunpack.c.l.b16 %v450
      %v595 = vunpack.c.l.b16 %v451
      %v596 = vunpack.c.l.b16 %v452
      %v597 = vunpack.c.l.b16 %v453
      %v598 = vunpack.c.l.b16 %v454
      %v599 = vunpack.c.l.b16 %v455
      %v600 = vunpack.c.l.b16 %v456
      %v601 = vunpack.c.l.b16 %v457
      %v602 = vunpack.c.l.b16 %v458
      %v603 = vpack.c.b16 %v540, %v539
      %v604 = vpack.c.b16 %v542, %v541
      %v605 = vpack.c.b16 %v544, %v543
      %v606 = vpack.c.b16 %v546, %v545
      %v607 = vpack.c.b16 %v548, %v547
      %v608 = vpack.c.b16 %v550, %v549
      %v609 = vpack.c.b16 %v552, %v551
      %v610 = vpack.c.b16 %v554, %v553
      %v611 = vpack.c.b16 %v556, %v555
      %v612 = vpack.c.b16 %v558, %v557
      %v613 = vpack.c.b16 %v560, %v559
      %v614 = vpack.c.b16 %v562, %v561
      %v615 = vpack.c.b16 %v564, %v563
      %v616 = vpack.c.b16 %v566, %v565
      %v617 = vpack.c.b16 %v568, %v567
      %v618 = vpack.c.b16 %v570, %v569
      %v619 = vpack.c.b16 %v572, %v571
      %v620 = vpack.c.b16 %v574, %v573
      %v621 = vpack.c.b16 %v576, %v575
      %v622 = vpack.c.b16 %v578, %v577
      %v623 = vpack.c.b16 %v580, %v579
      %v624 = vpack.c.b16 %v582, %v581
      %v625 = vpack.c.b16 %v584, %v583
      %v626 = vpack.c.b16 %v586, %v585
      %v627 = vpack.c.b16 %v588, %v587
      %v628 = vpack.c.b16 %v590, %v589
      %v629 = vpack.c.b16 %v592, %v591
      %v630 = vpack.c.b16 %v594, %v593
      %v631 = vpack.c.b16 %v596, %v595
      %v632 = vpack.c.b16 %v598, %v597
      %v633 = vpack.c.b16 %v600, %v599
      %v634 = vpack.c.b16 %v602, %v601
      %v683 = vunpack.c.l.b16 %v459
      %v684 = vunpack.c.l.b16 %v460
      %v685 = vunpack.c.l.b16 %v461
      %v686 = vunpack.c.l.b16 %v462
      %v687 = vunpack.c.l.b16 %v463
      %v688 = vunpack.c.l.b16 %v464
      %v689 = vunpack.c.l.b16 %v465
      %v690 = vunpack.c.l.b16 %v466
      %v691 = vunpack.c.l.b16 %v467
      %v692 = vunpack.c.l.b16 %v468
      %v693 = vunpack.c.l.b16 %v469
      %v694 = vunpack.c.l.b16 %v470
      %v695 = vunpack.c.l.b16 %v471
      %v696 = vunpack.c.l.b16 %v472
      %v697 = vunpack.c.l.b16 %v473
      %v698 = vunpack.c.l.b16 %v474
      %v699 = vpack.c.b16 %v684, %v683
      %v700 = vpack.c.b16 %v686, %v685
      %v701 = vpack.c.b16 %v688, %v687
      %v702 = vpack.c.b16 %v690, %v689
      %v703 = vpack.c.b16 %v692, %v691
      %v704 = vpack.c.b16 %v694, %v693
      %v705 = vpack.c.b16 %v696, %v695
      %v706 = vpack.c.b16 %v698, %v697
      %715 = vmatpush.bf16.msra.mxu0 %v706
      %716 = vmatpush.bf16.msra.mxu0 %v705
      %717 = vmatpush.bf16.msra.mxu0 %v704
      %718 = vmatpush.bf16.msra.mxu0 %v703
      %719 = vmatpush.bf16.msra.mxu0 %v702
      %720 = vmatpush.bf16.msra.mxu0 %v701
      %721 = vmatpush.bf16.msra.mxu0 %v700
      %722 = vmatpush.bf16.msra.mxu0 %v699
      %723 = vmatmul.bf16.gmra.mxu0 %v603
      %v724 = vpop.f32.mrf.mxu0
      %v725 = vadd.f32 0.0, %v724
      %v726 = vpop.f32.mrf.mxu0
      %v727 = vadd.f32 0.0, %v726
      %728 = vmatmul.bf16.gmra.mxu0 %v604
      %v729 = vpop.f32.mrf.mxu0
      %v730 = vadd.f32 0.0, %v729
      %v731 = vpop.f32.mrf.mxu0
      %v732 = vadd.f32 0.0, %v731
      %733 = vmatmul.bf16.gmra.mxu0 %v605
      %v734 = vpop.f32.mrf.mxu0
      %v735 = vadd.f32 0.0, %v734
      %v736 = vpop.f32.mrf.mxu0
      %v737 = vadd.f32 0.0, %v736
      %738 = vmatmul.bf16.gmra.mxu0 %v606
      %v739 = vpop.f32.mrf.mxu0
      %v740 = vadd.f32 0.0, %v739
      %v741 = vpop.f32.mrf.mxu0
      %v742 = vadd.f32 0.0, %v741
      %743 = vmatmul.bf16.gmra.mxu0 %v607
      %v744 = vpop.f32.mrf.mxu0
      %v745 = vadd.f32 0.0, %v744
      %v746 = vpop.f32.mrf.mxu0
      %v747 = vadd.f32 0.0, %v746
      %748 = vmatmul.bf16.gmra.mxu0 %v608
      %v749 = vpop.f32.mrf.mxu0
      %v750 = vadd.f32 0.0, %v749
      %v751 = vpop.f32.mrf.mxu0
      %v752 = vadd.f32 0.0, %v751
      %753 = vmatmul.bf16.gmra.mxu0 %v609
      %v754 = vpop.f32.mrf.mxu0
      %v755 = vadd.f32 0.0, %v754
      %v756 = vpop.f32.mrf.mxu0
      %v757 = vadd.f32 0.0, %v756
      %758 = vmatmul.bf16.gmra.mxu0 %v610
      %v759 = vpop.f32.mrf.mxu0
      %v760 = vadd.f32 0.0, %v759
      %v761 = vpop.f32.mrf.mxu0
      %v762 = vadd.f32 0.0, %v761
      %763 = vmatmul.bf16.gmra.mxu0 %v611
      %v764 = vpop.f32.mrf.mxu0
      %v765 = vadd.f32 0.0, %v764
      %v766 = vpop.f32.mrf.mxu0
      %v767 = vadd.f32 0.0, %v766
      %768 = vmatmul.bf16.gmra.mxu0 %v612
      %v769 = vpop.f32.mrf.mxu0
      %v770 = vadd.f32 0.0, %v769
      %v771 = vpop.f32.mrf.mxu0
      %v772 = vadd.f32 0.0, %v771
      %773 = vmatmul.bf16.gmra.mxu0 %v613
      %v774 = vpop.f32.mrf.mxu0
      %v775 = vadd.f32 0.0, %v774
      %v776 = vpop.f32.mrf.mxu0
      %v777 = vadd.f32 0.0, %v776
      %778 = vmatmul.bf16.gmra.mxu0 %v614
      %v779 = vpop.f32.mrf.mxu0
      %v780 = vadd.f32 0.0, %v779
      %v781 = vpop.f32.mrf.mxu0
      %v782 = vadd.f32 0.0, %v781
      %783 = vmatmul.bf16.gmra.mxu0 %v615
      %v784 = vpop.f32.mrf.mxu0
      %v785 = vadd.f32 0.0, %v784
      %v786 = vpop.f32.mrf.mxu0
      %v787 = vadd.f32 0.0, %v786
      %788 = vmatmul.bf16.gmra.mxu0 %v616
      %v789 = vpop.f32.mrf.mxu0
      %v790 = vadd.f32 0.0, %v789
      %v791 = vpop.f32.mrf.mxu0
      %v792 = vadd.f32 0.0, %v791
      %793 = vmatmul.bf16.gmra.mxu0 %v617
      %v794 = vpop.f32.mrf.mxu0
      %v795 = vadd.f32 0.0, %v794
      %v796 = vpop.f32.mrf.mxu0
      %v797 = vadd.f32 0.0, %v796
      %798 = vmatmul.bf16.gmra.mxu0 %v618
      %v799 = vpop.f32.mrf.mxu0
      %v800 = vadd.f32 0.0, %v799
      %v801 = vpop.f32.mrf.mxu0
      %v802 = vadd.f32 0.0, %v801
      %803 = vmatmul.bf16.gmra.mxu0 %v619
      %v804 = vpop.f32.mrf.mxu0
      %v805 = vadd.f32 0.0, %v804
      %v806 = vpop.f32.mrf.mxu0
      %v807 = vadd.f32 0.0, %v806
      %808 = vmatmul.bf16.gmra.mxu0 %v620
      %v809 = vpop.f32.mrf.mxu0
      %v810 = vadd.f32 0.0, %v809
      %v811 = vpop.f32.mrf.mxu0
      %v812 = vadd.f32 0.0, %v811
      %813 = vmatmul.bf16.gmra.mxu0 %v621
      %v814 = vpop.f32.mrf.mxu0
      %v815 = vadd.f32 0.0, %v814
      %v816 = vpop.f32.mrf.mxu0
      %v817 = vadd.f32 0.0, %v816
      %818 = vmatmul.bf16.gmra.mxu0 %v622
      %v819 = vpop.f32.mrf.mxu0
      %v820 = vadd.f32 0.0, %v819
      %v821 = vpop.f32.mrf.mxu0
      %v822 = vadd.f32 0.0, %v821
      %823 = vmatmul.bf16.gmra.mxu0 %v623
      %v824 = vpop.f32.mrf.mxu0
      %v825 = vadd.f32 0.0, %v824
      %v826 = vpop.f32.mrf.mxu0
      %v827 = vadd.f32 0.0, %v826
      %828 = vmatmul.bf16.gmra.mxu0 %v624
      %v829 = vpop.f32.mrf.mxu0
      %v830 = vadd.f32 0.0, %v829
      %v831 = vpop.f32.mrf.mxu0
      %v832 = vadd.f32 0.0, %v831
      %833 = vmatmul.bf16.gmra.mxu0 %v625
      %v834 = vpop.f32.mrf.mxu0
      %v835 = vadd.f32 0.0, %v834
      %v836 = vpop.f32.mrf.mxu0
      %v837 = vadd.f32 0.0, %v836
      %838 = vmatmul.bf16.gmra.mxu0 %v626
      %v839 = vpop.f32.mrf.mxu0
      %v840 = vadd.f32 0.0, %v839
      %v841 = vpop.f32.mrf.mxu0
      %v842 = vadd.f32 0.0, %v841
      %843 = vmatmul.bf16.gmra.mxu0 %v627
      %v844 = vpop.f32.mrf.mxu0
      %v845 = vadd.f32 0.0, %v844
      %v846 = vpop.f32.mrf.mxu0
      %v847 = vadd.f32 0.0, %v846
      %848 = vmatmul.bf16.gmra.mxu0 %v628
      %v849 = vpop.f32.mrf.mxu0
      %v850 = vadd.f32 0.0, %v849
      %v851 = vpop.f32.mrf.mxu0
      %v852 = vadd.f32 0.0, %v851
      %853 = vmatmul.bf16.gmra.mxu0 %v629
      %v854 = vpop.f32.mrf.mxu0
      %v855 = vadd.f32 0.0, %v854
      %v856 = vpop.f32.mrf.mxu0
      %v857 = vadd.f32 0.0, %v856
      %858 = vmatmul.bf16.gmra.mxu0 %v630
      %v859 = vpop.f32.mrf.mxu0
      %v860 = vadd.f32 0.0, %v859
      %v861 = vpop.f32.mrf.mxu0
      %v862 = vadd.f32 0.0, %v861
      %863 = vmatmul.bf16.gmra.mxu0 %v631
      %v864 = vpop.f32.mrf.mxu0
      %v865 = vadd.f32 0.0, %v864
      %v866 = vpop.f32.mrf.mxu0
      %v867 = vadd.f32 0.0, %v866
      %868 = vmatmul.bf16.gmra.mxu0 %v632
      %v869 = vpop.f32.mrf.mxu0
      %v870 = vadd.f32 0.0, %v869
      %v871 = vpop.f32.mrf.mxu0
      %v872 = vadd.f32 0.0, %v871
      %873 = vmatmul.bf16.gmra.mxu0 %v633
      %v874 = vpop.f32.mrf.mxu0
      %v875 = vadd.f32 0.0, %v874
      %v876 = vpop.f32.mrf.mxu0
      %v877 = vadd.f32 0.0, %v876
      %878 = vmatmul.bf16.gmra.mxu0 %v634
      %v879 = vpop.f32.mrf.mxu0
      %v880 = vadd.f32 0.0, %v879
      %v881 = vpop.f32.mrf.mxu0
      %v882 = vadd.f32 0.0, %v881
      %883 = vdwg.mxu0
      %v884 = vadd.f32 %v331, %v725
      %v885 = vadd.f32 %v332, %v727
      %v886 = vadd.f32 %v333, %v730
      %v887 = vadd.f32 %v334, %v732
      %v888 = vadd.f32 %v335, %v735
      %v889 = vadd.f32 %v336, %v737
      %v890 = vadd.f32 %v337, %v740
      %v891 = vadd.f32 %v338, %v742
      %v892 = vadd.f32 %v339, %v745
      %v893 = vadd.f32 %v340, %v747
      %v894 = vadd.f32 %v341, %v750
      %v895 = vadd.f32 %v342, %v752
      %v896 = vadd.f32 %v343, %v755
      %v897 = vadd.f32 %v344, %v757
      %v898 = vadd.f32 %v345, %v760
      %v899 = vadd.f32 %v346, %v762
      %v900 = vadd.f32 %v347, %v765
      %v901 = vadd.f32 %v348, %v767
      %v902 = vadd.f32 %v349, %v770
      %v903 = vadd.f32 %v350, %v772
      %v904 = vadd.f32 %v351, %v775
      %v905 = vadd.f32 %v352, %v777
      %v906 = vadd.f32 %v353, %v780
      %v907 = vadd.f32 %v354, %v782
      %v908 = vadd.f32 %v355, %v785
      %v909 = vadd.f32 %v356, %v787
      %v910 = vadd.f32 %v357, %v790
      %v911 = vadd.f32 %v358, %v792
      %v912 = vadd.f32 %v359, %v795
      %v913 = vadd.f32 %v360, %v797
      %v914 = vadd.f32 %v361, %v800
      %v915 = vadd.f32 %v362, %v802
      %v916 = vadd.f32 %v363, %v805
      %v917 = vadd.f32 %v364, %v807
      %v918 = vadd.f32 %v365, %v810
      %v919 = vadd.f32 %v366, %v812
      %v920 = vadd.f32 %v367, %v815
      %v921 = vadd.f32 %v368, %v817
      %v922 = vadd.f32 %v369, %v820
      %v923 = vadd.f32 %v370, %v822
      %v924 = vadd.f32 %v371, %v825
      %v925 = vadd.f32 %v372, %v827
      %v926 = vadd.f32 %v373, %v830
      %v927 = vadd.f32 %v374, %v832
      %v928 = vadd.f32 %v375, %v835
      %v929 = vadd.f32 %v376, %v837
      %v930 = vadd.f32 %v377, %v840
      %v931 = vadd.f32 %v378, %v842
      %v932 = vadd.f32 %v379, %v845
      %v933 = vadd.f32 %v380, %v847
      %v934 = vadd.f32 %v381, %v850
      %v935 = vadd.f32 %v382, %v852
      %v936 = vadd.f32 %v383, %v855
      %v937 = vadd.f32 %v384, %v857
      %v938 = vadd.f32 %v385, %v860
      %v939 = vadd.f32 %v386, %v862
      %v940 = vadd.f32 %v387, %v865
      %v941 = vadd.f32 %v388, %v867
      %v942 = vadd.f32 %v389, %v870
      %v943 = vadd.f32 %v390, %v872
      %v944 = vadd.f32 %v391, %v875
      %v945 = vadd.f32 %v392, %v877
      %v946 = vadd.f32 %v393, %v880
      %v947 = vadd.f32 %v394, %v882
      %948 = vst [vmem:[#allocation2] sm:$0xff] %v884
      %949 = vst [vmem:[#allocation2 + $0x8] sm:$0xff] %v885
      %950 = vst [vmem:[#allocation2 + $0x10] sm:$0xff] %v886
      %951 = vst [vmem:[#allocation2 + $0x18] sm:$0xff] %v887
      %952 = vst [vmem:[#allocation2 + $0x20] sm:$0xff] %v888
      %953 = vst [vmem:[#allocation2 + $0x28] sm:$0xff] %v889
      %954 = vst [vmem:[#allocation2 + $0x30] sm:$0xff] %v890
      %955 = vst [vmem:[#allocation2 + $0x38] sm:$0xff] %v891
      %956 = vst [vmem:[#allocation2 + $0x40] sm:$0xff] %v892
      %957 = vst [vmem:[#allocation2 + $0x48] sm:$0xff] %v893
      %958 = vst [vmem:[#allocation2 + $0x50] sm:$0xff] %v894
      %959 = vst [vmem:[#allocation2 + $0x58] sm:$0xff] %v895
      %960 = vst [vmem:[#allocation2 + $0x60] sm:$0xff] %v896
      %961 = vst [vmem:[#allocation2 + $0x68] sm:$0xff] %v897
      %962 = vst [vmem:[#allocation2 + $0x70] sm:$0xff] %v898
      %963 = vst [vmem:[#allocation2 + $0x78] sm:$0xff] %v899
      %964 = vst [vmem:[#allocation2 + $0x80] sm:$0xff] %v900
      %965 = vst [vmem:[#allocation2 + $0x88] sm:$0xff] %v901
      %966 = vst [vmem:[#allocation2 + $0x90] sm:$0xff] %v902
      %967 = vst [vmem:[#allocation2 + $0x98] sm:$0xff] %v903
      %968 = vst [vmem:[#allocation2 + $0xa0] sm:$0xff] %v904
      %969 = vst [vmem:[#allocation2 + $0xa8] sm:$0xff] %v905
      %970 = vst [vmem:[#allocation2 + $0xb0] sm:$0xff] %v906
      %971 = vst [vmem:[#allocation2 + $0xb8] sm:$0xff] %v907
      %972 = vst [vmem:[#allocation2 + $0xc0] sm:$0xff] %v908
      %973 = vst [vmem:[#allocation2 + $0xc8] sm:$0xff] %v909
      %974 = vst [vmem:[#allocation2 + $0xd0] sm:$0xff] %v910
      %975 = vst [vmem:[#allocation2 + $0xd8] sm:$0xff] %v911
      %976 = vst [vmem:[#allocation2 + $0xe0] sm:$0xff] %v912
      %977 = vst [vmem:[#allocation2 + $0xe8] sm:$0xff] %v913
      %978 = vst [vmem:[#allocation2 + $0xf0] sm:$0xff] %v914
      %979 = vst [vmem:[#allocation2 + $0xf8] sm:$0xff] %v915
      %980 = vst [vmem:[#allocation2 + $0x100] sm:$0xff] %v916
      %981 = vst [vmem:[#allocation2 + $0x108] sm:$0xff] %v917
      %982 = vst [vmem:[#allocation2 + $0x110] sm:$0xff] %v918
      %983 = vst [vmem:[#allocation2 + $0x118] sm:$0xff] %v919
      %984 = vst [vmem:[#allocation2 + $0x120] sm:$0xff] %v920
      %985 = vst [vmem:[#allocation2 + $0x128] sm:$0xff] %v921
      %986 = vst [vmem:[#allocation2 + $0x130] sm:$0xff] %v922
      %987 = vst [vmem:[#allocation2 + $0x138] sm:$0xff] %v923
      %988 = vst [vmem:[#allocation2 + $0x140] sm:$0xff] %v924
      %989 = vst [vmem:[#allocation2 + $0x148] sm:$0xff] %v925
      %990 = vst [vmem:[#allocation2 + $0x150] sm:$0xff] %v926
      %991 = vst [vmem:[#allocation2 + $0x158] sm:$0xff] %v927
      %992 = vst [vmem:[#allocation2 + $0x160] sm:$0xff] %v928
      %993 = vst [vmem:[#allocation2 + $0x168] sm:$0xff] %v929
      %994 = vst [vmem:[#allocation2 + $0x170] sm:$0xff] %v930
      %995 = vst [vmem:[#allocation2 + $0x178] sm:$0xff] %v931
      %996 = vst [vmem:[#allocation2 + $0x180] sm:$0xff] %v932
      %997 = vst [vmem:[#allocation2 + $0x188] sm:$0xff] %v933
      %998 = vst [vmem:[#allocation2 + $0x190] sm:$0xff] %v934
      %999 = vst [vmem:[#allocation2 + $0x198] sm:$0xff] %v935
      %1000 = vst [vmem:[#allocation2 + $0x1a0] sm:$0xff] %v936
      %1001 = vst [vmem:[#allocation2 + $0x1a8] sm:$0xff] %v937
      %1002 = vst [vmem:[#allocation2 + $0x1b0] sm:$0xff] %v938
      %1003 = vst [vmem:[#allocation2 + $0x1b8] sm:$0xff] %v939
      %1004 = vst [vmem:[#allocation2 + $0x1c0] sm:$0xff] %v940
      %1005 = vst [vmem:[#allocation2 + $0x1c8] sm:$0xff] %v941
      %1006 = vst [vmem:[#allocation2 + $0x1d0] sm:$0xff] %v942
      %1007 = vst [vmem:[#allocation2 + $0x1d8] sm:$0xff] %v943
      %1008 = vst [vmem:[#allocation2 + $0x1e0] sm:$0xff] %v944
      %1009 = vst [vmem:[#allocation2 + $0x1e8] sm:$0xff] %v945
      %1010 = vst [vmem:[#allocation2 + $0x1f0] sm:$0xff] %v946
      %1011 = vst [vmem:[#allocation2 + $0x1f8] sm:$0xff] %v947
      // Predicated region
      $region33: #{generator_forward.22} parent=27 // pred_check
        %p1012 = pneg %p263
      $region34: #{generator_forward.22} parent=27 // pred_check_branch
        %1014 = sbr.rel (%p1012) target = $region36
      $region35: #{generator_forward.22} parent=27 // pred_region
        %v1015 = vld [vmem:[#allocation2] sm:$0xff]
        %v1016 = vld [vmem:[#allocation2 + $0x8] sm:$0xff]
        %v1017 = vld [vmem:[#allocation2 + $0x10] sm:$0xff]
        %v1018 = vld [vmem:[#allocation2 + $0x18] sm:$0xff]
        %v1019 = vld [vmem:[#allocation2 + $0x20] sm:$0xff]
        %v1020 = vld [vmem:[#allocation2 + $0x28] sm:$0xff]
        %v1021 = vld [vmem:[#allocation2 + $0x30] sm:$0xff]
        %v1022 = vld [vmem:[#allocation2 + $0x38] sm:$0xff]
        %v1023 = vld [vmem:[#allocation2 + $0x40] sm:$0xff]
        %v1024 = vld [vmem:[#allocation2 + $0x48] sm:$0xff]
        %v1025 = vld [vmem:[#allocation2 + $0x50] sm:$0xff]
        %v1026 = vld [vmem:[#allocation2 + $0x58] sm:$0xff]
        %v1027 = vld [vmem:[#allocation2 + $0x60] sm:$0xff]
        %v1028 = vld [vmem:[#allocation2 + $0x68] sm:$0xff]
        %v1029 = vld [vmem:[#allocation2 + $0x70] sm:$0xff]
        %v1030 = vld [vmem:[#allocation2 + $0x78] sm:$0xff]
        %v1031 = vld [vmem:[#allocation2 + $0x80] sm:$0xff]
        %v1032 = vld [vmem:[#allocation2 + $0x88] sm:$0xff]
        %v1033 = vld [vmem:[#allocation2 + $0x90] sm:$0xff]
        %v1034 = vld [vmem:[#allocation2 + $0x98] sm:$0xff]
        %v1035 = vld [vmem:[#allocation2 + $0xa0] sm:$0xff]
        %v1036 = vld [vmem:[#allocation2 + $0xa8] sm:$0xff]
        %v1037 = vld [vmem:[#allocation2 + $0xb0] sm:$0xff]
        %v1038 = vld [vmem:[#allocation2 + $0xb8] sm:$0xff]
        %v1039 = vld [vmem:[#allocation2 + $0xc0] sm:$0xff]
        %v1040 = vld [vmem:[#allocation2 + $0xc8] sm:$0xff]
        %v1041 = vld [vmem:[#allocation2 + $0xd0] sm:$0xff]
        %v1042 = vld [vmem:[#allocation2 + $0xd8] sm:$0xff]
        %v1043 = vld [vmem:[#allocation2 + $0xe0] sm:$0xff]
        %v1044 = vld [vmem:[#allocation2 + $0xe8] sm:$0xff]
        %v1045 = vld [vmem:[#allocation2 + $0xf0] sm:$0xff]
        %v1046 = vld [vmem:[#allocation2 + $0xf8] sm:$0xff]
        %v1047 = vld [vmem:[#allocation2 + $0x100] sm:$0xff]
        %v1048 = vld [vmem:[#allocation2 + $0x108] sm:$0xff]
        %v1049 = vld [vmem:[#allocation2 + $0x110] sm:$0xff]
        %v1050 = vld [vmem:[#allocation2 + $0x118] sm:$0xff]
        %v1051 = vld [vmem:[#allocation2 + $0x120] sm:$0xff]
        %v1052 = vld [vmem:[#allocation2 + $0x128] sm:$0xff]
        %v1053 = vld [vmem:[#allocation2 + $0x130] sm:$0xff]
        %v1054 = vld [vmem:[#allocation2 + $0x138] sm:$0xff]
        %v1055 = vld [vmem:[#allocation2 + $0x140] sm:$0xff]
        %v1056 = vld [vmem:[#allocation2 + $0x148] sm:$0xff]
        %v1057 = vld [vmem:[#allocation2 + $0x150] sm:$0xff]
        %v1058 = vld [vmem:[#allocation2 + $0x158] sm:$0xff]
        %v1059 = vld [vmem:[#allocation2 + $0x160] sm:$0xff]
        %v1060 = vld [vmem:[#allocation2 + $0x168] sm:$0xff]
        %v1061 = vld [vmem:[#allocation2 + $0x170] sm:$0xff]
        %v1062 = vld [vmem:[#allocation2 + $0x178] sm:$0xff]
        %v1063 = vld [vmem:[#allocation2 + $0x180] sm:$0xff]
        %v1064 = vld [vmem:[#allocation2 + $0x188] sm:$0xff]
        %v1065 = vld [vmem:[#allocation2 + $0x190] sm:$0xff]
        %v1066 = vld [vmem:[#allocation2 + $0x198] sm:$0xff]
        %v1067 = vld [vmem:[#allocation2 + $0x1a0] sm:$0xff]
        %v1068 = vld [vmem:[#allocation2 + $0x1a8] sm:$0xff]
        %v1069 = vld [vmem:[#allocation2 + $0x1b0] sm:$0xff]
        %v1070 = vld [vmem:[#allocation2 + $0x1b8] sm:$0xff]
        %v1071 = vld [vmem:[#allocation2 + $0x1c0] sm:$0xff]
        %v1072 = vld [vmem:[#allocation2 + $0x1c8] sm:$0xff]
        %v1073 = vld [vmem:[#allocation2 + $0x1d0] sm:$0xff]
        %v1074 = vld [vmem:[#allocation2 + $0x1d8] sm:$0xff]
        %v1075 = vld [vmem:[#allocation2 + $0x1e0] sm:$0xff]
        %v1076 = vld [vmem:[#allocation2 + $0x1e8] sm:$0xff]
        %v1077 = vld [vmem:[#allocation2 + $0x1f0] sm:$0xff]
        %v1078 = vld [vmem:[#allocation2 + $0x1f8] sm:$0xff]
        %1079 = vst [vmem:[%s261] sm:$0xff] %v1015
        %1080 = vst [vmem:[%s261 + $0x8] sm:$0xff] %v1016
        %1081 = vst [vmem:[%s261 + $0x10] sm:$0xff] %v1017
        %1082 = vst [vmem:[%s261 + $0x18] sm:$0xff] %v1018
        %1083 = vst [vmem:[%s261 + $0x20] sm:$0xff] %v1019
        %1084 = vst [vmem:[%s261 + $0x28] sm:$0xff] %v1020
        %1085 = vst [vmem:[%s261 + $0x30] sm:$0xff] %v1021
        %1086 = vst [vmem:[%s261 + $0x38] sm:$0xff] %v1022
        %1087 = vst [vmem:[%s261 + $0x40] sm:$0xff] %v1023
        %1088 = vst [vmem:[%s261 + $0x48] sm:$0xff] %v1024
        %1089 = vst [vmem:[%s261 + $0x50] sm:$0xff] %v1025
        %1090 = vst [vmem:[%s261 + $0x58] sm:$0xff] %v1026
        %1091 = vst [vmem:[%s261 + $0x60] sm:$0xff] %v1027
        %1092 = vst [vmem:[%s261 + $0x68] sm:$0xff] %v1028
        %1093 = vst [vmem:[%s261 + $0x70] sm:$0xff] %v1029
        %1094 = vst [vmem:[%s261 + $0x78] sm:$0xff] %v1030
        %1095 = vst [vmem:[%s261 + $0x80] sm:$0xff] %v1031
        %1096 = vst [vmem:[%s261 + $0x88] sm:$0xff] %v1032
        %1097 = vst [vmem:[%s261 + $0x90] sm:$0xff] %v1033
        %1098 = vst [vmem:[%s261 + $0x98] sm:$0xff] %v1034
        %1099 = vst [vmem:[%s261 + $0xa0] sm:$0xff] %v1035
        %1100 = vst [vmem:[%s261 + $0xa8] sm:$0xff] %v1036
        %1101 = vst [vmem:[%s261 + $0xb0] sm:$0xff] %v1037
        %1102 = vst [vmem:[%s261 + $0xb8] sm:$0xff] %v1038
        %1103 = vst [vmem:[%s261 + $0xc0] sm:$0xff] %v1039
        %1104 = vst [vmem:[%s261 + $0xc8] sm:$0xff] %v1040
        %1105 = vst [vmem:[%s261 + $0xd0] sm:$0xff] %v1041
        %1106 = vst [vmem:[%s261 + $0xd8] sm:$0xff] %v1042
        %1107 = vst [vmem:[%s261 + $0xe0] sm:$0xff] %v1043
        %1108 = vst [vmem:[%s261 + $0xe8] sm:$0xff] %v1044
        %1109 = vst [vmem:[%s261 + $0xf0] sm:$0xff] %v1045
        %1110 = vst [vmem:[%s261 + $0xf8] sm:$0xff] %v1046
        %1111 = vst [vmem:[%s261 + $0x100] sm:$0xff] %v1047
        %1112 = vst [vmem:[%s261 + $0x108] sm:$0xff] %v1048
        %1113 = vst [vmem:[%s261 + $0x110] sm:$0xff] %v1049
        %1114 = vst [vmem:[%s261 + $0x118] sm:$0xff] %v1050
        %1115 = vst [vmem:[%s261 + $0x120] sm:$0xff] %v1051
        %1116 = vst [vmem:[%s261 + $0x128] sm:$0xff] %v1052
        %1117 = vst [vmem:[%s261 + $0x130] sm:$0xff] %v1053
        %1118 = vst [vmem:[%s261 + $0x138] sm:$0xff] %v1054
        %1119 = vst [vmem:[%s261 + $0x140] sm:$0xff] %v1055
        %1120 = vst [vmem:[%s261 + $0x148] sm:$0xff] %v1056
        %1121 = vst [vmem:[%s261 + $0x150] sm:$0xff] %v1057
        %1122 = vst [vmem:[%s261 + $0x158] sm:$0xff] %v1058
        %1123 = vst [vmem:[%s261 + $0x160] sm:$0xff] %v1059
        %1124 = vst [vmem:[%s261 + $0x168] sm:$0xff] %v1060
        %1125 = vst [vmem:[%s261 + $0x170] sm:$0xff] %v1061
        %1126 = vst [vmem:[%s261 + $0x178] sm:$0xff] %v1062
        %1127 = vst [vmem:[%s261 + $0x180] sm:$0xff] %v1063
        %1128 = vst [vmem:[%s261 + $0x188] sm:$0xff] %v1064
        %1129 = vst [vmem:[%s261 + $0x190] sm:$0xff] %v1065
        %1130 = vst [vmem:[%s261 + $0x198] sm:$0xff] %v1066
        %1131 = vst [vmem:[%s261 + $0x1a0] sm:$0xff] %v1067
        %1132 = vst [vmem:[%s261 + $0x1a8] sm:$0xff] %v1068
        %1133 = vst [vmem:[%s261 + $0x1b0] sm:$0xff] %v1069
        %1134 = vst [vmem:[%s261 + $0x1b8] sm:$0xff] %v1070
        %1135 = vst [vmem:[%s261 + $0x1c0] sm:$0xff] %v1071
        %1136 = vst [vmem:[%s261 + $0x1c8] sm:$0xff] %v1072
        %1137 = vst [vmem:[%s261 + $0x1d0] sm:$0xff] %v1073
        %1138 = vst [vmem:[%s261 + $0x1d8] sm:$0xff] %v1074
        %1139 = vst [vmem:[%s261 + $0x1e0] sm:$0xff] %v1075
        %1140 = vst [vmem:[%s261 + $0x1e8] sm:$0xff] %v1076
        %1141 = vst [vmem:[%s261 + $0x1f0] sm:$0xff] %v1077
        %1142 = vst [vmem:[%s261 + $0x1f8] sm:$0xff] %v1078
      $region36: #{generator_forward.22} parent=27 // pred_fallthru
        _
      %s1143 = smul.u32 64, %s20
      %p1144 = scmp.lt.s32.totalorder %s19, 3
      %s1145 = scalar_select %p1144, %s19, 3
      %p1146 = scmp.lt.s32.totalorder %s1143, 63
      %s1147 = scalar_select %p1146, %s1143, 63
      %p1148 = scmp.lt.s32.totalorder %s21, 0
      %s1149 = scalar_select %p1148, %s21, 0
      %s1150 = sadd.s32 %s1149, %s1147
      %s1151 = smul.addr %s1145, 64
      %s1152 = sadd.s32 %s1150, %s1151
      %s1153 = smul.addr %s1152, 8
      %s1154 = scalar_lea.vmem %s2, %s1153
      // Predicated region
      $region37: #{generator_forward.22} parent=27 // pred_check
        %p1155 = pneg %p121
      $region38: #{generator_forward.22} parent=27 // pred_check_branch
        %1157 = sbr.rel (%p1155) target = $region40
      $region39: #{generator_forward.22} parent=27 // pred_region
        %s1158 = smul.u32 64, %s20
      $region40: #{generator_forward.22} parent=27 // pred_fallthru
        _
    $region28: #{generator_forward.22} parent=5 // pred_fallthru
      _
    %p1159 = scmp.le.s32.totalorder 2, %s8
    // Predicated region
    $region41: #{generator_forward.22} parent=5 // pred_check
      %p1160 = pneg %p1159
    $region42: #{generator_forward.22} parent=5 // pred_check_branch
      %1162 = sbr.rel (%p1160) target = $region44
    $region43: #{generator_forward.22} parent=5 // pred_region
      %s1163 = ssub.s32 %s8, 2
      // Predicated region
      $region45: #{generator_forward.22} parent=43 // pred_check
        %p1164 = pneg %p127
      $region46: #{generator_forward.22} parent=43 // pred_check_branch
        %1166 = sbr.rel (%p1164) target = $region48
      $region47: #{generator_forward.22} parent=43 // pred_region
        %s1167 = smul.u32 64, %s24
        %p1168 = scmp.lt.s32.totalorder %s23, 3
        %s1169 = scalar_select %p1168, %s23, 3
        %p1170 = scmp.lt.s32.totalorder %s1167, 63
        %s1171 = scalar_select %p1170, %s1167, 63
        %p1172 = scmp.lt.s32.totalorder %s25, 0
        %s1173 = scalar_select %p1172, %s25, 0
        %s1174 = sadd.s32 %s1173, %s1171
        %s1175 = smul.addr %s1169, 64
        %s1176 = sadd.s32 %s1174, %s1175
        %s1177 = smul.addr %s1176, 8
        %s1178 = scalar_lea.vmem %s2, %s1177
      $region48: #{generator_forward.22} parent=43 // pred_fallthru
        _
    $region44: #{generator_forward.22} parent=5 // pred_fallthru
      _
  $region6: #{generator_forward.22} parent=0 // loop_footer
    %s12 = sadd.s32 1, %s8
  $region7: #{generator_forward.22} parent=0 // loop_footer_branch
    %7 = sbr.rel target = $region3
  $region8: #{generator_forward.22} parent=0 // loop_exit
    _

// kernel: generator_forward.23
$region0: #{generator_forward.23}
  #allocation0 [shape = 'u32[]', space=smem, size = 0x4, offset = 0x4, fixed_abs, tag = 'smem constant byte address 0x4 - core index']
  #allocation1 [shape = 'u32[72,128]{1,0:T(1,128)}', space=vmem, size = 0x9000, scoped, tag = 'internal scratch']
  %s0 = inlined_call_operand.vmem [shape: f32[2048,8], index: 0, kind: input, shape index: {}]
  %s1 = inlined_call_operand.vmem [shape: f32[1,8], index: 1, kind: output, shape index: {0}]
  %s2 = inlined_call_operand.vmem [shape: f32[1,8], index: 2, kind: output, shape index: {1}]
  %3 = xla_tuple %s1, %s2
  %s4 = sld [smem:[#allocation0]]
  $region30: #{generator_forward.23} parent=0
    _
  %s6 = ssub.s32 1, %s4
  %s7 = scalar_select 0, %s6, %s4
  // Predicated region
  $region2: #{generator_forward.23} parent=0 // pred_check
    _
  $region3: #{generator_forward.23} parent=0 // pred_check_branch
    %9 = sbr.rel (0) target = $region5
  $region4: #{generator_forward.23} parent=0 // pred_region
    _
  $region5: #{generator_forward.23} parent=0 // pred_fallthru
    _
  %v10 = vld [vmem:[%s0] sm:$0xff]
  %v11 = vld [vmem:[%s0 + $0x8] sm:$0xff]
  %v12 = vld [vmem:[%s0 + $0x10] sm:$0xff]
  %v13 = vld [vmem:[%s0 + $0x18] sm:$0xff]
  %v14 = vld [vmem:[%s0 + $0x20] sm:$0xff]
  %v15 = vld [vmem:[%s0 + $0x28] sm:$0xff]
  %v16 = vld [vmem:[%s0 + $0x30] sm:$0xff]
  %v17 = vld [vmem:[%s0 + $0x38] sm:$0xff]
  %v18 = vld [vmem:[%s0 + $0x40] sm:$0xff]
  %v19 = vld [vmem:[%s0 + $0x48] sm:$0xff]
  %v20 = vld [vmem:[%s0 + $0x50] sm:$0xff]
  %v21 = vld [vmem:[%s0 + $0x58] sm:$0xff]
  %v22 = vld [vmem:[%s0 + $0x60] sm:$0xff]
  %v23 = vld [vmem:[%s0 + $0x68] sm:$0xff]
  %v24 = vld [vmem:[%s0 + $0x70] sm:$0xff]
  %v25 = vld [vmem:[%s0 + $0x78] sm:$0xff]
  %v26 = vld [vmem:[%s0 + $0x80] sm:$0xff]
  %v27 = vld [vmem:[%s0 + $0x88] sm:$0xff]
  %v28 = vld [vmem:[%s0 + $0x90] sm:$0xff]
  %v29 = vld [vmem:[%s0 + $0x98] sm:$0xff]
  %v30 = vld [vmem:[%s0 + $0xa0] sm:$0xff]
  %v31 = vld [vmem:[%s0 + $0xa8] sm:$0xff]
  %v32 = vld [vmem:[%s0 + $0xb0] sm:$0xff]
  %v33 = vld [vmem:[%s0 + $0xb8] sm:$0xff]
  %v34 = vld [vmem:[%s0 + $0xc0] sm:$0xff]
  %v35 = vld [vmem:[%s0 + $0xc8] sm:$0xff]
  %v36 = vld [vmem:[%s0 + $0xd0] sm:$0xff]
  %v37 = vld [vmem:[%s0 + $0xd8] sm:$0xff]
  %v38 = vld [vmem:[%s0 + $0xe0] sm:$0xff]
  %v39 = vld [vmem:[%s0 + $0xe8] sm:$0xff]
  %v40 = vld [vmem:[%s0 + $0xf0] sm:$0xff]
  %v41 = vld [vmem:[%s0 + $0xf8] sm:$0xff]
  %v42 = vld [vmem:[%s0 + $0x100] sm:$0xff]
  %v43 = vld [vmem:[%s0 + $0x108] sm:$0xff]
  %v44 = vld [vmem:[%s0 + $0x110] sm:$0xff]
  %v45 = vld [vmem:[%s0 + $0x118] sm:$0xff]
  %v46 = vld [vmem:[%s0 + $0x120] sm:$0xff]
  %v47 = vld [vmem:[%s0 + $0x128] sm:$0xff]
  %v48 = vld [vmem:[%s0 + $0x130] sm:$0xff]
  %v49 = vld [vmem:[%s0 + $0x138] sm:$0xff]
  %v50 = vld [vmem:[%s0 + $0x140] sm:$0xff]
  %v51 = vld [vmem:[%s0 + $0x148] sm:$0xff]
  %v52 = vld [vmem:[%s0 + $0x150] sm:$0xff]
  %v53 = vld [vmem:[%s0 + $0x158] sm:$0xff]
  %v54 = vld [vmem:[%s0 + $0x160] sm:$0xff]
  %v55 = vld [vmem:[%s0 + $0x168] sm:$0xff]
  %v56 = vld [vmem:[%s0 + $0x170] sm:$0xff]
  %v57 = vld [vmem:[%s0 + $0x178] sm:$0xff]
  %v58 = vld [vmem:[%s0 + $0x180] sm:$0xff]
  %v59 = vld [vmem:[%s0 + $0x188] sm:$0xff]
  %v60 = vld [vmem:[%s0 + $0x190] sm:$0xff]
  %v61 = vld [vmem:[%s0 + $0x198] sm:$0xff]
  %v62 = vld [vmem:[%s0 + $0x1a0] sm:$0xff]
  %v63 = vld [vmem:[%s0 + $0x1a8] sm:$0xff]
  %v64 = vld [vmem:[%s0 + $0x1b0] sm:$0xff]
  %v65 = vld [vmem:[%s0 + $0x1b8] sm:$0xff]
  %v66 = vld [vmem:[%s0 + $0x1c0] sm:$0xff]
  %v67 = vld [vmem:[%s0 + $0x1c8] sm:$0xff]
  %v68 = vld [vmem:[%s0 + $0x1d0] sm:$0xff]
  %v69 = vld [vmem:[%s0 + $0x1d8] sm:$0xff]
  %v70 = vld [vmem:[%s0 + $0x1e0] sm:$0xff]
  %v71 = vld [vmem:[%s0 + $0x1e8] sm:$0xff]
  %v72 = vld [vmem:[%s0 + $0x1f0] sm:$0xff]
  %v73 = vld [vmem:[%s0 + $0x1f8] sm:$0xff]
  %v74 = vld [vmem:[%s0 + $0x200] sm:$0xff]
  %v75 = vld [vmem:[%s0 + $0x208] sm:$0xff]
  %v76 = vld [vmem:[%s0 + $0x210] sm:$0xff]
  %v77 = vld [vmem:[%s0 + $0x218] sm:$0xff]
  %v78 = vld [vmem:[%s0 + $0x220] sm:$0xff]
  %v79 = vld [vmem:[%s0 + $0x228] sm:$0xff]
  %v80 = vld [vmem:[%s0 + $0x230] sm:$0xff]
  %v81 = vld [vmem:[%s0 + $0x238] sm:$0xff]
  %v82 = vld [vmem:[%s0 + $0x240] sm:$0xff]
  %v83 = vld [vmem:[%s0 + $0x248] sm:$0xff]
  %v84 = vld [vmem:[%s0 + $0x250] sm:$0xff]
  %v85 = vld [vmem:[%s0 + $0x258] sm:$0xff]
  %v86 = vld [vmem:[%s0 + $0x260] sm:$0xff]
  %v87 = vld [vmem:[%s0 + $0x268] sm:$0xff]
  %v88 = vld [vmem:[%s0 + $0x270] sm:$0xff]
  %v89 = vld [vmem:[%s0 + $0x278] sm:$0xff]
  %v90 = vld [vmem:[%s0 + $0x280] sm:$0xff]
  %v91 = vld [vmem:[%s0 + $0x288] sm:$0xff]
  %v92 = vld [vmem:[%s0 + $0x290] sm:$0xff]
  %v93 = vld [vmem:[%s0 + $0x298] sm:$0xff]
  %v94 = vld [vmem:[%s0 + $0x2a0] sm:$0xff]
  %v95 = vld [vmem:[%s0 + $0x2a8] sm:$0xff]
  %v96 = vld [vmem:[%s0 + $0x2b0] sm:$0xff]
  %v97 = vld [vmem:[%s0 + $0x2b8] sm:$0xff]
  %v98 = vld [vmem:[%s0 + $0x2c0] sm:$0xff]
  %v99 = vld [vmem:[%s0 + $0x2c8] sm:$0xff]
  %v100 = vld [vmem:[%s0 + $0x2d0] sm:$0xff]
  %v101 = vld [vmem:[%s0 + $0x2d8] sm:$0xff]
  %v102 = vld [vmem:[%s0 + $0x2e0] sm:$0xff]
  %v103 = vld [vmem:[%s0 + $0x2e8] sm:$0xff]
  %v104 = vld [vmem:[%s0 + $0x2f0] sm:$0xff]
  %v105 = vld [vmem:[%s0 + $0x2f8] sm:$0xff]
  %v106 = vld [vmem:[%s0 + $0x300] sm:$0xff]
  %v107 = vld [vmem:[%s0 + $0x308] sm:$0xff]
  %v108 = vld [vmem:[%s0 + $0x310] sm:$0xff]
  %v109 = vld [vmem:[%s0 + $0x318] sm:$0xff]
  %v110 = vld [vmem:[%s0 + $0x320] sm:$0xff]
  %v111 = vld [vmem:[%s0 + $0x328] sm:$0xff]
  %v112 = vld [vmem:[%s0 + $0x330] sm:$0xff]
  %v113 = vld [vmem:[%s0 + $0x338] sm:$0xff]
  %v114 = vld [vmem:[%s0 + $0x340] sm:$0xff]
  %v115 = vld [vmem:[%s0 + $0x348] sm:$0xff]
  %v116 = vld [vmem:[%s0 + $0x350] sm:$0xff]
  %v117 = vld [vmem:[%s0 + $0x358] sm:$0xff]
  %v118 = vld [vmem:[%s0 + $0x360] sm:$0xff]
  %v119 = vld [vmem:[%s0 + $0x368] sm:$0xff]
  %v120 = vld [vmem:[%s0 + $0x370] sm:$0xff]
  %v121 = vld [vmem:[%s0 + $0x378] sm:$0xff]
  %v122 = vld [vmem:[%s0 + $0x380] sm:$0xff]
  %v123 = vld [vmem:[%s0 + $0x388] sm:$0xff]
  %v124 = vld [vmem:[%s0 + $0x390] sm:$0xff]
  %v125 = vld [vmem:[%s0 + $0x398] sm:$0xff]
  %v126 = vld [vmem:[%s0 + $0x3a0] sm:$0xff]
  %v127 = vld [vmem:[%s0 + $0x3a8] sm:$0xff]
  %v128 = vld [vmem:[%s0 + $0x3b0] sm:$0xff]
  %v129 = vld [vmem:[%s0 + $0x3b8] sm:$0xff]
  %v130 = vld [vmem:[%s0 + $0x3c0] sm:$0xff]
  %v131 = vld [vmem:[%s0 + $0x3c8] sm:$0xff]
  %v132 = vld [vmem:[%s0 + $0x3d0] sm:$0xff]
  %v133 = vld [vmem:[%s0 + $0x3d8] sm:$0xff]
  %v134 = vld [vmem:[%s0 + $0x3e0] sm:$0xff]
  %v135 = vld [vmem:[%s0 + $0x3e8] sm:$0xff]
  %v136 = vld [vmem:[%s0 + $0x3f0] sm:$0xff]
  %v137 = vld [vmem:[%s0 + $0x3f8] sm:$0xff]
  %v138 = vld [vmem:[%s0 + $0x400] sm:$0xff]
  %v139 = vld [vmem:[%s0 + $0x408] sm:$0xff]
  %v140 = vld [vmem:[%s0 + $0x410] sm:$0xff]
  %v141 = vld [vmem:[%s0 + $0x418] sm:$0xff]
  %v142 = vld [vmem:[%s0 + $0x420] sm:$0xff]
  %v143 = vld [vmem:[%s0 + $0x428] sm:$0xff]
  %v144 = vld [vmem:[%s0 + $0x430] sm:$0xff]
  %v145 = vld [vmem:[%s0 + $0x438] sm:$0xff]
  %v146 = vld [vmem:[%s0 + $0x440] sm:$0xff]
  %v147 = vld [vmem:[%s0 + $0x448] sm:$0xff]
  %v148 = vld [vmem:[%s0 + $0x450] sm:$0xff]
  %v149 = vld [vmem:[%s0 + $0x458] sm:$0xff]
  %v150 = vld [vmem:[%s0 + $0x460] sm:$0xff]
  %v151 = vld [vmem:[%s0 + $0x468] sm:$0xff]
  %v152 = vld [vmem:[%s0 + $0x470] sm:$0xff]
  %v153 = vld [vmem:[%s0 + $0x478] sm:$0xff]
  %v154 = vld [vmem:[%s0 + $0x480] sm:$0xff]
  %v155 = vld [vmem:[%s0 + $0x488] sm:$0xff]
  %v156 = vld [vmem:[%s0 + $0x490] sm:$0xff]
  %v157 = vld [vmem:[%s0 + $0x498] sm:$0xff]
  %v158 = vld [vmem:[%s0 + $0x4a0] sm:$0xff]
  %v159 = vld [vmem:[%s0 + $0x4a8] sm:$0xff]
  %v160 = vld [vmem:[%s0 + $0x4b0] sm:$0xff]
  %v161 = vld [vmem:[%s0 + $0x4b8] sm:$0xff]
  %v162 = vld [vmem:[%s0 + $0x4c0] sm:$0xff]
  %v163 = vld [vmem:[%s0 + $0x4c8] sm:$0xff]
  %v164 = vld [vmem:[%s0 + $0x4d0] sm:$0xff]
  %v165 = vld [vmem:[%s0 + $0x4d8] sm:$0xff]
  %v166 = vld [vmem:[%s0 + $0x4e0] sm:$0xff]
  %v167 = vld [vmem:[%s0 + $0x4e8] sm:$0xff]
  %v168 = vld [vmem:[%s0 + $0x4f0] sm:$0xff]
  %v169 = vld [vmem:[%s0 + $0x4f8] sm:$0xff]
  %v170 = vld [vmem:[%s0 + $0x500] sm:$0xff]
  %v171 = vld [vmem:[%s0 + $0x508] sm:$0xff]
  %v172 = vld [vmem:[%s0 + $0x510] sm:$0xff]
  %v173 = vld [vmem:[%s0 + $0x518] sm:$0xff]
  %v174 = vld [vmem:[%s0 + $0x520] sm:$0xff]
  %v175 = vld [vmem:[%s0 + $0x528] sm:$0xff]
  %v176 = vld [vmem:[%s0 + $0x530] sm:$0xff]
  %v177 = vld [vmem:[%s0 + $0x538] sm:$0xff]
  %v178 = vld [vmem:[%s0 + $0x540] sm:$0xff]
  %v179 = vld [vmem:[%s0 + $0x548] sm:$0xff]
  %v180 = vld [vmem:[%s0 + $0x550] sm:$0xff]
  %v181 = vld [vmem:[%s0 + $0x558] sm:$0xff]
  %v182 = vld [vmem:[%s0 + $0x560] sm:$0xff]
  %v183 = vld [vmem:[%s0 + $0x568] sm:$0xff]
  %v184 = vld [vmem:[%s0 + $0x570] sm:$0xff]
  %v185 = vld [vmem:[%s0 + $0x578] sm:$0xff]
  %v186 = vld [vmem:[%s0 + $0x580] sm:$0xff]
  %v187 = vld [vmem:[%s0 + $0x588] sm:$0xff]
  %v188 = vld [vmem:[%s0 + $0x590] sm:$0xff]
  %v189 = vld [vmem:[%s0 + $0x598] sm:$0xff]
  %v190 = vld [vmem:[%s0 + $0x5a0] sm:$0xff]
  %v191 = vld [vmem:[%s0 + $0x5a8] sm:$0xff]
  %v192 = vld [vmem:[%s0 + $0x5b0] sm:$0xff]
  %v193 = vld [vmem:[%s0 + $0x5b8] sm:$0xff]
  %v194 = vld [vmem:[%s0 + $0x5c0] sm:$0xff]
  %v195 = vld [vmem:[%s0 + $0x5c8] sm:$0xff]
  %v196 = vld [vmem:[%s0 + $0x5d0] sm:$0xff]
  %v197 = vld [vmem:[%s0 + $0x5d8] sm:$0xff]
  %v198 = vld [vmem:[%s0 + $0x5e0] sm:$0xff]
  %v199 = vld [vmem:[%s0 + $0x5e8] sm:$0xff]
  %v200 = vld [vmem:[%s0 + $0x5f0] sm:$0xff]
  %v201 = vld [vmem:[%s0 + $0x5f8] sm:$0xff]
  %v202 = vld [vmem:[%s0 + $0x600] sm:$0xff]
  %v203 = vld [vmem:[%s0 + $0x608] sm:$0xff]
  %v204 = vld [vmem:[%s0 + $0x610] sm:$0xff]
  %v205 = vld [vmem:[%s0 + $0x618] sm:$0xff]
  %v206 = vld [vmem:[%s0 + $0x620] sm:$0xff]
  %v207 = vld [vmem:[%s0 + $0x628] sm:$0xff]
  %v208 = vld [vmem:[%s0 + $0x630] sm:$0xff]
  %v209 = vld [vmem:[%s0 + $0x638] sm:$0xff]
  %v210 = vld [vmem:[%s0 + $0x640] sm:$0xff]
  %v211 = vld [vmem:[%s0 + $0x648] sm:$0xff]
  %v212 = vld [vmem:[%s0 + $0x650] sm:$0xff]
  %v213 = vld [vmem:[%s0 + $0x658] sm:$0xff]
  %v214 = vld [vmem:[%s0 + $0x660] sm:$0xff]
  %v215 = vld [vmem:[%s0 + $0x668] sm:$0xff]
  %v216 = vld [vmem:[%s0 + $0x670] sm:$0xff]
  %v217 = vld [vmem:[%s0 + $0x678] sm:$0xff]
  %v218 = vld [vmem:[%s0 + $0x680] sm:$0xff]
  %v219 = vld [vmem:[%s0 + $0x688] sm:$0xff]
  %v220 = vld [vmem:[%s0 + $0x690] sm:$0xff]
  %v221 = vld [vmem:[%s0 + $0x698] sm:$0xff]
  %v222 = vld [vmem:[%s0 + $0x6a0] sm:$0xff]
  %v223 = vld [vmem:[%s0 + $0x6a8] sm:$0xff]
  %v224 = vld [vmem:[%s0 + $0x6b0] sm:$0xff]
  %v225 = vld [vmem:[%s0 + $0x6b8] sm:$0xff]
  %v226 = vld [vmem:[%s0 + $0x6c0] sm:$0xff]
  %v227 = vld [vmem:[%s0 + $0x6c8] sm:$0xff]
  %v228 = vld [vmem:[%s0 + $0x6d0] sm:$0xff]
  %v229 = vld [vmem:[%s0 + $0x6d8] sm:$0xff]
  %v230 = vld [vmem:[%s0 + $0x6e0] sm:$0xff]
  %v231 = vld [vmem:[%s0 + $0x6e8] sm:$0xff]
  %v232 = vld [vmem:[%s0 + $0x6f0] sm:$0xff]
  %v233 = vld [vmem:[%s0 + $0x6f8] sm:$0xff]
  %v234 = vld [vmem:[%s0 + $0x700] sm:$0xff]
  %v235 = vld [vmem:[%s0 + $0x708] sm:$0xff]
  %v236 = vld [vmem:[%s0 + $0x710] sm:$0xff]
  %v237 = vld [vmem:[%s0 + $0x718] sm:$0xff]
  %v238 = vld [vmem:[%s0 + $0x720] sm:$0xff]
  %v239 = vld [vmem:[%s0 + $0x728] sm:$0xff]
  %v240 = vld [vmem:[%s0 + $0x730] sm:$0xff]
  %v241 = vld [vmem:[%s0 + $0x738] sm:$0xff]
  %v242 = vld [vmem:[%s0 + $0x740] sm:$0xff]
  %v243 = vld [vmem:[%s0 + $0x748] sm:$0xff]
  %v244 = vld [vmem:[%s0 + $0x750] sm:$0xff]
  %v245 = vld [vmem:[%s0 + $0x758] sm:$0xff]
  %v246 = vld [vmem:[%s0 + $0x760] sm:$0xff]
  %v247 = vld [vmem:[%s0 + $0x768] sm:$0xff]
  %v248 = vld [vmem:[%s0 + $0x770] sm:$0xff]
  %v249 = vld [vmem:[%s0 + $0x778] sm:$0xff]
  %v250 = vld [vmem:[%s0 + $0x780] sm:$0xff]
  %v251 = vld [vmem:[%s0 + $0x788] sm:$0xff]
  %v252 = vld [vmem:[%s0 + $0x790] sm:$0xff]
  %v253 = vld [vmem:[%s0 + $0x798] sm:$0xff]
  %v254 = vld [vmem:[%s0 + $0x7a0] sm:$0xff]
  %v255 = vld [vmem:[%s0 + $0x7a8] sm:$0xff]
  %v256 = vld [vmem:[%s0 + $0x7b0] sm:$0xff]
  %v257 = vld [vmem:[%s0 + $0x7b8] sm:$0xff]
  %v258 = vld [vmem:[%s0 + $0x7c0] sm:$0xff]
  %v259 = vld [vmem:[%s0 + $0x7c8] sm:$0xff]
  %v260 = vld [vmem:[%s0 + $0x7d0] sm:$0xff]
  %v261 = vld [vmem:[%s0 + $0x7d8] sm:$0xff]
  %v262 = vld [vmem:[%s0 + $0x7e0] sm:$0xff]
  %v263 = vld [vmem:[%s0 + $0x7e8] sm:$0xff]
  %v264 = vld [vmem:[%s0 + $0x7f0] sm:$0xff]
  %v265 = vld [vmem:[%s0 + $0x7f8] sm:$0xff]
  %vm266 = vcmask 64512
  %v267 = vsel %vm266, %v10, 0.0
  %v268 = vsel %vm266, %v11, 0.0
  %v269 = vadd.f32 %v267, %v268
  %v270 = vsel %vm266, %v12, 0.0
  %v271 = vadd.f32 %v269, %v270
  %v272 = vsel %vm266, %v13, 0.0
  %v273 = vadd.f32 %v271, %v272
  %v274 = vsel %vm266, %v14, 0.0
  %v275 = vadd.f32 %v273, %v274
  %v276 = vsel %vm266, %v15, 0.0
  %v277 = vadd.f32 %v275, %v276
  %v278 = vsel %vm266, %v16, 0.0
  %v279 = vadd.f32 %v277, %v278
  %v280 = vsel %vm266, %v17, 0.0
  %v281 = vadd.f32 %v279, %v280
  %v282 = vsel %vm266, %v18, 0.0
  %v283 = vadd.f32 %v281, %v282
  %v284 = vsel %vm266, %v19, 0.0
  %v285 = vadd.f32 %v283, %v284
  %v286 = vsel %vm266, %v20, 0.0
  %v287 = vadd.f32 %v285, %v286
  %v288 = vsel %vm266, %v21, 0.0
  %v289 = vadd.f32 %v287, %v288
  %v290 = vsel %vm266, %v22, 0.0
  %v291 = vadd.f32 %v289, %v290
  %v292 = vsel %vm266, %v23, 0.0
  %v293 = vadd.f32 %v291, %v292
  %v294 = vsel %vm266, %v24, 0.0
  %v295 = vadd.f32 %v293, %v294
  %v296 = vsel %vm266, %v25, 0.0
  %v297 = vadd.f32 %v295, %v296
  %v298 = vsel %vm266, %v26, 0.0
  %v299 = vadd.f32 %v297, %v298
  %v300 = vsel %vm266, %v27, 0.0
  %v301 = vadd.f32 %v299, %v300
  %v302 = vsel %vm266, %v28, 0.0
  %v303 = vadd.f32 %v301, %v302
  %v304 = vsel %vm266, %v29, 0.0
  %v305 = vadd.f32 %v303, %v304
  %v306 = vsel %vm266, %v30, 0.0
  %v307 = vadd.f32 %v305, %v306
  %v308 = vsel %vm266, %v31, 0.0
  %v309 = vadd.f32 %v307, %v308
  %v310 = vsel %vm266, %v32, 0.0
  %v311 = vadd.f32 %v309, %v310
  %v312 = vsel %vm266, %v33, 0.0
  %v313 = vadd.f32 %v311, %v312
  %v314 = vsel %vm266, %v34, 0.0
  %v315 = vadd.f32 %v313, %v314
  %v316 = vsel %vm266, %v35, 0.0
  %v317 = vadd.f32 %v315, %v316
  %v318 = vsel %vm266, %v36, 0.0
  %v319 = vadd.f32 %v317, %v318
  %v320 = vsel %vm266, %v37, 0.0
  %v321 = vadd.f32 %v319, %v320
  %v322 = vsel %vm266, %v38, 0.0
  %v323 = vadd.f32 %v321, %v322
  %v324 = vsel %vm266, %v39, 0.0
  %v325 = vadd.f32 %v323, %v324
  %v326 = vsel %vm266, %v40, 0.0
  %v327 = vadd.f32 %v325, %v326
  %v328 = vsel %vm266, %v41, 0.0
  %v329 = vadd.f32 %v327, %v328
  %v330 = vsel %vm266, %v42, 0.0
  %v331 = vadd.f32 %v329, %v330
  %v332 = vsel %vm266, %v43, 0.0
  %v333 = vadd.f32 %v331, %v332
  %v334 = vsel %vm266, %v44, 0.0
  %v335 = vadd.f32 %v333, %v334
  %v336 = vsel %vm266, %v45, 0.0
  %v337 = vadd.f32 %v335, %v336
  %v338 = vsel %vm266, %v46, 0.0
  %v339 = vadd.f32 %v337, %v338
  %v340 = vsel %vm266, %v47, 0.0
  %v341 = vadd.f32 %v339, %v340
  %v342 = vsel %vm266, %v48, 0.0
  %v343 = vadd.f32 %v341, %v342
  %v344 = vsel %vm266, %v49, 0.0
  %v345 = vadd.f32 %v343, %v344
  %v346 = vsel %vm266, %v50, 0.0
  %v347 = vadd.f32 %v345, %v346
  %v348 = vsel %vm266, %v51, 0.0
  %v349 = vadd.f32 %v347, %v348
  %v350 = vsel %vm266, %v52, 0.0
  %v351 = vadd.f32 %v349, %v350
  %v352 = vsel %vm266, %v53, 0.0
  %v353 = vadd.f32 %v351, %v352
  %v354 = vsel %vm266, %v54, 0.0
  %v355 = vadd.f32 %v353, %v354
  %v356 = vsel %vm266, %v55, 0.0
  %v357 = vadd.f32 %v355, %v356
  %v358 = vsel %vm266, %v56, 0.0
  %v359 = vadd.f32 %v357, %v358
  %v360 = vsel %vm266, %v57, 0.0
  %v361 = vadd.f32 %v359, %v360
  %v362 = vsel %vm266, %v58, 0.0
  %v363 = vadd.f32 %v361, %v362
  %v364 = vsel %vm266, %v59, 0.0
  %v365 = vadd.f32 %v363, %v364
  %v366 = vsel %vm266, %v60, 0.0
  %v367 = vadd.f32 %v365, %v366
  %v368 = vsel %vm266, %v61, 0.0
  %v369 = vadd.f32 %v367, %v368
  %v370 = vsel %vm266, %v62, 0.0
  %v371 = vadd.f32 %v369, %v370
  %v372 = vsel %vm266, %v63, 0.0
  %v373 = vadd.f32 %v371, %v372
  %v374 = vsel %vm266, %v64, 0.0
  %v375 = vadd.f32 %v373, %v374
  %v376 = vsel %vm266, %v65, 0.0
  %v377 = vadd.f32 %v375, %v376
  %v378 = vsel %vm266, %v66, 0.0
  %v379 = vadd.f32 %v377, %v378
  %v380 = vsel %vm266, %v67, 0.0
  %v381 = vadd.f32 %v379, %v380
  %v382 = vsel %vm266, %v68, 0.0
  %v383 = vadd.f32 %v381, %v382
  %v384 = vsel %vm266, %v69, 0.0
  %v385 = vadd.f32 %v383, %v384
  %v386 = vsel %vm266, %v70, 0.0
  %v387 = vadd.f32 %v385, %v386
  %v388 = vsel %vm266, %v71, 0.0
  %v389 = vadd.f32 %v387, %v388
  %v390 = vsel %vm266, %v72, 0.0
  %v391 = vadd.f32 %v389, %v390
  %v392 = vsel %vm266, %v73, 0.0
  %v393 = vadd.f32 %v391, %v392
  %v394 = vsel %vm266, %v74, 0.0
  %v395 = vadd.f32 %v393, %v394
  %v396 = vsel %vm266, %v75, 0.0
  %v397 = vadd.f32 %v395, %v396
  %v398 = vsel %vm266, %v76, 0.0
  %v399 = vadd.f32 %v397, %v398
  %v400 = vsel %vm266, %v77, 0.0
  %v401 = vadd.f32 %v399, %v400
  %v402 = vsel %vm266, %v78, 0.0
  %v403 = vadd.f32 %v401, %v402
  %v404 = vsel %vm266, %v79, 0.0
  %v405 = vadd.f32 %v403, %v404
  %v406 = vsel %vm266, %v80, 0.0
  %v407 = vadd.f32 %v405, %v406
  %v408 = vsel %vm266, %v81, 0.0
  %v409 = vadd.f32 %v407, %v408
  %v410 = vsel %vm266, %v82, 0.0
  %v411 = vadd.f32 %v409, %v410
  %v412 = vsel %vm266, %v83, 0.0
  %v413 = vadd.f32 %v411, %v412
  %v414 = vsel %vm266, %v84, 0.0
  %v415 = vadd.f32 %v413, %v414
  %v416 = vsel %vm266, %v85, 0.0
  %v417 = vadd.f32 %v415, %v416
  %v418 = vsel %vm266, %v86, 0.0
  %v419 = vadd.f32 %v417, %v418
  %v420 = vsel %vm266, %v87, 0.0
  %v421 = vadd.f32 %v419, %v420
  %v422 = vsel %vm266, %v88, 0.0
  %v423 = vadd.f32 %v421, %v422
  %v424 = vsel %vm266, %v89, 0.0
  %v425 = vadd.f32 %v423, %v424
  %v426 = vsel %vm266, %v90, 0.0
  %v427 = vadd.f32 %v425, %v426
  %v428 = vsel %vm266, %v91, 0.0
  %v429 = vadd.f32 %v427, %v428
  %v430 = vsel %vm266, %v92, 0.0
  %v431 = vadd.f32 %v429, %v430
  %v432 = vsel %vm266, %v93, 0.0
  %v433 = vadd.f32 %v431, %v432
  %v434 = vsel %vm266, %v94, 0.0
  %v435 = vadd.f32 %v433, %v434
  %v436 = vsel %vm266, %v95, 0.0
  %v437 = vadd.f32 %v435, %v436
  %v438 = vsel %vm266, %v96, 0.0
  %v439 = vadd.f32 %v437, %v438
  %v440 = vsel %vm266, %v97, 0.0
  %v441 = vadd.f32 %v439, %v440
  %v442 = vsel %vm266, %v98, 0.0
  %v443 = vadd.f32 %v441, %v442
  %v444 = vsel %vm266, %v99, 0.0
  %v445 = vadd.f32 %v443, %v444
  %v446 = vsel %vm266, %v100, 0.0
  %v447 = vadd.f32 %v445, %v446
  %v448 = vsel %vm266, %v101, 0.0
  %v449 = vadd.f32 %v447, %v448
  %v450 = vsel %vm266, %v102, 0.0
  %v451 = vadd.f32 %v449, %v450
  %v452 = vsel %vm266, %v103, 0.0
  %v453 = vadd.f32 %v451, %v452
  %v454 = vsel %vm266, %v104, 0.0
  %v455 = vadd.f32 %v453, %v454
  %v456 = vsel %vm266, %v105, 0.0
  %v457 = vadd.f32 %v455, %v456
  %v458 = vsel %vm266, %v106, 0.0
  %v459 = vadd.f32 %v457, %v458
  %v460 = vsel %vm266, %v107, 0.0
  %v461 = vadd.f32 %v459, %v460
  %v462 = vsel %vm266, %v108, 0.0
  %v463 = vadd.f32 %v461, %v462
  %v464 = vsel %vm266, %v109, 0.0
  %v465 = vadd.f32 %v463, %v464
  %v466 = vsel %vm266, %v110, 0.0
  %v467 = vadd.f32 %v465, %v466
  %v468 = vsel %vm266, %v111, 0.0
  %v469 = vadd.f32 %v467, %v468
  %v470 = vsel %vm266, %v112, 0.0
  %v471 = vadd.f32 %v469, %v470
  %v472 = vsel %vm266, %v113, 0.0
  %v473 = vadd.f32 %v471, %v472
  %v474 = vsel %vm266, %v114, 0.0
  %v475 = vadd.f32 %v473, %v474
  %v476 = vsel %vm266, %v115, 0.0
  %v477 = vadd.f32 %v475, %v476
  %v478 = vsel %vm266, %v116, 0.0
  %v479 = vadd.f32 %v477, %v478
  %v480 = vsel %vm266, %v117, 0.0
  %v481 = vadd.f32 %v479, %v480
  %v482 = vsel %vm266, %v118, 0.0
  %v483 = vadd.f32 %v481, %v482
  %v484 = vsel %vm266, %v119, 0.0
  %v485 = vadd.f32 %v483, %v484
  %v486 = vsel %vm266, %v120, 0.0
  %v487 = vadd.f32 %v485, %v486
  %v488 = vsel %vm266, %v121, 0.0
  %v489 = vadd.f32 %v487, %v488
  %v490 = vsel %vm266, %v122, 0.0
  %v491 = vadd.f32 %v489, %v490
  %v492 = vsel %vm266, %v123, 0.0
  %v493 = vadd.f32 %v491, %v492
  %v494 = vsel %vm266, %v124, 0.0
  %v495 = vadd.f32 %v493, %v494
  %v496 = vsel %vm266, %v125, 0.0
  %v497 = vadd.f32 %v495, %v496
  %v498 = vsel %vm266, %v126, 0.0
  %v499 = vadd.f32 %v497, %v498
  %v500 = vsel %vm266, %v127, 0.0
  %v501 = vadd.f32 %v499, %v500
  %v502 = vsel %vm266, %v128, 0.0
  %v503 = vadd.f32 %v501, %v502
  %v504 = vsel %vm266, %v129, 0.0
  %v505 = vadd.f32 %v503, %v504
  %v506 = vsel %vm266, %v130, 0.0
  %v507 = vadd.f32 %v505, %v506
  %v508 = vsel %vm266, %v131, 0.0
  %v509 = vadd.f32 %v507, %v508
  %v510 = vsel %vm266, %v132, 0.0
  %v511 = vadd.f32 %v509, %v510
  %v512 = vsel %vm266, %v133, 0.0
  %v513 = vadd.f32 %v511, %v512
  %v514 = vsel %vm266, %v134, 0.0
  %v515 = vadd.f32 %v513, %v514
  %v516 = vsel %vm266, %v135, 0.0
  %v517 = vadd.f32 %v515, %v516
  %v518 = vsel %vm266, %v136, 0.0
  %v519 = vadd.f32 %v517, %v518
  %v520 = vsel %vm266, %v137, 0.0
  %v521 = vadd.f32 %v519, %v520
  %v522 = vsel %vm266, %v138, 0.0
  %v523 = vadd.f32 %v521, %v522
  %v524 = vsel %vm266, %v139, 0.0
  %v525 = vadd.f32 %v523, %v524
  %v526 = vsel %vm266, %v140, 0.0
  %v527 = vadd.f32 %v525, %v526
  %v528 = vsel %vm266, %v141, 0.0
  %v529 = vadd.f32 %v527, %v528
  %v530 = vsel %vm266, %v142, 0.0
  %v531 = vadd.f32 %v529, %v530
  %v532 = vsel %vm266, %v143, 0.0
  %v533 = vadd.f32 %v531, %v532
  %v534 = vsel %vm266, %v144, 0.0
  %v535 = vadd.f32 %v533, %v534
  %v536 = vsel %vm266, %v145, 0.0
  %v537 = vadd.f32 %v535, %v536
  %v538 = vsel %vm266, %v146, 0.0
  %v539 = vadd.f32 %v537, %v538
  %v540 = vsel %vm266, %v147, 0.0
  %v541 = vadd.f32 %v539, %v540
  %v542 = vsel %vm266, %v148, 0.0
  %v543 = vadd.f32 %v541, %v542
  %v544 = vsel %vm266, %v149, 0.0
  %v545 = vadd.f32 %v543, %v544
  %v546 = vsel %vm266, %v150, 0.0
  %v547 = vadd.f32 %v545, %v546
  %v548 = vsel %vm266, %v151, 0.0
  %v549 = vadd.f32 %v547, %v548
  %v550 = vsel %vm266, %v152, 0.0
  %v551 = vadd.f32 %v549, %v550
  %v552 = vsel %vm266, %v153, 0.0
  %v553 = vadd.f32 %v551, %v552
  %v554 = vsel %vm266, %v154, 0.0
  %v555 = vadd.f32 %v553, %v554
  %v556 = vsel %vm266, %v155, 0.0
  %v557 = vadd.f32 %v555, %v556
  %v558 = vsel %vm266, %v156, 0.0
  %v559 = vadd.f32 %v557, %v558
  %v560 = vsel %vm266, %v157, 0.0
  %v561 = vadd.f32 %v559, %v560
  %v562 = vsel %vm266, %v158, 0.0
  %v563 = vadd.f32 %v561, %v562
  %v564 = vsel %vm266, %v159, 0.0
  %v565 = vadd.f32 %v563, %v564
  %v566 = vsel %vm266, %v160, 0.0
  %v567 = vadd.f32 %v565, %v566
  %v568 = vsel %vm266, %v161, 0.0
  %v569 = vadd.f32 %v567, %v568
  %v570 = vsel %vm266, %v162, 0.0
  %v571 = vadd.f32 %v569, %v570
  %v572 = vsel %vm266, %v163, 0.0
  %v573 = vadd.f32 %v571, %v572
  %v574 = vsel %vm266, %v164, 0.0
  %v575 = vadd.f32 %v573, %v574
  %v576 = vsel %vm266, %v165, 0.0
  %v577 = vadd.f32 %v575, %v576
  %v578 = vsel %vm266, %v166, 0.0
  %v579 = vadd.f32 %v577, %v578
  %v580 = vsel %vm266, %v167, 0.0
  %v581 = vadd.f32 %v579, %v580
  %v582 = vsel %vm266, %v168, 0.0
  %v583 = vadd.f32 %v581, %v582
  %v584 = vsel %vm266, %v169, 0.0
  %v585 = vadd.f32 %v583, %v584
  %v586 = vsel %vm266, %v170, 0.0
  %v587 = vadd.f32 %v585, %v586
  %v588 = vsel %vm266, %v171, 0.0
  %v589 = vadd.f32 %v587, %v588
  %v590 = vsel %vm266, %v172, 0.0
  %v591 = vadd.f32 %v589, %v590
  %v592 = vsel %vm266, %v173, 0.0
  %v593 = vadd.f32 %v591, %v592
  %v594 = vsel %vm266, %v174, 0.0
  %v595 = vadd.f32 %v593, %v594
  %v596 = vsel %vm266, %v175, 0.0
  %v597 = vadd.f32 %v595, %v596
  %v598 = vsel %vm266, %v176, 0.0
  %v599 = vadd.f32 %v597, %v598
  %v600 = vsel %vm266, %v177, 0.0
  %v601 = vadd.f32 %v599, %v600
  %v602 = vsel %vm266, %v178, 0.0
  %v603 = vadd.f32 %v601, %v602
  %v604 = vsel %vm266, %v179, 0.0
  %v605 = vadd.f32 %v603, %v604
  %v606 = vsel %vm266, %v180, 0.0
  %v607 = vadd.f32 %v605, %v606
  %v608 = vsel %vm266, %v181, 0.0
  %v609 = vadd.f32 %v607, %v608
  %v610 = vsel %vm266, %v182, 0.0
  %v611 = vadd.f32 %v609, %v610
  %v612 = vsel %vm266, %v183, 0.0
  %v613 = vadd.f32 %v611, %v612
  %v614 = vsel %vm266, %v184, 0.0
  %v615 = vadd.f32 %v613, %v614
  %v616 = vsel %vm266, %v185, 0.0
  %v617 = vadd.f32 %v615, %v616
  %v618 = vsel %vm266, %v186, 0.0
  %v619 = vadd.f32 %v617, %v618
  %v620 = vsel %vm266, %v187, 0.0
  %v621 = vadd.f32 %v619, %v620
  %v622 = vsel %vm266, %v188, 0.0
  %v623 = vadd.f32 %v621, %v622
  %v624 = vsel %vm266, %v189, 0.0
  %v625 = vadd.f32 %v623, %v624
  %v626 = vsel %vm266, %v190, 0.0
  %v627 = vadd.f32 %v625, %v626
  %v628 = vsel %vm266, %v191, 0.0
  %v629 = vadd.f32 %v627, %v628
  %v630 = vsel %vm266, %v192, 0.0
  %v631 = vadd.f32 %v629, %v630
  %v632 = vsel %vm266, %v193, 0.0
  %v633 = vadd.f32 %v631, %v632
  %v634 = vsel %vm266, %v194, 0.0
  %v635 = vadd.f32 %v633, %v634
  %v636 = vsel %vm266, %v195, 0.0
  %v637 = vadd.f32 %v635, %v636
  %v638 = vsel %vm266, %v196, 0.0
  %v639 = vadd.f32 %v637, %v638
  %v640 = vsel %vm266, %v197, 0.0
  %v641 = vadd.f32 %v639, %v640
  %v642 = vsel %vm266, %v198, 0.0
  %v643 = vadd.f32 %v641, %v642
  %v644 = vsel %vm266, %v199, 0.0
  %v645 = vadd.f32 %v643, %v644
  %v646 = vsel %vm266, %v200, 0.0
  %v647 = vadd.f32 %v645, %v646
  %v648 = vsel %vm266, %v201, 0.0
  %v649 = vadd.f32 %v647, %v648
  %v650 = vsel %vm266, %v202, 0.0
  %v651 = vadd.f32 %v649, %v650
  %v652 = vsel %vm266, %v203, 0.0
  %v653 = vadd.f32 %v651, %v652
  %v654 = vsel %vm266, %v204, 0.0
  %v655 = vadd.f32 %v653, %v654
  %v656 = vsel %vm266, %v205, 0.0
  %v657 = vadd.f32 %v655, %v656
  %v658 = vsel %vm266, %v206, 0.0
  %v659 = vadd.f32 %v657, %v658
  %v660 = vsel %vm266, %v207, 0.0
  %v661 = vadd.f32 %v659, %v660
  %v662 = vsel %vm266, %v208, 0.0
  %v663 = vadd.f32 %v661, %v662
  %v664 = vsel %vm266, %v209, 0.0
  %v665 = vadd.f32 %v663, %v664
  %v666 = vsel %vm266, %v210, 0.0
  %v667 = vadd.f32 %v665, %v666
  %v668 = vsel %vm266, %v211, 0.0
  %v669 = vadd.f32 %v667, %v668
  %v670 = vsel %vm266, %v212, 0.0
  %v671 = vadd.f32 %v669, %v670
  %v672 = vsel %vm266, %v213, 0.0
  %v673 = vadd.f32 %v671, %v672
  %v674 = vsel %vm266, %v214, 0.0
  %v675 = vadd.f32 %v673, %v674
  %v676 = vsel %vm266, %v215, 0.0
  %v677 = vadd.f32 %v675, %v676
  %v678 = vsel %vm266, %v216, 0.0
  %v679 = vadd.f32 %v677, %v678
  %v680 = vsel %vm266, %v217, 0.0
  %v681 = vadd.f32 %v679, %v680
  %v682 = vsel %vm266, %v218, 0.0
  %v683 = vadd.f32 %v681, %v682
  %v684 = vsel %vm266, %v219, 0.0
  %v685 = vadd.f32 %v683, %v684
  %v686 = vsel %vm266, %v220, 0.0
  %v687 = vadd.f32 %v685, %v686
  %v688 = vsel %vm266, %v221, 0.0
  %v689 = vadd.f32 %v687, %v688
  %v690 = vsel %vm266, %v222, 0.0
  %v691 = vadd.f32 %v689, %v690
  %v692 = vsel %vm266, %v223, 0.0
  %v693 = vadd.f32 %v691, %v692
  %v694 = vsel %vm266, %v224, 0.0
  %v695 = vadd.f32 %v693, %v694
  %v696 = vsel %vm266, %v225, 0.0
  %v697 = vadd.f32 %v695, %v696
  %v698 = vsel %vm266, %v226, 0.0
  %v699 = vadd.f32 %v697, %v698
  %v700 = vsel %vm266, %v227, 0.0
  %v701 = vadd.f32 %v699, %v700
  %v702 = vsel %vm266, %v228, 0.0
  %v703 = vadd.f32 %v701, %v702
  %v704 = vsel %vm266, %v229, 0.0
  %v705 = vadd.f32 %v703, %v704
  %v706 = vsel %vm266, %v230, 0.0
  %v707 = vadd.f32 %v705, %v706
  %v708 = vsel %vm266, %v231, 0.0
  %v709 = vadd.f32 %v707, %v708
  %v710 = vsel %vm266, %v232, 0.0
  %v711 = vadd.f32 %v709, %v710
  %v712 = vsel %vm266, %v233, 0.0
  %v713 = vadd.f32 %v711, %v712
  %v714 = vsel %vm266, %v234, 0.0
  %v715 = vadd.f32 %v713, %v714
  %v716 = vsel %vm266, %v235, 0.0
  %v717 = vadd.f32 %v715, %v716
  %v718 = vsel %vm266, %v236, 0.0
  %v719 = vadd.f32 %v717, %v718
  %v720 = vsel %vm266, %v237, 0.0
  %v721 = vadd.f32 %v719, %v720
  %v722 = vsel %vm266, %v238, 0.0
  %v723 = vadd.f32 %v721, %v722
  %v724 = vsel %vm266, %v239, 0.0
  %v725 = vadd.f32 %v723, %v724
  %v726 = vsel %vm266, %v240, 0.0
  %v727 = vadd.f32 %v725, %v726
  %v728 = vsel %vm266, %v241, 0.0
  %v729 = vadd.f32 %v727, %v728
  %v730 = vsel %vm266, %v242, 0.0
  %v731 = vadd.f32 %v729, %v730
  %v732 = vsel %vm266, %v243, 0.0
  %v733 = vadd.f32 %v731, %v732
  %v734 = vsel %vm266, %v244, 0.0
  %v735 = vadd.f32 %v733, %v734
  %v736 = vsel %vm266, %v245, 0.0
  %v737 = vadd.f32 %v735, %v736
  %v738 = vsel %vm266, %v246, 0.0
  %v739 = vadd.f32 %v737, %v738
  %v740 = vsel %vm266, %v247, 0.0
  %v741 = vadd.f32 %v739, %v740
  %v742 = vsel %vm266, %v248, 0.0
  %v743 = vadd.f32 %v741, %v742
  %v744 = vsel %vm266, %v249, 0.0
  %v745 = vadd.f32 %v743, %v744
  %v746 = vsel %vm266, %v250, 0.0
  %v747 = vadd.f32 %v745, %v746
  %v748 = vsel %vm266, %v251, 0.0
  %v749 = vadd.f32 %v747, %v748
  %v750 = vsel %vm266, %v252, 0.0
  %v751 = vadd.f32 %v749, %v750
  %v752 = vsel %vm266, %v253, 0.0
  %v753 = vadd.f32 %v751, %v752
  %v754 = vsel %vm266, %v254, 0.0
  %v755 = vadd.f32 %v753, %v754
  %v756 = vsel %vm266, %v255, 0.0
  %v757 = vadd.f32 %v755, %v756
  %v758 = vsel %vm266, %v256, 0.0
  %v759 = vadd.f32 %v757, %v758
  %v760 = vsel %vm266, %v257, 0.0
  %v761 = vadd.f32 %v759, %v760
  %v762 = vsel %vm266, %v258, 0.0
  %v763 = vadd.f32 %v761, %v762
  %v764 = vsel %vm266, %v259, 0.0
  %v765 = vadd.f32 %v763, %v764
  %v766 = vsel %vm266, %v260, 0.0
  %v767 = vadd.f32 %v765, %v766
  %v768 = vsel %vm266, %v261, 0.0
  %v769 = vadd.f32 %v767, %v768
  %v770 = vsel %vm266, %v262, 0.0
  %v771 = vadd.f32 %v769, %v770
  %v772 = vsel %vm266, %v263, 0.0
  %v773 = vadd.f32 %v771, %v772
  %v774 = vsel %vm266, %v264, 0.0
  %v775 = vadd.f32 %v773, %v774
  %v776 = vsel %vm266, %v265, 0.0
  %v777 = vadd.f32 %v775, %v776
  %v778 = vrot.slane %v777, 4
  %v779 = vadd.f32 %v777, %v778
  %v780 = vrot.slane %v779, 2
  %v781 = vadd.f32 %v779, %v780
  %v782 = vrot.slane %v781, 1
  %v783 = vadd.f32 %v781, %v782
  %v784 = vmul.f32 %v10, %v10
  %v785 = vmul.f32 %v11, %v11
  %v786 = vmul.f32 %v12, %v12
  %v787 = vmul.f32 %v13, %v13
  %v788 = vmul.f32 %v14, %v14
  %v789 = vmul.f32 %v15, %v15
  %v790 = vmul.f32 %v16, %v16
  %v791 = vmul.f32 %v17, %v17
  %v792 = vmul.f32 %v18, %v18
  %v793 = vmul.f32 %v19, %v19
  %v794 = vmul.f32 %v20, %v20
  %v795 = vmul.f32 %v21, %v21
  %v796 = vmul.f32 %v22, %v22
  %v797 = vmul.f32 %v23, %v23
  %v798 = vmul.f32 %v24, %v24
  %v799 = vmul.f32 %v25, %v25
  %v800 = vmul.f32 %v26, %v26
  %v801 = vmul.f32 %v27, %v27
  %v802 = vmul.f32 %v28, %v28
  %v803 = vmul.f32 %v29, %v29
  %v804 = vmul.f32 %v30, %v30
  %v805 = vmul.f32 %v31, %v31
  %v806 = vmul.f32 %v32, %v32
  %v807 = vmul.f32 %v33, %v33
  %v808 = vmul.f32 %v34, %v34
  %v809 = vmul.f32 %v35, %v35
  %v810 = vmul.f32 %v36, %v36
  %v811 = vmul.f32 %v37, %v37
  %v812 = vmul.f32 %v38, %v38
  %v813 = vmul.f32 %v39, %v39
  %v814 = vmul.f32 %v40, %v40
  %v815 = vmul.f32 %v41, %v41
  %v816 = vmul.f32 %v42, %v42
  %v817 = vmul.f32 %v43, %v43
  %v818 = vmul.f32 %v44, %v44
  %v819 = vmul.f32 %v45, %v45
  %v820 = vmul.f32 %v46, %v46
  %v821 = vmul.f32 %v47, %v47
  %v822 = vmul.f32 %v48, %v48
  %v823 = vmul.f32 %v49, %v49
  %v824 = vmul.f32 %v50, %v50
  %v825 = vmul.f32 %v51, %v51
  %v826 = vmul.f32 %v52, %v52
  %v827 = vmul.f32 %v53, %v53
  %v828 = vmul.f32 %v54, %v54
  %v829 = vmul.f32 %v55, %v55
  %v830 = vmul.f32 %v56, %v56
  %v831 = vmul.f32 %v57, %v57
  %v832 = vmul.f32 %v58, %v58
  %v833 = vmul.f32 %v59, %v59
  %v834 = vmul.f32 %v60, %v60
  %v835 = vmul.f32 %v61, %v61
  %v836 = vmul.f32 %v62, %v62
  %v837 = vmul.f32 %v63, %v63
  %v838 = vmul.f32 %v64, %v64
  %v839 = vmul.f32 %v65, %v65
  %v840 = vmul.f32 %v66, %v66
  %v841 = vmul.f32 %v67, %v67
  %v842 = vmul.f32 %v68, %v68
  %v843 = vmul.f32 %v69, %v69
  %v844 = vmul.f32 %v70, %v70
  %v845 = vmul.f32 %v71, %v71
  %v846 = vmul.f32 %v72, %v72
  %v847 = vmul.f32 %v73, %v73
  %v848 = vmul.f32 %v74, %v74
  %v849 = vmul.f32 %v75, %v75
  %v850 = vmul.f32 %v76, %v76
  %v851 = vmul.f32 %v77, %v77
  %v852 = vmul.f32 %v78, %v78
  %v853 = vmul.f32 %v79, %v79
  %v854 = vmul.f32 %v80, %v80
  %v855 = vmul.f32 %v81, %v81
  %v856 = vmul.f32 %v82, %v82
  %v857 = vmul.f32 %v83, %v83
  %v858 = vmul.f32 %v84, %v84
  %v859 = vmul.f32 %v85, %v85
  %v860 = vmul.f32 %v86, %v86
  %v861 = vmul.f32 %v87, %v87
  %v862 = vmul.f32 %v88, %v88
  %v863 = vmul.f32 %v89, %v89
  %v864 = vmul.f32 %v90, %v90
  %v865 = vmul.f32 %v91, %v91
  %v866 = vmul.f32 %v92, %v92
  %v867 = vmul.f32 %v93, %v93
  %v868 = vmul.f32 %v94, %v94
  %v869 = vmul.f32 %v95, %v95
  %v870 = vmul.f32 %v96, %v96
  %v871 = vmul.f32 %v97, %v97
  %v872 = vmul.f32 %v98, %v98
  %v873 = vmul.f32 %v99, %v99
  %v874 = vmul.f32 %v100, %v100
  %v875 = vmul.f32 %v101, %v101
  %v876 = vmul.f32 %v102, %v102
  %v877 = vmul.f32 %v103, %v103
  %v878 = vmul.f32 %v104, %v104
  %v879 = vmul.f32 %v105, %v105
  %v880 = vmul.f32 %v106, %v106
  %v881 = vmul.f32 %v107, %v107
  %v882 = vmul.f32 %v108, %v108
  %v883 = vmul.f32 %v109, %v109
  %v884 = vmul.f32 %v110, %v110
  %v885 = vmul.f32 %v111, %v111
  %v886 = vmul.f32 %v112, %v112
  %v887 = vmul.f32 %v113, %v113
  %v888 = vmul.f32 %v114, %v114
  %v889 = vmul.f32 %v115, %v115
  %v890 = vmul.f32 %v116, %v116
  %v891 = vmul.f32 %v117, %v117
  %v892 = vmul.f32 %v118, %v118
  %v893 = vmul.f32 %v119, %v119
  %v894 = vmul.f32 %v120, %v120
  %v895 = vmul.f32 %v121, %v121
  %v896 = vmul.f32 %v122, %v122
  %v897 = vmul.f32 %v123, %v123
  %v898 = vmul.f32 %v124, %v124
  %v899 = vmul.f32 %v125, %v125
  %v900 = vmul.f32 %v126, %v126
  %v901 = vmul.f32 %v127, %v127
  %v902 = vmul.f32 %v128, %v128
  %v903 = vmul.f32 %v129, %v129
  %v904 = vmul.f32 %v130, %v130
  %v905 = vmul.f32 %v131, %v131
  %v906 = vmul.f32 %v132, %v132
  %v907 = vmul.f32 %v133, %v133
  %v908 = vmul.f32 %v134, %v134
  %v909 = vmul.f32 %v135, %v135
  %v910 = vmul.f32 %v136, %v136
  %v911 = vmul.f32 %v137, %v137
  %v912 = vmul.f32 %v138, %v138
  %v913 = vmul.f32 %v139, %v139
  %v914 = vmul.f32 %v140, %v140
  %v915 = vmul.f32 %v141, %v141
  %v916 = vmul.f32 %v142, %v142
  %v917 = vmul.f32 %v143, %v143
  %v918 = vmul.f32 %v144, %v144
  %v919 = vmul.f32 %v145, %v145
  %v920 = vmul.f32 %v146, %v146
  %v921 = vmul.f32 %v147, %v147
  %v922 = vmul.f32 %v148, %v148
  %v923 = vmul.f32 %v149, %v149
  %v924 = vmul.f32 %v150, %v150
  %v925 = vmul.f32 %v151, %v151
  %v926 = vmul.f32 %v152, %v152
  %v927 = vmul.f32 %v153, %v153
  %v928 = vmul.f32 %v154, %v154
  %v929 = vmul.f32 %v155, %v155
  %v930 = vmul.f32 %v156, %v156
  %v931 = vmul.f32 %v157, %v157
  %v932 = vmul.f32 %v158, %v158
  %v933 = vmul.f32 %v159, %v159
  %v934 = vmul.f32 %v160, %v160
  %v935 = vmul.f32 %v161, %v161
  %v936 = vmul.f32 %v162, %v162
  %v937 = vmul.f32 %v163, %v163
  %v938 = vmul.f32 %v164, %v164
  %v939 = vmul.f32 %v165, %v165
  %v940 = vmul.f32 %v166, %v166
  %v941 = vmul.f32 %v167, %v167
  %v942 = vmul.f32 %v168, %v168
  %v943 = vmul.f32 %v169, %v169
  %v944 = vmul.f32 %v170, %v170
  %v945 = vmul.f32 %v171, %v171
  %v946 = vmul.f32 %v172, %v172
  %v947 = vmul.f32 %v173, %v173
  %v948 = vmul.f32 %v174, %v174
  %v949 = vmul.f32 %v175, %v175
  %v950 = vmul.f32 %v176, %v176
  %v951 = vmul.f32 %v177, %v177
  %v952 = vmul.f32 %v178, %v178
  %v953 = vmul.f32 %v179, %v179
  %v954 = vmul.f32 %v180, %v180
  %v955 = vmul.f32 %v181, %v181
  %v956 = vmul.f32 %v182, %v182
  %v957 = vmul.f32 %v183, %v183
  %v958 = vmul.f32 %v184, %v184
  %v959 = vmul.f32 %v185, %v185
  %v960 = vmul.f32 %v186, %v186
  %v961 = vmul.f32 %v187, %v187
  %v962 = vmul.f32 %v188, %v188
  %v963 = vmul.f32 %v189, %v189
  %v964 = vmul.f32 %v190, %v190
  %v965 = vmul.f32 %v191, %v191
  %v966 = vmul.f32 %v192, %v192
  %v967 = vmul.f32 %v193, %v193
  %v968 = vmul.f32 %v194, %v194
  %v969 = vmul.f32 %v195, %v195
  %v970 = vmul.f32 %v196, %v196
  %v971 = vmul.f32 %v197, %v197
  %v972 = vmul.f32 %v198, %v198
  %v973 = vmul.f32 %v199, %v199
  %v974 = vmul.f32 %v200, %v200
  %v975 = vmul.f32 %v201, %v201
  %v976 = vmul.f32 %v202, %v202
  %v977 = vmul.f32 %v203, %v203
  %v978 = vmul.f32 %v204, %v204
  %v979 = vmul.f32 %v205, %v205
  %v980 = vmul.f32 %v206, %v206
  %v981 = vmul.f32 %v207, %v207
  %v982 = vmul.f32 %v208, %v208
  %v983 = vmul.f32 %v209, %v209
  %v984 = vmul.f32 %v210, %v210
  %v985 = vmul.f32 %v211, %v211
  %v986 = vmul.f32 %v212, %v212
  %v987 = vmul.f32 %v213, %v213
  %v988 = vmul.f32 %v214, %v214
  %v989 = vmul.f32 %v215, %v215
  %v990 = vmul.f32 %v216, %v216
  %v991 = vmul.f32 %v217, %v217
  %v992 = vmul.f32 %v218, %v218
  %v993 = vmul.f32 %v219, %v219
  %v994 = vmul.f32 %v220, %v220
  %v995 = vmul.f32 %v221, %v221
  %v996 = vmul.f32 %v222, %v222
  %v997 = vmul.f32 %v223, %v223
  %v998 = vmul.f32 %v224, %v224
  %v999 = vmul.f32 %v225, %v225
  %v1000 = vmul.f32 %v226, %v226
  %v1001 = vmul.f32 %v227, %v227
  %v1002 = vmul.f32 %v228, %v228
  %v1003 = vmul.f32 %v229, %v229
  %v1004 = vmul.f32 %v230, %v230
  %v1005 = vmul.f32 %v231, %v231
  %v1006 = vmul.f32 %v232, %v232
  %v1007 = vmul.f32 %v233, %v233
  %v1008 = vmul.f32 %v234, %v234
  %v1009 = vmul.f32 %v235, %v235
  %v1010 = vmul.f32 %v236, %v236
  %v1011 = vmul.f32 %v237, %v237
  %v1012 = vmul.f32 %v238, %v238
  %v1013 = vmul.f32 %v239, %v239
  %v1014 = vmul.f32 %v240, %v240
  %v1015 = vmul.f32 %v241, %v241
  %v1016 = vmul.f32 %v242, %v242
  %v1017 = vmul.f32 %v243, %v243
  %v1018 = vmul.f32 %v244, %v244
  %v1019 = vmul.f32 %v245, %v245
  %v1020 = vmul.f32 %v246, %v246
  %v1021 = vmul.f32 %v247, %v247
  %v1022 = vmul.f32 %v248, %v248
  %v1023 = vmul.f32 %v249, %v249
  %v1024 = vmul.f32 %v250, %v250
  %v1025 = vmul.f32 %v251, %v251
  %v1026 = vmul.f32 %v252, %v252
  %v1027 = vmul.f32 %v253, %v253
  %v1028 = vmul.f32 %v254, %v254
  %v1029 = vmul.f32 %v255, %v255
  %v1030 = vmul.f32 %v256, %v256
  %v1031 = vmul.f32 %v257, %v257
  %v1032 = vmul.f32 %v258, %v258
  %v1033 = vmul.f32 %v259, %v259
  %v1034 = vmul.f32 %v260, %v260
  %v1035 = vmul.f32 %v261, %v261
  %v1036 = vmul.f32 %v262, %v262
  %v1037 = vmul.f32 %v263, %v263
  %v1038 = vmul.f32 %v264, %v264
  %v1039 = vmul.f32 %v265, %v265
  %v1040 = vsel %vm266, %v784, 0.0
  %v1041 = vsel %vm266, %v785, 0.0
  %v1042 = vadd.f32 %v1040, %v1041
  %v1043 = vsel %vm266, %v786, 0.0
  %v1044 = vadd.f32 %v1042, %v1043
  %v1045 = vsel %vm266, %v787, 0.0
  %v1046 = vadd.f32 %v1044, %v1045
  %v1047 = vsel %vm266, %v788, 0.0
  %v1048 = vadd.f32 %v1046, %v1047
  %v1049 = vsel %vm266, %v789, 0.0
  %v1050 = vadd.f32 %v1048, %v1049
  %v1051 = vsel %vm266, %v790, 0.0
  %v1052 = vadd.f32 %v1050, %v1051
  %v1053 = vsel %vm266, %v791, 0.0
  %v1054 = vadd.f32 %v1052, %v1053
  %v1055 = vsel %vm266, %v792, 0.0
  %v1056 = vadd.f32 %v1054, %v1055
  %v1057 = vsel %vm266, %v793, 0.0
  %v1058 = vadd.f32 %v1056, %v1057
  %v1059 = vsel %vm266, %v794, 0.0
  %v1060 = vadd.f32 %v1058, %v1059
  %v1061 = vsel %vm266, %v795, 0.0
  %v1062 = vadd.f32 %v1060, %v1061
  %v1063 = vsel %vm266, %v796, 0.0
  %v1064 = vadd.f32 %v1062, %v1063
  %v1065 = vsel %vm266, %v797, 0.0
  %v1066 = vadd.f32 %v1064, %v1065
  %v1067 = vsel %vm266, %v798, 0.0
  %v1068 = vadd.f32 %v1066, %v1067
  %v1069 = vsel %vm266, %v799, 0.0
  %v1070 = vadd.f32 %v1068, %v1069
  %v1071 = vsel %vm266, %v800, 0.0
  %v1072 = vadd.f32 %v1070, %v1071
  %v1073 = vsel %vm266, %v801, 0.0
  %v1074 = vadd.f32 %v1072, %v1073
  %v1075 = vsel %vm266, %v802, 0.0
  %v1076 = vadd.f32 %v1074, %v1075
  %v1077 = vsel %vm266, %v803, 0.0
  %v1078 = vadd.f32 %v1076, %v1077
  %v1079 = vsel %vm266, %v804, 0.0
  %v1080 = vadd.f32 %v1078, %v1079
  %v1081 = vsel %vm266, %v805, 0.0
  %v1082 = vadd.f32 %v1080, %v1081
  %v1083 = vsel %vm266, %v806, 0.0
  %v1084 = vadd.f32 %v1082, %v1083
  %v1085 = vsel %vm266, %v807, 0.0
  %v1086 = vadd.f32 %v1084, %v1085
  %v1087 = vsel %vm266, %v808, 0.0
  %v1088 = vadd.f32 %v1086, %v1087
  %v1089 = vsel %vm266, %v809, 0.0
  %v1090 = vadd.f32 %v1088, %v1089
  %v1091 = vsel %vm266, %v810, 0.0
  %v1092 = vadd.f32 %v1090, %v1091
  %v1093 = vsel %vm266, %v811, 0.0
  %v1094 = vadd.f32 %v1092, %v1093
  %v1095 = vsel %vm266, %v812, 0.0
  %v1096 = vadd.f32 %v1094, %v1095
  %v1097 = vsel %vm266, %v813, 0.0
  %v1098 = vadd.f32 %v1096, %v1097
  %v1099 = vsel %vm266, %v814, 0.0
  %v1100 = vadd.f32 %v1098, %v1099
  %v1101 = vsel %vm266, %v815, 0.0
  %v1102 = vadd.f32 %v1100, %v1101
  %v1103 = vsel %vm266, %v816, 0.0
  %v1104 = vadd.f32 %v1102, %v1103
  %v1105 = vsel %vm266, %v817, 0.0
  %v1106 = vadd.f32 %v1104, %v1105
  %v1107 = vsel %vm266, %v818, 0.0
  %v1108 = vadd.f32 %v1106, %v1107
  %v1109 = vsel %vm266, %v819, 0.0
  %v1110 = vadd.f32 %v1108, %v1109
  %v1111 = vsel %vm266, %v820, 0.0
  %v1112 = vadd.f32 %v1110, %v1111
  %v1113 = vsel %vm266, %v821, 0.0
  %v1114 = vadd.f32 %v1112, %v1113
  %v1115 = vsel %vm266, %v822, 0.0
  %v1116 = vadd.f32 %v1114, %v1115
  %v1117 = vsel %vm266, %v823, 0.0
  %v1118 = vadd.f32 %v1116, %v1117
  %v1119 = vsel %vm266, %v824, 0.0
  %v1120 = vadd.f32 %v1118, %v1119
  %v1121 = vsel %vm266, %v825, 0.0
  %v1122 = vadd.f32 %v1120, %v1121
  %v1123 = vsel %vm266, %v826, 0.0
  %v1124 = vadd.f32 %v1122, %v1123
  %v1125 = vsel %vm266, %v827, 0.0
  %v1126 = vadd.f32 %v1124, %v1125
  %v1127 = vsel %vm266, %v828, 0.0
  %v1128 = vadd.f32 %v1126, %v1127
  %v1129 = vsel %vm266, %v829, 0.0
  %v1130 = vadd.f32 %v1128, %v1129
  %v1131 = vsel %vm266, %v830, 0.0
  %v1132 = vadd.f32 %v1130, %v1131
  %v1133 = vsel %vm266, %v831, 0.0
  %v1134 = vadd.f32 %v1132, %v1133
  %v1135 = vsel %vm266, %v832, 0.0
  %v1136 = vadd.f32 %v1134, %v1135
  %v1137 = vsel %vm266, %v833, 0.0
  %v1138 = vadd.f32 %v1136, %v1137
  %v1139 = vsel %vm266, %v834, 0.0
  %v1140 = vadd.f32 %v1138, %v1139
  %v1141 = vsel %vm266, %v835, 0.0
  %v1142 = vadd.f32 %v1140, %v1141
  %v1143 = vsel %vm266, %v836, 0.0
  %v1144 = vadd.f32 %v1142, %v1143
  %v1145 = vsel %vm266, %v837, 0.0
  %v1146 = vadd.f32 %v1144, %v1145
  %v1147 = vsel %vm266, %v838, 0.0
  %v1148 = vadd.f32 %v1146, %v1147
  %v1149 = vsel %vm266, %v839, 0.0
  %v1150 = vadd.f32 %v1148, %v1149
  %v1151 = vsel %vm266, %v840, 0.0
  %v1152 = vadd.f32 %v1150, %v1151
  %v1153 = vsel %vm266, %v841, 0.0
  %v1154 = vadd.f32 %v1152, %v1153
  %v1155 = vsel %vm266, %v842, 0.0
  %v1156 = vadd.f32 %v1154, %v1155
  %v1157 = vsel %vm266, %v843, 0.0
  %v1158 = vadd.f32 %v1156, %v1157
  %v1159 = vsel %vm266, %v844, 0.0
  %v1160 = vadd.f32 %v1158, %v1159
  %v1161 = vsel %vm266, %v845, 0.0
  %v1162 = vadd.f32 %v1160, %v1161
  %v1163 = vsel %vm266, %v846, 0.0
  %v1164 = vadd.f32 %v1162, %v1163
  %v1165 = vsel %vm266, %v847, 0.0
  %v1166 = vadd.f32 %v1164, %v1165
  %v1167 = vsel %vm266, %v848, 0.0
  %v1168 = vadd.f32 %v1166, %v1167
  %v1169 = vsel %vm266, %v849, 0.0
  %v1170 = vadd.f32 %v1168, %v1169
  %v1171 = vsel %vm266, %v850, 0.0
  %v1172 = vadd.f32 %v1170, %v1171
  %v1173 = vsel %vm266, %v851, 0.0
  %v1174 = vadd.f32 %v1172, %v1173
  %v1175 = vsel %vm266, %v852, 0.0
  %v1176 = vadd.f32 %v1174, %v1175
  %v1177 = vsel %vm266, %v853, 0.0
  %v1178 = vadd.f32 %v1176, %v1177
  %v1179 = vsel %vm266, %v854, 0.0
  %v1180 = vadd.f32 %v1178, %v1179
  %v1181 = vsel %vm266, %v855, 0.0
  %v1182 = vadd.f32 %v1180, %v1181
  %v1183 = vsel %vm266, %v856, 0.0
  %v1184 = vadd.f32 %v1182, %v1183
  %v1185 = vsel %vm266, %v857, 0.0
  %v1186 = vadd.f32 %v1184, %v1185
  %v1187 = vsel %vm266, %v858, 0.0
  %v1188 = vadd.f32 %v1186, %v1187
  %v1189 = vsel %vm266, %v859, 0.0
  %v1190 = vadd.f32 %v1188, %v1189
  %v1191 = vsel %vm266, %v860, 0.0
  %v1192 = vadd.f32 %v1190, %v1191
  %v1193 = vsel %vm266, %v861, 0.0
  %v1194 = vadd.f32 %v1192, %v1193
  %v1195 = vsel %vm266, %v862, 0.0
  %v1196 = vadd.f32 %v1194, %v1195
  %v1197 = vsel %vm266, %v863, 0.0
  %v1198 = vadd.f32 %v1196, %v1197
  %v1199 = vsel %vm266, %v864, 0.0
  %v1200 = vadd.f32 %v1198, %v1199
  %v1201 = vsel %vm266, %v865, 0.0
  %v1202 = vadd.f32 %v1200, %v1201
  %v1203 = vsel %vm266, %v866, 0.0
  %v1204 = vadd.f32 %v1202, %v1203
  %v1205 = vsel %vm266, %v867, 0.0
  %v1206 = vadd.f32 %v1204, %v1205
  %v1207 = vsel %vm266, %v868, 0.0
  %v1208 = vadd.f32 %v1206, %v1207
  %v1209 = vsel %vm266, %v869, 0.0
  %v1210 = vadd.f32 %v1208, %v1209
  %v1211 = vsel %vm266, %v870, 0.0
  %v1212 = vadd.f32 %v1210, %v1211
  %v1213 = vsel %vm266, %v871, 0.0
  %v1214 = vadd.f32 %v1212, %v1213
  %v1215 = vsel %vm266, %v872, 0.0
  %v1216 = vadd.f32 %v1214, %v1215
  %v1217 = vsel %vm266, %v873, 0.0
  %v1218 = vadd.f32 %v1216, %v1217
  %v1219 = vsel %vm266, %v874, 0.0
  %v1220 = vadd.f32 %v1218, %v1219
  %v1221 = vsel %vm266, %v875, 0.0
  %v1222 = vadd.f32 %v1220, %v1221
  %v1223 = vsel %vm266, %v876, 0.0
  %v1224 = vadd.f32 %v1222, %v1223
  %v1225 = vsel %vm266, %v877, 0.0
  %v1226 = vadd.f32 %v1224, %v1225
  %v1227 = vsel %vm266, %v878, 0.0
  %v1228 = vadd.f32 %v1226, %v1227
  %v1229 = vsel %vm266, %v879, 0.0
  %v1230 = vadd.f32 %v1228, %v1229
  %v1231 = vsel %vm266, %v880, 0.0
  %v1232 = vadd.f32 %v1230, %v1231
  %v1233 = vsel %vm266, %v881, 0.0
  %v1234 = vadd.f32 %v1232, %v1233
  %v1235 = vsel %vm266, %v882, 0.0
  %v1236 = vadd.f32 %v1234, %v1235
  %v1237 = vsel %vm266, %v883, 0.0
  %v1238 = vadd.f32 %v1236, %v1237
  %v1239 = vsel %vm266, %v884, 0.0
  %v1240 = vadd.f32 %v1238, %v1239
  %v1241 = vsel %vm266, %v885, 0.0
  %v1242 = vadd.f32 %v1240, %v1241
  %v1243 = vsel %vm266, %v886, 0.0
  %v1244 = vadd.f32 %v1242, %v1243
  %v1245 = vsel %vm266, %v887, 0.0
  %v1246 = vadd.f32 %v1244, %v1245
  %v1247 = vsel %vm266, %v888, 0.0
  %v1248 = vadd.f32 %v1246, %v1247
  %v1249 = vsel %vm266, %v889, 0.0
  %v1250 = vadd.f32 %v1248, %v1249
  %v1251 = vsel %vm266, %v890, 0.0
  %v1252 = vadd.f32 %v1250, %v1251
  %v1253 = vsel %vm266, %v891, 0.0
  %v1254 = vadd.f32 %v1252, %v1253
  %v1255 = vsel %vm266, %v892, 0.0
  %v1256 = vadd.f32 %v1254, %v1255
  %v1257 = vsel %vm266, %v893, 0.0
  %v1258 = vadd.f32 %v1256, %v1257
  %v1259 = vsel %vm266, %v894, 0.0
  %v1260 = vadd.f32 %v1258, %v1259
  %v1261 = vsel %vm266, %v895, 0.0
  %v1262 = vadd.f32 %v1260, %v1261
  %v1263 = vsel %vm266, %v896, 0.0
  %v1264 = vadd.f32 %v1262, %v1263
  %v1265 = vsel %vm266, %v897, 0.0
  %v1266 = vadd.f32 %v1264, %v1265
  %v1267 = vsel %vm266, %v898, 0.0
  %v1268 = vadd.f32 %v1266, %v1267
  %v1269 = vsel %vm266, %v899, 0.0
  %v1270 = vadd.f32 %v1268, %v1269
  %v1271 = vsel %vm266, %v900, 0.0
  %v1272 = vadd.f32 %v1270, %v1271
  %v1273 = vsel %vm266, %v901, 0.0
  %v1274 = vadd.f32 %v1272, %v1273
  %v1275 = vsel %vm266, %v902, 0.0
  %v1276 = vadd.f32 %v1274, %v1275
  %v1277 = vsel %vm266, %v903, 0.0
  %v1278 = vadd.f32 %v1276, %v1277
  %v1279 = vsel %vm266, %v904, 0.0
  %v1280 = vadd.f32 %v1278, %v1279
  %v1281 = vsel %vm266, %v905, 0.0
  %v1282 = vadd.f32 %v1280, %v1281
  %v1283 = vsel %vm266, %v906, 0.0
  %v1284 = vadd.f32 %v1282, %v1283
  %v1285 = vsel %vm266, %v907, 0.0
  %v1286 = vadd.f32 %v1284, %v1285
  %v1287 = vsel %vm266, %v908, 0.0
  %v1288 = vadd.f32 %v1286, %v1287
  %v1289 = vsel %vm266, %v909, 0.0
  %v1290 = vadd.f32 %v1288, %v1289
  %v1291 = vsel %vm266, %v910, 0.0
  %v1292 = vadd.f32 %v1290, %v1291
  %v1293 = vsel %vm266, %v911, 0.0
  %v1294 = vadd.f32 %v1292, %v1293
  %v1295 = vsel %vm266, %v912, 0.0
  %v1296 = vadd.f32 %v1294, %v1295
  %v1297 = vsel %vm266, %v913, 0.0
  %v1298 = vadd.f32 %v1296, %v1297
  %v1299 = vsel %vm266, %v914, 0.0
  %v1300 = vadd.f32 %v1298, %v1299
  %v1301 = vsel %vm266, %v915, 0.0
  %v1302 = vadd.f32 %v1300, %v1301
  %v1303 = vsel %vm266, %v916, 0.0
  %v1304 = vadd.f32 %v1302, %v1303
  %v1305 = vsel %vm266, %v917, 0.0
  %v1306 = vadd.f32 %v1304, %v1305
  %v1307 = vsel %vm266, %v918, 0.0
  %v1308 = vadd.f32 %v1306, %v1307
  %v1309 = vsel %vm266, %v919, 0.0
  %v1310 = vadd.f32 %v1308, %v1309
  %v1311 = vsel %vm266, %v920, 0.0
  %v1312 = vadd.f32 %v1310, %v1311
  %v1313 = vsel %vm266, %v921, 0.0
  %v1314 = vadd.f32 %v1312, %v1313
  %v1315 = vsel %vm266, %v922, 0.0
  %v1316 = vadd.f32 %v1314, %v1315
  %v1317 = vsel %vm266, %v923, 0.0
  %v1318 = vadd.f32 %v1316, %v1317
  %v1319 = vsel %vm266, %v924, 0.0
  %v1320 = vadd.f32 %v1318, %v1319
  %v1321 = vsel %vm266, %v925, 0.0
  %v1322 = vadd.f32 %v1320, %v1321
  %v1323 = vsel %vm266, %v926, 0.0
  %v1324 = vadd.f32 %v1322, %v1323
  %v1325 = vsel %vm266, %v927, 0.0
  %v1326 = vadd.f32 %v1324, %v1325
  %v1327 = vsel %vm266, %v928, 0.0
  %v1328 = vadd.f32 %v1326, %v1327
  %v1329 = vsel %vm266, %v929, 0.0
  %v1330 = vadd.f32 %v1328, %v1329
  %v1331 = vsel %vm266, %v930, 0.0
  %v1332 = vadd.f32 %v1330, %v1331
  %v1333 = vsel %vm266, %v931, 0.0
  %v1334 = vadd.f32 %v1332, %v1333
  %v1335 = vsel %vm266, %v932, 0.0
  %v1336 = vadd.f32 %v1334, %v1335
  %v1337 = vsel %vm266, %v933, 0.0
  %v1338 = vadd.f32 %v1336, %v1337
  %v1339 = vsel %vm266, %v934, 0.0
  %v1340 = vadd.f32 %v1338, %v1339
  %v1341 = vsel %vm266, %v935, 0.0
  %v1342 = vadd.f32 %v1340, %v1341
  %v1343 = vsel %vm266, %v936, 0.0
  %v1344 = vadd.f32 %v1342, %v1343
  %v1345 = vsel %vm266, %v937, 0.0
  %v1346 = vadd.f32 %v1344, %v1345
  %v1347 = vsel %vm266, %v938, 0.0
  %v1348 = vadd.f32 %v1346, %v1347
  %v1349 = vsel %vm266, %v939, 0.0
  %v1350 = vadd.f32 %v1348, %v1349
  %v1351 = vsel %vm266, %v940, 0.0
  %v1352 = vadd.f32 %v1350, %v1351
  %v1353 = vsel %vm266, %v941, 0.0
  %v1354 = vadd.f32 %v1352, %v1353
  %v1355 = vsel %vm266, %v942, 0.0
  %v1356 = vadd.f32 %v1354, %v1355
  %v1357 = vsel %vm266, %v943, 0.0
  %v1358 = vadd.f32 %v1356, %v1357
  %v1359 = vsel %vm266, %v944, 0.0
  %v1360 = vadd.f32 %v1358, %v1359
  %v1361 = vsel %vm266, %v945, 0.0
  %v1362 = vadd.f32 %v1360, %v1361
  %v1363 = vsel %vm266, %v946, 0.0
  %v1364 = vadd.f32 %v1362, %v1363
  %v1365 = vsel %vm266, %v947, 0.0
  %v1366 = vadd.f32 %v1364, %v1365
  %v1367 = vsel %vm266, %v948, 0.0
  %v1368 = vadd.f32 %v1366, %v1367
  %v1369 = vsel %vm266, %v949, 0.0
  %v1370 = vadd.f32 %v1368, %v1369
  %v1371 = vsel %vm266, %v950, 0.0
  %v1372 = vadd.f32 %v1370, %v1371
  %v1373 = vsel %vm266, %v951, 0.0
  %v1374 = vadd.f32 %v1372, %v1373
  %v1375 = vsel %vm266, %v952, 0.0
  %v1376 = vadd.f32 %v1374, %v1375
  %v1377 = vsel %vm266, %v953, 0.0
  %v1378 = vadd.f32 %v1376, %v1377
  %v1379 = vsel %vm266, %v954, 0.0
  %v1380 = vadd.f32 %v1378, %v1379
  %v1381 = vsel %vm266, %v955, 0.0
  %v1382 = vadd.f32 %v1380, %v1381
  %v1383 = vsel %vm266, %v956, 0.0
  %v1384 = vadd.f32 %v1382, %v1383
  %v1385 = vsel %vm266, %v957, 0.0
  %v1386 = vadd.f32 %v1384, %v1385
  %v1387 = vsel %vm266, %v958, 0.0
  %v1388 = vadd.f32 %v1386, %v1387
  %v1389 = vsel %vm266, %v959, 0.0
  %v1390 = vadd.f32 %v1388, %v1389
  %v1391 = vsel %vm266, %v960, 0.0
  %v1392 = vadd.f32 %v1390, %v1391
  %v1393 = vsel %vm266, %v961, 0.0
  %v1394 = vadd.f32 %v1392, %v1393
  %v1395 = vsel %vm266, %v962, 0.0
  %v1396 = vadd.f32 %v1394, %v1395
  %v1397 = vsel %vm266, %v963, 0.0
  %v1398 = vadd.f32 %v1396, %v1397
  %v1399 = vsel %vm266, %v964, 0.0
  %v1400 = vadd.f32 %v1398, %v1399
  %v1401 = vsel %vm266, %v965, 0.0
  %v1402 = vadd.f32 %v1400, %v1401
  %v1403 = vsel %vm266, %v966, 0.0
  %v1404 = vadd.f32 %v1402, %v1403
  %v1405 = vsel %vm266, %v967, 0.0
  %v1406 = vadd.f32 %v1404, %v1405
  %v1407 = vsel %vm266, %v968, 0.0
  %v1408 = vadd.f32 %v1406, %v1407
  %v1409 = vsel %vm266, %v969, 0.0
  %v1410 = vadd.f32 %v1408, %v1409
  %v1411 = vsel %vm266, %v970, 0.0
  %v1412 = vadd.f32 %v1410, %v1411
  %v1413 = vsel %vm266, %v971, 0.0
  %v1414 = vadd.f32 %v1412, %v1413
  %v1415 = vsel %vm266, %v972, 0.0
  %v1416 = vadd.f32 %v1414, %v1415
  %v1417 = vsel %vm266, %v973, 0.0
  %v1418 = vadd.f32 %v1416, %v1417
  %v1419 = vsel %vm266, %v974, 0.0
  %v1420 = vadd.f32 %v1418, %v1419
  %v1421 = vsel %vm266, %v975, 0.0
  %v1422 = vadd.f32 %v1420, %v1421
  %v1423 = vsel %vm266, %v976, 0.0
  %v1424 = vadd.f32 %v1422, %v1423
  %v1425 = vsel %vm266, %v977, 0.0
  %v1426 = vadd.f32 %v1424, %v1425
  %v1427 = vsel %vm266, %v978, 0.0
  %v1428 = vadd.f32 %v1426, %v1427
  %v1429 = vsel %vm266, %v979, 0.0
  %v1430 = vadd.f32 %v1428, %v1429
  %v1431 = vsel %vm266, %v980, 0.0
  %v1432 = vadd.f32 %v1430, %v1431
  %v1433 = vsel %vm266, %v981, 0.0
  %v1434 = vadd.f32 %v1432, %v1433
  %v1435 = vsel %vm266, %v982, 0.0
  %v1436 = vadd.f32 %v1434, %v1435
  %v1437 = vsel %vm266, %v983, 0.0
  %v1438 = vadd.f32 %v1436, %v1437
  %v1439 = vsel %vm266, %v984, 0.0
  %v1440 = vadd.f32 %v1438, %v1439
  %v1441 = vsel %vm266, %v985, 0.0
  %v1442 = vadd.f32 %v1440, %v1441
  %v1443 = vsel %vm266, %v986, 0.0
  %v1444 = vadd.f32 %v1442, %v1443
  %v1445 = vsel %vm266, %v987, 0.0
  %v1446 = vadd.f32 %v1444, %v1445
  %v1447 = vsel %vm266, %v988, 0.0
  %v1448 = vadd.f32 %v1446, %v1447
  %v1449 = vsel %vm266, %v989, 0.0
  %v1450 = vadd.f32 %v1448, %v1449
  %v1451 = vsel %vm266, %v990, 0.0
  %v1452 = vadd.f32 %v1450, %v1451
  %v1453 = vsel %vm266, %v991, 0.0
  %v1454 = vadd.f32 %v1452, %v1453
  %v1455 = vsel %vm266, %v992, 0.0
  %v1456 = vadd.f32 %v1454, %v1455
  %v1457 = vsel %vm266, %v993, 0.0
  %v1458 = vadd.f32 %v1456, %v1457
  %v1459 = vsel %vm266, %v994, 0.0
  %v1460 = vadd.f32 %v1458, %v1459
  %v1461 = vsel %vm266, %v995, 0.0
  %v1462 = vadd.f32 %v1460, %v1461
  %v1463 = vsel %vm266, %v996, 0.0
  %v1464 = vadd.f32 %v1462, %v1463
  %v1465 = vsel %vm266, %v997, 0.0
  %v1466 = vadd.f32 %v1464, %v1465
  %v1467 = vsel %vm266, %v998, 0.0
  %v1468 = vadd.f32 %v1466, %v1467
  %v1469 = vsel %vm266, %v999, 0.0
  %v1470 = vadd.f32 %v1468, %v1469
  %v1471 = vsel %vm266, %v1000, 0.0
  %v1472 = vadd.f32 %v1470, %v1471
  %v1473 = vsel %vm266, %v1001, 0.0
  %v1474 = vadd.f32 %v1472, %v1473
  %v1475 = vsel %vm266, %v1002, 0.0
  %v1476 = vadd.f32 %v1474, %v1475
  %v1477 = vsel %vm266, %v1003, 0.0
  %v1478 = vadd.f32 %v1476, %v1477
  %v1479 = vsel %vm266, %v1004, 0.0
  %v1480 = vadd.f32 %v1478, %v1479
  %v1481 = vsel %vm266, %v1005, 0.0
  %v1482 = vadd.f32 %v1480, %v1481
  %v1483 = vsel %vm266, %v1006, 0.0
  %v1484 = vadd.f32 %v1482, %v1483
  %v1485 = vsel %vm266, %v1007, 0.0
  %v1486 = vadd.f32 %v1484, %v1485
  %v1487 = vsel %vm266, %v1008, 0.0
  %v1488 = vadd.f32 %v1486, %v1487
  %v1489 = vsel %vm266, %v1009, 0.0
  %v1490 = vadd.f32 %v1488, %v1489
  %v1491 = vsel %vm266, %v1010, 0.0
  %v1492 = vadd.f32 %v1490, %v1491
  %v1493 = vsel %vm266, %v1011, 0.0
  %v1494 = vadd.f32 %v1492, %v1493
  %v1495 = vsel %vm266, %v1012, 0.0
  %v1496 = vadd.f32 %v1494, %v1495
  %v1497 = vsel %vm266, %v1013, 0.0
  %v1498 = vadd.f32 %v1496, %v1497
  %v1499 = vsel %vm266, %v1014, 0.0
  %v1500 = vadd.f32 %v1498, %v1499
  %v1501 = vsel %vm266, %v1015, 0.0
  %v1502 = vadd.f32 %v1500, %v1501
  %v1503 = vsel %vm266, %v1016, 0.0
  %v1504 = vadd.f32 %v1502, %v1503
  %v1505 = vsel %vm266, %v1017, 0.0
  %v1506 = vadd.f32 %v1504, %v1505
  %v1507 = vsel %vm266, %v1018, 0.0
  %v1508 = vadd.f32 %v1506, %v1507
  %v1509 = vsel %vm266, %v1019, 0.0
  %v1510 = vadd.f32 %v1508, %v1509
  %v1511 = vsel %vm266, %v1020, 0.0
  %v1512 = vadd.f32 %v1510, %v1511
  %v1513 = vsel %vm266, %v1021, 0.0
  %v1514 = vadd.f32 %v1512, %v1513
  %v1515 = vsel %vm266, %v1022, 0.0
  %v1516 = vadd.f32 %v1514, %v1515
  %v1517 = vsel %vm266, %v1023, 0.0
  %v1518 = vadd.f32 %v1516, %v1517
  %v1519 = vsel %vm266, %v1024, 0.0
  %v1520 = vadd.f32 %v1518, %v1519
  %v1521 = vsel %vm266, %v1025, 0.0
  %v1522 = vadd.f32 %v1520, %v1521
  %v1523 = vsel %vm266, %v1026, 0.0
  %v1524 = vadd.f32 %v1522, %v1523
  %v1525 = vsel %vm266, %v1027, 0.0
  %v1526 = vadd.f32 %v1524, %v1525
  %v1527 = vsel %vm266, %v1028, 0.0
  %v1528 = vadd.f32 %v1526, %v1527
  %v1529 = vsel %vm266, %v1029, 0.0
  %v1530 = vadd.f32 %v1528, %v1529
  %v1531 = vsel %vm266, %v1030, 0.0
  %v1532 = vadd.f32 %v1530, %v1531
  %v1533 = vsel %vm266, %v1031, 0.0
  %v1534 = vadd.f32 %v1532, %v1533
  %v1535 = vsel %vm266, %v1032, 0.0
  %v1536 = vadd.f32 %v1534, %v1535
  %v1537 = vsel %vm266, %v1033, 0.0
  %v1538 = vadd.f32 %v1536, %v1537
  %v1539 = vsel %vm266, %v1034, 0.0
  %v1540 = vadd.f32 %v1538, %v1539
  %v1541 = vsel %vm266, %v1035, 0.0
  %v1542 = vadd.f32 %v1540, %v1541
  %v1543 = vsel %vm266, %v1036, 0.0
  %v1544 = vadd.f32 %v1542, %v1543
  %v1545 = vsel %vm266, %v1037, 0.0
  %v1546 = vadd.f32 %v1544, %v1545
  %v1547 = vsel %vm266, %v1038, 0.0
  %v1548 = vadd.f32 %v1546, %v1547
  %v1549 = vsel %vm266, %v1039, 0.0
  %v1550 = vadd.f32 %v1548, %v1549
  %v1551 = vrot.slane %v1550, 4
  %v1552 = vadd.f32 %v1550, %v1551
  %v1553 = vrot.slane %v1552, 2
  %v1554 = vadd.f32 %v1552, %v1553
  %v1555 = vrot.slane %v1554, 1
  %v1556 = vadd.f32 %v1554, %v1555
  %p1557 = scmp.eq.s32.totalorder 0, 0
  // Predicated region
  $region6: #{generator_forward.23} parent=0 // pred_check
    %p1558 = pneg %p1557
  $region7: #{generator_forward.23} parent=0 // pred_check_branch
    %1560 = sbr.rel (%p1558) target = $region9
  $region8: #{generator_forward.23} parent=0 // pred_region
    %vm1561 = vcmask 57344
    %1562 = vst.msk [vmem:[%s1] sm:$0x1] %vm1561, %v783
    %1563 = vst.msk [vmem:[%s2] sm:$0x1] %vm1561, %v1556
  $region9: #{generator_forward.23} parent=0 // pred_fallthru
    _
  %p1564 = scmp.gt.s32.totalorder 0, 0
  // Predicated region
  $region10: #{generator_forward.23} parent=0 // pred_check
    %p1565 = pneg %p1564
  $region11: #{generator_forward.23} parent=0 // pred_check_branch
    %1567 = sbr.rel (%p1565) target = $region13
  $region12: #{generator_forward.23} parent=0 // pred_region
    %v1568 = vld [vmem:[%s1] sm:$0x1]
    %v1569 = vadd.f32 %v1568, %v783
    %vm1570 = vcmask 57344
    %1571 = vst.msk [vmem:[%s1] sm:$0x1] %vm1570, %v1569
    %v1572 = vld [vmem:[%s2] sm:$0x1]
    %v1573 = vadd.f32 %v1572, %v1556
    %1574 = vst.msk [vmem:[%s2] sm:$0x1] %vm1570, %v1573
  $region13: #{generator_forward.23} parent=0 // pred_fallthru
    _
  // Predicated region
  $region14: #{generator_forward.23} parent=0 // pred_check
    _
  $region15: #{generator_forward.23} parent=0 // pred_check_branch
    %1576 = sbr.rel (0) target = $region17
  $region16: #{generator_forward.23} parent=0 // pred_region
    _
  $region17: #{generator_forward.23} parent=0 // pred_fallthru
    _
  // Predicated region
  $region18: #{generator_forward.23} parent=0 // pred_check
    _
  $region19: #{generator_forward.23} parent=0 // pred_check_branch
    %1578 = sbr.rel (0) target = $region21
  $region20: #{generator_forward.23} parent=0 // pred_region
    _
  $region21: #{generator_forward.23} parent=0 // pred_fallthru
    _
  // Predicated region
  $region22: #{generator_forward.23} parent=0 // pred_check
    _
  $region23: #{generator_forward.23} parent=0 // pred_check_branch
    %1580 = sbr.rel (0) target = $region25
  $region24: #{generator_forward.23} parent=0 // pred_region
    _
  $region25: #{generator_forward.23} parent=0 // pred_fallthru
    _
  // Predicated region
  $region26: #{generator_forward.23} parent=0 // pred_check
    _
  $region27: #{generator_forward.23} parent=0 // pred_check_branch
    %1582 = sbr.rel (0) target = $region29
  $region28: #{generator_forward.23} parent=0 // pred_region
    _
  $region29: #{generator_forward.23} parent=0 // pred_fallthru
    _

// kernel: generator_forward.24
$region0: #{generator_forward.24}
  #allocation0 [shape = 'u32[]', space=smem, size = 0x4, offset = 0x4, fixed_abs, tag = 'smem constant byte address 0x4 - core index']
  #allocation1 [shape = 'u32[72,128]{1,0:T(1,128)}', space=vmem, size = 0x9000, scoped, tag = 'internal scratch']
  %s0 = inlined_call_operand.vmem [shape: f32[2048,8], index: 0, kind: input, shape index: {}]
  %s1 = inlined_call_operand.vmem [shape: f32[1,8], index: 1, kind: input, shape index: {}]
  %s2 = inlined_call_operand.vmem [shape: f32[1,8], index: 2, kind: input, shape index: {}]
  %s3 = inlined_call_operand.vmem [shape: bf16[2048,8], index: 3, kind: output, shape index: {}]
  %s4 = sld [smem:[#allocation0]]
  $region22: #{generator_forward.24} parent=0
    _
  %s6 = ssub.s32 1, %s4
  %s7 = scalar_select 0, %s6, %s4
  // Predicated region
  $region2: #{generator_forward.24} parent=0 // pred_check
    _
  $region3: #{generator_forward.24} parent=0 // pred_check_branch
    %9 = sbr.rel (0) target = $region5
  $region4: #{generator_forward.24} parent=0 // pred_region
    _
  $region5: #{generator_forward.24} parent=0 // pred_fallthru
    _
  // Predicated region
  $region6: #{generator_forward.24} parent=0 // pred_check
    _
  $region7: #{generator_forward.24} parent=0 // pred_check_branch
    %11 = sbr.rel (0) target = $region9
  $region8: #{generator_forward.24} parent=0 // pred_region
    _
  $region9: #{generator_forward.24} parent=0 // pred_fallthru
    _
  // Predicated region
  $region10: #{generator_forward.24} parent=0 // pred_check
    _
  $region11: #{generator_forward.24} parent=0 // pred_check_branch
    %13 = sbr.rel (0) target = $region13
  $region12: #{generator_forward.24} parent=0 // pred_region
    _
  $region13: #{generator_forward.24} parent=0 // pred_fallthru
    _
  %v14 = vld [vmem:[%s0] sm:$0xff]
  %v15 = vld [vmem:[%s0 + $0x8] sm:$0xff]
  %v16 = vld [vmem:[%s0 + $0x10] sm:$0xff]
  %v17 = vld [vmem:[%s0 + $0x18] sm:$0xff]
  %v18 = vld [vmem:[%s0 + $0x20] sm:$0xff]
  %v19 = vld [vmem:[%s0 + $0x28] sm:$0xff]
  %v20 = vld [vmem:[%s0 + $0x30] sm:$0xff]
  %v21 = vld [vmem:[%s0 + $0x38] sm:$0xff]
  %v22 = vld [vmem:[%s0 + $0x40] sm:$0xff]
  %v23 = vld [vmem:[%s0 + $0x48] sm:$0xff]
  %v24 = vld [vmem:[%s0 + $0x50] sm:$0xff]
  %v25 = vld [vmem:[%s0 + $0x58] sm:$0xff]
  %v26 = vld [vmem:[%s0 + $0x60] sm:$0xff]
  %v27 = vld [vmem:[%s0 + $0x68] sm:$0xff]
  %v28 = vld [vmem:[%s0 + $0x70] sm:$0xff]
  %v29 = vld [vmem:[%s0 + $0x78] sm:$0xff]
  %v30 = vld [vmem:[%s0 + $0x80] sm:$0xff]
  %v31 = vld [vmem:[%s0 + $0x88] sm:$0xff]
  %v32 = vld [vmem:[%s0 + $0x90] sm:$0xff]
  %v33 = vld [vmem:[%s0 + $0x98] sm:$0xff]
  %v34 = vld [vmem:[%s0 + $0xa0] sm:$0xff]
  %v35 = vld [vmem:[%s0 + $0xa8] sm:$0xff]
  %v36 = vld [vmem:[%s0 + $0xb0] sm:$0xff]
  %v37 = vld [vmem:[%s0 + $0xb8] sm:$0xff]
  %v38 = vld [vmem:[%s0 + $0xc0] sm:$0xff]
  %v39 = vld [vmem:[%s0 + $0xc8] sm:$0xff]
  %v40 = vld [vmem:[%s0 + $0xd0] sm:$0xff]
  %v41 = vld [vmem:[%s0 + $0xd8] sm:$0xff]
  %v42 = vld [vmem:[%s0 + $0xe0] sm:$0xff]
  %v43 = vld [vmem:[%s0 + $0xe8] sm:$0xff]
  %v44 = vld [vmem:[%s0 + $0xf0] sm:$0xff]
  %v45 = vld [vmem:[%s0 + $0xf8] sm:$0xff]
  %v46 = vld [vmem:[%s0 + $0x100] sm:$0xff]
  %v47 = vld [vmem:[%s0 + $0x108] sm:$0xff]
  %v48 = vld [vmem:[%s0 + $0x110] sm:$0xff]
  %v49 = vld [vmem:[%s0 + $0x118] sm:$0xff]
  %v50 = vld [vmem:[%s0 + $0x120] sm:$0xff]
  %v51 = vld [vmem:[%s0 + $0x128] sm:$0xff]
  %v52 = vld [vmem:[%s0 + $0x130] sm:$0xff]
  %v53 = vld [vmem:[%s0 + $0x138] sm:$0xff]
  %v54 = vld [vmem:[%s0 + $0x140] sm:$0xff]
  %v55 = vld [vmem:[%s0 + $0x148] sm:$0xff]
  %v56 = vld [vmem:[%s0 + $0x150] sm:$0xff]
  %v57 = vld [vmem:[%s0 + $0x158] sm:$0xff]
  %v58 = vld [vmem:[%s0 + $0x160] sm:$0xff]
  %v59 = vld [vmem:[%s0 + $0x168] sm:$0xff]
  %v60 = vld [vmem:[%s0 + $0x170] sm:$0xff]
  %v61 = vld [vmem:[%s0 + $0x178] sm:$0xff]
  %v62 = vld [vmem:[%s0 + $0x180] sm:$0xff]
  %v63 = vld [vmem:[%s0 + $0x188] sm:$0xff]
  %v64 = vld [vmem:[%s0 + $0x190] sm:$0xff]
  %v65 = vld [vmem:[%s0 + $0x198] sm:$0xff]
  %v66 = vld [vmem:[%s0 + $0x1a0] sm:$0xff]
  %v67 = vld [vmem:[%s0 + $0x1a8] sm:$0xff]
  %v68 = vld [vmem:[%s0 + $0x1b0] sm:$0xff]
  %v69 = vld [vmem:[%s0 + $0x1b8] sm:$0xff]
  %v70 = vld [vmem:[%s0 + $0x1c0] sm:$0xff]
  %v71 = vld [vmem:[%s0 + $0x1c8] sm:$0xff]
  %v72 = vld [vmem:[%s0 + $0x1d0] sm:$0xff]
  %v73 = vld [vmem:[%s0 + $0x1d8] sm:$0xff]
  %v74 = vld [vmem:[%s0 + $0x1e0] sm:$0xff]
  %v75 = vld [vmem:[%s0 + $0x1e8] sm:$0xff]
  %v76 = vld [vmem:[%s0 + $0x1f0] sm:$0xff]
  %v77 = vld [vmem:[%s0 + $0x1f8] sm:$0xff]
  %v78 = vld [vmem:[%s0 + $0x200] sm:$0xff]
  %v79 = vld [vmem:[%s0 + $0x208] sm:$0xff]
  %v80 = vld [vmem:[%s0 + $0x210] sm:$0xff]
  %v81 = vld [vmem:[%s0 + $0x218] sm:$0xff]
  %v82 = vld [vmem:[%s0 + $0x220] sm:$0xff]
  %v83 = vld [vmem:[%s0 + $0x228] sm:$0xff]
  %v84 = vld [vmem:[%s0 + $0x230] sm:$0xff]
  %v85 = vld [vmem:[%s0 + $0x238] sm:$0xff]
  %v86 = vld [vmem:[%s0 + $0x240] sm:$0xff]
  %v87 = vld [vmem:[%s0 + $0x248] sm:$0xff]
  %v88 = vld [vmem:[%s0 + $0x250] sm:$0xff]
  %v89 = vld [vmem:[%s0 + $0x258] sm:$0xff]
  %v90 = vld [vmem:[%s0 + $0x260] sm:$0xff]
  %v91 = vld [vmem:[%s0 + $0x268] sm:$0xff]
  %v92 = vld [vmem:[%s0 + $0x270] sm:$0xff]
  %v93 = vld [vmem:[%s0 + $0x278] sm:$0xff]
  %v94 = vld [vmem:[%s0 + $0x280] sm:$0xff]
  %v95 = vld [vmem:[%s0 + $0x288] sm:$0xff]
  %v96 = vld [vmem:[%s0 + $0x290] sm:$0xff]
  %v97 = vld [vmem:[%s0 + $0x298] sm:$0xff]
  %v98 = vld [vmem:[%s0 + $0x2a0] sm:$0xff]
  %v99 = vld [vmem:[%s0 + $0x2a8] sm:$0xff]
  %v100 = vld [vmem:[%s0 + $0x2b0] sm:$0xff]
  %v101 = vld [vmem:[%s0 + $0x2b8] sm:$0xff]
  %v102 = vld [vmem:[%s0 + $0x2c0] sm:$0xff]
  %v103 = vld [vmem:[%s0 + $0x2c8] sm:$0xff]
  %v104 = vld [vmem:[%s0 + $0x2d0] sm:$0xff]
  %v105 = vld [vmem:[%s0 + $0x2d8] sm:$0xff]
  %v106 = vld [vmem:[%s0 + $0x2e0] sm:$0xff]
  %v107 = vld [vmem:[%s0 + $0x2e8] sm:$0xff]
  %v108 = vld [vmem:[%s0 + $0x2f0] sm:$0xff]
  %v109 = vld [vmem:[%s0 + $0x2f8] sm:$0xff]
  %v110 = vld [vmem:[%s0 + $0x300] sm:$0xff]
  %v111 = vld [vmem:[%s0 + $0x308] sm:$0xff]
  %v112 = vld [vmem:[%s0 + $0x310] sm:$0xff]
  %v113 = vld [vmem:[%s0 + $0x318] sm:$0xff]
  %v114 = vld [vmem:[%s0 + $0x320] sm:$0xff]
  %v115 = vld [vmem:[%s0 + $0x328] sm:$0xff]
  %v116 = vld [vmem:[%s0 + $0x330] sm:$0xff]
  %v117 = vld [vmem:[%s0 + $0x338] sm:$0xff]
  %v118 = vld [vmem:[%s0 + $0x340] sm:$0xff]
  %v119 = vld [vmem:[%s0 + $0x348] sm:$0xff]
  %v120 = vld [vmem:[%s0 + $0x350] sm:$0xff]
  %v121 = vld [vmem:[%s0 + $0x358] sm:$0xff]
  %v122 = vld [vmem:[%s0 + $0x360] sm:$0xff]
  %v123 = vld [vmem:[%s0 + $0x368] sm:$0xff]
  %v124 = vld [vmem:[%s0 + $0x370] sm:$0xff]
  %v125 = vld [vmem:[%s0 + $0x378] sm:$0xff]
  %v126 = vld [vmem:[%s0 + $0x380] sm:$0xff]
  %v127 = vld [vmem:[%s0 + $0x388] sm:$0xff]
  %v128 = vld [vmem:[%s0 + $0x390] sm:$0xff]
  %v129 = vld [vmem:[%s0 + $0x398] sm:$0xff]
  %v130 = vld [vmem:[%s0 + $0x3a0] sm:$0xff]
  %v131 = vld [vmem:[%s0 + $0x3a8] sm:$0xff]
  %v132 = vld [vmem:[%s0 + $0x3b0] sm:$0xff]
  %v133 = vld [vmem:[%s0 + $0x3b8] sm:$0xff]
  %v134 = vld [vmem:[%s0 + $0x3c0] sm:$0xff]
  %v135 = vld [vmem:[%s0 + $0x3c8] sm:$0xff]
  %v136 = vld [vmem:[%s0 + $0x3d0] sm:$0xff]
  %v137 = vld [vmem:[%s0 + $0x3d8] sm:$0xff]
  %v138 = vld [vmem:[%s0 + $0x3e0] sm:$0xff]
  %v139 = vld [vmem:[%s0 + $0x3e8] sm:$0xff]
  %v140 = vld [vmem:[%s0 + $0x3f0] sm:$0xff]
  %v141 = vld [vmem:[%s0 + $0x3f8] sm:$0xff]
  %v142 = vld [vmem:[%s0 + $0x400] sm:$0xff]
  %v143 = vld [vmem:[%s0 + $0x408] sm:$0xff]
  %v144 = vld [vmem:[%s0 + $0x410] sm:$0xff]
  %v145 = vld [vmem:[%s0 + $0x418] sm:$0xff]
  %v146 = vld [vmem:[%s0 + $0x420] sm:$0xff]
  %v147 = vld [vmem:[%s0 + $0x428] sm:$0xff]
  %v148 = vld [vmem:[%s0 + $0x430] sm:$0xff]
  %v149 = vld [vmem:[%s0 + $0x438] sm:$0xff]
  %v150 = vld [vmem:[%s0 + $0x440] sm:$0xff]
  %v151 = vld [vmem:[%s0 + $0x448] sm:$0xff]
  %v152 = vld [vmem:[%s0 + $0x450] sm:$0xff]
  %v153 = vld [vmem:[%s0 + $0x458] sm:$0xff]
  %v154 = vld [vmem:[%s0 + $0x460] sm:$0xff]
  %v155 = vld [vmem:[%s0 + $0x468] sm:$0xff]
  %v156 = vld [vmem:[%s0 + $0x470] sm:$0xff]
  %v157 = vld [vmem:[%s0 + $0x478] sm:$0xff]
  %v158 = vld [vmem:[%s0 + $0x480] sm:$0xff]
  %v159 = vld [vmem:[%s0 + $0x488] sm:$0xff]
  %v160 = vld [vmem:[%s0 + $0x490] sm:$0xff]
  %v161 = vld [vmem:[%s0 + $0x498] sm:$0xff]
  %v162 = vld [vmem:[%s0 + $0x4a0] sm:$0xff]
  %v163 = vld [vmem:[%s0 + $0x4a8] sm:$0xff]
  %v164 = vld [vmem:[%s0 + $0x4b0] sm:$0xff]
  %v165 = vld [vmem:[%s0 + $0x4b8] sm:$0xff]
  %v166 = vld [vmem:[%s0 + $0x4c0] sm:$0xff]
  %v167 = vld [vmem:[%s0 + $0x4c8] sm:$0xff]
  %v168 = vld [vmem:[%s0 + $0x4d0] sm:$0xff]
  %v169 = vld [vmem:[%s0 + $0x4d8] sm:$0xff]
  %v170 = vld [vmem:[%s0 + $0x4e0] sm:$0xff]
  %v171 = vld [vmem:[%s0 + $0x4e8] sm:$0xff]
  %v172 = vld [vmem:[%s0 + $0x4f0] sm:$0xff]
  %v173 = vld [vmem:[%s0 + $0x4f8] sm:$0xff]
  %v174 = vld [vmem:[%s0 + $0x500] sm:$0xff]
  %v175 = vld [vmem:[%s0 + $0x508] sm:$0xff]
  %v176 = vld [vmem:[%s0 + $0x510] sm:$0xff]
  %v177 = vld [vmem:[%s0 + $0x518] sm:$0xff]
  %v178 = vld [vmem:[%s0 + $0x520] sm:$0xff]
  %v179 = vld [vmem:[%s0 + $0x528] sm:$0xff]
  %v180 = vld [vmem:[%s0 + $0x530] sm:$0xff]
  %v181 = vld [vmem:[%s0 + $0x538] sm:$0xff]
  %v182 = vld [vmem:[%s0 + $0x540] sm:$0xff]
  %v183 = vld [vmem:[%s0 + $0x548] sm:$0xff]
  %v184 = vld [vmem:[%s0 + $0x550] sm:$0xff]
  %v185 = vld [vmem:[%s0 + $0x558] sm:$0xff]
  %v186 = vld [vmem:[%s0 + $0x560] sm:$0xff]
  %v187 = vld [vmem:[%s0 + $0x568] sm:$0xff]
  %v188 = vld [vmem:[%s0 + $0x570] sm:$0xff]
  %v189 = vld [vmem:[%s0 + $0x578] sm:$0xff]
  %v190 = vld [vmem:[%s0 + $0x580] sm:$0xff]
  %v191 = vld [vmem:[%s0 + $0x588] sm:$0xff]
  %v192 = vld [vmem:[%s0 + $0x590] sm:$0xff]
  %v193 = vld [vmem:[%s0 + $0x598] sm:$0xff]
  %v194 = vld [vmem:[%s0 + $0x5a0] sm:$0xff]
  %v195 = vld [vmem:[%s0 + $0x5a8] sm:$0xff]
  %v196 = vld [vmem:[%s0 + $0x5b0] sm:$0xff]
  %v197 = vld [vmem:[%s0 + $0x5b8] sm:$0xff]
  %v198 = vld [vmem:[%s0 + $0x5c0] sm:$0xff]
  %v199 = vld [vmem:[%s0 + $0x5c8] sm:$0xff]
  %v200 = vld [vmem:[%s0 + $0x5d0] sm:$0xff]
  %v201 = vld [vmem:[%s0 + $0x5d8] sm:$0xff]
  %v202 = vld [vmem:[%s0 + $0x5e0] sm:$0xff]
  %v203 = vld [vmem:[%s0 + $0x5e8] sm:$0xff]
  %v204 = vld [vmem:[%s0 + $0x5f0] sm:$0xff]
  %v205 = vld [vmem:[%s0 + $0x5f8] sm:$0xff]
  %v206 = vld [vmem:[%s0 + $0x600] sm:$0xff]
  %v207 = vld [vmem:[%s0 + $0x608] sm:$0xff]
  %v208 = vld [vmem:[%s0 + $0x610] sm:$0xff]
  %v209 = vld [vmem:[%s0 + $0x618] sm:$0xff]
  %v210 = vld [vmem:[%s0 + $0x620] sm:$0xff]
  %v211 = vld [vmem:[%s0 + $0x628] sm:$0xff]
  %v212 = vld [vmem:[%s0 + $0x630] sm:$0xff]
  %v213 = vld [vmem:[%s0 + $0x638] sm:$0xff]
  %v214 = vld [vmem:[%s0 + $0x640] sm:$0xff]
  %v215 = vld [vmem:[%s0 + $0x648] sm:$0xff]
  %v216 = vld [vmem:[%s0 + $0x650] sm:$0xff]
  %v217 = vld [vmem:[%s0 + $0x658] sm:$0xff]
  %v218 = vld [vmem:[%s0 + $0x660] sm:$0xff]
  %v219 = vld [vmem:[%s0 + $0x668] sm:$0xff]
  %v220 = vld [vmem:[%s0 + $0x670] sm:$0xff]
  %v221 = vld [vmem:[%s0 + $0x678] sm:$0xff]
  %v222 = vld [vmem:[%s0 + $0x680] sm:$0xff]
  %v223 = vld [vmem:[%s0 + $0x688] sm:$0xff]
  %v224 = vld [vmem:[%s0 + $0x690] sm:$0xff]
  %v225 = vld [vmem:[%s0 + $0x698] sm:$0xff]
  %v226 = vld [vmem:[%s0 + $0x6a0] sm:$0xff]
  %v227 = vld [vmem:[%s0 + $0x6a8] sm:$0xff]
  %v228 = vld [vmem:[%s0 + $0x6b0] sm:$0xff]
  %v229 = vld [vmem:[%s0 + $0x6b8] sm:$0xff]
  %v230 = vld [vmem:[%s0 + $0x6c0] sm:$0xff]
  %v231 = vld [vmem:[%s0 + $0x6c8] sm:$0xff]
  %v232 = vld [vmem:[%s0 + $0x6d0] sm:$0xff]
  %v233 = vld [vmem:[%s0 + $0x6d8] sm:$0xff]
  %v234 = vld [vmem:[%s0 + $0x6e0] sm:$0xff]
  %v235 = vld [vmem:[%s0 + $0x6e8] sm:$0xff]
  %v236 = vld [vmem:[%s0 + $0x6f0] sm:$0xff]
  %v237 = vld [vmem:[%s0 + $0x6f8] sm:$0xff]
  %v238 = vld [vmem:[%s0 + $0x700] sm:$0xff]
  %v239 = vld [vmem:[%s0 + $0x708] sm:$0xff]
  %v240 = vld [vmem:[%s0 + $0x710] sm:$0xff]
  %v241 = vld [vmem:[%s0 + $0x718] sm:$0xff]
  %v242 = vld [vmem:[%s0 + $0x720] sm:$0xff]
  %v243 = vld [vmem:[%s0 + $0x728] sm:$0xff]
  %v244 = vld [vmem:[%s0 + $0x730] sm:$0xff]
  %v245 = vld [vmem:[%s0 + $0x738] sm:$0xff]
  %v246 = vld [vmem:[%s0 + $0x740] sm:$0xff]
  %v247 = vld [vmem:[%s0 + $0x748] sm:$0xff]
  %v248 = vld [vmem:[%s0 + $0x750] sm:$0xff]
  %v249 = vld [vmem:[%s0 + $0x758] sm:$0xff]
  %v250 = vld [vmem:[%s0 + $0x760] sm:$0xff]
  %v251 = vld [vmem:[%s0 + $0x768] sm:$0xff]
  %v252 = vld [vmem:[%s0 + $0x770] sm:$0xff]
  %v253 = vld [vmem:[%s0 + $0x778] sm:$0xff]
  %v254 = vld [vmem:[%s0 + $0x780] sm:$0xff]
  %v255 = vld [vmem:[%s0 + $0x788] sm:$0xff]
  %v256 = vld [vmem:[%s0 + $0x790] sm:$0xff]
  %v257 = vld [vmem:[%s0 + $0x798] sm:$0xff]
  %v258 = vld [vmem:[%s0 + $0x7a0] sm:$0xff]
  %v259 = vld [vmem:[%s0 + $0x7a8] sm:$0xff]
  %v260 = vld [vmem:[%s0 + $0x7b0] sm:$0xff]
  %v261 = vld [vmem:[%s0 + $0x7b8] sm:$0xff]
  %v262 = vld [vmem:[%s0 + $0x7c0] sm:$0xff]
  %v263 = vld [vmem:[%s0 + $0x7c8] sm:$0xff]
  %v264 = vld [vmem:[%s0 + $0x7d0] sm:$0xff]
  %v265 = vld [vmem:[%s0 + $0x7d8] sm:$0xff]
  %v266 = vld [vmem:[%s0 + $0x7e0] sm:$0xff]
  %v267 = vld [vmem:[%s0 + $0x7e8] sm:$0xff]
  %v268 = vld [vmem:[%s0 + $0x7f0] sm:$0xff]
  %v269 = vld [vmem:[%s0 + $0x7f8] sm:$0xff]
  %v270 = vld [vmem:[%s1] sm:$0x1]
  %v272 = vperm.slane %v270, 0
  %v274 = vmul.f32 %v14, %v272
  %v275 = vmul.f32 %v15, %v272
  %v276 = vmul.f32 %v16, %v272
  %v277 = vmul.f32 %v17, %v272
  %v278 = vmul.f32 %v18, %v272
  %v279 = vmul.f32 %v19, %v272
  %v280 = vmul.f32 %v20, %v272
  %v281 = vmul.f32 %v21, %v272
  %v282 = vmul.f32 %v22, %v272
  %v283 = vmul.f32 %v23, %v272
  %v284 = vmul.f32 %v24, %v272
  %v285 = vmul.f32 %v25, %v272
  %v286 = vmul.f32 %v26, %v272
  %v287 = vmul.f32 %v27, %v272
  %v288 = vmul.f32 %v28, %v272
  %v289 = vmul.f32 %v29, %v272
  %v290 = vmul.f32 %v30, %v272
  %v291 = vmul.f32 %v31, %v272
  %v292 = vmul.f32 %v32, %v272
  %v293 = vmul.f32 %v33, %v272
  %v294 = vmul.f32 %v34, %v272
  %v295 = vmul.f32 %v35, %v272
  %v296 = vmul.f32 %v36, %v272
  %v297 = vmul.f32 %v37, %v272
  %v298 = vmul.f32 %v38, %v272
  %v299 = vmul.f32 %v39, %v272
  %v300 = vmul.f32 %v40, %v272
  %v301 = vmul.f32 %v41, %v272
  %v302 = vmul.f32 %v42, %v272
  %v303 = vmul.f32 %v43, %v272
  %v304 = vmul.f32 %v44, %v272
  %v305 = vmul.f32 %v45, %v272
  %v306 = vmul.f32 %v46, %v272
  %v307 = vmul.f32 %v47, %v272
  %v308 = vmul.f32 %v48, %v272
  %v309 = vmul.f32 %v49, %v272
  %v310 = vmul.f32 %v50, %v272
  %v311 = vmul.f32 %v51, %v272
  %v312 = vmul.f32 %v52, %v272
  %v313 = vmul.f32 %v53, %v272
  %v314 = vmul.f32 %v54, %v272
  %v315 = vmul.f32 %v55, %v272
  %v316 = vmul.f32 %v56, %v272
  %v317 = vmul.f32 %v57, %v272
  %v318 = vmul.f32 %v58, %v272
  %v319 = vmul.f32 %v59, %v272
  %v320 = vmul.f32 %v60, %v272
  %v321 = vmul.f32 %v61, %v272
  %v322 = vmul.f32 %v62, %v272
  %v323 = vmul.f32 %v63, %v272
  %v324 = vmul.f32 %v64, %v272
  %v325 = vmul.f32 %v65, %v272
  %v326 = vmul.f32 %v66, %v272
  %v327 = vmul.f32 %v67, %v272
  %v328 = vmul.f32 %v68, %v272
  %v329 = vmul.f32 %v69, %v272
  %v330 = vmul.f32 %v70, %v272
  %v331 = vmul.f32 %v71, %v272
  %v332 = vmul.f32 %v72, %v272
  %v333 = vmul.f32 %v73, %v272
  %v334 = vmul.f32 %v74, %v272
  %v335 = vmul.f32 %v75, %v272
  %v336 = vmul.f32 %v76, %v272
  %v337 = vmul.f32 %v77, %v272
  %v338 = vmul.f32 %v78, %v272
  %v339 = vmul.f32 %v79, %v272
  %v340 = vmul.f32 %v80, %v272
  %v341 = vmul.f32 %v81, %v272
  %v342 = vmul.f32 %v82, %v272
  %v343 = vmul.f32 %v83, %v272
  %v344 = vmul.f32 %v84, %v272
  %v345 = vmul.f32 %v85, %v272
  %v346 = vmul.f32 %v86, %v272
  %v347 = vmul.f32 %v87, %v272
  %v348 = vmul.f32 %v88, %v272
  %v349 = vmul.f32 %v89, %v272
  %v350 = vmul.f32 %v90, %v272
  %v351 = vmul.f32 %v91, %v272
  %v352 = vmul.f32 %v92, %v272
  %v353 = vmul.f32 %v93, %v272
  %v354 = vmul.f32 %v94, %v272
  %v355 = vmul.f32 %v95, %v272
  %v356 = vmul.f32 %v96, %v272
  %v357 = vmul.f32 %v97, %v272
  %v358 = vmul.f32 %v98, %v272
  %v359 = vmul.f32 %v99, %v272
  %v360 = vmul.f32 %v100, %v272
  %v361 = vmul.f32 %v101, %v272
  %v362 = vmul.f32 %v102, %v272
  %v363 = vmul.f32 %v103, %v272
  %v364 = vmul.f32 %v104, %v272
  %v365 = vmul.f32 %v105, %v272
  %v366 = vmul.f32 %v106, %v272
  %v367 = vmul.f32 %v107, %v272
  %v368 = vmul.f32 %v108, %v272
  %v369 = vmul.f32 %v109, %v272
  %v370 = vmul.f32 %v110, %v272
  %v371 = vmul.f32 %v111, %v272
  %v372 = vmul.f32 %v112, %v272
  %v373 = vmul.f32 %v113, %v272
  %v374 = vmul.f32 %v114, %v272
  %v375 = vmul.f32 %v115, %v272
  %v376 = vmul.f32 %v116, %v272
  %v377 = vmul.f32 %v117, %v272
  %v378 = vmul.f32 %v118, %v272
  %v379 = vmul.f32 %v119, %v272
  %v380 = vmul.f32 %v120, %v272
  %v381 = vmul.f32 %v121, %v272
  %v382 = vmul.f32 %v122, %v272
  %v383 = vmul.f32 %v123, %v272
  %v384 = vmul.f32 %v124, %v272
  %v385 = vmul.f32 %v125, %v272
  %v386 = vmul.f32 %v126, %v272
  %v387 = vmul.f32 %v127, %v272
  %v388 = vmul.f32 %v128, %v272
  %v389 = vmul.f32 %v129, %v272
  %v390 = vmul.f32 %v130, %v272
  %v391 = vmul.f32 %v131, %v272
  %v392 = vmul.f32 %v132, %v272
  %v393 = vmul.f32 %v133, %v272
  %v394 = vmul.f32 %v134, %v272
  %v395 = vmul.f32 %v135, %v272
  %v396 = vmul.f32 %v136, %v272
  %v397 = vmul.f32 %v137, %v272
  %v398 = vmul.f32 %v138, %v272
  %v399 = vmul.f32 %v139, %v272
  %v400 = vmul.f32 %v140, %v272
  %v401 = vmul.f32 %v141, %v272
  %v402 = vmul.f32 %v142, %v272
  %v403 = vmul.f32 %v143, %v272
  %v404 = vmul.f32 %v144, %v272
  %v405 = vmul.f32 %v145, %v272
  %v406 = vmul.f32 %v146, %v272
  %v407 = vmul.f32 %v147, %v272
  %v408 = vmul.f32 %v148, %v272
  %v409 = vmul.f32 %v149, %v272
  %v410 = vmul.f32 %v150, %v272
  %v411 = vmul.f32 %v151, %v272
  %v412 = vmul.f32 %v152, %v272
  %v413 = vmul.f32 %v153, %v272
  %v414 = vmul.f32 %v154, %v272
  %v415 = vmul.f32 %v155, %v272
  %v416 = vmul.f32 %v156, %v272
  %v417 = vmul.f32 %v157, %v272
  %v418 = vmul.f32 %v158, %v272
  %v419 = vmul.f32 %v159, %v272
  %v420 = vmul.f32 %v160, %v272
  %v421 = vmul.f32 %v161, %v272
  %v422 = vmul.f32 %v162, %v272
  %v423 = vmul.f32 %v163, %v272
  %v424 = vmul.f32 %v164, %v272
  %v425 = vmul.f32 %v165, %v272
  %v426 = vmul.f32 %v166, %v272
  %v427 = vmul.f32 %v167, %v272
  %v428 = vmul.f32 %v168, %v272
  %v429 = vmul.f32 %v169, %v272
  %v430 = vmul.f32 %v170, %v272
  %v431 = vmul.f32 %v171, %v272
  %v432 = vmul.f32 %v172, %v272
  %v433 = vmul.f32 %v173, %v272
  %v434 = vmul.f32 %v174, %v272
  %v435 = vmul.f32 %v175, %v272
  %v436 = vmul.f32 %v176, %v272
  %v437 = vmul.f32 %v177, %v272
  %v438 = vmul.f32 %v178, %v272
  %v439 = vmul.f32 %v179, %v272
  %v440 = vmul.f32 %v180, %v272
  %v441 = vmul.f32 %v181, %v272
  %v442 = vmul.f32 %v182, %v272
  %v443 = vmul.f32 %v183, %v272
  %v444 = vmul.f32 %v184, %v272
  %v445 = vmul.f32 %v185, %v272
  %v446 = vmul.f32 %v186, %v272
  %v447 = vmul.f32 %v187, %v272
  %v448 = vmul.f32 %v188, %v272
  %v449 = vmul.f32 %v189, %v272
  %v450 = vmul.f32 %v190, %v272
  %v451 = vmul.f32 %v191, %v272
  %v452 = vmul.f32 %v192, %v272
  %v453 = vmul.f32 %v193, %v272
  %v454 = vmul.f32 %v194, %v272
  %v455 = vmul.f32 %v195, %v272
  %v456 = vmul.f32 %v196, %v272
  %v457 = vmul.f32 %v197, %v272
  %v458 = vmul.f32 %v198, %v272
  %v459 = vmul.f32 %v199, %v272
  %v460 = vmul.f32 %v200, %v272
  %v461 = vmul.f32 %v201, %v272
  %v462 = vmul.f32 %v202, %v272
  %v463 = vmul.f32 %v203, %v272
  %v464 = vmul.f32 %v204, %v272
  %v465 = vmul.f32 %v205, %v272
  %v466 = vmul.f32 %v206, %v272
  %v467 = vmul.f32 %v207, %v272
  %v468 = vmul.f32 %v208, %v272
  %v469 = vmul.f32 %v209, %v272
  %v470 = vmul.f32 %v210, %v272
  %v471 = vmul.f32 %v211, %v272
  %v472 = vmul.f32 %v212, %v272
  %v473 = vmul.f32 %v213, %v272
  %v474 = vmul.f32 %v214, %v272
  %v475 = vmul.f32 %v215, %v272
  %v476 = vmul.f32 %v216, %v272
  %v477 = vmul.f32 %v217, %v272
  %v478 = vmul.f32 %v218, %v272
  %v479 = vmul.f32 %v219, %v272
  %v480 = vmul.f32 %v220, %v272
  %v481 = vmul.f32 %v221, %v272
  %v482 = vmul.f32 %v222, %v272
  %v483 = vmul.f32 %v223, %v272
  %v484 = vmul.f32 %v224, %v272
  %v485 = vmul.f32 %v225, %v272
  %v486 = vmul.f32 %v226, %v272
  %v487 = vmul.f32 %v227, %v272
  %v488 = vmul.f32 %v228, %v272
  %v489 = vmul.f32 %v229, %v272
  %v490 = vmul.f32 %v230, %v272
  %v491 = vmul.f32 %v231, %v272
  %v492 = vmul.f32 %v232, %v272
  %v493 = vmul.f32 %v233, %v272
  %v494 = vmul.f32 %v234, %v272
  %v495 = vmul.f32 %v235, %v272
  %v496 = vmul.f32 %v236, %v272
  %v497 = vmul.f32 %v237, %v272
  %v498 = vmul.f32 %v238, %v272
  %v499 = vmul.f32 %v239, %v272
  %v500 = vmul.f32 %v240, %v272
  %v501 = vmul.f32 %v241, %v272
  %v502 = vmul.f32 %v242, %v272
  %v503 = vmul.f32 %v243, %v272
  %v504 = vmul.f32 %v244, %v272
  %v505 = vmul.f32 %v245, %v272
  %v506 = vmul.f32 %v246, %v272
  %v507 = vmul.f32 %v247, %v272
  %v508 = vmul.f32 %v248, %v272
  %v509 = vmul.f32 %v249, %v272
  %v510 = vmul.f32 %v250, %v272
  %v511 = vmul.f32 %v251, %v272
  %v512 = vmul.f32 %v252, %v272
  %v513 = vmul.f32 %v253, %v272
  %v514 = vmul.f32 %v254, %v272
  %v515 = vmul.f32 %v255, %v272
  %v516 = vmul.f32 %v256, %v272
  %v517 = vmul.f32 %v257, %v272
  %v518 = vmul.f32 %v258, %v272
  %v519 = vmul.f32 %v259, %v272
  %v520 = vmul.f32 %v260, %v272
  %v521 = vmul.f32 %v261, %v272
  %v522 = vmul.f32 %v262, %v272
  %v523 = vmul.f32 %v263, %v272
  %v524 = vmul.f32 %v264, %v272
  %v525 = vmul.f32 %v265, %v272
  %v526 = vmul.f32 %v266, %v272
  %v527 = vmul.f32 %v267, %v272
  %v528 = vmul.f32 %v268, %v272
  %v529 = vmul.f32 %v269, %v272
  %v530 = vld [vmem:[%s2] sm:$0x1]
  %v532 = vperm.slane %v530, 0
  %v534 = vadd.f32 %v274, %v532
  %v535 = vadd.f32 %v275, %v532
  %v536 = vadd.f32 %v276, %v532
  %v537 = vadd.f32 %v277, %v532
  %v538 = vadd.f32 %v278, %v532
  %v539 = vadd.f32 %v279, %v532
  %v540 = vadd.f32 %v280, %v532
  %v541 = vadd.f32 %v281, %v532
  %v542 = vadd.f32 %v282, %v532
  %v543 = vadd.f32 %v283, %v532
  %v544 = vadd.f32 %v284, %v532
  %v545 = vadd.f32 %v285, %v532
  %v546 = vadd.f32 %v286, %v532
  %v547 = vadd.f32 %v287, %v532
  %v548 = vadd.f32 %v288, %v532
  %v549 = vadd.f32 %v289, %v532
  %v550 = vadd.f32 %v290, %v532
  %v551 = vadd.f32 %v291, %v532
  %v552 = vadd.f32 %v292, %v532
  %v553 = vadd.f32 %v293, %v532
  %v554 = vadd.f32 %v294, %v532
  %v555 = vadd.f32 %v295, %v532
  %v556 = vadd.f32 %v296, %v532
  %v557 = vadd.f32 %v297, %v532
  %v558 = vadd.f32 %v298, %v532
  %v559 = vadd.f32 %v299, %v532
  %v560 = vadd.f32 %v300, %v532
  %v561 = vadd.f32 %v301, %v532
  %v562 = vadd.f32 %v302, %v532
  %v563 = vadd.f32 %v303, %v532
  %v564 = vadd.f32 %v304, %v532
  %v565 = vadd.f32 %v305, %v532
  %v566 = vadd.f32 %v306, %v532
  %v567 = vadd.f32 %v307, %v532
  %v568 = vadd.f32 %v308, %v532
  %v569 = vadd.f32 %v309, %v532
  %v570 = vadd.f32 %v310, %v532
  %v571 = vadd.f32 %v311, %v532
  %v572 = vadd.f32 %v312, %v532
  %v573 = vadd.f32 %v313, %v532
  %v574 = vadd.f32 %v314, %v532
  %v575 = vadd.f32 %v315, %v532
  %v576 = vadd.f32 %v316, %v532
  %v577 = vadd.f32 %v317, %v532
  %v578 = vadd.f32 %v318, %v532
  %v579 = vadd.f32 %v319, %v532
  %v580 = vadd.f32 %v320, %v532
  %v581 = vadd.f32 %v321, %v532
  %v582 = vadd.f32 %v322, %v532
  %v583 = vadd.f32 %v323, %v532
  %v584 = vadd.f32 %v324, %v532
  %v585 = vadd.f32 %v325, %v532
  %v586 = vadd.f32 %v326, %v532
  %v587 = vadd.f32 %v327, %v532
  %v588 = vadd.f32 %v328, %v532
  %v589 = vadd.f32 %v329, %v532
  %v590 = vadd.f32 %v330, %v532
  %v591 = vadd.f32 %v331, %v532
  %v592 = vadd.f32 %v332, %v532
  %v593 = vadd.f32 %v333, %v532
  %v594 = vadd.f32 %v334, %v532
  %v595 = vadd.f32 %v335, %v532
  %v596 = vadd.f32 %v336, %v532
  %v597 = vadd.f32 %v337, %v532
  %v598 = vadd.f32 %v338, %v532
  %v599 = vadd.f32 %v339, %v532
  %v600 = vadd.f32 %v340, %v532
  %v601 = vadd.f32 %v341, %v532
  %v602 = vadd.f32 %v342, %v532
  %v603 = vadd.f32 %v343, %v532
  %v604 = vadd.f32 %v344, %v532
  %v605 = vadd.f32 %v345, %v532
  %v606 = vadd.f32 %v346, %v532
  %v607 = vadd.f32 %v347, %v532
  %v608 = vadd.f32 %v348, %v532
  %v609 = vadd.f32 %v349, %v532
  %v610 = vadd.f32 %v350, %v532
  %v611 = vadd.f32 %v351, %v532
  %v612 = vadd.f32 %v352, %v532
  %v613 = vadd.f32 %v353, %v532
  %v614 = vadd.f32 %v354, %v532
  %v615 = vadd.f32 %v355, %v532
  %v616 = vadd.f32 %v356, %v532
  %v617 = vadd.f32 %v357, %v532
  %v618 = vadd.f32 %v358, %v532
  %v619 = vadd.f32 %v359, %v532
  %v620 = vadd.f32 %v360, %v532
  %v621 = vadd.f32 %v361, %v532
  %v622 = vadd.f32 %v362, %v532
  %v623 = vadd.f32 %v363, %v532
  %v624 = vadd.f32 %v364, %v532
  %v625 = vadd.f32 %v365, %v532
  %v626 = vadd.f32 %v366, %v532
  %v627 = vadd.f32 %v367, %v532
  %v628 = vadd.f32 %v368, %v532
  %v629 = vadd.f32 %v369, %v532
  %v630 = vadd.f32 %v370, %v532
  %v631 = vadd.f32 %v371, %v532
  %v632 = vadd.f32 %v372, %v532
  %v633 = vadd.f32 %v373, %v532
  %v634 = vadd.f32 %v374, %v532
  %v635 = vadd.f32 %v375, %v532
  %v636 = vadd.f32 %v376, %v532
  %v637 = vadd.f32 %v377, %v532
  %v638 = vadd.f32 %v378, %v532
  %v639 = vadd.f32 %v379, %v532
  %v640 = vadd.f32 %v380, %v532
  %v641 = vadd.f32 %v381, %v532
  %v642 = vadd.f32 %v382, %v532
  %v643 = vadd.f32 %v383, %v532
  %v644 = vadd.f32 %v384, %v532
  %v645 = vadd.f32 %v385, %v532
  %v646 = vadd.f32 %v386, %v532
  %v647 = vadd.f32 %v387, %v532
  %v648 = vadd.f32 %v388, %v532
  %v649 = vadd.f32 %v389, %v532
  %v650 = vadd.f32 %v390, %v532
  %v651 = vadd.f32 %v391, %v532
  %v652 = vadd.f32 %v392, %v532
  %v653 = vadd.f32 %v393, %v532
  %v654 = vadd.f32 %v394, %v532
  %v655 = vadd.f32 %v395, %v532
  %v656 = vadd.f32 %v396, %v532
  %v657 = vadd.f32 %v397, %v532
  %v658 = vadd.f32 %v398, %v532
  %v659 = vadd.f32 %v399, %v532
  %v660 = vadd.f32 %v400, %v532
  %v661 = vadd.f32 %v401, %v532
  %v662 = vadd.f32 %v402, %v532
  %v663 = vadd.f32 %v403, %v532
  %v664 = vadd.f32 %v404, %v532
  %v665 = vadd.f32 %v405, %v532
  %v666 = vadd.f32 %v406, %v532
  %v667 = vadd.f32 %v407, %v532
  %v668 = vadd.f32 %v408, %v532
  %v669 = vadd.f32 %v409, %v532
  %v670 = vadd.f32 %v410, %v532
  %v671 = vadd.f32 %v411, %v532
  %v672 = vadd.f32 %v412, %v532
  %v673 = vadd.f32 %v413, %v532
  %v674 = vadd.f32 %v414, %v532
  %v675 = vadd.f32 %v415, %v532
  %v676 = vadd.f32 %v416, %v532
  %v677 = vadd.f32 %v417, %v532
  %v678 = vadd.f32 %v418, %v532
  %v679 = vadd.f32 %v419, %v532
  %v680 = vadd.f32 %v420, %v532
  %v681 = vadd.f32 %v421, %v532
  %v682 = vadd.f32 %v422, %v532
  %v683 = vadd.f32 %v423, %v532
  %v684 = vadd.f32 %v424, %v532
  %v685 = vadd.f32 %v425, %v532
  %v686 = vadd.f32 %v426, %v532
  %v687 = vadd.f32 %v427, %v532
  %v688 = vadd.f32 %v428, %v532
  %v689 = vadd.f32 %v429, %v532
  %v690 = vadd.f32 %v430, %v532
  %v691 = vadd.f32 %v431, %v532
  %v692 = vadd.f32 %v432, %v532
  %v693 = vadd.f32 %v433, %v532
  %v694 = vadd.f32 %v434, %v532
  %v695 = vadd.f32 %v435, %v532
  %v696 = vadd.f32 %v436, %v532
  %v697 = vadd.f32 %v437, %v532
  %v698 = vadd.f32 %v438, %v532
  %v699 = vadd.f32 %v439, %v532
  %v700 = vadd.f32 %v440, %v532
  %v701 = vadd.f32 %v441, %v532
  %v702 = vadd.f32 %v442, %v532
  %v703 = vadd.f32 %v443, %v532
  %v704 = vadd.f32 %v444, %v532
  %v705 = vadd.f32 %v445, %v532
  %v706 = vadd.f32 %v446, %v532
  %v707 = vadd.f32 %v447, %v532
  %v708 = vadd.f32 %v448, %v532
  %v709 = vadd.f32 %v449, %v532
  %v710 = vadd.f32 %v450, %v532
  %v711 = vadd.f32 %v451, %v532
  %v712 = vadd.f32 %v452, %v532
  %v713 = vadd.f32 %v453, %v532
  %v714 = vadd.f32 %v454, %v532
  %v715 = vadd.f32 %v455, %v532
  %v716 = vadd.f32 %v456, %v532
  %v717 = vadd.f32 %v457, %v532
  %v718 = vadd.f32 %v458, %v532
  %v719 = vadd.f32 %v459, %v532
  %v720 = vadd.f32 %v460, %v532
  %v721 = vadd.f32 %v461, %v532
  %v722 = vadd.f32 %v462, %v532
  %v723 = vadd.f32 %v463, %v532
  %v724 = vadd.f32 %v464, %v532
  %v725 = vadd.f32 %v465, %v532
  %v726 = vadd.f32 %v466, %v532
  %v727 = vadd.f32 %v467, %v532
  %v728 = vadd.f32 %v468, %v532
  %v729 = vadd.f32 %v469, %v532
  %v730 = vadd.f32 %v470, %v532
  %v731 = vadd.f32 %v471, %v532
  %v732 = vadd.f32 %v472, %v532
  %v733 = vadd.f32 %v473, %v532
  %v734 = vadd.f32 %v474, %v532
  %v735 = vadd.f32 %v475, %v532
  %v736 = vadd.f32 %v476, %v532
  %v737 = vadd.f32 %v477, %v532
  %v738 = vadd.f32 %v478, %v532
  %v739 = vadd.f32 %v479, %v532
  %v740 = vadd.f32 %v480, %v532
  %v741 = vadd.f32 %v481, %v532
  %v742 = vadd.f32 %v482, %v532
  %v743 = vadd.f32 %v483, %v532
  %v744 = vadd.f32 %v484, %v532
  %v745 = vadd.f32 %v485, %v532
  %v746 = vadd.f32 %v486, %v532
  %v747 = vadd.f32 %v487, %v532
  %v748 = vadd.f32 %v488, %v532
  %v749 = vadd.f32 %v489, %v532
  %v750 = vadd.f32 %v490, %v532
  %v751 = vadd.f32 %v491, %v532
  %v752 = vadd.f32 %v492, %v532
  %v753 = vadd.f32 %v493, %v532
  %v754 = vadd.f32 %v494, %v532
  %v755 = vadd.f32 %v495, %v532
  %v756 = vadd.f32 %v496, %v532
  %v757 = vadd.f32 %v497, %v532
  %v758 = vadd.f32 %v498, %v532
  %v759 = vadd.f32 %v499, %v532
  %v760 = vadd.f32 %v500, %v532
  %v761 = vadd.f32 %v501, %v532
  %v762 = vadd.f32 %v502, %v532
  %v763 = vadd.f32 %v503, %v532
  %v764 = vadd.f32 %v504, %v532
  %v765 = vadd.f32 %v505, %v532
  %v766 = vadd.f32 %v506, %v532
  %v767 = vadd.f32 %v507, %v532
  %v768 = vadd.f32 %v508, %v532
  %v769 = vadd.f32 %v509, %v532
  %v770 = vadd.f32 %v510, %v532
  %v771 = vadd.f32 %v511, %v532
  %v772 = vadd.f32 %v512, %v532
  %v773 = vadd.f32 %v513, %v532
  %v774 = vadd.f32 %v514, %v532
  %v775 = vadd.f32 %v515, %v532
  %v776 = vadd.f32 %v516, %v532
  %v777 = vadd.f32 %v517, %v532
  %v778 = vadd.f32 %v518, %v532
  %v779 = vadd.f32 %v519, %v532
  %v780 = vadd.f32 %v520, %v532
  %v781 = vadd.f32 %v521, %v532
  %v782 = vadd.f32 %v522, %v532
  %v783 = vadd.f32 %v523, %v532
  %v784 = vadd.f32 %v524, %v532
  %v785 = vadd.f32 %v525, %v532
  %v786 = vadd.f32 %v526, %v532
  %v787 = vadd.f32 %v527, %v532
  %v788 = vadd.f32 %v528, %v532
  %v789 = vadd.f32 %v529, %v532
  %v790 = vmax.f32 %v534, 0.0
  %v791 = vmax.f32 %v535, 0.0
  %v792 = vmax.f32 %v536, 0.0
  %v793 = vmax.f32 %v537, 0.0
  %v794 = vmax.f32 %v538, 0.0
  %v795 = vmax.f32 %v539, 0.0
  %v796 = vmax.f32 %v540, 0.0
  %v797 = vmax.f32 %v541, 0.0
  %v798 = vmax.f32 %v542, 0.0
  %v799 = vmax.f32 %v543, 0.0
  %v800 = vmax.f32 %v544, 0.0
  %v801 = vmax.f32 %v545, 0.0
  %v802 = vmax.f32 %v546, 0.0
  %v803 = vmax.f32 %v547, 0.0
  %v804 = vmax.f32 %v548, 0.0
  %v805 = vmax.f32 %v549, 0.0
  %v806 = vmax.f32 %v550, 0.0
  %v807 = vmax.f32 %v551, 0.0
  %v808 = vmax.f32 %v552, 0.0
  %v809 = vmax.f32 %v553, 0.0
  %v810 = vmax.f32 %v554, 0.0
  %v811 = vmax.f32 %v555, 0.0
  %v812 = vmax.f32 %v556, 0.0
  %v813 = vmax.f32 %v557, 0.0
  %v814 = vmax.f32 %v558, 0.0
  %v815 = vmax.f32 %v559, 0.0
  %v816 = vmax.f32 %v560, 0.0
  %v817 = vmax.f32 %v561, 0.0
  %v818 = vmax.f32 %v562, 0.0
  %v819 = vmax.f32 %v563, 0.0
  %v820 = vmax.f32 %v564, 0.0
  %v821 = vmax.f32 %v565, 0.0
  %v822 = vmax.f32 %v566, 0.0
  %v823 = vmax.f32 %v567, 0.0
  %v824 = vmax.f32 %v568, 0.0
  %v825 = vmax.f32 %v569, 0.0
  %v826 = vmax.f32 %v570, 0.0
  %v827 = vmax.f32 %v571, 0.0
  %v828 = vmax.f32 %v572, 0.0
  %v829 = vmax.f32 %v573, 0.0
  %v830 = vmax.f32 %v574, 0.0
  %v831 = vmax.f32 %v575, 0.0
  %v832 = vmax.f32 %v576, 0.0
  %v833 = vmax.f32 %v577, 0.0
  %v834 = vmax.f32 %v578, 0.0
  %v835 = vmax.f32 %v579, 0.0
  %v836 = vmax.f32 %v580, 0.0
  %v837 = vmax.f32 %v581, 0.0
  %v838 = vmax.f32 %v582, 0.0
  %v839 = vmax.f32 %v583, 0.0
  %v840 = vmax.f32 %v584, 0.0
  %v841 = vmax.f32 %v585, 0.0
  %v842 = vmax.f32 %v586, 0.0
  %v843 = vmax.f32 %v587, 0.0
  %v844 = vmax.f32 %v588, 0.0
  %v845 = vmax.f32 %v589, 0.0
  %v846 = vmax.f32 %v590, 0.0
  %v847 = vmax.f32 %v591, 0.0
  %v848 = vmax.f32 %v592, 0.0
  %v849 = vmax.f32 %v593, 0.0
  %v850 = vmax.f32 %v594, 0.0
  %v851 = vmax.f32 %v595, 0.0
  %v852 = vmax.f32 %v596, 0.0
  %v853 = vmax.f32 %v597, 0.0
  %v854 = vmax.f32 %v598, 0.0
  %v855 = vmax.f32 %v599, 0.0
  %v856 = vmax.f32 %v600, 0.0
  %v857 = vmax.f32 %v601, 0.0
  %v858 = vmax.f32 %v602, 0.0
  %v859 = vmax.f32 %v603, 0.0
  %v860 = vmax.f32 %v604, 0.0
  %v861 = vmax.f32 %v605, 0.0
  %v862 = vmax.f32 %v606, 0.0
  %v863 = vmax.f32 %v607, 0.0
  %v864 = vmax.f32 %v608, 0.0
  %v865 = vmax.f32 %v609, 0.0
  %v866 = vmax.f32 %v610, 0.0
  %v867 = vmax.f32 %v611, 0.0
  %v868 = vmax.f32 %v612, 0.0
  %v869 = vmax.f32 %v613, 0.0
  %v870 = vmax.f32 %v614, 0.0
  %v871 = vmax.f32 %v615, 0.0
  %v872 = vmax.f32 %v616, 0.0
  %v873 = vmax.f32 %v617, 0.0
  %v874 = vmax.f32 %v618, 0.0
  %v875 = vmax.f32 %v619, 0.0
  %v876 = vmax.f32 %v620, 0.0
  %v877 = vmax.f32 %v621, 0.0
  %v878 = vmax.f32 %v622, 0.0
  %v879 = vmax.f32 %v623, 0.0
  %v880 = vmax.f32 %v624, 0.0
  %v881 = vmax.f32 %v625, 0.0
  %v882 = vmax.f32 %v626, 0.0
  %v883 = vmax.f32 %v627, 0.0
  %v884 = vmax.f32 %v628, 0.0
  %v885 = vmax.f32 %v629, 0.0
  %v886 = vmax.f32 %v630, 0.0
  %v887 = vmax.f32 %v631, 0.0
  %v888 = vmax.f32 %v632, 0.0
  %v889 = vmax.f32 %v633, 0.0
  %v890 = vmax.f32 %v634, 0.0
  %v891 = vmax.f32 %v635, 0.0
  %v892 = vmax.f32 %v636, 0.0
  %v893 = vmax.f32 %v637, 0.0
  %v894 = vmax.f32 %v638, 0.0
  %v895 = vmax.f32 %v639, 0.0
  %v896 = vmax.f32 %v640, 0.0
  %v897 = vmax.f32 %v641, 0.0
  %v898 = vmax.f32 %v642, 0.0
  %v899 = vmax.f32 %v643, 0.0
  %v900 = vmax.f32 %v644, 0.0
  %v901 = vmax.f32 %v645, 0.0
  %v902 = vmax.f32 %v646, 0.0
  %v903 = vmax.f32 %v647, 0.0
  %v904 = vmax.f32 %v648, 0.0
  %v905 = vmax.f32 %v649, 0.0
  %v906 = vmax.f32 %v650, 0.0
  %v907 = vmax.f32 %v651, 0.0
  %v908 = vmax.f32 %v652, 0.0
  %v909 = vmax.f32 %v653, 0.0
  %v910 = vmax.f32 %v654, 0.0
  %v911 = vmax.f32 %v655, 0.0
  %v912 = vmax.f32 %v656, 0.0
  %v913 = vmax.f32 %v657, 0.0
  %v914 = vmax.f32 %v658, 0.0
  %v915 = vmax.f32 %v659, 0.0
  %v916 = vmax.f32 %v660, 0.0
  %v917 = vmax.f32 %v661, 0.0
  %v918 = vmax.f32 %v662, 0.0
  %v919 = vmax.f32 %v663, 0.0
  %v920 = vmax.f32 %v664, 0.0
  %v921 = vmax.f32 %v665, 0.0
  %v922 = vmax.f32 %v666, 0.0
  %v923 = vmax.f32 %v667, 0.0
  %v924 = vmax.f32 %v668, 0.0
  %v925 = vmax.f32 %v669, 0.0
  %v926 = vmax.f32 %v670, 0.0
  %v927 = vmax.f32 %v671, 0.0
  %v928 = vmax.f32 %v672, 0.0
  %v929 = vmax.f32 %v673, 0.0
  %v930 = vmax.f32 %v674, 0.0
  %v931 = vmax.f32 %v675, 0.0
  %v932 = vmax.f32 %v676, 0.0
  %v933 = vmax.f32 %v677, 0.0
  %v934 = vmax.f32 %v678, 0.0
  %v935 = vmax.f32 %v679, 0.0
  %v936 = vmax.f32 %v680, 0.0
  %v937 = vmax.f32 %v681, 0.0
  %v938 = vmax.f32 %v682, 0.0
  %v939 = vmax.f32 %v683, 0.0
  %v940 = vmax.f32 %v684, 0.0
  %v941 = vmax.f32 %v685, 0.0
  %v942 = vmax.f32 %v686, 0.0
  %v943 = vmax.f32 %v687, 0.0
  %v944 = vmax.f32 %v688, 0.0
  %v945 = vmax.f32 %v689, 0.0
  %v946 = vmax.f32 %v690, 0.0
  %v947 = vmax.f32 %v691, 0.0
  %v948 = vmax.f32 %v692, 0.0
  %v949 = vmax.f32 %v693, 0.0
  %v950 = vmax.f32 %v694, 0.0
  %v951 = vmax.f32 %v695, 0.0
  %v952 = vmax.f32 %v696, 0.0
  %v953 = vmax.f32 %v697, 0.0
  %v954 = vmax.f32 %v698, 0.0
  %v955 = vmax.f32 %v699, 0.0
  %v956 = vmax.f32 %v700, 0.0
  %v957 = vmax.f32 %v701, 0.0
  %v958 = vmax.f32 %v702, 0.0
  %v959 = vmax.f32 %v703, 0.0
  %v960 = vmax.f32 %v704, 0.0
  %v961 = vmax.f32 %v705, 0.0
  %v962 = vmax.f32 %v706, 0.0
  %v963 = vmax.f32 %v707, 0.0
  %v964 = vmax.f32 %v708, 0.0
  %v965 = vmax.f32 %v709, 0.0
  %v966 = vmax.f32 %v710, 0.0
  %v967 = vmax.f32 %v711, 0.0
  %v968 = vmax.f32 %v712, 0.0
  %v969 = vmax.f32 %v713, 0.0
  %v970 = vmax.f32 %v714, 0.0
  %v971 = vmax.f32 %v715, 0.0
  %v972 = vmax.f32 %v716, 0.0
  %v973 = vmax.f32 %v717, 0.0
  %v974 = vmax.f32 %v718, 0.0
  %v975 = vmax.f32 %v719, 0.0
  %v976 = vmax.f32 %v720, 0.0
  %v977 = vmax.f32 %v721, 0.0
  %v978 = vmax.f32 %v722, 0.0
  %v979 = vmax.f32 %v723, 0.0
  %v980 = vmax.f32 %v724, 0.0
  %v981 = vmax.f32 %v725, 0.0
  %v982 = vmax.f32 %v726, 0.0
  %v983 = vmax.f32 %v727, 0.0
  %v984 = vmax.f32 %v728, 0.0
  %v985 = vmax.f32 %v729, 0.0
  %v986 = vmax.f32 %v730, 0.0
  %v987 = vmax.f32 %v731, 0.0
  %v988 = vmax.f32 %v732, 0.0
  %v989 = vmax.f32 %v733, 0.0
  %v990 = vmax.f32 %v734, 0.0
  %v991 = vmax.f32 %v735, 0.0
  %v992 = vmax.f32 %v736, 0.0
  %v993 = vmax.f32 %v737, 0.0
  %v994 = vmax.f32 %v738, 0.0
  %v995 = vmax.f32 %v739, 0.0
  %v996 = vmax.f32 %v740, 0.0
  %v997 = vmax.f32 %v741, 0.0
  %v998 = vmax.f32 %v742, 0.0
  %v999 = vmax.f32 %v743, 0.0
  %v1000 = vmax.f32 %v744, 0.0
  %v1001 = vmax.f32 %v745, 0.0
  %v1002 = vmax.f32 %v746, 0.0
  %v1003 = vmax.f32 %v747, 0.0
  %v1004 = vmax.f32 %v748, 0.0
  %v1005 = vmax.f32 %v749, 0.0
  %v1006 = vmax.f32 %v750, 0.0
  %v1007 = vmax.f32 %v751, 0.0
  %v1008 = vmax.f32 %v752, 0.0
  %v1009 = vmax.f32 %v753, 0.0
  %v1010 = vmax.f32 %v754, 0.0
  %v1011 = vmax.f32 %v755, 0.0
  %v1012 = vmax.f32 %v756, 0.0
  %v1013 = vmax.f32 %v757, 0.0
  %v1014 = vmax.f32 %v758, 0.0
  %v1015 = vmax.f32 %v759, 0.0
  %v1016 = vmax.f32 %v760, 0.0
  %v1017 = vmax.f32 %v761, 0.0
  %v1018 = vmax.f32 %v762, 0.0
  %v1019 = vmax.f32 %v763, 0.0
  %v1020 = vmax.f32 %v764, 0.0
  %v1021 = vmax.f32 %v765, 0.0
  %v1022 = vmax.f32 %v766, 0.0
  %v1023 = vmax.f32 %v767, 0.0
  %v1024 = vmax.f32 %v768, 0.0
  %v1025 = vmax.f32 %v769, 0.0
  %v1026 = vmax.f32 %v770, 0.0
  %v1027 = vmax.f32 %v771, 0.0
  %v1028 = vmax.f32 %v772, 0.0
  %v1029 = vmax.f32 %v773, 0.0
  %v1030 = vmax.f32 %v774, 0.0
  %v1031 = vmax.f32 %v775, 0.0
  %v1032 = vmax.f32 %v776, 0.0
  %v1033 = vmax.f32 %v777, 0.0
  %v1034 = vmax.f32 %v778, 0.0
  %v1035 = vmax.f32 %v779, 0.0
  %v1036 = vmax.f32 %v780, 0.0
  %v1037 = vmax.f32 %v781, 0.0
  %v1038 = vmax.f32 %v782, 0.0
  %v1039 = vmax.f32 %v783, 0.0
  %v1040 = vmax.f32 %v784, 0.0
  %v1041 = vmax.f32 %v785, 0.0
  %v1042 = vmax.f32 %v786, 0.0
  %v1043 = vmax.f32 %v787, 0.0
  %v1044 = vmax.f32 %v788, 0.0
  %v1045 = vmax.f32 %v789, 0.0
  %v1046 = vpack.c.bf16 %v790, %v790
  %v1047 = vpack.c.bf16 %v791, %v791
  %v1048 = vpack.c.bf16 %v792, %v792
  %v1049 = vpack.c.bf16 %v793, %v793
  %v1050 = vpack.c.bf16 %v794, %v794
  %v1051 = vpack.c.bf16 %v795, %v795
  %v1052 = vpack.c.bf16 %v796, %v796
  %v1053 = vpack.c.bf16 %v797, %v797
  %v1054 = vpack.c.bf16 %v798, %v798
  %v1055 = vpack.c.bf16 %v799, %v799
  %v1056 = vpack.c.bf16 %v800, %v800
  %v1057 = vpack.c.bf16 %v801, %v801
  %v1058 = vpack.c.bf16 %v802, %v802
  %v1059 = vpack.c.bf16 %v803, %v803
  %v1060 = vpack.c.bf16 %v804, %v804
  %v1061 = vpack.c.bf16 %v805, %v805
  %v1062 = vpack.c.bf16 %v806, %v806
  %v1063 = vpack.c.bf16 %v807, %v807
  %v1064 = vpack.c.bf16 %v808, %v808
  %v1065 = vpack.c.bf16 %v809, %v809
  %v1066 = vpack.c.bf16 %v810, %v810
  %v1067 = vpack.c.bf16 %v811, %v811
  %v1068 = vpack.c.bf16 %v812, %v812
  %v1069 = vpack.c.bf16 %v813, %v813
  %v1070 = vpack.c.bf16 %v814, %v814
  %v1071 = vpack.c.bf16 %v815, %v815
  %v1072 = vpack.c.bf16 %v816, %v816
  %v1073 = vpack.c.bf16 %v817, %v817
  %v1074 = vpack.c.bf16 %v818, %v818
  %v1075 = vpack.c.bf16 %v819, %v819
  %v1076 = vpack.c.bf16 %v820, %v820
  %v1077 = vpack.c.bf16 %v821, %v821
  %v1078 = vpack.c.bf16 %v822, %v822
  %v1079 = vpack.c.bf16 %v823, %v823
  %v1080 = vpack.c.bf16 %v824, %v824
  %v1081 = vpack.c.bf16 %v825, %v825
  %v1082 = vpack.c.bf16 %v826, %v826
  %v1083 = vpack.c.bf16 %v827, %v827
  %v1084 = vpack.c.bf16 %v828, %v828
  %v1085 = vpack.c.bf16 %v829, %v829
  %v1086 = vpack.c.bf16 %v830, %v830
  %v1087 = vpack.c.bf16 %v831, %v831
  %v1088 = vpack.c.bf16 %v832, %v832
  %v1089 = vpack.c.bf16 %v833, %v833
  %v1090 = vpack.c.bf16 %v834, %v834
  %v1091 = vpack.c.bf16 %v835, %v835
  %v1092 = vpack.c.bf16 %v836, %v836
  %v1093 = vpack.c.bf16 %v837, %v837
  %v1094 = vpack.c.bf16 %v838, %v838
  %v1095 = vpack.c.bf16 %v839, %v839
  %v1096 = vpack.c.bf16 %v840, %v840
  %v1097 = vpack.c.bf16 %v841, %v841
  %v1098 = vpack.c.bf16 %v842, %v842
  %v1099 = vpack.c.bf16 %v843, %v843
  %v1100 = vpack.c.bf16 %v844, %v844
  %v1101 = vpack.c.bf16 %v845, %v845
  %v1102 = vpack.c.bf16 %v846, %v846
  %v1103 = vpack.c.bf16 %v847, %v847
  %v1104 = vpack.c.bf16 %v848, %v848
  %v1105 = vpack.c.bf16 %v849, %v849
  %v1106 = vpack.c.bf16 %v850, %v850
  %v1107 = vpack.c.bf16 %v851, %v851
  %v1108 = vpack.c.bf16 %v852, %v852
  %v1109 = vpack.c.bf16 %v853, %v853
  %v1110 = vpack.c.bf16 %v854, %v854
  %v1111 = vpack.c.bf16 %v855, %v855
  %v1112 = vpack.c.bf16 %v856, %v856
  %v1113 = vpack.c.bf16 %v857, %v857
  %v1114 = vpack.c.bf16 %v858, %v858
  %v1115 = vpack.c.bf16 %v859, %v859
  %v1116 = vpack.c.bf16 %v860, %v860
  %v1117 = vpack.c.bf16 %v861, %v861
  %v1118 = vpack.c.bf16 %v862, %v862
  %v1119 = vpack.c.bf16 %v863, %v863
  %v1120 = vpack.c.bf16 %v864, %v864
  %v1121 = vpack.c.bf16 %v865, %v865
  %v1122 = vpack.c.bf16 %v866, %v866
  %v1123 = vpack.c.bf16 %v867, %v867
  %v1124 = vpack.c.bf16 %v868, %v868
  %v1125 = vpack.c.bf16 %v869, %v869
  %v1126 = vpack.c.bf16 %v870, %v870
  %v1127 = vpack.c.bf16 %v871, %v871
  %v1128 = vpack.c.bf16 %v872, %v872
  %v1129 = vpack.c.bf16 %v873, %v873
  %v1130 = vpack.c.bf16 %v874, %v874
  %v1131 = vpack.c.bf16 %v875, %v875
  %v1132 = vpack.c.bf16 %v876, %v876
  %v1133 = vpack.c.bf16 %v877, %v877
  %v1134 = vpack.c.bf16 %v878, %v878
  %v1135 = vpack.c.bf16 %v879, %v879
  %v1136 = vpack.c.bf16 %v880, %v880
  %v1137 = vpack.c.bf16 %v881, %v881
  %v1138 = vpack.c.bf16 %v882, %v882
  %v1139 = vpack.c.bf16 %v883, %v883
  %v1140 = vpack.c.bf16 %v884, %v884
  %v1141 = vpack.c.bf16 %v885, %v885
  %v1142 = vpack.c.bf16 %v886, %v886
  %v1143 = vpack.c.bf16 %v887, %v887
  %v1144 = vpack.c.bf16 %v888, %v888
  %v1145 = vpack.c.bf16 %v889, %v889
  %v1146 = vpack.c.bf16 %v890, %v890
  %v1147 = vpack.c.bf16 %v891, %v891
  %v1148 = vpack.c.bf16 %v892, %v892
  %v1149 = vpack.c.bf16 %v893, %v893
  %v1150 = vpack.c.bf16 %v894, %v894
  %v1151 = vpack.c.bf16 %v895, %v895
  %v1152 = vpack.c.bf16 %v896, %v896
  %v1153 = vpack.c.bf16 %v897, %v897
  %v1154 = vpack.c.bf16 %v898, %v898
  %v1155 = vpack.c.bf16 %v899, %v899
  %v1156 = vpack.c.bf16 %v900, %v900
  %v1157 = vpack.c.bf16 %v901, %v901
  %v1158 = vpack.c.bf16 %v902, %v902
  %v1159 = vpack.c.bf16 %v903, %v903
  %v1160 = vpack.c.bf16 %v904, %v904
  %v1161 = vpack.c.bf16 %v905, %v905
  %v1162 = vpack.c.bf16 %v906, %v906
  %v1163 = vpack.c.bf16 %v907, %v907
  %v1164 = vpack.c.bf16 %v908, %v908
  %v1165 = vpack.c.bf16 %v909, %v909
  %v1166 = vpack.c.bf16 %v910, %v910
  %v1167 = vpack.c.bf16 %v911, %v911
  %v1168 = vpack.c.bf16 %v912, %v912
  %v1169 = vpack.c.bf16 %v913, %v913
  %v1170 = vpack.c.bf16 %v914, %v914
  %v1171 = vpack.c.bf16 %v915, %v915
  %v1172 = vpack.c.bf16 %v916, %v916
  %v1173 = vpack.c.bf16 %v917, %v917
  %v1174 = vpack.c.bf16 %v918, %v918
  %v1175 = vpack.c.bf16 %v919, %v919
  %v1176 = vpack.c.bf16 %v920, %v920
  %v1177 = vpack.c.bf16 %v921, %v921
  %v1178 = vpack.c.bf16 %v922, %v922
  %v1179 = vpack.c.bf16 %v923, %v923
  %v1180 = vpack.c.bf16 %v924, %v924
  %v1181 = vpack.c.bf16 %v925, %v925
  %v1182 = vpack.c.bf16 %v926, %v926
  %v1183 = vpack.c.bf16 %v927, %v927
  %v1184 = vpack.c.bf16 %v928, %v928
  %v1185 = vpack.c.bf16 %v929, %v929
  %v1186 = vpack.c.bf16 %v930, %v930
  %v1187 = vpack.c.bf16 %v931, %v931
  %v1188 = vpack.c.bf16 %v932, %v932
  %v1189 = vpack.c.bf16 %v933, %v933
  %v1190 = vpack.c.bf16 %v934, %v934
  %v1191 = vpack.c.bf16 %v935, %v935
  %v1192 = vpack.c.bf16 %v936, %v936
  %v1193 = vpack.c.bf16 %v937, %v937
  %v1194 = vpack.c.bf16 %v938, %v938
  %v1195 = vpack.c.bf16 %v939, %v939
  %v1196 = vpack.c.bf16 %v940, %v940
  %v1197 = vpack.c.bf16 %v941, %v941
  %v1198 = vpack.c.bf16 %v942, %v942
  %v1199 = vpack.c.bf16 %v943, %v943
  %v1200 = vpack.c.bf16 %v944, %v944
  %v1201 = vpack.c.bf16 %v945, %v945
  %v1202 = vpack.c.bf16 %v946, %v946
  %v1203 = vpack.c.bf16 %v947, %v947
  %v1204 = vpack.c.bf16 %v948, %v948
  %v1205 = vpack.c.bf16 %v949, %v949
  %v1206 = vpack.c.bf16 %v950, %v950
  %v1207 = vpack.c.bf16 %v951, %v951
  %v1208 = vpack.c.bf16 %v952, %v952
  %v1209 = vpack.c.bf16 %v953, %v953
  %v1210 = vpack.c.bf16 %v954, %v954
  %v1211 = vpack.c.bf16 %v955, %v955
  %v1212 = vpack.c.bf16 %v956, %v956
  %v1213 = vpack.c.bf16 %v957, %v957
  %v1214 = vpack.c.bf16 %v958, %v958
  %v1215 = vpack.c.bf16 %v959, %v959
  %v1216 = vpack.c.bf16 %v960, %v960
  %v1217 = vpack.c.bf16 %v961, %v961
  %v1218 = vpack.c.bf16 %v962, %v962
  %v1219 = vpack.c.bf16 %v963, %v963
  %v1220 = vpack.c.bf16 %v964, %v964
  %v1221 = vpack.c.bf16 %v965, %v965
  %v1222 = vpack.c.bf16 %v966, %v966
  %v1223 = vpack.c.bf16 %v967, %v967
  %v1224 = vpack.c.bf16 %v968, %v968
  %v1225 = vpack.c.bf16 %v969, %v969
  %v1226 = vpack.c.bf16 %v970, %v970
  %v1227 = vpack.c.bf16 %v971, %v971
  %v1228 = vpack.c.bf16 %v972, %v972
  %v1229 = vpack.c.bf16 %v973, %v973
  %v1230 = vpack.c.bf16 %v974, %v974
  %v1231 = vpack.c.bf16 %v975, %v975
  %v1232 = vpack.c.bf16 %v976, %v976
  %v1233 = vpack.c.bf16 %v977, %v977
  %v1234 = vpack.c.bf16 %v978, %v978
  %v1235 = vpack.c.bf16 %v979, %v979
  %v1236 = vpack.c.bf16 %v980, %v980
  %v1237 = vpack.c.bf16 %v981, %v981
  %v1238 = vpack.c.bf16 %v982, %v982
  %v1239 = vpack.c.bf16 %v983, %v983
  %v1240 = vpack.c.bf16 %v984, %v984
  %v1241 = vpack.c.bf16 %v985, %v985
  %v1242 = vpack.c.bf16 %v986, %v986
  %v1243 = vpack.c.bf16 %v987, %v987
  %v1244 = vpack.c.bf16 %v988, %v988
  %v1245 = vpack.c.bf16 %v989, %v989
  %v1246 = vpack.c.bf16 %v990, %v990
  %v1247 = vpack.c.bf16 %v991, %v991
  %v1248 = vpack.c.bf16 %v992, %v992
  %v1249 = vpack.c.bf16 %v993, %v993
  %v1250 = vpack.c.bf16 %v994, %v994
  %v1251 = vpack.c.bf16 %v995, %v995
  %v1252 = vpack.c.bf16 %v996, %v996
  %v1253 = vpack.c.bf16 %v997, %v997
  %v1254 = vpack.c.bf16 %v998, %v998
  %v1255 = vpack.c.bf16 %v999, %v999
  %v1256 = vpack.c.bf16 %v1000, %v1000
  %v1257 = vpack.c.bf16 %v1001, %v1001
  %v1258 = vpack.c.bf16 %v1002, %v1002
  %v1259 = vpack.c.bf16 %v1003, %v1003
  %v1260 = vpack.c.bf16 %v1004, %v1004
  %v1261 = vpack.c.bf16 %v1005, %v1005
  %v1262 = vpack.c.bf16 %v1006, %v1006
  %v1263 = vpack.c.bf16 %v1007, %v1007
  %v1264 = vpack.c.bf16 %v1008, %v1008
  %v1265 = vpack.c.bf16 %v1009, %v1009
  %v1266 = vpack.c.bf16 %v1010, %v1010
  %v1267 = vpack.c.bf16 %v1011, %v1011
  %v1268 = vpack.c.bf16 %v1012, %v1012
  %v1269 = vpack.c.bf16 %v1013, %v1013
  %v1270 = vpack.c.bf16 %v1014, %v1014
  %v1271 = vpack.c.bf16 %v1015, %v1015
  %v1272 = vpack.c.bf16 %v1016, %v1016
  %v1273 = vpack.c.bf16 %v1017, %v1017
  %v1274 = vpack.c.bf16 %v1018, %v1018
  %v1275 = vpack.c.bf16 %v1019, %v1019
  %v1276 = vpack.c.bf16 %v1020, %v1020
  %v1277 = vpack.c.bf16 %v1021, %v1021
  %v1278 = vpack.c.bf16 %v1022, %v1022
  %v1279 = vpack.c.bf16 %v1023, %v1023
  %v1280 = vpack.c.bf16 %v1024, %v1024
  %v1281 = vpack.c.bf16 %v1025, %v1025
  %v1282 = vpack.c.bf16 %v1026, %v1026
  %v1283 = vpack.c.bf16 %v1027, %v1027
  %v1284 = vpack.c.bf16 %v1028, %v1028
  %v1285 = vpack.c.bf16 %v1029, %v1029
  %v1286 = vpack.c.bf16 %v1030, %v1030
  %v1287 = vpack.c.bf16 %v1031, %v1031
  %v1288 = vpack.c.bf16 %v1032, %v1032
  %v1289 = vpack.c.bf16 %v1033, %v1033
  %v1290 = vpack.c.bf16 %v1034, %v1034
  %v1291 = vpack.c.bf16 %v1035, %v1035
  %v1292 = vpack.c.bf16 %v1036, %v1036
  %v1293 = vpack.c.bf16 %v1037, %v1037
  %v1294 = vpack.c.bf16 %v1038, %v1038
  %v1295 = vpack.c.bf16 %v1039, %v1039
  %v1296 = vpack.c.bf16 %v1040, %v1040
  %v1297 = vpack.c.bf16 %v1041, %v1041
  %v1298 = vpack.c.bf16 %v1042, %v1042
  %v1299 = vpack.c.bf16 %v1043, %v1043
  %v1300 = vpack.c.bf16 %v1044, %v1044
  %v1301 = vpack.c.bf16 %v1045, %v1045
  %vm1302 = vcmask 60416
  %1303 = vst.msk [vmem:[%s3] sm:$0xf] %vm1302, %v1046
  %1304 = vst.msk [vmem:[%s3 + $0x4] sm:$0xf] %vm1302, %v1047
  %1305 = vst.msk [vmem:[%s3 + $0x8] sm:$0xf] %vm1302, %v1048
  %1306 = vst.msk [vmem:[%s3 + $0xc] sm:$0xf] %vm1302, %v1049
  %1307 = vst.msk [vmem:[%s3 + $0x10] sm:$0xf] %vm1302, %v1050
  %1308 = vst.msk [vmem:[%s3 + $0x14] sm:$0xf] %vm1302, %v1051
  %1309 = vst.msk [vmem:[%s3 + $0x18] sm:$0xf] %vm1302, %v1052
  %1310 = vst.msk [vmem:[%s3 + $0x1c] sm:$0xf] %vm1302, %v1053
  %1311 = vst.msk [vmem:[%s3 + $0x20] sm:$0xf] %vm1302, %v1054
  %1312 = vst.msk [vmem:[%s3 + $0x24] sm:$0xf] %vm1302, %v1055
  %1313 = vst.msk [vmem:[%s3 + $0x28] sm:$0xf] %vm1302, %v1056
  %1314 = vst.msk [vmem:[%s3 + $0x2c] sm:$0xf] %vm1302, %v1057
  %1315 = vst.msk [vmem:[%s3 + $0x30] sm:$0xf] %vm1302, %v1058
  %1316 = vst.msk [vmem:[%s3 + $0x34] sm:$0xf] %vm1302, %v1059
  %1317 = vst.msk [vmem:[%s3 + $0x38] sm:$0xf] %vm1302, %v1060
  %1318 = vst.msk [vmem:[%s3 + $0x3c] sm:$0xf] %vm1302, %v1061
  %1319 = vst.msk [vmem:[%s3 + $0x40] sm:$0xf] %vm1302, %v1062
  %1320 = vst.msk [vmem:[%s3 + $0x44] sm:$0xf] %vm1302, %v1063
  %1321 = vst.msk [vmem:[%s3 + $0x48] sm:$0xf] %vm1302, %v1064
  %1322 = vst.msk [vmem:[%s3 + $0x4c] sm:$0xf] %vm1302, %v1065
  %1323 = vst.msk [vmem:[%s3 + $0x50] sm:$0xf] %vm1302, %v1066
  %1324 = vst.msk [vmem:[%s3 + $0x54] sm:$0xf] %vm1302, %v1067
  %1325 = vst.msk [vmem:[%s3 + $0x58] sm:$0xf] %vm1302, %v1068
  %1326 = vst.msk [vmem:[%s3 + $0x5c] sm:$0xf] %vm1302, %v1069
  %1327 = vst.msk [vmem:[%s3 + $0x60] sm:$0xf] %vm1302, %v1070
  %1328 = vst.msk [vmem:[%s3 + $0x64] sm:$0xf] %vm1302, %v1071
  %1329 = vst.msk [vmem:[%s3 + $0x68] sm:$0xf] %vm1302, %v1072
  %1330 = vst.msk [vmem:[%s3 + $0x6c] sm:$0xf] %vm1302, %v1073
  %1331 = vst.msk [vmem:[%s3 + $0x70] sm:$0xf] %vm1302, %v1074
  %1332 = vst.msk [vmem:[%s3 + $0x74] sm:$0xf] %vm1302, %v1075
  %1333 = vst.msk [vmem:[%s3 + $0x78] sm:$0xf] %vm1302, %v1076
  %1334 = vst.msk [vmem:[%s3 + $0x7c] sm:$0xf] %vm1302, %v1077
  %1335 = vst.msk [vmem:[%s3 + $0x80] sm:$0xf] %vm1302, %v1078
  %1336 = vst.msk [vmem:[%s3 + $0x84] sm:$0xf] %vm1302, %v1079
  %1337 = vst.msk [vmem:[%s3 + $0x88] sm:$0xf] %vm1302, %v1080
  %1338 = vst.msk [vmem:[%s3 + $0x8c] sm:$0xf] %vm1302, %v1081
  %1339 = vst.msk [vmem:[%s3 + $0x90] sm:$0xf] %vm1302, %v1082
  %1340 = vst.msk [vmem:[%s3 + $0x94] sm:$0xf] %vm1302, %v1083
  %1341 = vst.msk [vmem:[%s3 + $0x98] sm:$0xf] %vm1302, %v1084
  %1342 = vst.msk [vmem:[%s3 + $0x9c] sm:$0xf] %vm1302, %v1085
  %1343 = vst.msk [vmem:[%s3 + $0xa0] sm:$0xf] %vm1302, %v1086
  %1344 = vst.msk [vmem:[%s3 + $0xa4] sm:$0xf] %vm1302, %v1087
  %1345 = vst.msk [vmem:[%s3 + $0xa8] sm:$0xf] %vm1302, %v1088
  %1346 = vst.msk [vmem:[%s3 + $0xac] sm:$0xf] %vm1302, %v1089
  %1347 = vst.msk [vmem:[%s3 + $0xb0] sm:$0xf] %vm1302, %v1090
  %1348 = vst.msk [vmem:[%s3 + $0xb4] sm:$0xf] %vm1302, %v1091
  %1349 = vst.msk [vmem:[%s3 + $0xb8] sm:$0xf] %vm1302, %v1092
  %1350 = vst.msk [vmem:[%s3 + $0xbc] sm:$0xf] %vm1302, %v1093
  %1351 = vst.msk [vmem:[%s3 + $0xc0] sm:$0xf] %vm1302, %v1094
  %1352 = vst.msk [vmem:[%s3 + $0xc4] sm:$0xf] %vm1302, %v1095
  %1353 = vst.msk [vmem:[%s3 + $0xc8] sm:$0xf] %vm1302, %v1096
  %1354 = vst.msk [vmem:[%s3 + $0xcc] sm:$0xf] %vm1302, %v1097
  %1355 = vst.msk [vmem:[%s3 + $0xd0] sm:$0xf] %vm1302, %v1098
  %1356 = vst.msk [vmem:[%s3 + $0xd4] sm:$0xf] %vm1302, %v1099
  %1357 = vst.msk [vmem:[%s3 + $0xd8] sm:$0xf] %vm1302, %v1100
  %1358 = vst.msk [vmem:[%s3 + $0xdc] sm:$0xf] %vm1302, %v1101
  %1359 = vst.msk [vmem:[%s3 + $0xe0] sm:$0xf] %vm1302, %v1102
  %1360 = vst.msk [vmem:[%s3 + $0xe4] sm:$0xf] %vm1302, %v1103
  %1361 = vst.msk [vmem:[%s3 + $0xe8] sm:$0xf] %vm1302, %v1104
  %1362 = vst.msk [vmem:[%s3 + $0xec] sm:$0xf] %vm1302, %v1105
  %1363 = vst.msk [vmem:[%s3 + $0xf0] sm:$0xf] %vm1302, %v1106
  %1364 = vst.msk [vmem:[%s3 + $0xf4] sm:$0xf] %vm1302, %v1107
  %1365 = vst.msk [vmem:[%s3 + $0xf8] sm:$0xf] %vm1302, %v1108
  %1366 = vst.msk [vmem:[%s3 + $0xfc] sm:$0xf] %vm1302, %v1109
  %1367 = vst.msk [vmem:[%s3 + $0x100] sm:$0xf] %vm1302, %v1110
  %1368 = vst.msk [vmem:[%s3 + $0x104] sm:$0xf] %vm1302, %v1111
  %1369 = vst.msk [vmem:[%s3 + $0x108] sm:$0xf] %vm1302, %v1112
  %1370 = vst.msk [vmem:[%s3 + $0x10c] sm:$0xf] %vm1302, %v1113
  %1371 = vst.msk [vmem:[%s3 + $0x110] sm:$0xf] %vm1302, %v1114
  %1372 = vst.msk [vmem:[%s3 + $0x114] sm:$0xf] %vm1302, %v1115
  %1373 = vst.msk [vmem:[%s3 + $0x118] sm:$0xf] %vm1302, %v1116
  %1374 = vst.msk [vmem:[%s3 + $0x11c] sm:$0xf] %vm1302, %v1117
  %1375 = vst.msk [vmem:[%s3 + $0x120] sm:$0xf] %vm1302, %v1118
  %1376 = vst.msk [vmem:[%s3 + $0x124] sm:$0xf] %vm1302, %v1119
  %1377 = vst.msk [vmem:[%s3 + $0x128] sm:$0xf] %vm1302, %v1120
  %1378 = vst.msk [vmem:[%s3 + $0x12c] sm:$0xf] %vm1302, %v1121
  %1379 = vst.msk [vmem:[%s3 + $0x130] sm:$0xf] %vm1302, %v1122
  %1380 = vst.msk [vmem:[%s3 + $0x134] sm:$0xf] %vm1302, %v1123
  %1381 = vst.msk [vmem:[%s3 + $0x138] sm:$0xf] %vm1302, %v1124
  %1382 = vst.msk [vmem:[%s3 + $0x13c] sm:$0xf] %vm1302, %v1125
  %1383 = vst.msk [vmem:[%s3 + $0x140] sm:$0xf] %vm1302, %v1126
  %1384 = vst.msk [vmem:[%s3 + $0x144] sm:$0xf] %vm1302, %v1127
  %1385 = vst.msk [vmem:[%s3 + $0x148] sm:$0xf] %vm1302, %v1128
  %1386 = vst.msk [vmem:[%s3 + $0x14c] sm:$0xf] %vm1302, %v1129
  %1387 = vst.msk [vmem:[%s3 + $0x150] sm:$0xf] %vm1302, %v1130
  %1388 = vst.msk [vmem:[%s3 + $0x154] sm:$0xf] %vm1302, %v1131
  %1389 = vst.msk [vmem:[%s3 + $0x158] sm:$0xf] %vm1302, %v1132
  %1390 = vst.msk [vmem:[%s3 + $0x15c] sm:$0xf] %vm1302, %v1133
  %1391 = vst.msk [vmem:[%s3 + $0x160] sm:$0xf] %vm1302, %v1134
  %1392 = vst.msk [vmem:[%s3 + $0x164] sm:$0xf] %vm1302, %v1135
  %1393 = vst.msk [vmem:[%s3 + $0x168] sm:$0xf] %vm1302, %v1136
  %1394 = vst.msk [vmem:[%s3 + $0x16c] sm:$0xf] %vm1302, %v1137
  %1395 = vst.msk [vmem:[%s3 + $0x170] sm:$0xf] %vm1302, %v1138
  %1396 = vst.msk [vmem:[%s3 + $0x174] sm:$0xf] %vm1302, %v1139
  %1397 = vst.msk [vmem:[%s3 + $0x178] sm:$0xf] %vm1302, %v1140
  %1398 = vst.msk [vmem:[%s3 + $0x17c] sm:$0xf] %vm1302, %v1141
  %1399 = vst.msk [vmem:[%s3 + $0x180] sm:$0xf] %vm1302, %v1142
  %1400 = vst.msk [vmem:[%s3 + $0x184] sm:$0xf] %vm1302, %v1143
  %1401 = vst.msk [vmem:[%s3 + $0x188] sm:$0xf] %vm1302, %v1144
  %1402 = vst.msk [vmem:[%s3 + $0x18c] sm:$0xf] %vm1302, %v1145
  %1403 = vst.msk [vmem:[%s3 + $0x190] sm:$0xf] %vm1302, %v1146
  %1404 = vst.msk [vmem:[%s3 + $0x194] sm:$0xf] %vm1302, %v1147
  %1405 = vst.msk [vmem:[%s3 + $0x198] sm:$0xf] %vm1302, %v1148
  %1406 = vst.msk [vmem:[%s3 + $0x19c] sm:$0xf] %vm1302, %v1149
  %1407 = vst.msk [vmem:[%s3 + $0x1a0] sm:$0xf] %vm1302, %v1150
  %1408 = vst.msk [vmem:[%s3 + $0x1a4] sm:$0xf] %vm1302, %v1151
  %1409 = vst.msk [vmem:[%s3 + $0x1a8] sm:$0xf] %vm1302, %v1152
  %1410 = vst.msk [vmem:[%s3 + $0x1ac] sm:$0xf] %vm1302, %v1153
  %1411 = vst.msk [vmem:[%s3 + $0x1b0] sm:$0xf] %vm1302, %v1154
  %1412 = vst.msk [vmem:[%s3 + $0x1b4] sm:$0xf] %vm1302, %v1155
  %1413 = vst.msk [vmem:[%s3 + $0x1b8] sm:$0xf] %vm1302, %v1156
  %1414 = vst.msk [vmem:[%s3 + $0x1bc] sm:$0xf] %vm1302, %v1157
  %1415 = vst.msk [vmem:[%s3 + $0x1c0] sm:$0xf] %vm1302, %v1158
  %1416 = vst.msk [vmem:[%s3 + $0x1c4] sm:$0xf] %vm1302, %v1159
  %1417 = vst.msk [vmem:[%s3 + $0x1c8] sm:$0xf] %vm1302, %v1160
  %1418 = vst.msk [vmem:[%s3 + $0x1cc] sm:$0xf] %vm1302, %v1161
  %1419 = vst.msk [vmem:[%s3 + $0x1d0] sm:$0xf] %vm1302, %v1162
  %1420 = vst.msk [vmem:[%s3 + $0x1d4] sm:$0xf] %vm1302, %v1163
  %1421 = vst.msk [vmem:[%s3 + $0x1d8] sm:$0xf] %vm1302, %v1164
  %1422 = vst.msk [vmem:[%s3 + $0x1dc] sm:$0xf] %vm1302, %v1165
  %1423 = vst.msk [vmem:[%s3 + $0x1e0] sm:$0xf] %vm1302, %v1166
  %1424 = vst.msk [vmem:[%s3 + $0x1e4] sm:$0xf] %vm1302, %v1167
  %1425 = vst.msk [vmem:[%s3 + $0x1e8] sm:$0xf] %vm1302, %v1168
  %1426 = vst.msk [vmem:[%s3 + $0x1ec] sm:$0xf] %vm1302, %v1169
  %1427 = vst.msk [vmem:[%s3 + $0x1f0] sm:$0xf] %vm1302, %v1170
  %1428 = vst.msk [vmem:[%s3 + $0x1f4] sm:$0xf] %vm1302, %v1171
  %1429 = vst.msk [vmem:[%s3 + $0x1f8] sm:$0xf] %vm1302, %v1172
  %1430 = vst.msk [vmem:[%s3 + $0x1fc] sm:$0xf] %vm1302, %v1173
  %1431 = vst.msk [vmem:[%s3 + $0x200] sm:$0xf] %vm1302, %v1174
  %1432 = vst.msk [vmem:[%s3 + $0x204] sm:$0xf] %vm1302, %v1175
  %1433 = vst.msk [vmem:[%s3 + $0x208] sm:$0xf] %vm1302, %v1176
  %1434 = vst.msk [vmem:[%s3 + $0x20c] sm:$0xf] %vm1302, %v1177
  %1435 = vst.msk [vmem:[%s3 + $0x210] sm:$0xf] %vm1302, %v1178
  %1436 = vst.msk [vmem:[%s3 + $0x214] sm:$0xf] %vm1302, %v1179
  %1437 = vst.msk [vmem:[%s3 + $0x218] sm:$0xf] %vm1302, %v1180
  %1438 = vst.msk [vmem:[%s3 + $0x21c] sm:$0xf] %vm1302, %v1181
  %1439 = vst.msk [vmem:[%s3 + $0x220] sm:$0xf] %vm1302, %v1182
  %1440 = vst.msk [vmem:[%s3 + $0x224] sm:$0xf] %vm1302, %v1183
  %1441 = vst.msk [vmem:[%s3 + $0x228] sm:$0xf] %vm1302, %v1184
  %1442 = vst.msk [vmem:[%s3 + $0x22c] sm:$0xf] %vm1302, %v1185
  %1443 = vst.msk [vmem:[%s3 + $0x230] sm:$0xf] %vm1302, %v1186
  %1444 = vst.msk [vmem:[%s3 + $0x234] sm:$0xf] %vm1302, %v1187
  %1445 = vst.msk [vmem:[%s3 + $0x238] sm:$0xf] %vm1302, %v1188
  %1446 = vst.msk [vmem:[%s3 + $0x23c] sm:$0xf] %vm1302, %v1189
  %1447 = vst.msk [vmem:[%s3 + $0x240] sm:$0xf] %vm1302, %v1190
  %1448 = vst.msk [vmem:[%s3 + $0x244] sm:$0xf] %vm1302, %v1191
  %1449 = vst.msk [vmem:[%s3 + $0x248] sm:$0xf] %vm1302, %v1192
  %1450 = vst.msk [vmem:[%s3 + $0x24c] sm:$0xf] %vm1302, %v1193
  %1451 = vst.msk [vmem:[%s3 + $0x250] sm:$0xf] %vm1302, %v1194
  %1452 = vst.msk [vmem:[%s3 + $0x254] sm:$0xf] %vm1302, %v1195
  %1453 = vst.msk [vmem:[%s3 + $0x258] sm:$0xf] %vm1302, %v1196
  %1454 = vst.msk [vmem:[%s3 + $0x25c] sm:$0xf] %vm1302, %v1197
  %1455 = vst.msk [vmem:[%s3 + $0x260] sm:$0xf] %vm1302, %v1198
  %1456 = vst.msk [vmem:[%s3 + $0x264] sm:$0xf] %vm1302, %v1199
  %1457 = vst.msk [vmem:[%s3 + $0x268] sm:$0xf] %vm1302, %v1200
  %1458 = vst.msk [vmem:[%s3 + $0x26c] sm:$0xf] %vm1302, %v1201
  %1459 = vst.msk [vmem:[%s3 + $0x270] sm:$0xf] %vm1302, %v1202
  %1460 = vst.msk [vmem:[%s3 + $0x274] sm:$0xf] %vm1302, %v1203
  %1461 = vst.msk [vmem:[%s3 + $0x278] sm:$0xf] %vm1302, %v1204
  %1462 = vst.msk [vmem:[%s3 + $0x27c] sm:$0xf] %vm1302, %v1205
  %1463 = vst.msk [vmem:[%s3 + $0x280] sm:$0xf] %vm1302, %v1206
  %1464 = vst.msk [vmem:[%s3 + $0x284] sm:$0xf] %vm1302, %v1207
  %1465 = vst.msk [vmem:[%s3 + $0x288] sm:$0xf] %vm1302, %v1208
  %1466 = vst.msk [vmem:[%s3 + $0x28c] sm:$0xf] %vm1302, %v1209
  %1467 = vst.msk [vmem:[%s3 + $0x290] sm:$0xf] %vm1302, %v1210
  %1468 = vst.msk [vmem:[%s3 + $0x294] sm:$0xf] %vm1302, %v1211
  %1469 = vst.msk [vmem:[%s3 + $0x298] sm:$0xf] %vm1302, %v1212
  %1470 = vst.msk [vmem:[%s3 + $0x29c] sm:$0xf] %vm1302, %v1213
  %1471 = vst.msk [vmem:[%s3 + $0x2a0] sm:$0xf] %vm1302, %v1214
  %1472 = vst.msk [vmem:[%s3 + $0x2a4] sm:$0xf] %vm1302, %v1215
  %1473 = vst.msk [vmem:[%s3 + $0x2a8] sm:$0xf] %vm1302, %v1216
  %1474 = vst.msk [vmem:[%s3 + $0x2ac] sm:$0xf] %vm1302, %v1217
  %1475 = vst.msk [vmem:[%s3 + $0x2b0] sm:$0xf] %vm1302, %v1218
  %1476 = vst.msk [vmem:[%s3 + $0x2b4] sm:$0xf] %vm1302, %v1219
  %1477 = vst.msk [vmem:[%s3 + $0x2b8] sm:$0xf] %vm1302, %v1220
  %1478 = vst.msk [vmem:[%s3 + $0x2bc] sm:$0xf] %vm1302, %v1221
  %1479 = vst.msk [vmem:[%s3 + $0x2c0] sm:$0xf] %vm1302, %v1222
  %1480 = vst.msk [vmem:[%s3 + $0x2c4] sm:$0xf] %vm1302, %v1223
  %1481 = vst.msk [vmem:[%s3 + $0x2c8] sm:$0xf] %vm1302, %v1224
  %1482 = vst.msk [vmem:[%s3 + $0x2cc] sm:$0xf] %vm1302, %v1225
  %1483 = vst.msk [vmem:[%s3 + $0x2d0] sm:$0xf] %vm1302, %v1226
  %1484 = vst.msk [vmem:[%s3 + $0x2d4] sm:$0xf] %vm1302, %v1227
  %1485 = vst.msk [vmem:[%s3 + $0x2d8] sm:$0xf] %vm1302, %v1228
  %1486 = vst.msk [vmem:[%s3 + $0x2dc] sm:$0xf] %vm1302, %v1229
  %1487 = vst.msk [vmem:[%s3 + $0x2e0] sm:$0xf] %vm1302, %v1230
  %1488 = vst.msk [vmem:[%s3 + $0x2e4] sm:$0xf] %vm1302, %v1231
  %1489 = vst.msk [vmem:[%s3 + $0x2e8] sm:$0xf] %vm1302, %v1232
  %1490 = vst.msk [vmem:[%s3 + $0x2ec] sm:$0xf] %vm1302, %v1233
  %1491 = vst.msk [vmem:[%s3 + $0x2f0] sm:$0xf] %vm1302, %v1234
  %1492 = vst.msk [vmem:[%s3 + $0x2f4] sm:$0xf] %vm1302, %v1235
  %1493 = vst.msk [vmem:[%s3 + $0x2f8] sm:$0xf] %vm1302, %v1236
  %1494 = vst.msk [vmem:[%s3 + $0x2fc] sm:$0xf] %vm1302, %v1237
  %1495 = vst.msk [vmem:[%s3 + $0x300] sm:$0xf] %vm1302, %v1238
  %1496 = vst.msk [vmem:[%s3 + $0x304] sm:$0xf] %vm1302, %v1239
  %1497 = vst.msk [vmem:[%s3 + $0x308] sm:$0xf] %vm1302, %v1240
  %1498 = vst.msk [vmem:[%s3 + $0x30c] sm:$0xf] %vm1302, %v1241
  %1499 = vst.msk [vmem:[%s3 + $0x310] sm:$0xf] %vm1302, %v1242
  %1500 = vst.msk [vmem:[%s3 + $0x314] sm:$0xf] %vm1302, %v1243
  %1501 = vst.msk [vmem:[%s3 + $0x318] sm:$0xf] %vm1302, %v1244
  %1502 = vst.msk [vmem:[%s3 + $0x31c] sm:$0xf] %vm1302, %v1245
  %1503 = vst.msk [vmem:[%s3 + $0x320] sm:$0xf] %vm1302, %v1246
  %1504 = vst.msk [vmem:[%s3 + $0x324] sm:$0xf] %vm1302, %v1247
  %1505 = vst.msk [vmem:[%s3 + $0x328] sm:$0xf] %vm1302, %v1248
  %1506 = vst.msk [vmem:[%s3 + $0x32c] sm:$0xf] %vm1302, %v1249
  %1507 = vst.msk [vmem:[%s3 + $0x330] sm:$0xf] %vm1302, %v1250
  %1508 = vst.msk [vmem:[%s3 + $0x334] sm:$0xf] %vm1302, %v1251
  %1509 = vst.msk [vmem:[%s3 + $0x338] sm:$0xf] %vm1302, %v1252
  %1510 = vst.msk [vmem:[%s3 + $0x33c] sm:$0xf] %vm1302, %v1253
  %1511 = vst.msk [vmem:[%s3 + $0x340] sm:$0xf] %vm1302, %v1254
  %1512 = vst.msk [vmem:[%s3 + $0x344] sm:$0xf] %vm1302, %v1255
  %1513 = vst.msk [vmem:[%s3 + $0x348] sm:$0xf] %vm1302, %v1256
  %1514 = vst.msk [vmem:[%s3 + $0x34c] sm:$0xf] %vm1302, %v1257
  %1515 = vst.msk [vmem:[%s3 + $0x350] sm:$0xf] %vm1302, %v1258
  %1516 = vst.msk [vmem:[%s3 + $0x354] sm:$0xf] %vm1302, %v1259
  %1517 = vst.msk [vmem:[%s3 + $0x358] sm:$0xf] %vm1302, %v1260
  %1518 = vst.msk [vmem:[%s3 + $0x35c] sm:$0xf] %vm1302, %v1261
  %1519 = vst.msk [vmem:[%s3 + $0x360] sm:$0xf] %vm1302, %v1262
  %1520 = vst.msk [vmem:[%s3 + $0x364] sm:$0xf] %vm1302, %v1263
  %1521 = vst.msk [vmem:[%s3 + $0x368] sm:$0xf] %vm1302, %v1264
  %1522 = vst.msk [vmem:[%s3 + $0x36c] sm:$0xf] %vm1302, %v1265
  %1523 = vst.msk [vmem:[%s3 + $0x370] sm:$0xf] %vm1302, %v1266
  %1524 = vst.msk [vmem:[%s3 + $0x374] sm:$0xf] %vm1302, %v1267
  %1525 = vst.msk [vmem:[%s3 + $0x378] sm:$0xf] %vm1302, %v1268
  %1526 = vst.msk [vmem:[%s3 + $0x37c] sm:$0xf] %vm1302, %v1269
  %1527 = vst.msk [vmem:[%s3 + $0x380] sm:$0xf] %vm1302, %v1270
  %1528 = vst.msk [vmem:[%s3 + $0x384] sm:$0xf] %vm1302, %v1271
  %1529 = vst.msk [vmem:[%s3 + $0x388] sm:$0xf] %vm1302, %v1272
  %1530 = vst.msk [vmem:[%s3 + $0x38c] sm:$0xf] %vm1302, %v1273
  %1531 = vst.msk [vmem:[%s3 + $0x390] sm:$0xf] %vm1302, %v1274
  %1532 = vst.msk [vmem:[%s3 + $0x394] sm:$0xf] %vm1302, %v1275
  %1533 = vst.msk [vmem:[%s3 + $0x398] sm:$0xf] %vm1302, %v1276
  %1534 = vst.msk [vmem:[%s3 + $0x39c] sm:$0xf] %vm1302, %v1277
  %1535 = vst.msk [vmem:[%s3 + $0x3a0] sm:$0xf] %vm1302, %v1278
  %1536 = vst.msk [vmem:[%s3 + $0x3a4] sm:$0xf] %vm1302, %v1279
  %1537 = vst.msk [vmem:[%s3 + $0x3a8] sm:$0xf] %vm1302, %v1280
  %1538 = vst.msk [vmem:[%s3 + $0x3ac] sm:$0xf] %vm1302, %v1281
  %1539 = vst.msk [vmem:[%s3 + $0x3b0] sm:$0xf] %vm1302, %v1282
  %1540 = vst.msk [vmem:[%s3 + $0x3b4] sm:$0xf] %vm1302, %v1283
  %1541 = vst.msk [vmem:[%s3 + $0x3b8] sm:$0xf] %vm1302, %v1284
  %1542 = vst.msk [vmem:[%s3 + $0x3bc] sm:$0xf] %vm1302, %v1285
  %1543 = vst.msk [vmem:[%s3 + $0x3c0] sm:$0xf] %vm1302, %v1286
  %1544 = vst.msk [vmem:[%s3 + $0x3c4] sm:$0xf] %vm1302, %v1287
  %1545 = vst.msk [vmem:[%s3 + $0x3c8] sm:$0xf] %vm1302, %v1288
  %1546 = vst.msk [vmem:[%s3 + $0x3cc] sm:$0xf] %vm1302, %v1289
  %1547 = vst.msk [vmem:[%s3 + $0x3d0] sm:$0xf] %vm1302, %v1290
  %1548 = vst.msk [vmem:[%s3 + $0x3d4] sm:$0xf] %vm1302, %v1291
  %1549 = vst.msk [vmem:[%s3 + $0x3d8] sm:$0xf] %vm1302, %v1292
  %1550 = vst.msk [vmem:[%s3 + $0x3dc] sm:$0xf] %vm1302, %v1293
  %1551 = vst.msk [vmem:[%s3 + $0x3e0] sm:$0xf] %vm1302, %v1294
  %1552 = vst.msk [vmem:[%s3 + $0x3e4] sm:$0xf] %vm1302, %v1295
  %1553 = vst.msk [vmem:[%s3 + $0x3e8] sm:$0xf] %vm1302, %v1296
  %1554 = vst.msk [vmem:[%s3 + $0x3ec] sm:$0xf] %vm1302, %v1297
  %1555 = vst.msk [vmem:[%s3 + $0x3f0] sm:$0xf] %vm1302, %v1298
  %1556 = vst.msk [vmem:[%s3 + $0x3f4] sm:$0xf] %vm1302, %v1299
  %1557 = vst.msk [vmem:[%s3 + $0x3f8] sm:$0xf] %vm1302, %v1300
  %1558 = vst.msk [vmem:[%s3 + $0x3fc] sm:$0xf] %vm1302, %v1301
  // Predicated region
  $region14: #{generator_forward.24} parent=0 // pred_check
    _
  $region15: #{generator_forward.24} parent=0 // pred_check_branch
    %1560 = sbr.rel (0) target = $region17
  $region16: #{generator_forward.24} parent=0 // pred_region
    _
  $region17: #{generator_forward.24} parent=0 // pred_fallthru
    _
  // Predicated region
  $region18: #{generator_forward.24} parent=0 // pred_check
    _
  $region19: #{generator_forward.24} parent=0 // pred_check_branch
    %1562 = sbr.rel (0) target = $region21
  $region20: #{generator_forward.24} parent=0 // pred_region
    _
  $region21: #{generator_forward.24} parent=0 // pred_fallthru
    _

// kernel: generator_forward.25
$region0: #{generator_forward.25}
  #allocation0 [shape = 'u32[]', space=smem, size = 0x4, offset = 0x4, fixed_abs, tag = 'smem constant byte address 0x4 - core index']
  #allocation1 [shape = 'u32[72,128]{1,0:T(1,128)}', space=vmem, size = 0x9000, scoped, tag = 'internal scratch']
  #allocation2 [shape = 'f32[1024,128]{1,0:T(8,128)}', space=vmem, size = 0x80000, scoped, tag = 'scratch operand']
  %s0 = inlined_call_operand.vmem [shape: bf16[4,2048,128], index: 0, kind: input, shape index: {}]
  %s1 = inlined_call_operand.vmem [shape: bf16[4,128,128], index: 1, kind: input, shape index: {}]
  %s2 = inlined_call_operand.vmem [shape: f32[4,2048,128], index: 2, kind: output, shape index: {}]
  %s3 = sld [smem:[#allocation0]]
  $region49: #{generator_forward.25} parent=0
    _
  %s5 = ssub.s32 1, %s3
  %s6 = scalar_select 0, %s5, %s3
  loop: start=0, step=1, limit=10
  $region2: #{generator_forward.25} parent=0 // loop_pre_header
    _
  $region3: #{generator_forward.25} parent=0 // loop_header
    %s8 = sphi 0, %s12
    %p9 = scmp.ge.s32.totalorder %s8, 10
    %s15 = sphi 0, %s41
    %s16 = sphi 0, %s37
    %s17 = sphi 0, %s33
    %s18 = sphi 0, %s29
    %s19 = sphi 0, %s15
    %s20 = sphi 0, %s16
    %s21 = sphi 0, %s17
    %s22 = sphi 0, %s18
    %s23 = sphi 0, %s19
    %s24 = sphi 0, %s20
    %s25 = sphi 0, %s21
    %s26 = sphi 0, %s22
    %s48 = sphi 0, %s50
    %s51 = sphi 0, %s48
    %s52 = sphi 0, %s51
    %s68 = sphi 0, %s52
    %s78 = sphi 0, %s80
    %s81 = sphi 0, %s78
    %s82 = sphi 0, %s81
    %s98 = sphi 0, %s82
    %s108 = sphi 0, %s110
    %s111 = sphi 0, %s108
    %s112 = sphi 0, %s111
    %s128 = sphi 0, %s112
  $region4: #{generator_forward.25} parent=0 // loop_header_branch
    %11 = sbr.rel (%p9) target = $region8
  $region5: #{generator_forward.25} parent=0 // loop_body
    %s13 = ssub.s32 %s8, 1
    %s14 = ssub.s32 %s8, 2
    %s27 = sadd.s32 1, %s18
    %p28 = scmp.ge.s32.totalorder %s27, 1
    %s29 = scalar_select %p28, 0, %s27
    %s30 = sadd.s32 1, %s17
    %s31 = scalar_select %p28, %s30, %s17
    %p32 = scmp.ge.s32.totalorder %s31, 1
    %s33 = scalar_select %p32, 0, %s31
    %s34 = sadd.s32 1, %s16
    %s35 = scalar_select %p32, %s34, %s16
    %p36 = scmp.ge.s32.totalorder %s35, 2
    %s37 = scalar_select %p36, 0, %s35
    %s38 = sadd.s32 1, %s15
    %s39 = scalar_select %p36, %s38, %s15
    %p40 = scmp.ge.s32.totalorder %s39, 4
    %s41 = scalar_select %p40, 0, %s39
    %s42 = ssub.s32 %s15, %s41
    %s43 = ssub.s32 %s16, %s37
    %s44 = sor.u32 %s42, %s43
    %s45 = ssub.s32 %s18, %s29
    %s46 = sor.u32 %s44, %s45
    %p47 = scmp.eq.s32.totalorder %s46, 0
    %s49 = sadd.s32 %s48, 1
    %s50 = scalar_select %p47, %s48, %s49
    %p53 = pneg %p47
    %p54 = scmp.eq.s32.totalorder %s8, 7
    %p55 = por %p53, %p54
    %p56 = scmp.ne.s32.totalorder %s48, %s51
    %p57 = scmp.eq.s32.totalorder %s8, 0
    %p58 = por %p56, %p57
    %p59 = scmp.ne.s32.totalorder %s48, %s51
    %p60 = scmp.eq.s32.totalorder %s13, 7
    %p61 = por %p59, %p60
    %p62 = scmp.ne.s32.totalorder %s51, %s52
    %p63 = scmp.eq.s32.totalorder %s13, 0
    %p64 = por %p62, %p63
    %p65 = scmp.ne.s32.totalorder %s51, %s52
    %p66 = scmp.eq.s32.totalorder %s14, 7
    %p67 = por %p65, %p66
    %p69 = scmp.ne.s32.totalorder %s52, %s68
    %p70 = scmp.eq.s32.totalorder %s14, 0
    %p71 = por %p69, %p70
    %s72 = ssub.s32 %s15, %s41
    %s73 = ssub.s32 %s18, %s29
    %s74 = sor.u32 %s72, %s73
    %s75 = ssub.s32 %s17, %s33
    %s76 = sor.u32 %s74, %s75
    %p77 = scmp.eq.s32.totalorder %s76, 0
    %s79 = sadd.s32 %s78, 1
    %s80 = scalar_select %p77, %s78, %s79
    %p83 = pneg %p77
    %p84 = scmp.eq.s32.totalorder %s8, 7
    %p85 = por %p83, %p84
    %p86 = scmp.ne.s32.totalorder %s78, %s81
    %p87 = scmp.eq.s32.totalorder %s8, 0
    %p88 = por %p86, %p87
    %p89 = scmp.ne.s32.totalorder %s78, %s81
    %p90 = scmp.eq.s32.totalorder %s13, 7
    %p91 = por %p89, %p90
    %p92 = scmp.ne.s32.totalorder %s81, %s82
    %p93 = scmp.eq.s32.totalorder %s13, 0
    %p94 = por %p92, %p93
    %p95 = scmp.ne.s32.totalorder %s81, %s82
    %p96 = scmp.eq.s32.totalorder %s14, 7
    %p97 = por %p95, %p96
    %p99 = scmp.ne.s32.totalorder %s82, %s98
    %p100 = scmp.eq.s32.totalorder %s14, 0
    %p101 = por %p99, %p100
    %s102 = ssub.s32 %s15, %s41
    %s103 = ssub.s32 %s16, %s37
    %s104 = sor.u32 %s102, %s103
    %s105 = ssub.s32 %s17, %s33
    %s106 = sor.u32 %s104, %s105
    %p107 = scmp.eq.s32.totalorder %s106, 0
    %s109 = sadd.s32 %s108, 1
    %s110 = scalar_select %p107, %s108, %s109
    %p113 = pneg %p107
    %p114 = scmp.eq.s32.totalorder %s8, 7
    %p115 = por %p113, %p114
    %p116 = scmp.ne.s32.totalorder %s108, %s111
    %p117 = scmp.eq.s32.totalorder %s8, 0
    %p118 = por %p116, %p117
    %p119 = scmp.ne.s32.totalorder %s108, %s111
    %p120 = scmp.eq.s32.totalorder %s13, 7
    %p121 = por %p119, %p120
    %p122 = scmp.ne.s32.totalorder %s111, %s112
    %p123 = scmp.eq.s32.totalorder %s13, 0
    %p124 = por %p122, %p123
    %p125 = scmp.ne.s32.totalorder %s111, %s112
    %p126 = scmp.eq.s32.totalorder %s14, 7
    %p127 = por %p125, %p126
    %p129 = scmp.ne.s32.totalorder %s112, %s128
    %p130 = scmp.eq.s32.totalorder %s14, 0
    %p131 = por %p129, %p130
    %p132 = scmp.le.s32.totalorder 1, %s8
    %p133 = scmp.lt.s32.totalorder %s8, 9
    %p134 = pnand %p132, %p133
    %p135 = pneg %p134
    // Predicated region
    $region9: #{generator_forward.25} parent=5 // pred_check
      _
    $region10: #{generator_forward.25} parent=5 // pred_check_branch
      %137 = sbr.rel (%p134) target = $region12
    $region11: #{generator_forward.25} parent=5 // pred_region
      %s138 = ssub.s32 %s8, 1
    $region12: #{generator_forward.25} parent=5 // pred_fallthru
      _
    %p139 = scmp.lt.s32.totalorder %s8, 8
    // Predicated region
    $region13: #{generator_forward.25} parent=5 // pred_check
      %p140 = pneg %p139
    $region14: #{generator_forward.25} parent=5 // pred_check_branch
      %142 = sbr.rel (%p140) target = $region16
    $region15: #{generator_forward.25} parent=5 // pred_region
      // Predicated region
      $region17: #{generator_forward.25} parent=15 // pred_check
        %p143 = pneg %p58
      $region18: #{generator_forward.25} parent=15 // pred_check_branch
        %145 = sbr.rel (%p143) target = $region20
      $region19: #{generator_forward.25} parent=15 // pred_region
        %s146 = smul.u32 128, %s16
        %p147 = scmp.lt.s32.totalorder %s15, 3
        %s148 = scalar_select %p147, %s15, 3
        %p149 = scmp.lt.s32.totalorder %s146, 255
        %s150 = scalar_select %p149, %s146, 255
        %p151 = scmp.lt.s32.totalorder %s18, 0
        %s152 = scalar_select %p151, %s18, 0
        %s153 = sadd.s32 %s152, %s150
        %s154 = smul.addr %s148, 256
        %s155 = sadd.s32 %s153, %s154
        %s156 = smul.addr %s155, 4
        %s157 = scalar_lea.vmem %s0, %s156
        %s158 = smul.u32 128, %s16
      $region20: #{generator_forward.25} parent=15 // pred_fallthru
        _
      // Predicated region
      $region21: #{generator_forward.25} parent=15 // pred_check
        %p159 = pneg %p88
      $region22: #{generator_forward.25} parent=15 // pred_check_branch
        %161 = sbr.rel (%p159) target = $region24
      $region23: #{generator_forward.25} parent=15 // pred_region
        %s162 = smul.u32 16, %s18
        %p163 = scmp.lt.s32.totalorder %s15, 3
        %s164 = scalar_select %p163, %s15, 3
        %p165 = scmp.lt.s32.totalorder %s162, 15
        %s166 = scalar_select %p165, %s162, 15
        %p167 = scmp.lt.s32.totalorder %s17, 0
        %s168 = scalar_select %p167, %s17, 0
        %s169 = sadd.s32 %s168, %s166
        %s170 = smul.addr %s164, 16
        %s171 = sadd.s32 %s169, %s170
        %s172 = smul.addr %s171, 4
        %s173 = scalar_lea.vmem %s1, %s172
        %s174 = smul.u32 16, %s18
      $region24: #{generator_forward.25} parent=15 // pred_fallthru
        _
    $region16: #{generator_forward.25} parent=5 // pred_fallthru
      _
    %p175 = scmp.le.s32.totalorder 1, %s8
    %p176 = scmp.lt.s32.totalorder %s8, 9
    %p177 = pnand %p175, %p176
    %p178 = pneg %p177
    // Predicated region
    $region25: #{generator_forward.25} parent=5 // pred_check
      _
    $region26: #{generator_forward.25} parent=5 // pred_check_branch
      %180 = sbr.rel (%p177) target = $region28
    $region27: #{generator_forward.25} parent=5 // pred_region
      %s181 = ssub.s32 %s8, 1
      %s182 = smul.u32 128, %s20
      %p183 = scmp.lt.s32.totalorder %s19, 3
      %s184 = scalar_select %p183, %s19, 3
      %p185 = scmp.lt.s32.totalorder %s182, 255
      %s186 = scalar_select %p185, %s182, 255
      %p187 = scmp.lt.s32.totalorder %s22, 0
      %s188 = scalar_select %p187, %s22, 0
      %s189 = sadd.s32 %s188, %s186
      %s190 = smul.addr %s184, 256
      %s191 = sadd.s32 %s189, %s190
      %s192 = smul.addr %s191, 4
      %s193 = scalar_lea.vmem %s0, %s192
      %p194 = pneg %p64
      %p195 = pneg %p61
      %s196 = smul.u32 16, %s22
      %p197 = scmp.lt.s32.totalorder %s19, 3
      %s198 = scalar_select %p197, %s19, 3
      %p199 = scmp.lt.s32.totalorder %s196, 15
      %s200 = scalar_select %p199, %s196, 15
      %p201 = scmp.lt.s32.totalorder %s21, 0
      %s202 = scalar_select %p201, %s21, 0
      %s203 = sadd.s32 %s202, %s200
      %s204 = smul.addr %s198, 16
      %s205 = sadd.s32 %s203, %s204
      %s206 = smul.addr %s205, 4
      %s207 = scalar_lea.vmem %s1, %s206
      %p208 = pneg %p94
      %p209 = pneg %p91
      %p210 = pneg %p124
      %p211 = pneg %p121
      %s212 = smul.u32 128, %s20
      %p213 = scmp.lt.s32.totalorder %s19, 3
      %s214 = scalar_select %p213, %s19, 3
      %p215 = scmp.lt.s32.totalorder %s212, 255
      %s216 = scalar_select %p215, %s212, 255
      %p217 = scmp.lt.s32.totalorder %s21, 0
      %s218 = scalar_select %p217, %s21, 0
      %s219 = sadd.s32 %s218, %s216
      %s220 = smul.addr %s214, 256
      %s221 = sadd.s32 %s219, %s220
      %s222 = smul.addr %s221, 8
      %s223 = scalar_lea.vmem %s2, %s222
      %s224 = smul.u32 128, %s20
      %p225 = scmp.lt.s32.totalorder %s19, 3
      %s226 = scalar_select %p225, %s19, 3
      %p227 = scmp.lt.s32.totalorder %s224, 255
      %s228 = scalar_select %p227, %s224, 255
      %p229 = scmp.lt.s32.totalorder %s22, 0
      %s230 = scalar_select %p229, %s22, 0
      %s231 = sadd.s32 %s230, %s228
      %s232 = smul.addr %s226, 256
      %s233 = sadd.s32 %s231, %s232
      %s234 = smul.addr %s233, 4
      %s235 = scalar_lea.vmem %s0, %s234
      %s236 = smul.u32 128, %s20
      %s237 = smul.u32 16, %s22
      %p238 = scmp.lt.s32.totalorder %s19, 3
      %s239 = scalar_select %p238, %s19, 3
      %p240 = scmp.lt.s32.totalorder %s237, 15
      %s241 = scalar_select %p240, %s237, 15
      %p242 = scmp.lt.s32.totalorder %s21, 0
      %s243 = scalar_select %p242, %s21, 0
      %s244 = sadd.s32 %s243, %s241
      %s245 = smul.addr %s239, 16
      %s246 = sadd.s32 %s244, %s245
      %s247 = smul.addr %s246, 4
      %s248 = scalar_lea.vmem %s1, %s247
      %s249 = smul.u32 16, %s22
      %s250 = smul.u32 128, %s20
      %p251 = scmp.lt.s32.totalorder %s19, 3
      %s252 = scalar_select %p251, %s19, 3
      %p253 = scmp.lt.s32.totalorder %s250, 255
      %s254 = scalar_select %p253, %s250, 255
      %p255 = scmp.lt.s32.totalorder %s21, 0
      %s256 = scalar_select %p255, %s21, 0
      %s257 = sadd.s32 %s256, %s254
      %s258 = smul.addr %s252, 256
      %s259 = sadd.s32 %s257, %s258
      %s260 = smul.addr %s259, 8
      %s261 = scalar_lea.vmem %s2, %s260
      %s262 = smul.u32 128, %s20
      %p263 = scmp.eq.s32.totalorder %s22, 0
      // Predicated region
      $region29: #{generator_forward.25} parent=27 // pred_check
        %p264 = pneg %p263
      $region30: #{generator_forward.25} parent=27 // pred_check_branch
        %266 = sbr.rel (%p264) target = $region32
      $region31: #{generator_forward.25} parent=27 // pred_region
        %267 = vst [vmem:[#allocation2] sm:$0xff] 0.0
        %268 = vst [vmem:[#allocation2 + $0x8] sm:$0xff] 0.0
        %269 = vst [vmem:[#allocation2 + $0x10] sm:$0xff] 0.0
        %270 = vst [vmem:[#allocation2 + $0x18] sm:$0xff] 0.0
        %271 = vst [vmem:[#allocation2 + $0x20] sm:$0xff] 0.0
        %272 = vst [vmem:[#allocation2 + $0x28] sm:$0xff] 0.0
        %273 = vst [vmem:[#allocation2 + $0x30] sm:$0xff] 0.0
        %274 = vst [vmem:[#allocation2 + $0x38] sm:$0xff] 0.0
        %275 = vst [vmem:[#allocation2 + $0x40] sm:$0xff] 0.0
        %276 = vst [vmem:[#allocation2 + $0x48] sm:$0xff] 0.0
        %277 = vst [vmem:[#allocation2 + $0x50] sm:$0xff] 0.0
        %278 = vst [vmem:[#allocation2 + $0x58] sm:$0xff] 0.0
        %279 = vst [vmem:[#allocation2 + $0x60] sm:$0xff] 0.0
        %280 = vst [vmem:[#allocation2 + $0x68] sm:$0xff] 0.0
        %281 = vst [vmem:[#allocation2 + $0x70] sm:$0xff] 0.0
        %282 = vst [vmem:[#allocation2 + $0x78] sm:$0xff] 0.0
        %283 = vst [vmem:[#allocation2 + $0x80] sm:$0xff] 0.0
        %284 = vst [vmem:[#allocation2 + $0x88] sm:$0xff] 0.0
        %285 = vst [vmem:[#allocation2 + $0x90] sm:$0xff] 0.0
        %286 = vst [vmem:[#allocation2 + $0x98] sm:$0xff] 0.0
        %287 = vst [vmem:[#allocation2 + $0xa0] sm:$0xff] 0.0
        %288 = vst [vmem:[#allocation2 + $0xa8] sm:$0xff] 0.0
        %289 = vst [vmem:[#allocation2 + $0xb0] sm:$0xff] 0.0
        %290 = vst [vmem:[#allocation2 + $0xb8] sm:$0xff] 0.0
        %291 = vst [vmem:[#allocation2 + $0xc0] sm:$0xff] 0.0
        %292 = vst [vmem:[#allocation2 + $0xc8] sm:$0xff] 0.0
        %293 = vst [vmem:[#allocation2 + $0xd0] sm:$0xff] 0.0
        %294 = vst [vmem:[#allocation2 + $0xd8] sm:$0xff] 0.0
        %295 = vst [vmem:[#allocation2 + $0xe0] sm:$0xff] 0.0
        %296 = vst [vmem:[#allocation2 + $0xe8] sm:$0xff] 0.0
        %297 = vst [vmem:[#allocation2 + $0xf0] sm:$0xff] 0.0
        %298 = vst [vmem:[#allocation2 + $0xf8] sm:$0xff] 0.0
        %299 = vst [vmem:[#allocation2 + $0x100] sm:$0xff] 0.0
        %300 = vst [vmem:[#allocation2 + $0x108] sm:$0xff] 0.0
        %301 = vst [vmem:[#allocation2 + $0x110] sm:$0xff] 0.0
        %302 = vst [vmem:[#allocation2 + $0x118] sm:$0xff] 0.0
        %303 = vst [vmem:[#allocation2 + $0x120] sm:$0xff] 0.0
        %304 = vst [vmem:[#allocation2 + $0x128] sm:$0xff] 0.0
        %305 = vst [vmem:[#allocation2 + $0x130] sm:$0xff] 0.0
        %306 = vst [vmem:[#allocation2 + $0x138] sm:$0xff] 0.0
        %307 = vst [vmem:[#allocation2 + $0x140] sm:$0xff] 0.0
        %308 = vst [vmem:[#allocation2 + $0x148] sm:$0xff] 0.0
        %309 = vst [vmem:[#allocation2 + $0x150] sm:$0xff] 0.0
        %310 = vst [vmem:[#allocation2 + $0x158] sm:$0xff] 0.0
        %311 = vst [vmem:[#allocation2 + $0x160] sm:$0xff] 0.0
        %312 = vst [vmem:[#allocation2 + $0x168] sm:$0xff] 0.0
        %313 = vst [vmem:[#allocation2 + $0x170] sm:$0xff] 0.0
        %314 = vst [vmem:[#allocation2 + $0x178] sm:$0xff] 0.0
        %315 = vst [vmem:[#allocation2 + $0x180] sm:$0xff] 0.0
        %316 = vst [vmem:[#allocation2 + $0x188] sm:$0xff] 0.0
        %317 = vst [vmem:[#allocation2 + $0x190] sm:$0xff] 0.0
        %318 = vst [vmem:[#allocation2 + $0x198] sm:$0xff] 0.0
        %319 = vst [vmem:[#allocation2 + $0x1a0] sm:$0xff] 0.0
        %320 = vst [vmem:[#allocation2 + $0x1a8] sm:$0xff] 0.0
        %321 = vst [vmem:[#allocation2 + $0x1b0] sm:$0xff] 0.0
        %322 = vst [vmem:[#allocation2 + $0x1b8] sm:$0xff] 0.0
        %323 = vst [vmem:[#allocation2 + $0x1c0] sm:$0xff] 0.0
        %324 = vst [vmem:[#allocation2 + $0x1c8] sm:$0xff] 0.0
        %325 = vst [vmem:[#allocation2 + $0x1d0] sm:$0xff] 0.0
        %326 = vst [vmem:[#allocation2 + $0x1d8] sm:$0xff] 0.0
        %327 = vst [vmem:[#allocation2 + $0x1e0] sm:$0xff] 0.0
        %328 = vst [vmem:[#allocation2 + $0x1e8] sm:$0xff] 0.0
        %329 = vst [vmem:[#allocation2 + $0x1f0] sm:$0xff] 0.0
        %330 = vst [vmem:[#allocation2 + $0x1f8] sm:$0xff] 0.0
        %331 = vst [vmem:[#allocation2 + $0x200] sm:$0xff] 0.0
        %332 = vst [vmem:[#allocation2 + $0x208] sm:$0xff] 0.0
        %333 = vst [vmem:[#allocation2 + $0x210] sm:$0xff] 0.0
        %334 = vst [vmem:[#allocation2 + $0x218] sm:$0xff] 0.0
        %335 = vst [vmem:[#allocation2 + $0x220] sm:$0xff] 0.0
        %336 = vst [vmem:[#allocation2 + $0x228] sm:$0xff] 0.0
        %337 = vst [vmem:[#allocation2 + $0x230] sm:$0xff] 0.0
        %338 = vst [vmem:[#allocation2 + $0x238] sm:$0xff] 0.0
        %339 = vst [vmem:[#allocation2 + $0x240] sm:$0xff] 0.0
        %340 = vst [vmem:[#allocation2 + $0x248] sm:$0xff] 0.0
        %341 = vst [vmem:[#allocation2 + $0x250] sm:$0xff] 0.0
        %342 = vst [vmem:[#allocation2 + $0x258] sm:$0xff] 0.0
        %343 = vst [vmem:[#allocation2 + $0x260] sm:$0xff] 0.0
        %344 = vst [vmem:[#allocation2 + $0x268] sm:$0xff] 0.0
        %345 = vst [vmem:[#allocation2 + $0x270] sm:$0xff] 0.0
        %346 = vst [vmem:[#allocation2 + $0x278] sm:$0xff] 0.0
        %347 = vst [vmem:[#allocation2 + $0x280] sm:$0xff] 0.0
        %348 = vst [vmem:[#allocation2 + $0x288] sm:$0xff] 0.0
        %349 = vst [vmem:[#allocation2 + $0x290] sm:$0xff] 0.0
        %350 = vst [vmem:[#allocation2 + $0x298] sm:$0xff] 0.0
        %351 = vst [vmem:[#allocation2 + $0x2a0] sm:$0xff] 0.0
        %352 = vst [vmem:[#allocation2 + $0x2a8] sm:$0xff] 0.0
        %353 = vst [vmem:[#allocation2 + $0x2b0] sm:$0xff] 0.0
        %354 = vst [vmem:[#allocation2 + $0x2b8] sm:$0xff] 0.0
        %355 = vst [vmem:[#allocation2 + $0x2c0] sm:$0xff] 0.0
        %356 = vst [vmem:[#allocation2 + $0x2c8] sm:$0xff] 0.0
        %357 = vst [vmem:[#allocation2 + $0x2d0] sm:$0xff] 0.0
        %358 = vst [vmem:[#allocation2 + $0x2d8] sm:$0xff] 0.0
        %359 = vst [vmem:[#allocation2 + $0x2e0] sm:$0xff] 0.0
        %360 = vst [vmem:[#allocation2 + $0x2e8] sm:$0xff] 0.0
        %361 = vst [vmem:[#allocation2 + $0x2f0] sm:$0xff] 0.0
        %362 = vst [vmem:[#allocation2 + $0x2f8] sm:$0xff] 0.0
        %363 = vst [vmem:[#allocation2 + $0x300] sm:$0xff] 0.0
        %364 = vst [vmem:[#allocation2 + $0x308] sm:$0xff] 0.0
        %365 = vst [vmem:[#allocation2 + $0x310] sm:$0xff] 0.0
        %366 = vst [vmem:[#allocation2 + $0x318] sm:$0xff] 0.0
        %367 = vst [vmem:[#allocation2 + $0x320] sm:$0xff] 0.0
        %368 = vst [vmem:[#allocation2 + $0x328] sm:$0xff] 0.0
        %369 = vst [vmem:[#allocation2 + $0x330] sm:$0xff] 0.0
        %370 = vst [vmem:[#allocation2 + $0x338] sm:$0xff] 0.0
        %371 = vst [vmem:[#allocation2 + $0x340] sm:$0xff] 0.0
        %372 = vst [vmem:[#allocation2 + $0x348] sm:$0xff] 0.0
        %373 = vst [vmem:[#allocation2 + $0x350] sm:$0xff] 0.0
        %374 = vst [vmem:[#allocation2 + $0x358] sm:$0xff] 0.0
        %375 = vst [vmem:[#allocation2 + $0x360] sm:$0xff] 0.0
        %376 = vst [vmem:[#allocation2 + $0x368] sm:$0xff] 0.0
        %377 = vst [vmem:[#allocation2 + $0x370] sm:$0xff] 0.0
        %378 = vst [vmem:[#allocation2 + $0x378] sm:$0xff] 0.0
        %379 = vst [vmem:[#allocation2 + $0x380] sm:$0xff] 0.0
        %380 = vst [vmem:[#allocation2 + $0x388] sm:$0xff] 0.0
        %381 = vst [vmem:[#allocation2 + $0x390] sm:$0xff] 0.0
        %382 = vst [vmem:[#allocation2 + $0x398] sm:$0xff] 0.0
        %383 = vst [vmem:[#allocation2 + $0x3a0] sm:$0xff] 0.0
        %384 = vst [vmem:[#allocation2 + $0x3a8] sm:$0xff] 0.0
        %385 = vst [vmem:[#allocation2 + $0x3b0] sm:$0xff] 0.0
        %386 = vst [vmem:[#allocation2 + $0x3b8] sm:$0xff] 0.0
        %387 = vst [vmem:[#allocation2 + $0x3c0] sm:$0xff] 0.0
        %388 = vst [vmem:[#allocation2 + $0x3c8] sm:$0xff] 0.0
        %389 = vst [vmem:[#allocation2 + $0x3d0] sm:$0xff] 0.0
        %390 = vst [vmem:[#allocation2 + $0x3d8] sm:$0xff] 0.0
        %391 = vst [vmem:[#allocation2 + $0x3e0] sm:$0xff] 0.0
        %392 = vst [vmem:[#allocation2 + $0x3e8] sm:$0xff] 0.0
        %393 = vst [vmem:[#allocation2 + $0x3f0] sm:$0xff] 0.0
        %394 = vst [vmem:[#allocation2 + $0x3f8] sm:$0xff] 0.0
      $region32: #{generator_forward.25} parent=27 // pred_fallthru
        _
      %v395 = vld [vmem:[#allocation2] sm:$0xff]
      %v396 = vld [vmem:[#allocation2 + $0x8] sm:$0xff]
      %v397 = vld [vmem:[#allocation2 + $0x10] sm:$0xff]
      %v398 = vld [vmem:[#allocation2 + $0x18] sm:$0xff]
      %v399 = vld [vmem:[#allocation2 + $0x20] sm:$0xff]
      %v400 = vld [vmem:[#allocation2 + $0x28] sm:$0xff]
      %v401 = vld [vmem:[#allocation2 + $0x30] sm:$0xff]
      %v402 = vld [vmem:[#allocation2 + $0x38] sm:$0xff]
      %v403 = vld [vmem:[#allocation2 + $0x40] sm:$0xff]
      %v404 = vld [vmem:[#allocation2 + $0x48] sm:$0xff]
      %v405 = vld [vmem:[#allocation2 + $0x50] sm:$0xff]
      %v406 = vld [vmem:[#allocation2 + $0x58] sm:$0xff]
      %v407 = vld [vmem:[#allocation2 + $0x60] sm:$0xff]
      %v408 = vld [vmem:[#allocation2 + $0x68] sm:$0xff]
      %v409 = vld [vmem:[#allocation2 + $0x70] sm:$0xff]
      %v410 = vld [vmem:[#allocation2 + $0x78] sm:$0xff]
      %v411 = vld [vmem:[#allocation2 + $0x80] sm:$0xff]
      %v412 = vld [vmem:[#allocation2 + $0x88] sm:$0xff]
      %v413 = vld [vmem:[#allocation2 + $0x90] sm:$0xff]
      %v414 = vld [vmem:[#allocation2 + $0x98] sm:$0xff]
      %v415 = vld [vmem:[#allocation2 + $0xa0] sm:$0xff]
      %v416 = vld [vmem:[#allocation2 + $0xa8] sm:$0xff]
      %v417 = vld [vmem:[#allocation2 + $0xb0] sm:$0xff]
      %v418 = vld [vmem:[#allocation2 + $0xb8] sm:$0xff]
      %v419 = vld [vmem:[#allocation2 + $0xc0] sm:$0xff]
      %v420 = vld [vmem:[#allocation2 + $0xc8] sm:$0xff]
      %v421 = vld [vmem:[#allocation2 + $0xd0] sm:$0xff]
      %v422 = vld [vmem:[#allocation2 + $0xd8] sm:$0xff]
      %v423 = vld [vmem:[#allocation2 + $0xe0] sm:$0xff]
      %v424 = vld [vmem:[#allocation2 + $0xe8] sm:$0xff]
      %v425 = vld [vmem:[#allocation2 + $0xf0] sm:$0xff]
      %v426 = vld [vmem:[#allocation2 + $0xf8] sm:$0xff]
      %v427 = vld [vmem:[#allocation2 + $0x100] sm:$0xff]
      %v428 = vld [vmem:[#allocation2 + $0x108] sm:$0xff]
      %v429 = vld [vmem:[#allocation2 + $0x110] sm:$0xff]
      %v430 = vld [vmem:[#allocation2 + $0x118] sm:$0xff]
      %v431 = vld [vmem:[#allocation2 + $0x120] sm:$0xff]
      %v432 = vld [vmem:[#allocation2 + $0x128] sm:$0xff]
      %v433 = vld [vmem:[#allocation2 + $0x130] sm:$0xff]
      %v434 = vld [vmem:[#allocation2 + $0x138] sm:$0xff]
      %v435 = vld [vmem:[#allocation2 + $0x140] sm:$0xff]
      %v436 = vld [vmem:[#allocation2 + $0x148] sm:$0xff]
      %v437 = vld [vmem:[#allocation2 + $0x150] sm:$0xff]
      %v438 = vld [vmem:[#allocation2 + $0x158] sm:$0xff]
      %v439 = vld [vmem:[#allocation2 + $0x160] sm:$0xff]
      %v440 = vld [vmem:[#allocation2 + $0x168] sm:$0xff]
      %v441 = vld [vmem:[#allocation2 + $0x170] sm:$0xff]
      %v442 = vld [vmem:[#allocation2 + $0x178] sm:$0xff]
      %v443 = vld [vmem:[#allocation2 + $0x180] sm:$0xff]
      %v444 = vld [vmem:[#allocation2 + $0x188] sm:$0xff]
      %v445 = vld [vmem:[#allocation2 + $0x190] sm:$0xff]
      %v446 = vld [vmem:[#allocation2 + $0x198] sm:$0xff]
      %v447 = vld [vmem:[#allocation2 + $0x1a0] sm:$0xff]
      %v448 = vld [vmem:[#allocation2 + $0x1a8] sm:$0xff]
      %v449 = vld [vmem:[#allocation2 + $0x1b0] sm:$0xff]
      %v450 = vld [vmem:[#allocation2 + $0x1b8] sm:$0xff]
      %v451 = vld [vmem:[#allocation2 + $0x1c0] sm:$0xff]
      %v452 = vld [vmem:[#allocation2 + $0x1c8] sm:$0xff]
      %v453 = vld [vmem:[#allocation2 + $0x1d0] sm:$0xff]
      %v454 = vld [vmem:[#allocation2 + $0x1d8] sm:$0xff]
      %v455 = vld [vmem:[#allocation2 + $0x1e0] sm:$0xff]
      %v456 = vld [vmem:[#allocation2 + $0x1e8] sm:$0xff]
      %v457 = vld [vmem:[#allocation2 + $0x1f0] sm:$0xff]
      %v458 = vld [vmem:[#allocation2 + $0x1f8] sm:$0xff]
      %v459 = vld [vmem:[#allocation2 + $0x200] sm:$0xff]
      %v460 = vld [vmem:[#allocation2 + $0x208] sm:$0xff]
      %v461 = vld [vmem:[#allocation2 + $0x210] sm:$0xff]
      %v462 = vld [vmem:[#allocation2 + $0x218] sm:$0xff]
      %v463 = vld [vmem:[#allocation2 + $0x220] sm:$0xff]
      %v464 = vld [vmem:[#allocation2 + $0x228] sm:$0xff]
      %v465 = vld [vmem:[#allocation2 + $0x230] sm:$0xff]
      %v466 = vld [vmem:[#allocation2 + $0x238] sm:$0xff]
      %v467 = vld [vmem:[#allocation2 + $0x240] sm:$0xff]
      %v468 = vld [vmem:[#allocation2 + $0x248] sm:$0xff]
      %v469 = vld [vmem:[#allocation2 + $0x250] sm:$0xff]
      %v470 = vld [vmem:[#allocation2 + $0x258] sm:$0xff]
      %v471 = vld [vmem:[#allocation2 + $0x260] sm:$0xff]
      %v472 = vld [vmem:[#allocation2 + $0x268] sm:$0xff]
      %v473 = vld [vmem:[#allocation2 + $0x270] sm:$0xff]
      %v474 = vld [vmem:[#allocation2 + $0x278] sm:$0xff]
      %v475 = vld [vmem:[#allocation2 + $0x280] sm:$0xff]
      %v476 = vld [vmem:[#allocation2 + $0x288] sm:$0xff]
      %v477 = vld [vmem:[#allocation2 + $0x290] sm:$0xff]
      %v478 = vld [vmem:[#allocation2 + $0x298] sm:$0xff]
      %v479 = vld [vmem:[#allocation2 + $0x2a0] sm:$0xff]
      %v480 = vld [vmem:[#allocation2 + $0x2a8] sm:$0xff]
      %v481 = vld [vmem:[#allocation2 + $0x2b0] sm:$0xff]
      %v482 = vld [vmem:[#allocation2 + $0x2b8] sm:$0xff]
      %v483 = vld [vmem:[#allocation2 + $0x2c0] sm:$0xff]
      %v484 = vld [vmem:[#allocation2 + $0x2c8] sm:$0xff]
      %v485 = vld [vmem:[#allocation2 + $0x2d0] sm:$0xff]
      %v486 = vld [vmem:[#allocation2 + $0x2d8] sm:$0xff]
      %v487 = vld [vmem:[#allocation2 + $0x2e0] sm:$0xff]
      %v488 = vld [vmem:[#allocation2 + $0x2e8] sm:$0xff]
      %v489 = vld [vmem:[#allocation2 + $0x2f0] sm:$0xff]
      %v490 = vld [vmem:[#allocation2 + $0x2f8] sm:$0xff]
      %v491 = vld [vmem:[#allocation2 + $0x300] sm:$0xff]
      %v492 = vld [vmem:[#allocation2 + $0x308] sm:$0xff]
      %v493 = vld [vmem:[#allocation2 + $0x310] sm:$0xff]
      %v494 = vld [vmem:[#allocation2 + $0x318] sm:$0xff]
      %v495 = vld [vmem:[#allocation2 + $0x320] sm:$0xff]
      %v496 = vld [vmem:[#allocation2 + $0x328] sm:$0xff]
      %v497 = vld [vmem:[#allocation2 + $0x330] sm:$0xff]
      %v498 = vld [vmem:[#allocation2 + $0x338] sm:$0xff]
      %v499 = vld [vmem:[#allocation2 + $0x340] sm:$0xff]
      %v500 = vld [vmem:[#allocation2 + $0x348] sm:$0xff]
      %v501 = vld [vmem:[#allocation2 + $0x350] sm:$0xff]
      %v502 = vld [vmem:[#allocation2 + $0x358] sm:$0xff]
      %v503 = vld [vmem:[#allocation2 + $0x360] sm:$0xff]
      %v504 = vld [vmem:[#allocation2 + $0x368] sm:$0xff]
      %v505 = vld [vmem:[#allocation2 + $0x370] sm:$0xff]
      %v506 = vld [vmem:[#allocation2 + $0x378] sm:$0xff]
      %v507 = vld [vmem:[#allocation2 + $0x380] sm:$0xff]
      %v508 = vld [vmem:[#allocation2 + $0x388] sm:$0xff]
      %v509 = vld [vmem:[#allocation2 + $0x390] sm:$0xff]
      %v510 = vld [vmem:[#allocation2 + $0x398] sm:$0xff]
      %v511 = vld [vmem:[#allocation2 + $0x3a0] sm:$0xff]
      %v512 = vld [vmem:[#allocation2 + $0x3a8] sm:$0xff]
      %v513 = vld [vmem:[#allocation2 + $0x3b0] sm:$0xff]
      %v514 = vld [vmem:[#allocation2 + $0x3b8] sm:$0xff]
      %v515 = vld [vmem:[#allocation2 + $0x3c0] sm:$0xff]
      %v516 = vld [vmem:[#allocation2 + $0x3c8] sm:$0xff]
      %v517 = vld [vmem:[#allocation2 + $0x3d0] sm:$0xff]
      %v518 = vld [vmem:[#allocation2 + $0x3d8] sm:$0xff]
      %v519 = vld [vmem:[#allocation2 + $0x3e0] sm:$0xff]
      %v520 = vld [vmem:[#allocation2 + $0x3e8] sm:$0xff]
      %v521 = vld [vmem:[#allocation2 + $0x3f0] sm:$0xff]
      %v522 = vld [vmem:[#allocation2 + $0x3f8] sm:$0xff]
      %v523 = vld [vmem:[%s235] sm:$0xf]
      %v524 = vld [vmem:[%s235 + $0x4] sm:$0xf]
      %v525 = vld [vmem:[%s235 + $0x8] sm:$0xf]
      %v526 = vld [vmem:[%s235 + $0xc] sm:$0xf]
      %v527 = vld [vmem:[%s235 + $0x10] sm:$0xf]
      %v528 = vld [vmem:[%s235 + $0x14] sm:$0xf]
      %v529 = vld [vmem:[%s235 + $0x18] sm:$0xf]
      %v530 = vld [vmem:[%s235 + $0x1c] sm:$0xf]
      %v531 = vld [vmem:[%s235 + $0x20] sm:$0xf]
      %v532 = vld [vmem:[%s235 + $0x24] sm:$0xf]
      %v533 = vld [vmem:[%s235 + $0x28] sm:$0xf]
      %v534 = vld [vmem:[%s235 + $0x2c] sm:$0xf]
      %v535 = vld [vmem:[%s235 + $0x30] sm:$0xf]
      %v536 = vld [vmem:[%s235 + $0x34] sm:$0xf]
      %v537 = vld [vmem:[%s235 + $0x38] sm:$0xf]
      %v538 = vld [vmem:[%s235 + $0x3c] sm:$0xf]
      %v539 = vld [vmem:[%s235 + $0x40] sm:$0xf]
      %v540 = vld [vmem:[%s235 + $0x44] sm:$0xf]
      %v541 = vld [vmem:[%s235 + $0x48] sm:$0xf]
      %v542 = vld [vmem:[%s235 + $0x4c] sm:$0xf]
      %v543 = vld [vmem:[%s235 + $0x50] sm:$0xf]
      %v544 = vld [vmem:[%s235 + $0x54] sm:$0xf]
      %v545 = vld [vmem:[%s235 + $0x58] sm:$0xf]
      %v546 = vld [vmem:[%s235 + $0x5c] sm:$0xf]
      %v547 = vld [vmem:[%s235 + $0x60] sm:$0xf]
      %v548 = vld [vmem:[%s235 + $0x64] sm:$0xf]
      %v549 = vld [vmem:[%s235 + $0x68] sm:$0xf]
      %v550 = vld [vmem:[%s235 + $0x6c] sm:$0xf]
      %v551 = vld [vmem:[%s235 + $0x70] sm:$0xf]
      %v552 = vld [vmem:[%s235 + $0x74] sm:$0xf]
      %v553 = vld [vmem:[%s235 + $0x78] sm:$0xf]
      %v554 = vld [vmem:[%s235 + $0x7c] sm:$0xf]
      %v555 = vld [vmem:[%s235 + $0x80] sm:$0xf]
      %v556 = vld [vmem:[%s235 + $0x84] sm:$0xf]
      %v557 = vld [vmem:[%s235 + $0x88] sm:$0xf]
      %v558 = vld [vmem:[%s235 + $0x8c] sm:$0xf]
      %v559 = vld [vmem:[%s235 + $0x90] sm:$0xf]
      %v560 = vld [vmem:[%s235 + $0x94] sm:$0xf]
      %v561 = vld [vmem:[%s235 + $0x98] sm:$0xf]
      %v562 = vld [vmem:[%s235 + $0x9c] sm:$0xf]
      %v563 = vld [vmem:[%s235 + $0xa0] sm:$0xf]
      %v564 = vld [vmem:[%s235 + $0xa4] sm:$0xf]
      %v565 = vld [vmem:[%s235 + $0xa8] sm:$0xf]
      %v566 = vld [vmem:[%s235 + $0xac] sm:$0xf]
      %v567 = vld [vmem:[%s235 + $0xb0] sm:$0xf]
      %v568 = vld [vmem:[%s235 + $0xb4] sm:$0xf]
      %v569 = vld [vmem:[%s235 + $0xb8] sm:$0xf]
      %v570 = vld [vmem:[%s235 + $0xbc] sm:$0xf]
      %v571 = vld [vmem:[%s235 + $0xc0] sm:$0xf]
      %v572 = vld [vmem:[%s235 + $0xc4] sm:$0xf]
      %v573 = vld [vmem:[%s235 + $0xc8] sm:$0xf]
      %v574 = vld [vmem:[%s235 + $0xcc] sm:$0xf]
      %v575 = vld [vmem:[%s235 + $0xd0] sm:$0xf]
      %v576 = vld [vmem:[%s235 + $0xd4] sm:$0xf]
      %v577 = vld [vmem:[%s235 + $0xd8] sm:$0xf]
      %v578 = vld [vmem:[%s235 + $0xdc] sm:$0xf]
      %v579 = vld [vmem:[%s235 + $0xe0] sm:$0xf]
      %v580 = vld [vmem:[%s235 + $0xe4] sm:$0xf]
      %v581 = vld [vmem:[%s235 + $0xe8] sm:$0xf]
      %v582 = vld [vmem:[%s235 + $0xec] sm:$0xf]
      %v583 = vld [vmem:[%s235 + $0xf0] sm:$0xf]
      %v584 = vld [vmem:[%s235 + $0xf4] sm:$0xf]
      %v585 = vld [vmem:[%s235 + $0xf8] sm:$0xf]
      %v586 = vld [vmem:[%s235 + $0xfc] sm:$0xf]
      %v587 = vld [vmem:[%s235 + $0x100] sm:$0xf]
      %v588 = vld [vmem:[%s235 + $0x104] sm:$0xf]
      %v589 = vld [vmem:[%s235 + $0x108] sm:$0xf]
      %v590 = vld [vmem:[%s235 + $0x10c] sm:$0xf]
      %v591 = vld [vmem:[%s235 + $0x110] sm:$0xf]
      %v592 = vld [vmem:[%s235 + $0x114] sm:$0xf]
      %v593 = vld [vmem:[%s235 + $0x118] sm:$0xf]
      %v594 = vld [vmem:[%s235 + $0x11c] sm:$0xf]
      %v595 = vld [vmem:[%s235 + $0x120] sm:$0xf]
      %v596 = vld [vmem:[%s235 + $0x124] sm:$0xf]
      %v597 = vld [vmem:[%s235 + $0x128] sm:$0xf]
      %v598 = vld [vmem:[%s235 + $0x12c] sm:$0xf]
      %v599 = vld [vmem:[%s235 + $0x130] sm:$0xf]
      %v600 = vld [vmem:[%s235 + $0x134] sm:$0xf]
      %v601 = vld [vmem:[%s235 + $0x138] sm:$0xf]
      %v602 = vld [vmem:[%s235 + $0x13c] sm:$0xf]
      %v603 = vld [vmem:[%s235 + $0x140] sm:$0xf]
      %v604 = vld [vmem:[%s235 + $0x144] sm:$0xf]
      %v605 = vld [vmem:[%s235 + $0x148] sm:$0xf]
      %v606 = vld [vmem:[%s235 + $0x14c] sm:$0xf]
      %v607 = vld [vmem:[%s235 + $0x150] sm:$0xf]
      %v608 = vld [vmem:[%s235 + $0x154] sm:$0xf]
      %v609 = vld [vmem:[%s235 + $0x158] sm:$0xf]
      %v610 = vld [vmem:[%s235 + $0x15c] sm:$0xf]
      %v611 = vld [vmem:[%s235 + $0x160] sm:$0xf]
      %v612 = vld [vmem:[%s235 + $0x164] sm:$0xf]
      %v613 = vld [vmem:[%s235 + $0x168] sm:$0xf]
      %v614 = vld [vmem:[%s235 + $0x16c] sm:$0xf]
      %v615 = vld [vmem:[%s235 + $0x170] sm:$0xf]
      %v616 = vld [vmem:[%s235 + $0x174] sm:$0xf]
      %v617 = vld [vmem:[%s235 + $0x178] sm:$0xf]
      %v618 = vld [vmem:[%s235 + $0x17c] sm:$0xf]
      %v619 = vld [vmem:[%s235 + $0x180] sm:$0xf]
      %v620 = vld [vmem:[%s235 + $0x184] sm:$0xf]
      %v621 = vld [vmem:[%s235 + $0x188] sm:$0xf]
      %v622 = vld [vmem:[%s235 + $0x18c] sm:$0xf]
      %v623 = vld [vmem:[%s235 + $0x190] sm:$0xf]
      %v624 = vld [vmem:[%s235 + $0x194] sm:$0xf]
      %v625 = vld [vmem:[%s235 + $0x198] sm:$0xf]
      %v626 = vld [vmem:[%s235 + $0x19c] sm:$0xf]
      %v627 = vld [vmem:[%s235 + $0x1a0] sm:$0xf]
      %v628 = vld [vmem:[%s235 + $0x1a4] sm:$0xf]
      %v629 = vld [vmem:[%s235 + $0x1a8] sm:$0xf]
      %v630 = vld [vmem:[%s235 + $0x1ac] sm:$0xf]
      %v631 = vld [vmem:[%s235 + $0x1b0] sm:$0xf]
      %v632 = vld [vmem:[%s235 + $0x1b4] sm:$0xf]
      %v633 = vld [vmem:[%s235 + $0x1b8] sm:$0xf]
      %v634 = vld [vmem:[%s235 + $0x1bc] sm:$0xf]
      %v635 = vld [vmem:[%s235 + $0x1c0] sm:$0xf]
      %v636 = vld [vmem:[%s235 + $0x1c4] sm:$0xf]
      %v637 = vld [vmem:[%s235 + $0x1c8] sm:$0xf]
      %v638 = vld [vmem:[%s235 + $0x1cc] sm:$0xf]
      %v639 = vld [vmem:[%s235 + $0x1d0] sm:$0xf]
      %v640 = vld [vmem:[%s235 + $0x1d4] sm:$0xf]
      %v641 = vld [vmem:[%s235 + $0x1d8] sm:$0xf]
      %v642 = vld [vmem:[%s235 + $0x1dc] sm:$0xf]
      %v643 = vld [vmem:[%s235 + $0x1e0] sm:$0xf]
      %v644 = vld [vmem:[%s235 + $0x1e4] sm:$0xf]
      %v645 = vld [vmem:[%s235 + $0x1e8] sm:$0xf]
      %v646 = vld [vmem:[%s235 + $0x1ec] sm:$0xf]
      %v647 = vld [vmem:[%s235 + $0x1f0] sm:$0xf]
      %v648 = vld [vmem:[%s235 + $0x1f4] sm:$0xf]
      %v649 = vld [vmem:[%s235 + $0x1f8] sm:$0xf]
      %v650 = vld [vmem:[%s235 + $0x1fc] sm:$0xf]
      %v651 = vld [vmem:[%s248] sm:$0xf]
      %v652 = vld [vmem:[%s248 + $0x4] sm:$0xf]
      %v653 = vld [vmem:[%s248 + $0x8] sm:$0xf]
      %v654 = vld [vmem:[%s248 + $0xc] sm:$0xf]
      %v655 = vld [vmem:[%s248 + $0x10] sm:$0xf]
      %v656 = vld [vmem:[%s248 + $0x14] sm:$0xf]
      %v657 = vld [vmem:[%s248 + $0x18] sm:$0xf]
      %v658 = vld [vmem:[%s248 + $0x1c] sm:$0xf]
      %v659 = vld [vmem:[%s248 + $0x20] sm:$0xf]
      %v660 = vld [vmem:[%s248 + $0x24] sm:$0xf]
      %v661 = vld [vmem:[%s248 + $0x28] sm:$0xf]
      %v662 = vld [vmem:[%s248 + $0x2c] sm:$0xf]
      %v663 = vld [vmem:[%s248 + $0x30] sm:$0xf]
      %v664 = vld [vmem:[%s248 + $0x34] sm:$0xf]
      %v665 = vld [vmem:[%s248 + $0x38] sm:$0xf]
      %v666 = vld [vmem:[%s248 + $0x3c] sm:$0xf]
      %v795 = vunpack.c.l.b16 %v523
      %v796 = vunpack.c.l.b16 %v524
      %v797 = vunpack.c.l.b16 %v525
      %v798 = vunpack.c.l.b16 %v526
      %v799 = vunpack.c.l.b16 %v527
      %v800 = vunpack.c.l.b16 %v528
      %v801 = vunpack.c.l.b16 %v529
      %v802 = vunpack.c.l.b16 %v530
      %v803 = vunpack.c.l.b16 %v531
      %v804 = vunpack.c.l.b16 %v532
      %v805 = vunpack.c.l.b16 %v533
      %v806 = vunpack.c.l.b16 %v534
      %v807 = vunpack.c.l.b16 %v535
      %v808 = vunpack.c.l.b16 %v536
      %v809 = vunpack.c.l.b16 %v537
      %v810 = vunpack.c.l.b16 %v538
      %v811 = vunpack.c.l.b16 %v539
      %v812 = vunpack.c.l.b16 %v540
      %v813 = vunpack.c.l.b16 %v541
      %v814 = vunpack.c.l.b16 %v542
      %v815 = vunpack.c.l.b16 %v543
      %v816 = vunpack.c.l.b16 %v544
      %v817 = vunpack.c.l.b16 %v545
      %v818 = vunpack.c.l.b16 %v546
      %v819 = vunpack.c.l.b16 %v547
      %v820 = vunpack.c.l.b16 %v548
      %v821 = vunpack.c.l.b16 %v549
      %v822 = vunpack.c.l.b16 %v550
      %v823 = vunpack.c.l.b16 %v551
      %v824 = vunpack.c.l.b16 %v552
      %v825 = vunpack.c.l.b16 %v553
      %v826 = vunpack.c.l.b16 %v554
      %v827 = vunpack.c.l.b16 %v555
      %v828 = vunpack.c.l.b16 %v556
      %v829 = vunpack.c.l.b16 %v557
      %v830 = vunpack.c.l.b16 %v558
      %v831 = vunpack.c.l.b16 %v559
      %v832 = vunpack.c.l.b16 %v560
      %v833 = vunpack.c.l.b16 %v561
      %v834 = vunpack.c.l.b16 %v562
      %v835 = vunpack.c.l.b16 %v563
      %v836 = vunpack.c.l.b16 %v564
      %v837 = vunpack.c.l.b16 %v565
      %v838 = vunpack.c.l.b16 %v566
      %v839 = vunpack.c.l.b16 %v567
      %v840 = vunpack.c.l.b16 %v568
      %v841 = vunpack.c.l.b16 %v569
      %v842 = vunpack.c.l.b16 %v570
      %v843 = vunpack.c.l.b16 %v571
      %v844 = vunpack.c.l.b16 %v572
      %v845 = vunpack.c.l.b16 %v573
      %v846 = vunpack.c.l.b16 %v574
      %v847 = vunpack.c.l.b16 %v575
      %v848 = vunpack.c.l.b16 %v576
      %v849 = vunpack.c.l.b16 %v577
      %v850 = vunpack.c.l.b16 %v578
      %v851 = vunpack.c.l.b16 %v579
      %v852 = vunpack.c.l.b16 %v580
      %v853 = vunpack.c.l.b16 %v581
      %v854 = vunpack.c.l.b16 %v582
      %v855 = vunpack.c.l.b16 %v583
      %v856 = vunpack.c.l.b16 %v584
      %v857 = vunpack.c.l.b16 %v585
      %v858 = vunpack.c.l.b16 %v586
      %v859 = vunpack.c.l.b16 %v587
      %v860 = vunpack.c.l.b16 %v588
      %v861 = vunpack.c.l.b16 %v589
      %v862 = vunpack.c.l.b16 %v590
      %v863 = vunpack.c.l.b16 %v591
      %v864 = vunpack.c.l.b16 %v592
      %v865 = vunpack.c.l.b16 %v593
      %v866 = vunpack.c.l.b16 %v594
      %v867 = vunpack.c.l.b16 %v595
      %v868 = vunpack.c.l.b16 %v596
      %v869 = vunpack.c.l.b16 %v597
      %v870 = vunpack.c.l.b16 %v598
      %v871 = vunpack.c.l.b16 %v599
      %v872 = vunpack.c.l.b16 %v600
      %v873 = vunpack.c.l.b16 %v601
      %v874 = vunpack.c.l.b16 %v602
      %v875 = vunpack.c.l.b16 %v603
      %v876 = vunpack.c.l.b16 %v604
      %v877 = vunpack.c.l.b16 %v605
      %v878 = vunpack.c.l.b16 %v606
      %v879 = vunpack.c.l.b16 %v607
      %v880 = vunpack.c.l.b16 %v608
      %v881 = vunpack.c.l.b16 %v609
      %v882 = vunpack.c.l.b16 %v610
      %v883 = vunpack.c.l.b16 %v611
      %v884 = vunpack.c.l.b16 %v612
      %v885 = vunpack.c.l.b16 %v613
      %v886 = vunpack.c.l.b16 %v614
      %v887 = vunpack.c.l.b16 %v615
      %v888 = vunpack.c.l.b16 %v616
      %v889 = vunpack.c.l.b16 %v617
      %v890 = vunpack.c.l.b16 %v618
      %v891 = vunpack.c.l.b16 %v619
      %v892 = vunpack.c.l.b16 %v620
      %v893 = vunpack.c.l.b16 %v621
      %v894 = vunpack.c.l.b16 %v622
      %v895 = vunpack.c.l.b16 %v623
      %v896 = vunpack.c.l.b16 %v624
      %v897 = vunpack.c.l.b16 %v625
      %v898 = vunpack.c.l.b16 %v626
      %v899 = vunpack.c.l.b16 %v627
      %v900 = vunpack.c.l.b16 %v628
      %v901 = vunpack.c.l.b16 %v629
      %v902 = vunpack.c.l.b16 %v630
      %v903 = vunpack.c.l.b16 %v631
      %v904 = vunpack.c.l.b16 %v632
      %v905 = vunpack.c.l.b16 %v633
      %v906 = vunpack.c.l.b16 %v634
      %v907 = vunpack.c.l.b16 %v635
      %v908 = vunpack.c.l.b16 %v636
      %v909 = vunpack.c.l.b16 %v637
      %v910 = vunpack.c.l.b16 %v638
      %v911 = vunpack.c.l.b16 %v639
      %v912 = vunpack.c.l.b16 %v640
      %v913 = vunpack.c.l.b16 %v641
      %v914 = vunpack.c.l.b16 %v642
      %v915 = vunpack.c.l.b16 %v643
      %v916 = vunpack.c.l.b16 %v644
      %v917 = vunpack.c.l.b16 %v645
      %v918 = vunpack.c.l.b16 %v646
      %v919 = vunpack.c.l.b16 %v647
      %v920 = vunpack.c.l.b16 %v648
      %v921 = vunpack.c.l.b16 %v649
      %v922 = vunpack.c.l.b16 %v650
      %v923 = vpack.c.b16 %v796, %v795
      %v924 = vpack.c.b16 %v798, %v797
      %v925 = vpack.c.b16 %v800, %v799
      %v926 = vpack.c.b16 %v802, %v801
      %v927 = vpack.c.b16 %v804, %v803
      %v928 = vpack.c.b16 %v806, %v805
      %v929 = vpack.c.b16 %v808, %v807
      %v930 = vpack.c.b16 %v810, %v809
      %v931 = vpack.c.b16 %v812, %v811
      %v932 = vpack.c.b16 %v814, %v813
      %v933 = vpack.c.b16 %v816, %v815
      %v934 = vpack.c.b16 %v818, %v817
      %v935 = vpack.c.b16 %v820, %v819
      %v936 = vpack.c.b16 %v822, %v821
      %v937 = vpack.c.b16 %v824, %v823
      %v938 = vpack.c.b16 %v826, %v825
      %v939 = vpack.c.b16 %v828, %v827
      %v940 = vpack.c.b16 %v830, %v829
      %v941 = vpack.c.b16 %v832, %v831
      %v942 = vpack.c.b16 %v834, %v833
      %v943 = vpack.c.b16 %v836, %v835
      %v944 = vpack.c.b16 %v838, %v837
      %v945 = vpack.c.b16 %v840, %v839
      %v946 = vpack.c.b16 %v842, %v841
      %v947 = vpack.c.b16 %v844, %v843
      %v948 = vpack.c.b16 %v846, %v845
      %v949 = vpack.c.b16 %v848, %v847
      %v950 = vpack.c.b16 %v850, %v849
      %v951 = vpack.c.b16 %v852, %v851
      %v952 = vpack.c.b16 %v854, %v853
      %v953 = vpack.c.b16 %v856, %v855
      %v954 = vpack.c.b16 %v858, %v857
      %v955 = vpack.c.b16 %v860, %v859
      %v956 = vpack.c.b16 %v862, %v861
      %v957 = vpack.c.b16 %v864, %v863
      %v958 = vpack.c.b16 %v866, %v865
      %v959 = vpack.c.b16 %v868, %v867
      %v960 = vpack.c.b16 %v870, %v869
      %v961 = vpack.c.b16 %v872, %v871
      %v962 = vpack.c.b16 %v874, %v873
      %v963 = vpack.c.b16 %v876, %v875
      %v964 = vpack.c.b16 %v878, %v877
      %v965 = vpack.c.b16 %v880, %v879
      %v966 = vpack.c.b16 %v882, %v881
      %v967 = vpack.c.b16 %v884, %v883
      %v968 = vpack.c.b16 %v886, %v885
      %v969 = vpack.c.b16 %v888, %v887
      %v970 = vpack.c.b16 %v890, %v889
      %v971 = vpack.c.b16 %v892, %v891
      %v972 = vpack.c.b16 %v894, %v893
      %v973 = vpack.c.b16 %v896, %v895
      %v974 = vpack.c.b16 %v898, %v897
      %v975 = vpack.c.b16 %v900, %v899
      %v976 = vpack.c.b16 %v902, %v901
      %v977 = vpack.c.b16 %v904, %v903
      %v978 = vpack.c.b16 %v906, %v905
      %v979 = vpack.c.b16 %v908, %v907
      %v980 = vpack.c.b16 %v910, %v909
      %v981 = vpack.c.b16 %v912, %v911
      %v982 = vpack.c.b16 %v914, %v913
      %v983 = vpack.c.b16 %v916, %v915
      %v984 = vpack.c.b16 %v918, %v917
      %v985 = vpack.c.b16 %v920, %v919
      %v986 = vpack.c.b16 %v922, %v921
      %v1067 = vunpack.c.l.b16 %v651
      %v1068 = vunpack.c.l.b16 %v652
      %v1069 = vunpack.c.l.b16 %v653
      %v1070 = vunpack.c.l.b16 %v654
      %v1071 = vunpack.c.l.b16 %v655
      %v1072 = vunpack.c.l.b16 %v656
      %v1073 = vunpack.c.l.b16 %v657
      %v1074 = vunpack.c.l.b16 %v658
      %v1075 = vunpack.c.l.b16 %v659
      %v1076 = vunpack.c.l.b16 %v660
      %v1077 = vunpack.c.l.b16 %v661
      %v1078 = vunpack.c.l.b16 %v662
      %v1079 = vunpack.c.l.b16 %v663
      %v1080 = vunpack.c.l.b16 %v664
      %v1081 = vunpack.c.l.b16 %v665
      %v1082 = vunpack.c.l.b16 %v666
      %v1083 = vpack.c.b16 %v1068, %v1067
      %v1084 = vpack.c.b16 %v1070, %v1069
      %v1085 = vpack.c.b16 %v1072, %v1071
      %v1086 = vpack.c.b16 %v1074, %v1073
      %v1087 = vpack.c.b16 %v1076, %v1075
      %v1088 = vpack.c.b16 %v1078, %v1077
      %v1089 = vpack.c.b16 %v1080, %v1079
      %v1090 = vpack.c.b16 %v1082, %v1081
      %1099 = vmatpush.bf16.msra.mxu0 %v1090
      %1100 = vmatpush.bf16.msra.mxu0 %v1089
      %1101 = vmatpush.bf16.msra.mxu0 %v1088
      %1102 = vmatpush.bf16.msra.mxu0 %v1087
      %1103 = vmatpush.bf16.msra.mxu0 %v1086
      %1104 = vmatpush.bf16.msra.mxu0 %v1085
      %1105 = vmatpush.bf16.msra.mxu0 %v1084
      %1106 = vmatpush.bf16.msra.mxu0 %v1083
      %1107 = vmatmul.bf16.gmra.mxu0 %v923
      %v1108 = vpop.f32.mrf.mxu0
      %v1109 = vadd.f32 0.0, %v1108
      %v1110 = vpop.f32.mrf.mxu0
      %v1111 = vadd.f32 0.0, %v1110
      %1112 = vmatmul.bf16.gmra.mxu0 %v924
      %v1113 = vpop.f32.mrf.mxu0
      %v1114 = vadd.f32 0.0, %v1113
      %v1115 = vpop.f32.mrf.mxu0
      %v1116 = vadd.f32 0.0, %v1115
      %1117 = vmatmul.bf16.gmra.mxu0 %v925
      %v1118 = vpop.f32.mrf.mxu0
      %v1119 = vadd.f32 0.0, %v1118
      %v1120 = vpop.f32.mrf.mxu0
      %v1121 = vadd.f32 0.0, %v1120
      %1122 = vmatmul.bf16.gmra.mxu0 %v926
      %v1123 = vpop.f32.mrf.mxu0
      %v1124 = vadd.f32 0.0, %v1123
      %v1125 = vpop.f32.mrf.mxu0
      %v1126 = vadd.f32 0.0, %v1125
      %1127 = vmatmul.bf16.gmra.mxu0 %v927
      %v1128 = vpop.f32.mrf.mxu0
      %v1129 = vadd.f32 0.0, %v1128
      %v1130 = vpop.f32.mrf.mxu0
      %v1131 = vadd.f32 0.0, %v1130
      %1132 = vmatmul.bf16.gmra.mxu0 %v928
      %v1133 = vpop.f32.mrf.mxu0
      %v1134 = vadd.f32 0.0, %v1133
      %v1135 = vpop.f32.mrf.mxu0
      %v1136 = vadd.f32 0.0, %v1135
      %1137 = vmatmul.bf16.gmra.mxu0 %v929
      %v1138 = vpop.f32.mrf.mxu0
      %v1139 = vadd.f32 0.0, %v1138
      %v1140 = vpop.f32.mrf.mxu0
      %v1141 = vadd.f32 0.0, %v1140
      %1142 = vmatmul.bf16.gmra.mxu0 %v930
      %v1143 = vpop.f32.mrf.mxu0
      %v1144 = vadd.f32 0.0, %v1143
      %v1145 = vpop.f32.mrf.mxu0
      %v1146 = vadd.f32 0.0, %v1145
      %1147 = vmatmul.bf16.gmra.mxu0 %v931
      %v1148 = vpop.f32.mrf.mxu0
      %v1149 = vadd.f32 0.0, %v1148
      %v1150 = vpop.f32.mrf.mxu0
      %v1151 = vadd.f32 0.0, %v1150
      %1152 = vmatmul.bf16.gmra.mxu0 %v932
      %v1153 = vpop.f32.mrf.mxu0
      %v1154 = vadd.f32 0.0, %v1153
      %v1155 = vpop.f32.mrf.mxu0
      %v1156 = vadd.f32 0.0, %v1155
      %1157 = vmatmul.bf16.gmra.mxu0 %v933
      %v1158 = vpop.f32.mrf.mxu0
      %v1159 = vadd.f32 0.0, %v1158
      %v1160 = vpop.f32.mrf.mxu0
      %v1161 = vadd.f32 0.0, %v1160
      %1162 = vmatmul.bf16.gmra.mxu0 %v934
      %v1163 = vpop.f32.mrf.mxu0
      %v1164 = vadd.f32 0.0, %v1163
      %v1165 = vpop.f32.mrf.mxu0
      %v1166 = vadd.f32 0.0, %v1165
      %1167 = vmatmul.bf16.gmra.mxu0 %v935
      %v1168 = vpop.f32.mrf.mxu0
      %v1169 = vadd.f32 0.0, %v1168
      %v1170 = vpop.f32.mrf.mxu0
      %v1171 = vadd.f32 0.0, %v1170
      %1172 = vmatmul.bf16.gmra.mxu0 %v936
      %v1173 = vpop.f32.mrf.mxu0
      %v1174 = vadd.f32 0.0, %v1173
      %v1175 = vpop.f32.mrf.mxu0
      %v1176 = vadd.f32 0.0, %v1175
      %1177 = vmatmul.bf16.gmra.mxu0 %v937
      %v1178 = vpop.f32.mrf.mxu0
      %v1179 = vadd.f32 0.0, %v1178
      %v1180 = vpop.f32.mrf.mxu0
      %v1181 = vadd.f32 0.0, %v1180
      %1182 = vmatmul.bf16.gmra.mxu0 %v938
      %v1183 = vpop.f32.mrf.mxu0
      %v1184 = vadd.f32 0.0, %v1183
      %v1185 = vpop.f32.mrf.mxu0
      %v1186 = vadd.f32 0.0, %v1185
      %1187 = vmatmul.bf16.gmra.mxu0 %v939
      %v1188 = vpop.f32.mrf.mxu0
      %v1189 = vadd.f32 0.0, %v1188
      %v1190 = vpop.f32.mrf.mxu0
      %v1191 = vadd.f32 0.0, %v1190
      %1192 = vmatmul.bf16.gmra.mxu0 %v940
      %v1193 = vpop.f32.mrf.mxu0
      %v1194 = vadd.f32 0.0, %v1193
      %v1195 = vpop.f32.mrf.mxu0
      %v1196 = vadd.f32 0.0, %v1195
      %1197 = vmatmul.bf16.gmra.mxu0 %v941
      %v1198 = vpop.f32.mrf.mxu0
      %v1199 = vadd.f32 0.0, %v1198
      %v1200 = vpop.f32.mrf.mxu0
      %v1201 = vadd.f32 0.0, %v1200
      %1202 = vmatmul.bf16.gmra.mxu0 %v942
      %v1203 = vpop.f32.mrf.mxu0
      %v1204 = vadd.f32 0.0, %v1203
      %v1205 = vpop.f32.mrf.mxu0
      %v1206 = vadd.f32 0.0, %v1205
      %1207 = vmatmul.bf16.gmra.mxu0 %v943
      %v1208 = vpop.f32.mrf.mxu0
      %v1209 = vadd.f32 0.0, %v1208
      %v1210 = vpop.f32.mrf.mxu0
      %v1211 = vadd.f32 0.0, %v1210
      %1212 = vmatmul.bf16.gmra.mxu0 %v944
      %v1213 = vpop.f32.mrf.mxu0
      %v1214 = vadd.f32 0.0, %v1213
      %v1215 = vpop.f32.mrf.mxu0
      %v1216 = vadd.f32 0.0, %v1215
      %1217 = vmatmul.bf16.gmra.mxu0 %v945
      %v1218 = vpop.f32.mrf.mxu0
      %v1219 = vadd.f32 0.0, %v1218
      %v1220 = vpop.f32.mrf.mxu0
      %v1221 = vadd.f32 0.0, %v1220
      %1222 = vmatmul.bf16.gmra.mxu0 %v946
      %v1223 = vpop.f32.mrf.mxu0
      %v1224 = vadd.f32 0.0, %v1223
      %v1225 = vpop.f32.mrf.mxu0
      %v1226 = vadd.f32 0.0, %v1225
      %1227 = vmatmul.bf16.gmra.mxu0 %v947
      %v1228 = vpop.f32.mrf.mxu0
      %v1229 = vadd.f32 0.0, %v1228
      %v1230 = vpop.f32.mrf.mxu0
      %v1231 = vadd.f32 0.0, %v1230
      %1232 = vmatmul.bf16.gmra.mxu0 %v948
      %v1233 = vpop.f32.mrf.mxu0
      %v1234 = vadd.f32 0.0, %v1233
      %v1235 = vpop.f32.mrf.mxu0
      %v1236 = vadd.f32 0.0, %v1235
      %1237 = vmatmul.bf16.gmra.mxu0 %v949
      %v1238 = vpop.f32.mrf.mxu0
      %v1239 = vadd.f32 0.0, %v1238
      %v1240 = vpop.f32.mrf.mxu0
      %v1241 = vadd.f32 0.0, %v1240
      %1242 = vmatmul.bf16.gmra.mxu0 %v950
      %v1243 = vpop.f32.mrf.mxu0
      %v1244 = vadd.f32 0.0, %v1243
      %v1245 = vpop.f32.mrf.mxu0
      %v1246 = vadd.f32 0.0, %v1245
      %1247 = vmatmul.bf16.gmra.mxu0 %v951
      %v1248 = vpop.f32.mrf.mxu0
      %v1249 = vadd.f32 0.0, %v1248
      %v1250 = vpop.f32.mrf.mxu0
      %v1251 = vadd.f32 0.0, %v1250
      %1252 = vmatmul.bf16.gmra.mxu0 %v952
      %v1253 = vpop.f32.mrf.mxu0
      %v1254 = vadd.f32 0.0, %v1253
      %v1255 = vpop.f32.mrf.mxu0
      %v1256 = vadd.f32 0.0, %v1255
      %1257 = vmatmul.bf16.gmra.mxu0 %v953
      %v1258 = vpop.f32.mrf.mxu0
      %v1259 = vadd.f32 0.0, %v1258
      %v1260 = vpop.f32.mrf.mxu0
      %v1261 = vadd.f32 0.0, %v1260
      %1262 = vmatmul.bf16.gmra.mxu0 %v954
      %v1263 = vpop.f32.mrf.mxu0
      %v1264 = vadd.f32 0.0, %v1263
      %v1265 = vpop.f32.mrf.mxu0
      %v1266 = vadd.f32 0.0, %v1265
      %1267 = vmatmul.bf16.gmra.mxu0 %v955
      %v1268 = vpop.f32.mrf.mxu0
      %v1269 = vadd.f32 0.0, %v1268
      %v1270 = vpop.f32.mrf.mxu0
      %v1271 = vadd.f32 0.0, %v1270
      %1272 = vmatmul.bf16.gmra.mxu0 %v956
      %v1273 = vpop.f32.mrf.mxu0
      %v1274 = vadd.f32 0.0, %v1273
      %v1275 = vpop.f32.mrf.mxu0
      %v1276 = vadd.f32 0.0, %v1275
      %1277 = vmatmul.bf16.gmra.mxu0 %v957
      %v1278 = vpop.f32.mrf.mxu0
      %v1279 = vadd.f32 0.0, %v1278
      %v1280 = vpop.f32.mrf.mxu0
      %v1281 = vadd.f32 0.0, %v1280
      %1282 = vmatmul.bf16.gmra.mxu0 %v958
      %v1283 = vpop.f32.mrf.mxu0
      %v1284 = vadd.f32 0.0, %v1283
      %v1285 = vpop.f32.mrf.mxu0
      %v1286 = vadd.f32 0.0, %v1285
      %1287 = vmatmul.bf16.gmra.mxu0 %v959
      %v1288 = vpop.f32.mrf.mxu0
      %v1289 = vadd.f32 0.0, %v1288
      %v1290 = vpop.f32.mrf.mxu0
      %v1291 = vadd.f32 0.0, %v1290
      %1292 = vmatmul.bf16.gmra.mxu0 %v960
      %v1293 = vpop.f32.mrf.mxu0
      %v1294 = vadd.f32 0.0, %v1293
      %v1295 = vpop.f32.mrf.mxu0
      %v1296 = vadd.f32 0.0, %v1295
      %1297 = vmatmul.bf16.gmra.mxu0 %v961
      %v1298 = vpop.f32.mrf.mxu0
      %v1299 = vadd.f32 0.0, %v1298
      %v1300 = vpop.f32.mrf.mxu0
      %v1301 = vadd.f32 0.0, %v1300
      %1302 = vmatmul.bf16.gmra.mxu0 %v962
      %v1303 = vpop.f32.mrf.mxu0
      %v1304 = vadd.f32 0.0, %v1303
      %v1305 = vpop.f32.mrf.mxu0
      %v1306 = vadd.f32 0.0, %v1305
      %1307 = vmatmul.bf16.gmra.mxu0 %v963
      %v1308 = vpop.f32.mrf.mxu0
      %v1309 = vadd.f32 0.0, %v1308
      %v1310 = vpop.f32.mrf.mxu0
      %v1311 = vadd.f32 0.0, %v1310
      %1312 = vmatmul.bf16.gmra.mxu0 %v964
      %v1313 = vpop.f32.mrf.mxu0
      %v1314 = vadd.f32 0.0, %v1313
      %v1315 = vpop.f32.mrf.mxu0
      %v1316 = vadd.f32 0.0, %v1315
      %1317 = vmatmul.bf16.gmra.mxu0 %v965
      %v1318 = vpop.f32.mrf.mxu0
      %v1319 = vadd.f32 0.0, %v1318
      %v1320 = vpop.f32.mrf.mxu0
      %v1321 = vadd.f32 0.0, %v1320
      %1322 = vmatmul.bf16.gmra.mxu0 %v966
      %v1323 = vpop.f32.mrf.mxu0
      %v1324 = vadd.f32 0.0, %v1323
      %v1325 = vpop.f32.mrf.mxu0
      %v1326 = vadd.f32 0.0, %v1325
      %1327 = vmatmul.bf16.gmra.mxu0 %v967
      %v1328 = vpop.f32.mrf.mxu0
      %v1329 = vadd.f32 0.0, %v1328
      %v1330 = vpop.f32.mrf.mxu0
      %v1331 = vadd.f32 0.0, %v1330
      %1332 = vmatmul.bf16.gmra.mxu0 %v968
      %v1333 = vpop.f32.mrf.mxu0
      %v1334 = vadd.f32 0.0, %v1333
      %v1335 = vpop.f32.mrf.mxu0
      %v1336 = vadd.f32 0.0, %v1335
      %1337 = vmatmul.bf16.gmra.mxu0 %v969
      %v1338 = vpop.f32.mrf.mxu0
      %v1339 = vadd.f32 0.0, %v1338
      %v1340 = vpop.f32.mrf.mxu0
      %v1341 = vadd.f32 0.0, %v1340
      %1342 = vmatmul.bf16.gmra.mxu0 %v970
      %v1343 = vpop.f32.mrf.mxu0
      %v1344 = vadd.f32 0.0, %v1343
      %v1345 = vpop.f32.mrf.mxu0
      %v1346 = vadd.f32 0.0, %v1345
      %1347 = vmatmul.bf16.gmra.mxu0 %v971
      %v1348 = vpop.f32.mrf.mxu0
      %v1349 = vadd.f32 0.0, %v1348
      %v1350 = vpop.f32.mrf.mxu0
      %v1351 = vadd.f32 0.0, %v1350
      %1352 = vmatmul.bf16.gmra.mxu0 %v972
      %v1353 = vpop.f32.mrf.mxu0
      %v1354 = vadd.f32 0.0, %v1353
      %v1355 = vpop.f32.mrf.mxu0
      %v1356 = vadd.f32 0.0, %v1355
      %1357 = vmatmul.bf16.gmra.mxu0 %v973
      %v1358 = vpop.f32.mrf.mxu0
      %v1359 = vadd.f32 0.0, %v1358
      %v1360 = vpop.f32.mrf.mxu0
      %v1361 = vadd.f32 0.0, %v1360
      %1362 = vmatmul.bf16.gmra.mxu0 %v974
      %v1363 = vpop.f32.mrf.mxu0
      %v1364 = vadd.f32 0.0, %v1363
      %v1365 = vpop.f32.mrf.mxu0
      %v1366 = vadd.f32 0.0, %v1365
      %1367 = vmatmul.bf16.gmra.mxu0 %v975
      %v1368 = vpop.f32.mrf.mxu0
      %v1369 = vadd.f32 0.0, %v1368
      %v1370 = vpop.f32.mrf.mxu0
      %v1371 = vadd.f32 0.0, %v1370
      %1372 = vmatmul.bf16.gmra.mxu0 %v976
      %v1373 = vpop.f32.mrf.mxu0
      %v1374 = vadd.f32 0.0, %v1373
      %v1375 = vpop.f32.mrf.mxu0
      %v1376 = vadd.f32 0.0, %v1375
      %1377 = vmatmul.bf16.gmra.mxu0 %v977
      %v1378 = vpop.f32.mrf.mxu0
      %v1379 = vadd.f32 0.0, %v1378
      %v1380 = vpop.f32.mrf.mxu0
      %v1381 = vadd.f32 0.0, %v1380
      %1382 = vmatmul.bf16.gmra.mxu0 %v978
      %v1383 = vpop.f32.mrf.mxu0
      %v1384 = vadd.f32 0.0, %v1383
      %v1385 = vpop.f32.mrf.mxu0
      %v1386 = vadd.f32 0.0, %v1385
      %1387 = vmatmul.bf16.gmra.mxu0 %v979
      %v1388 = vpop.f32.mrf.mxu0
      %v1389 = vadd.f32 0.0, %v1388
      %v1390 = vpop.f32.mrf.mxu0
      %v1391 = vadd.f32 0.0, %v1390
      %1392 = vmatmul.bf16.gmra.mxu0 %v980
      %v1393 = vpop.f32.mrf.mxu0
      %v1394 = vadd.f32 0.0, %v1393
      %v1395 = vpop.f32.mrf.mxu0
      %v1396 = vadd.f32 0.0, %v1395
      %1397 = vmatmul.bf16.gmra.mxu0 %v981
      %v1398 = vpop.f32.mrf.mxu0
      %v1399 = vadd.f32 0.0, %v1398
      %v1400 = vpop.f32.mrf.mxu0
      %v1401 = vadd.f32 0.0, %v1400
      %1402 = vmatmul.bf16.gmra.mxu0 %v982
      %v1403 = vpop.f32.mrf.mxu0
      %v1404 = vadd.f32 0.0, %v1403
      %v1405 = vpop.f32.mrf.mxu0
      %v1406 = vadd.f32 0.0, %v1405
      %1407 = vmatmul.bf16.gmra.mxu0 %v983
      %v1408 = vpop.f32.mrf.mxu0
      %v1409 = vadd.f32 0.0, %v1408
      %v1410 = vpop.f32.mrf.mxu0
      %v1411 = vadd.f32 0.0, %v1410
      %1412 = vmatmul.bf16.gmra.mxu0 %v984
      %v1413 = vpop.f32.mrf.mxu0
      %v1414 = vadd.f32 0.0, %v1413
      %v1415 = vpop.f32.mrf.mxu0
      %v1416 = vadd.f32 0.0, %v1415
      %1417 = vmatmul.bf16.gmra.mxu0 %v985
      %v1418 = vpop.f32.mrf.mxu0
      %v1419 = vadd.f32 0.0, %v1418
      %v1420 = vpop.f32.mrf.mxu0
      %v1421 = vadd.f32 0.0, %v1420
      %1422 = vmatmul.bf16.gmra.mxu0 %v986
      %v1423 = vpop.f32.mrf.mxu0
      %v1424 = vadd.f32 0.0, %v1423
      %v1425 = vpop.f32.mrf.mxu0
      %v1426 = vadd.f32 0.0, %v1425
      %1427 = vdwg.mxu0
      %v1428 = vadd.f32 %v395, %v1109
      %v1429 = vadd.f32 %v396, %v1111
      %v1430 = vadd.f32 %v397, %v1114
      %v1431 = vadd.f32 %v398, %v1116
      %v1432 = vadd.f32 %v399, %v1119
      %v1433 = vadd.f32 %v400, %v1121
      %v1434 = vadd.f32 %v401, %v1124
      %v1435 = vadd.f32 %v402, %v1126
      %v1436 = vadd.f32 %v403, %v1129
      %v1437 = vadd.f32 %v404, %v1131
      %v1438 = vadd.f32 %v405, %v1134
      %v1439 = vadd.f32 %v406, %v1136
      %v1440 = vadd.f32 %v407, %v1139
      %v1441 = vadd.f32 %v408, %v1141
      %v1442 = vadd.f32 %v409, %v1144
      %v1443 = vadd.f32 %v410, %v1146
      %v1444 = vadd.f32 %v411, %v1149
      %v1445 = vadd.f32 %v412, %v1151
      %v1446 = vadd.f32 %v413, %v1154
      %v1447 = vadd.f32 %v414, %v1156
      %v1448 = vadd.f32 %v415, %v1159
      %v1449 = vadd.f32 %v416, %v1161
      %v1450 = vadd.f32 %v417, %v1164
      %v1451 = vadd.f32 %v418, %v1166
      %v1452 = vadd.f32 %v419, %v1169
      %v1453 = vadd.f32 %v420, %v1171
      %v1454 = vadd.f32 %v421, %v1174
      %v1455 = vadd.f32 %v422, %v1176
      %v1456 = vadd.f32 %v423, %v1179
      %v1457 = vadd.f32 %v424, %v1181
      %v1458 = vadd.f32 %v425, %v1184
      %v1459 = vadd.f32 %v426, %v1186
      %v1460 = vadd.f32 %v427, %v1189
      %v1461 = vadd.f32 %v428, %v1191
      %v1462 = vadd.f32 %v429, %v1194
      %v1463 = vadd.f32 %v430, %v1196
      %v1464 = vadd.f32 %v431, %v1199
      %v1465 = vadd.f32 %v432, %v1201
      %v1466 = vadd.f32 %v433, %v1204
      %v1467 = vadd.f32 %v434, %v1206
      %v1468 = vadd.f32 %v435, %v1209
      %v1469 = vadd.f32 %v436, %v1211
      %v1470 = vadd.f32 %v437, %v1214
      %v1471 = vadd.f32 %v438, %v1216
      %v1472 = vadd.f32 %v439, %v1219
      %v1473 = vadd.f32 %v440, %v1221
      %v1474 = vadd.f32 %v441, %v1224
      %v1475 = vadd.f32 %v442, %v1226
      %v1476 = vadd.f32 %v443, %v1229
      %v1477 = vadd.f32 %v444, %v1231
      %v1478 = vadd.f32 %v445, %v1234
      %v1479 = vadd.f32 %v446, %v1236
      %v1480 = vadd.f32 %v447, %v1239
      %v1481 = vadd.f32 %v448, %v1241
      %v1482 = vadd.f32 %v449, %v1244
      %v1483 = vadd.f32 %v450, %v1246
      %v1484 = vadd.f32 %v451, %v1249
      %v1485 = vadd.f32 %v452, %v1251
      %v1486 = vadd.f32 %v453, %v1254
      %v1487 = vadd.f32 %v454, %v1256
      %v1488 = vadd.f32 %v455, %v1259
      %v1489 = vadd.f32 %v456, %v1261
      %v1490 = vadd.f32 %v457, %v1264
      %v1491 = vadd.f32 %v458, %v1266
      %v1492 = vadd.f32 %v459, %v1269
      %v1493 = vadd.f32 %v460, %v1271
      %v1494 = vadd.f32 %v461, %v1274
      %v1495 = vadd.f32 %v462, %v1276
      %v1496 = vadd.f32 %v463, %v1279
      %v1497 = vadd.f32 %v464, %v1281
      %v1498 = vadd.f32 %v465, %v1284
      %v1499 = vadd.f32 %v466, %v1286
      %v1500 = vadd.f32 %v467, %v1289
      %v1501 = vadd.f32 %v468, %v1291
      %v1502 = vadd.f32 %v469, %v1294
      %v1503 = vadd.f32 %v470, %v1296
      %v1504 = vadd.f32 %v471, %v1299
      %v1505 = vadd.f32 %v472, %v1301
      %v1506 = vadd.f32 %v473, %v1304
      %v1507 = vadd.f32 %v474, %v1306
      %v1508 = vadd.f32 %v475, %v1309
      %v1509 = vadd.f32 %v476, %v1311
      %v1510 = vadd.f32 %v477, %v1314
      %v1511 = vadd.f32 %v478, %v1316
      %v1512 = vadd.f32 %v479, %v1319
      %v1513 = vadd.f32 %v480, %v1321
      %v1514 = vadd.f32 %v481, %v1324
      %v1515 = vadd.f32 %v482, %v1326
      %v1516 = vadd.f32 %v483, %v1329
      %v1517 = vadd.f32 %v484, %v1331
      %v1518 = vadd.f32 %v485, %v1334
      %v1519 = vadd.f32 %v486, %v1336
      %v1520 = vadd.f32 %v487, %v1339
      %v1521 = vadd.f32 %v488, %v1341
      %v1522 = vadd.f32 %v489, %v1344
      %v1523 = vadd.f32 %v490, %v1346
      %v1524 = vadd.f32 %v491, %v1349
      %v1525 = vadd.f32 %v492, %v1351
      %v1526 = vadd.f32 %v493, %v1354
      %v1527 = vadd.f32 %v494, %v1356
      %v1528 = vadd.f32 %v495, %v1359
      %v1529 = vadd.f32 %v496, %v1361
      %v1530 = vadd.f32 %v497, %v1364
      %v1531 = vadd.f32 %v498, %v1366
      %v1532 = vadd.f32 %v499, %v1369
      %v1533 = vadd.f32 %v500, %v1371
      %v1534 = vadd.f32 %v501, %v1374
      %v1535 = vadd.f32 %v502, %v1376
      %v1536 = vadd.f32 %v503, %v1379
      %v1537 = vadd.f32 %v504, %v1381
      %v1538 = vadd.f32 %v505, %v1384
      %v1539 = vadd.f32 %v506, %v1386
      %v1540 = vadd.f32 %v507, %v1389
      %v1541 = vadd.f32 %v508, %v1391
      %v1542 = vadd.f32 %v509, %v1394
      %v1543 = vadd.f32 %v510, %v1396
      %v1544 = vadd.f32 %v511, %v1399
      %v1545 = vadd.f32 %v512, %v1401
      %v1546 = vadd.f32 %v513, %v1404
      %v1547 = vadd.f32 %v514, %v1406
      %v1548 = vadd.f32 %v515, %v1409
      %v1549 = vadd.f32 %v516, %v1411
      %v1550 = vadd.f32 %v517, %v1414
      %v1551 = vadd.f32 %v518, %v1416
      %v1552 = vadd.f32 %v519, %v1419
      %v1553 = vadd.f32 %v520, %v1421
      %v1554 = vadd.f32 %v521, %v1424
      %v1555 = vadd.f32 %v522, %v1426
      %1556 = vst [vmem:[#allocation2] sm:$0xff] %v1428
      %1557 = vst [vmem:[#allocation2 + $0x8] sm:$0xff] %v1429
      %1558 = vst [vmem:[#allocation2 + $0x10] sm:$0xff] %v1430
      %1559 = vst [vmem:[#allocation2 + $0x18] sm:$0xff] %v1431
      %1560 = vst [vmem:[#allocation2 + $0x20] sm:$0xff] %v1432
      %1561 = vst [vmem:[#allocation2 + $0x28] sm:$0xff] %v1433
      %1562 = vst [vmem:[#allocation2 + $0x30] sm:$0xff] %v1434
      %1563 = vst [vmem:[#allocation2 + $0x38] sm:$0xff] %v1435
      %1564 = vst [vmem:[#allocation2 + $0x40] sm:$0xff] %v1436
      %1565 = vst [vmem:[#allocation2 + $0x48] sm:$0xff] %v1437
      %1566 = vst [vmem:[#allocation2 + $0x50] sm:$0xff] %v1438
      %1567 = vst [vmem:[#allocation2 + $0x58] sm:$0xff] %v1439
      %1568 = vst [vmem:[#allocation2 + $0x60] sm:$0xff] %v1440
      %1569 = vst [vmem:[#allocation2 + $0x68] sm:$0xff] %v1441
      %1570 = vst [vmem:[#allocation2 + $0x70] sm:$0xff] %v1442
      %1571 = vst [vmem:[#allocation2 + $0x78] sm:$0xff] %v1443
      %1572 = vst [vmem:[#allocation2 + $0x80] sm:$0xff] %v1444
      %1573 = vst [vmem:[#allocation2 + $0x88] sm:$0xff] %v1445
      %1574 = vst [vmem:[#allocation2 + $0x90] sm:$0xff] %v1446
      %1575 = vst [vmem:[#allocation2 + $0x98] sm:$0xff] %v1447
      %1576 = vst [vmem:[#allocation2 + $0xa0] sm:$0xff] %v1448
      %1577 = vst [vmem:[#allocation2 + $0xa8] sm:$0xff] %v1449
      %1578 = vst [vmem:[#allocation2 + $0xb0] sm:$0xff] %v1450
      %1579 = vst [vmem:[#allocation2 + $0xb8] sm:$0xff] %v1451
      %1580 = vst [vmem:[#allocation2 + $0xc0] sm:$0xff] %v1452
      %1581 = vst [vmem:[#allocation2 + $0xc8] sm:$0xff] %v1453
      %1582 = vst [vmem:[#allocation2 + $0xd0] sm:$0xff] %v1454
      %1583 = vst [vmem:[#allocation2 + $0xd8] sm:$0xff] %v1455
      %1584 = vst [vmem:[#allocation2 + $0xe0] sm:$0xff] %v1456
      %1585 = vst [vmem:[#allocation2 + $0xe8] sm:$0xff] %v1457
      %1586 = vst [vmem:[#allocation2 + $0xf0] sm:$0xff] %v1458
      %1587 = vst [vmem:[#allocation2 + $0xf8] sm:$0xff] %v1459
      %1588 = vst [vmem:[#allocation2 + $0x100] sm:$0xff] %v1460
      %1589 = vst [vmem:[#allocation2 + $0x108] sm:$0xff] %v1461
      %1590 = vst [vmem:[#allocation2 + $0x110] sm:$0xff] %v1462
      %1591 = vst [vmem:[#allocation2 + $0x118] sm:$0xff] %v1463
      %1592 = vst [vmem:[#allocation2 + $0x120] sm:$0xff] %v1464
      %1593 = vst [vmem:[#allocation2 + $0x128] sm:$0xff] %v1465
      %1594 = vst [vmem:[#allocation2 + $0x130] sm:$0xff] %v1466
      %1595 = vst [vmem:[#allocation2 + $0x138] sm:$0xff] %v1467
      %1596 = vst [vmem:[#allocation2 + $0x140] sm:$0xff] %v1468
      %1597 = vst [vmem:[#allocation2 + $0x148] sm:$0xff] %v1469
      %1598 = vst [vmem:[#allocation2 + $0x150] sm:$0xff] %v1470
      %1599 = vst [vmem:[#allocation2 + $0x158] sm:$0xff] %v1471
      %1600 = vst [vmem:[#allocation2 + $0x160] sm:$0xff] %v1472
      %1601 = vst [vmem:[#allocation2 + $0x168] sm:$0xff] %v1473
      %1602 = vst [vmem:[#allocation2 + $0x170] sm:$0xff] %v1474
      %1603 = vst [vmem:[#allocation2 + $0x178] sm:$0xff] %v1475
      %1604 = vst [vmem:[#allocation2 + $0x180] sm:$0xff] %v1476
      %1605 = vst [vmem:[#allocation2 + $0x188] sm:$0xff] %v1477
      %1606 = vst [vmem:[#allocation2 + $0x190] sm:$0xff] %v1478
      %1607 = vst [vmem:[#allocation2 + $0x198] sm:$0xff] %v1479
      %1608 = vst [vmem:[#allocation2 + $0x1a0] sm:$0xff] %v1480
      %1609 = vst [vmem:[#allocation2 + $0x1a8] sm:$0xff] %v1481
      %1610 = vst [vmem:[#allocation2 + $0x1b0] sm:$0xff] %v1482
      %1611 = vst [vmem:[#allocation2 + $0x1b8] sm:$0xff] %v1483
      %1612 = vst [vmem:[#allocation2 + $0x1c0] sm:$0xff] %v1484
      %1613 = vst [vmem:[#allocation2 + $0x1c8] sm:$0xff] %v1485
      %1614 = vst [vmem:[#allocation2 + $0x1d0] sm:$0xff] %v1486
      %1615 = vst [vmem:[#allocation2 + $0x1d8] sm:$0xff] %v1487
      %1616 = vst [vmem:[#allocation2 + $0x1e0] sm:$0xff] %v1488
      %1617 = vst [vmem:[#allocation2 + $0x1e8] sm:$0xff] %v1489
      %1618 = vst [vmem:[#allocation2 + $0x1f0] sm:$0xff] %v1490
      %1619 = vst [vmem:[#allocation2 + $0x1f8] sm:$0xff] %v1491
      %1620 = vst [vmem:[#allocation2 + $0x200] sm:$0xff] %v1492
      %1621 = vst [vmem:[#allocation2 + $0x208] sm:$0xff] %v1493
      %1622 = vst [vmem:[#allocation2 + $0x210] sm:$0xff] %v1494
      %1623 = vst [vmem:[#allocation2 + $0x218] sm:$0xff] %v1495
      %1624 = vst [vmem:[#allocation2 + $0x220] sm:$0xff] %v1496
      %1625 = vst [vmem:[#allocation2 + $0x228] sm:$0xff] %v1497
      %1626 = vst [vmem:[#allocation2 + $0x230] sm:$0xff] %v1498
      %1627 = vst [vmem:[#allocation2 + $0x238] sm:$0xff] %v1499
      %1628 = vst [vmem:[#allocation2 + $0x240] sm:$0xff] %v1500
      %1629 = vst [vmem:[#allocation2 + $0x248] sm:$0xff] %v1501
      %1630 = vst [vmem:[#allocation2 + $0x250] sm:$0xff] %v1502
      %1631 = vst [vmem:[#allocation2 + $0x258] sm:$0xff] %v1503
      %1632 = vst [vmem:[#allocation2 + $0x260] sm:$0xff] %v1504
      %1633 = vst [vmem:[#allocation2 + $0x268] sm:$0xff] %v1505
      %1634 = vst [vmem:[#allocation2 + $0x270] sm:$0xff] %v1506
      %1635 = vst [vmem:[#allocation2 + $0x278] sm:$0xff] %v1507
      %1636 = vst [vmem:[#allocation2 + $0x280] sm:$0xff] %v1508
      %1637 = vst [vmem:[#allocation2 + $0x288] sm:$0xff] %v1509
      %1638 = vst [vmem:[#allocation2 + $0x290] sm:$0xff] %v1510
      %1639 = vst [vmem:[#allocation2 + $0x298] sm:$0xff] %v1511
      %1640 = vst [vmem:[#allocation2 + $0x2a0] sm:$0xff] %v1512
      %1641 = vst [vmem:[#allocation2 + $0x2a8] sm:$0xff] %v1513
      %1642 = vst [vmem:[#allocation2 + $0x2b0] sm:$0xff] %v1514
      %1643 = vst [vmem:[#allocation2 + $0x2b8] sm:$0xff] %v1515
      %1644 = vst [vmem:[#allocation2 + $0x2c0] sm:$0xff] %v1516
      %1645 = vst [vmem:[#allocation2 + $0x2c8] sm:$0xff] %v1517
      %1646 = vst [vmem:[#allocation2 + $0x2d0] sm:$0xff] %v1518
      %1647 = vst [vmem:[#allocation2 + $0x2d8] sm:$0xff] %v1519
      %1648 = vst [vmem:[#allocation2 + $0x2e0] sm:$0xff] %v1520
      %1649 = vst [vmem:[#allocation2 + $0x2e8] sm:$0xff] %v1521
      %1650 = vst [vmem:[#allocation2 + $0x2f0] sm:$0xff] %v1522
      %1651 = vst [vmem:[#allocation2 + $0x2f8] sm:$0xff] %v1523
      %1652 = vst [vmem:[#allocation2 + $0x300] sm:$0xff] %v1524
      %1653 = vst [vmem:[#allocation2 + $0x308] sm:$0xff] %v1525
      %1654 = vst [vmem:[#allocation2 + $0x310] sm:$0xff] %v1526
      %1655 = vst [vmem:[#allocation2 + $0x318] sm:$0xff] %v1527
      %1656 = vst [vmem:[#allocation2 + $0x320] sm:$0xff] %v1528
      %1657 = vst [vmem:[#allocation2 + $0x328] sm:$0xff] %v1529
      %1658 = vst [vmem:[#allocation2 + $0x330] sm:$0xff] %v1530
      %1659 = vst [vmem:[#allocation2 + $0x338] sm:$0xff] %v1531
      %1660 = vst [vmem:[#allocation2 + $0x340] sm:$0xff] %v1532
      %1661 = vst [vmem:[#allocation2 + $0x348] sm:$0xff] %v1533
      %1662 = vst [vmem:[#allocation2 + $0x350] sm:$0xff] %v1534
      %1663 = vst [vmem:[#allocation2 + $0x358] sm:$0xff] %v1535
      %1664 = vst [vmem:[#allocation2 + $0x360] sm:$0xff] %v1536
      %1665 = vst [vmem:[#allocation2 + $0x368] sm:$0xff] %v1537
      %1666 = vst [vmem:[#allocation2 + $0x370] sm:$0xff] %v1538
      %1667 = vst [vmem:[#allocation2 + $0x378] sm:$0xff] %v1539
      %1668 = vst [vmem:[#allocation2 + $0x380] sm:$0xff] %v1540
      %1669 = vst [vmem:[#allocation2 + $0x388] sm:$0xff] %v1541
      %1670 = vst [vmem:[#allocation2 + $0x390] sm:$0xff] %v1542
      %1671 = vst [vmem:[#allocation2 + $0x398] sm:$0xff] %v1543
      %1672 = vst [vmem:[#allocation2 + $0x3a0] sm:$0xff] %v1544
      %1673 = vst [vmem:[#allocation2 + $0x3a8] sm:$0xff] %v1545
      %1674 = vst [vmem:[#allocation2 + $0x3b0] sm:$0xff] %v1546
      %1675 = vst [vmem:[#allocation2 + $0x3b8] sm:$0xff] %v1547
      %1676 = vst [vmem:[#allocation2 + $0x3c0] sm:$0xff] %v1548
      %1677 = vst [vmem:[#allocation2 + $0x3c8] sm:$0xff] %v1549
      %1678 = vst [vmem:[#allocation2 + $0x3d0] sm:$0xff] %v1550
      %1679 = vst [vmem:[#allocation2 + $0x3d8] sm:$0xff] %v1551
      %1680 = vst [vmem:[#allocation2 + $0x3e0] sm:$0xff] %v1552
      %1681 = vst [vmem:[#allocation2 + $0x3e8] sm:$0xff] %v1553
      %1682 = vst [vmem:[#allocation2 + $0x3f0] sm:$0xff] %v1554
      %1683 = vst [vmem:[#allocation2 + $0x3f8] sm:$0xff] %v1555
      // Predicated region
      $region33: #{generator_forward.25} parent=27 // pred_check
        %p1684 = pneg %p263
      $region34: #{generator_forward.25} parent=27 // pred_check_branch
        %1686 = sbr.rel (%p1684) target = $region36
      $region35: #{generator_forward.25} parent=27 // pred_region
        %v1687 = vld [vmem:[#allocation2] sm:$0xff]
        %v1688 = vld [vmem:[#allocation2 + $0x8] sm:$0xff]
        %v1689 = vld [vmem:[#allocation2 + $0x10] sm:$0xff]
        %v1690 = vld [vmem:[#allocation2 + $0x18] sm:$0xff]
        %v1691 = vld [vmem:[#allocation2 + $0x20] sm:$0xff]
        %v1692 = vld [vmem:[#allocation2 + $0x28] sm:$0xff]
        %v1693 = vld [vmem:[#allocation2 + $0x30] sm:$0xff]
        %v1694 = vld [vmem:[#allocation2 + $0x38] sm:$0xff]
        %v1695 = vld [vmem:[#allocation2 + $0x40] sm:$0xff]
        %v1696 = vld [vmem:[#allocation2 + $0x48] sm:$0xff]
        %v1697 = vld [vmem:[#allocation2 + $0x50] sm:$0xff]
        %v1698 = vld [vmem:[#allocation2 + $0x58] sm:$0xff]
        %v1699 = vld [vmem:[#allocation2 + $0x60] sm:$0xff]
        %v1700 = vld [vmem:[#allocation2 + $0x68] sm:$0xff]
        %v1701 = vld [vmem:[#allocation2 + $0x70] sm:$0xff]
        %v1702 = vld [vmem:[#allocation2 + $0x78] sm:$0xff]
        %v1703 = vld [vmem:[#allocation2 + $0x80] sm:$0xff]
        %v1704 = vld [vmem:[#allocation2 + $0x88] sm:$0xff]
        %v1705 = vld [vmem:[#allocation2 + $0x90] sm:$0xff]
        %v1706 = vld [vmem:[#allocation2 + $0x98] sm:$0xff]
        %v1707 = vld [vmem:[#allocation2 + $0xa0] sm:$0xff]
        %v1708 = vld [vmem:[#allocation2 + $0xa8] sm:$0xff]
        %v1709 = vld [vmem:[#allocation2 + $0xb0] sm:$0xff]
        %v1710 = vld [vmem:[#allocation2 + $0xb8] sm:$0xff]
        %v1711 = vld [vmem:[#allocation2 + $0xc0] sm:$0xff]
        %v1712 = vld [vmem:[#allocation2 + $0xc8] sm:$0xff]
        %v1713 = vld [vmem:[#allocation2 + $0xd0] sm:$0xff]
        %v1714 = vld [vmem:[#allocation2 + $0xd8] sm:$0xff]
        %v1715 = vld [vmem:[#allocation2 + $0xe0] sm:$0xff]
        %v1716 = vld [vmem:[#allocation2 + $0xe8] sm:$0xff]
        %v1717 = vld [vmem:[#allocation2 + $0xf0] sm:$0xff]
        %v1718 = vld [vmem:[#allocation2 + $0xf8] sm:$0xff]
        %v1719 = vld [vmem:[#allocation2 + $0x100] sm:$0xff]
        %v1720 = vld [vmem:[#allocation2 + $0x108] sm:$0xff]
        %v1721 = vld [vmem:[#allocation2 + $0x110] sm:$0xff]
        %v1722 = vld [vmem:[#allocation2 + $0x118] sm:$0xff]
        %v1723 = vld [vmem:[#allocation2 + $0x120] sm:$0xff]
        %v1724 = vld [vmem:[#allocation2 + $0x128] sm:$0xff]
        %v1725 = vld [vmem:[#allocation2 + $0x130] sm:$0xff]
        %v1726 = vld [vmem:[#allocation2 + $0x138] sm:$0xff]
        %v1727 = vld [vmem:[#allocation2 + $0x140] sm:$0xff]
        %v1728 = vld [vmem:[#allocation2 + $0x148] sm:$0xff]
        %v1729 = vld [vmem:[#allocation2 + $0x150] sm:$0xff]
        %v1730 = vld [vmem:[#allocation2 + $0x158] sm:$0xff]
        %v1731 = vld [vmem:[#allocation2 + $0x160] sm:$0xff]
        %v1732 = vld [vmem:[#allocation2 + $0x168] sm:$0xff]
        %v1733 = vld [vmem:[#allocation2 + $0x170] sm:$0xff]
        %v1734 = vld [vmem:[#allocation2 + $0x178] sm:$0xff]
        %v1735 = vld [vmem:[#allocation2 + $0x180] sm:$0xff]
        %v1736 = vld [vmem:[#allocation2 + $0x188] sm:$0xff]
        %v1737 = vld [vmem:[#allocation2 + $0x190] sm:$0xff]
        %v1738 = vld [vmem:[#allocation2 + $0x198] sm:$0xff]
        %v1739 = vld [vmem:[#allocation2 + $0x1a0] sm:$0xff]
        %v1740 = vld [vmem:[#allocation2 + $0x1a8] sm:$0xff]
        %v1741 = vld [vmem:[#allocation2 + $0x1b0] sm:$0xff]
        %v1742 = vld [vmem:[#allocation2 + $0x1b8] sm:$0xff]
        %v1743 = vld [vmem:[#allocation2 + $0x1c0] sm:$0xff]
        %v1744 = vld [vmem:[#allocation2 + $0x1c8] sm:$0xff]
        %v1745 = vld [vmem:[#allocation2 + $0x1d0] sm:$0xff]
        %v1746 = vld [vmem:[#allocation2 + $0x1d8] sm:$0xff]
        %v1747 = vld [vmem:[#allocation2 + $0x1e0] sm:$0xff]
        %v1748 = vld [vmem:[#allocation2 + $0x1e8] sm:$0xff]
        %v1749 = vld [vmem:[#allocation2 + $0x1f0] sm:$0xff]
        %v1750 = vld [vmem:[#allocation2 + $0x1f8] sm:$0xff]
        %v1751 = vld [vmem:[#allocation2 + $0x200] sm:$0xff]
        %v1752 = vld [vmem:[#allocation2 + $0x208] sm:$0xff]
        %v1753 = vld [vmem:[#allocation2 + $0x210] sm:$0xff]
        %v1754 = vld [vmem:[#allocation2 + $0x218] sm:$0xff]
        %v1755 = vld [vmem:[#allocation2 + $0x220] sm:$0xff]
        %v1756 = vld [vmem:[#allocation2 + $0x228] sm:$0xff]
        %v1757 = vld [vmem:[#allocation2 + $0x230] sm:$0xff]
        %v1758 = vld [vmem:[#allocation2 + $0x238] sm:$0xff]
        %v1759 = vld [vmem:[#allocation2 + $0x240] sm:$0xff]
        %v1760 = vld [vmem:[#allocation2 + $0x248] sm:$0xff]
        %v1761 = vld [vmem:[#allocation2 + $0x250] sm:$0xff]
        %v1762 = vld [vmem:[#allocation2 + $0x258] sm:$0xff]
        %v1763 = vld [vmem:[#allocation2 + $0x260] sm:$0xff]
        %v1764 = vld [vmem:[#allocation2 + $0x268] sm:$0xff]
        %v1765 = vld [vmem:[#allocation2 + $0x270] sm:$0xff]
        %v1766 = vld [vmem:[#allocation2 + $0x278] sm:$0xff]
        %v1767 = vld [vmem:[#allocation2 + $0x280] sm:$0xff]
        %v1768 = vld [vmem:[#allocation2 + $0x288] sm:$0xff]
        %v1769 = vld [vmem:[#allocation2 + $0x290] sm:$0xff]
        %v1770 = vld [vmem:[#allocation2 + $0x298] sm:$0xff]
        %v1771 = vld [vmem:[#allocation2 + $0x2a0] sm:$0xff]
        %v1772 = vld [vmem:[#allocation2 + $0x2a8] sm:$0xff]
        %v1773 = vld [vmem:[#allocation2 + $0x2b0] sm:$0xff]
        %v1774 = vld [vmem:[#allocation2 + $0x2b8] sm:$0xff]
        %v1775 = vld [vmem:[#allocation2 + $0x2c0] sm:$0xff]
        %v1776 = vld [vmem:[#allocation2 + $0x2c8] sm:$0xff]
        %v1777 = vld [vmem:[#allocation2 + $0x2d0] sm:$0xff]
        %v1778 = vld [vmem:[#allocation2 + $0x2d8] sm:$0xff]
        %v1779 = vld [vmem:[#allocation2 + $0x2e0] sm:$0xff]
        %v1780 = vld [vmem:[#allocation2 + $0x2e8] sm:$0xff]
        %v1781 = vld [vmem:[#allocation2 + $0x2f0] sm:$0xff]
        %v1782 = vld [vmem:[#allocation2 + $0x2f8] sm:$0xff]
        %v1783 = vld [vmem:[#allocation2 + $0x300] sm:$0xff]
        %v1784 = vld [vmem:[#allocation2 + $0x308] sm:$0xff]
        %v1785 = vld [vmem:[#allocation2 + $0x310] sm:$0xff]
        %v1786 = vld [vmem:[#allocation2 + $0x318] sm:$0xff]
        %v1787 = vld [vmem:[#allocation2 + $0x320] sm:$0xff]
        %v1788 = vld [vmem:[#allocation2 + $0x328] sm:$0xff]
        %v1789 = vld [vmem:[#allocation2 + $0x330] sm:$0xff]
        %v1790 = vld [vmem:[#allocation2 + $0x338] sm:$0xff]
        %v1791 = vld [vmem:[#allocation2 + $0x340] sm:$0xff]
        %v1792 = vld [vmem:[#allocation2 + $0x348] sm:$0xff]
        %v1793 = vld [vmem:[#allocation2 + $0x350] sm:$0xff]
        %v1794 = vld [vmem:[#allocation2 + $0x358] sm:$0xff]
        %v1795 = vld [vmem:[#allocation2 + $0x360] sm:$0xff]
        %v1796 = vld [vmem:[#allocation2 + $0x368] sm:$0xff]
        %v1797 = vld [vmem:[#allocation2 + $0x370] sm:$0xff]
        %v1798 = vld [vmem:[#allocation2 + $0x378] sm:$0xff]
        %v1799 = vld [vmem:[#allocation2 + $0x380] sm:$0xff]
        %v1800 = vld [vmem:[#allocation2 + $0x388] sm:$0xff]
        %v1801 = vld [vmem:[#allocation2 + $0x390] sm:$0xff]
        %v1802 = vld [vmem:[#allocation2 + $0x398] sm:$0xff]
        %v1803 = vld [vmem:[#allocation2 + $0x3a0] sm:$0xff]
        %v1804 = vld [vmem:[#allocation2 + $0x3a8] sm:$0xff]
        %v1805 = vld [vmem:[#allocation2 + $0x3b0] sm:$0xff]
        %v1806 = vld [vmem:[#allocation2 + $0x3b8] sm:$0xff]
        %v1807 = vld [vmem:[#allocation2 + $0x3c0] sm:$0xff]
        %v1808 = vld [vmem:[#allocation2 + $0x3c8] sm:$0xff]
        %v1809 = vld [vmem:[#allocation2 + $0x3d0] sm:$0xff]
        %v1810 = vld [vmem:[#allocation2 + $0x3d8] sm:$0xff]
        %v1811 = vld [vmem:[#allocation2 + $0x3e0] sm:$0xff]
        %v1812 = vld [vmem:[#allocation2 + $0x3e8] sm:$0xff]
        %v1813 = vld [vmem:[#allocation2 + $0x3f0] sm:$0xff]
        %v1814 = vld [vmem:[#allocation2 + $0x3f8] sm:$0xff]
        %v1815 = vtanh.pop %v1687
        %v1816 = vtanh.pop %v1688
        %v1817 = vtanh.pop %v1689
        %v1818 = vtanh.pop %v1690
        %v1819 = vtanh.pop %v1691
        %v1820 = vtanh.pop %v1692
        %v1821 = vtanh.pop %v1693
        %v1822 = vtanh.pop %v1694
        %v1823 = vtanh.pop %v1695
        %v1824 = vtanh.pop %v1696
        %v1825 = vtanh.pop %v1697
        %v1826 = vtanh.pop %v1698
        %v1827 = vtanh.pop %v1699
        %v1828 = vtanh.pop %v1700
        %v1829 = vtanh.pop %v1701
        %v1830 = vtanh.pop %v1702
        %v1831 = vtanh.pop %v1703
        %v1832 = vtanh.pop %v1704
        %v1833 = vtanh.pop %v1705
        %v1834 = vtanh.pop %v1706
        %v1835 = vtanh.pop %v1707
        %v1836 = vtanh.pop %v1708
        %v1837 = vtanh.pop %v1709
        %v1838 = vtanh.pop %v1710
        %v1839 = vtanh.pop %v1711
        %v1840 = vtanh.pop %v1712
        %v1841 = vtanh.pop %v1713
        %v1842 = vtanh.pop %v1714
        %v1843 = vtanh.pop %v1715
        %v1844 = vtanh.pop %v1716
        %v1845 = vtanh.pop %v1717
        %v1846 = vtanh.pop %v1718
        %v1847 = vtanh.pop %v1719
        %v1848 = vtanh.pop %v1720
        %v1849 = vtanh.pop %v1721
        %v1850 = vtanh.pop %v1722
        %v1851 = vtanh.pop %v1723
        %v1852 = vtanh.pop %v1724
        %v1853 = vtanh.pop %v1725
        %v1854 = vtanh.pop %v1726
        %v1855 = vtanh.pop %v1727
        %v1856 = vtanh.pop %v1728
        %v1857 = vtanh.pop %v1729
        %v1858 = vtanh.pop %v1730
        %v1859 = vtanh.pop %v1731
        %v1860 = vtanh.pop %v1732
        %v1861 = vtanh.pop %v1733
        %v1862 = vtanh.pop %v1734
        %v1863 = vtanh.pop %v1735
        %v1864 = vtanh.pop %v1736
        %v1865 = vtanh.pop %v1737
        %v1866 = vtanh.pop %v1738
        %v1867 = vtanh.pop %v1739
        %v1868 = vtanh.pop %v1740
        %v1869 = vtanh.pop %v1741
        %v1870 = vtanh.pop %v1742
        %v1871 = vtanh.pop %v1743
        %v1872 = vtanh.pop %v1744
        %v1873 = vtanh.pop %v1745
        %v1874 = vtanh.pop %v1746
        %v1875 = vtanh.pop %v1747
        %v1876 = vtanh.pop %v1748
        %v1877 = vtanh.pop %v1749
        %v1878 = vtanh.pop %v1750
        %v1879 = vtanh.pop %v1751
        %v1880 = vtanh.pop %v1752
        %v1881 = vtanh.pop %v1753
        %v1882 = vtanh.pop %v1754
        %v1883 = vtanh.pop %v1755
        %v1884 = vtanh.pop %v1756
        %v1885 = vtanh.pop %v1757
        %v1886 = vtanh.pop %v1758
        %v1887 = vtanh.pop %v1759
        %v1888 = vtanh.pop %v1760
        %v1889 = vtanh.pop %v1761
        %v1890 = vtanh.pop %v1762
        %v1891 = vtanh.pop %v1763
        %v1892 = vtanh.pop %v1764
        %v1893 = vtanh.pop %v1765
        %v1894 = vtanh.pop %v1766
        %v1895 = vtanh.pop %v1767
        %v1896 = vtanh.pop %v1768
        %v1897 = vtanh.pop %v1769
        %v1898 = vtanh.pop %v1770
        %v1899 = vtanh.pop %v1771
        %v1900 = vtanh.pop %v1772
        %v1901 = vtanh.pop %v1773
        %v1902 = vtanh.pop %v1774
        %v1903 = vtanh.pop %v1775
        %v1904 = vtanh.pop %v1776
        %v1905 = vtanh.pop %v1777
        %v1906 = vtanh.pop %v1778
        %v1907 = vtanh.pop %v1779
        %v1908 = vtanh.pop %v1780
        %v1909 = vtanh.pop %v1781
        %v1910 = vtanh.pop %v1782
        %v1911 = vtanh.pop %v1783
        %v1912 = vtanh.pop %v1784
        %v1913 = vtanh.pop %v1785
        %v1914 = vtanh.pop %v1786
        %v1915 = vtanh.pop %v1787
        %v1916 = vtanh.pop %v1788
        %v1917 = vtanh.pop %v1789
        %v1918 = vtanh.pop %v1790
        %v1919 = vtanh.pop %v1791
        %v1920 = vtanh.pop %v1792
        %v1921 = vtanh.pop %v1793
        %v1922 = vtanh.pop %v1794
        %v1923 = vtanh.pop %v1795
        %v1924 = vtanh.pop %v1796
        %v1925 = vtanh.pop %v1797
        %v1926 = vtanh.pop %v1798
        %v1927 = vtanh.pop %v1799
        %v1928 = vtanh.pop %v1800
        %v1929 = vtanh.pop %v1801
        %v1930 = vtanh.pop %v1802
        %v1931 = vtanh.pop %v1803
        %v1932 = vtanh.pop %v1804
        %v1933 = vtanh.pop %v1805
        %v1934 = vtanh.pop %v1806
        %v1935 = vtanh.pop %v1807
        %v1936 = vtanh.pop %v1808
        %v1937 = vtanh.pop %v1809
        %v1938 = vtanh.pop %v1810
        %v1939 = vtanh.pop %v1811
        %v1940 = vtanh.pop %v1812
        %v1941 = vtanh.pop %v1813
        %v1942 = vtanh.pop %v1814
        %1943 = vst [vmem:[%s261] sm:$0xff] %v1815
        %1944 = vst [vmem:[%s261 + $0x8] sm:$0xff] %v1816
        %1945 = vst [vmem:[%s261 + $0x10] sm:$0xff] %v1817
        %1946 = vst [vmem:[%s261 + $0x18] sm:$0xff] %v1818
        %1947 = vst [vmem:[%s261 + $0x20] sm:$0xff] %v1819
        %1948 = vst [vmem:[%s261 + $0x28] sm:$0xff] %v1820
        %1949 = vst [vmem:[%s261 + $0x30] sm:$0xff] %v1821
        %1950 = vst [vmem:[%s261 + $0x38] sm:$0xff] %v1822
        %1951 = vst [vmem:[%s261 + $0x40] sm:$0xff] %v1823
        %1952 = vst [vmem:[%s261 + $0x48] sm:$0xff] %v1824
        %1953 = vst [vmem:[%s261 + $0x50] sm:$0xff] %v1825
        %1954 = vst [vmem:[%s261 + $0x58] sm:$0xff] %v1826
        %1955 = vst [vmem:[%s261 + $0x60] sm:$0xff] %v1827
        %1956 = vst [vmem:[%s261 + $0x68] sm:$0xff] %v1828
        %1957 = vst [vmem:[%s261 + $0x70] sm:$0xff] %v1829
        %1958 = vst [vmem:[%s261 + $0x78] sm:$0xff] %v1830
        %1959 = vst [vmem:[%s261 + $0x80] sm:$0xff] %v1831
        %1960 = vst [vmem:[%s261 + $0x88] sm:$0xff] %v1832
        %1961 = vst [vmem:[%s261 + $0x90] sm:$0xff] %v1833
        %1962 = vst [vmem:[%s261 + $0x98] sm:$0xff] %v1834
        %1963 = vst [vmem:[%s261 + $0xa0] sm:$0xff] %v1835
        %1964 = vst [vmem:[%s261 + $0xa8] sm:$0xff] %v1836
        %1965 = vst [vmem:[%s261 + $0xb0] sm:$0xff] %v1837
        %1966 = vst [vmem:[%s261 + $0xb8] sm:$0xff] %v1838
        %1967 = vst [vmem:[%s261 + $0xc0] sm:$0xff] %v1839
        %1968 = vst [vmem:[%s261 + $0xc8] sm:$0xff] %v1840
        %1969 = vst [vmem:[%s261 + $0xd0] sm:$0xff] %v1841
        %1970 = vst [vmem:[%s261 + $0xd8] sm:$0xff] %v1842
        %1971 = vst [vmem:[%s261 + $0xe0] sm:$0xff] %v1843
        %1972 = vst [vmem:[%s261 + $0xe8] sm:$0xff] %v1844
        %1973 = vst [vmem:[%s261 + $0xf0] sm:$0xff] %v1845
        %1974 = vst [vmem:[%s261 + $0xf8] sm:$0xff] %v1846
        %1975 = vst [vmem:[%s261 + $0x100] sm:$0xff] %v1847
        %1976 = vst [vmem:[%s261 + $0x108] sm:$0xff] %v1848
        %1977 = vst [vmem:[%s261 + $0x110] sm:$0xff] %v1849
        %1978 = vst [vmem:[%s261 + $0x118] sm:$0xff] %v1850
        %1979 = vst [vmem:[%s261 + $0x120] sm:$0xff] %v1851
        %1980 = vst [vmem:[%s261 + $0x128] sm:$0xff] %v1852
        %1981 = vst [vmem:[%s261 + $0x130] sm:$0xff] %v1853
        %1982 = vst [vmem:[%s261 + $0x138] sm:$0xff] %v1854
        %1983 = vst [vmem:[%s261 + $0x140] sm:$0xff] %v1855
        %1984 = vst [vmem:[%s261 + $0x148] sm:$0xff] %v1856
        %1985 = vst [vmem:[%s261 + $0x150] sm:$0xff] %v1857
        %1986 = vst [vmem:[%s261 + $0x158] sm:$0xff] %v1858
        %1987 = vst [vmem:[%s261 + $0x160] sm:$0xff] %v1859
        %1988 = vst [vmem:[%s261 + $0x168] sm:$0xff] %v1860
        %1989 = vst [vmem:[%s261 + $0x170] sm:$0xff] %v1861
        %1990 = vst [vmem:[%s261 + $0x178] sm:$0xff] %v1862
        %1991 = vst [vmem:[%s261 + $0x180] sm:$0xff] %v1863
        %1992 = vst [vmem:[%s261 + $0x188] sm:$0xff] %v1864
        %1993 = vst [vmem:[%s261 + $0x190] sm:$0xff] %v1865
        %1994 = vst [vmem:[%s261 + $0x198] sm:$0xff] %v1866
        %1995 = vst [vmem:[%s261 + $0x1a0] sm:$0xff] %v1867
        %1996 = vst [vmem:[%s261 + $0x1a8] sm:$0xff] %v1868
        %1997 = vst [vmem:[%s261 + $0x1b0] sm:$0xff] %v1869
        %1998 = vst [vmem:[%s261 + $0x1b8] sm:$0xff] %v1870
        %1999 = vst [vmem:[%s261 + $0x1c0] sm:$0xff] %v1871
        %2000 = vst [vmem:[%s261 + $0x1c8] sm:$0xff] %v1872
        %2001 = vst [vmem:[%s261 + $0x1d0] sm:$0xff] %v1873
        %2002 = vst [vmem:[%s261 + $0x1d8] sm:$0xff] %v1874
        %2003 = vst [vmem:[%s261 + $0x1e0] sm:$0xff] %v1875
        %2004 = vst [vmem:[%s261 + $0x1e8] sm:$0xff] %v1876
        %2005 = vst [vmem:[%s261 + $0x1f0] sm:$0xff] %v1877
        %2006 = vst [vmem:[%s261 + $0x1f8] sm:$0xff] %v1878
        %2007 = vst [vmem:[%s261 + $0x200] sm:$0xff] %v1879
        %2008 = vst [vmem:[%s261 + $0x208] sm:$0xff] %v1880
        %2009 = vst [vmem:[%s261 + $0x210] sm:$0xff] %v1881
        %2010 = vst [vmem:[%s261 + $0x218] sm:$0xff] %v1882
        %2011 = vst [vmem:[%s261 + $0x220] sm:$0xff] %v1883
        %2012 = vst [vmem:[%s261 + $0x228] sm:$0xff] %v1884
        %2013 = vst [vmem:[%s261 + $0x230] sm:$0xff] %v1885
        %2014 = vst [vmem:[%s261 + $0x238] sm:$0xff] %v1886
        %2015 = vst [vmem:[%s261 + $0x240] sm:$0xff] %v1887
        %2016 = vst [vmem:[%s261 + $0x248] sm:$0xff] %v1888
        %2017 = vst [vmem:[%s261 + $0x250] sm:$0xff] %v1889
        %2018 = vst [vmem:[%s261 + $0x258] sm:$0xff] %v1890
        %2019 = vst [vmem:[%s261 + $0x260] sm:$0xff] %v1891
        %2020 = vst [vmem:[%s261 + $0x268] sm:$0xff] %v1892
        %2021 = vst [vmem:[%s261 + $0x270] sm:$0xff] %v1893
        %2022 = vst [vmem:[%s261 + $0x278] sm:$0xff] %v1894
        %2023 = vst [vmem:[%s261 + $0x280] sm:$0xff] %v1895
        %2024 = vst [vmem:[%s261 + $0x288] sm:$0xff] %v1896
        %2025 = vst [vmem:[%s261 + $0x290] sm:$0xff] %v1897
        %2026 = vst [vmem:[%s261 + $0x298] sm:$0xff] %v1898
        %2027 = vst [vmem:[%s261 + $0x2a0] sm:$0xff] %v1899
        %2028 = vst [vmem:[%s261 + $0x2a8] sm:$0xff] %v1900
        %2029 = vst [vmem:[%s261 + $0x2b0] sm:$0xff] %v1901
        %2030 = vst [vmem:[%s261 + $0x2b8] sm:$0xff] %v1902
        %2031 = vst [vmem:[%s261 + $0x2c0] sm:$0xff] %v1903
        %2032 = vst [vmem:[%s261 + $0x2c8] sm:$0xff] %v1904
        %2033 = vst [vmem:[%s261 + $0x2d0] sm:$0xff] %v1905
        %2034 = vst [vmem:[%s261 + $0x2d8] sm:$0xff] %v1906
        %2035 = vst [vmem:[%s261 + $0x2e0] sm:$0xff] %v1907
        %2036 = vst [vmem:[%s261 + $0x2e8] sm:$0xff] %v1908
        %2037 = vst [vmem:[%s261 + $0x2f0] sm:$0xff] %v1909
        %2038 = vst [vmem:[%s261 + $0x2f8] sm:$0xff] %v1910
        %2039 = vst [vmem:[%s261 + $0x300] sm:$0xff] %v1911
        %2040 = vst [vmem:[%s261 + $0x308] sm:$0xff] %v1912
        %2041 = vst [vmem:[%s261 + $0x310] sm:$0xff] %v1913
        %2042 = vst [vmem:[%s261 + $0x318] sm:$0xff] %v1914
        %2043 = vst [vmem:[%s261 + $0x320] sm:$0xff] %v1915
        %2044 = vst [vmem:[%s261 + $0x328] sm:$0xff] %v1916
        %2045 = vst [vmem:[%s261 + $0x330] sm:$0xff] %v1917
        %2046 = vst [vmem:[%s261 + $0x338] sm:$0xff] %v1918
        %2047 = vst [vmem:[%s261 + $0x340] sm:$0xff] %v1919
        %2048 = vst [vmem:[%s261 + $0x348] sm:$0xff] %v1920
        %2049 = vst [vmem:[%s261 + $0x350] sm:$0xff] %v1921
        %2050 = vst [vmem:[%s261 + $0x358] sm:$0xff] %v1922
        %2051 = vst [vmem:[%s261 + $0x360] sm:$0xff] %v1923
        %2052 = vst [vmem:[%s261 + $0x368] sm:$0xff] %v1924
        %2053 = vst [vmem:[%s261 + $0x370] sm:$0xff] %v1925
        %2054 = vst [vmem:[%s261 + $0x378] sm:$0xff] %v1926
        %2055 = vst [vmem:[%s261 + $0x380] sm:$0xff] %v1927
        %2056 = vst [vmem:[%s261 + $0x388] sm:$0xff] %v1928
        %2057 = vst [vmem:[%s261 + $0x390] sm:$0xff] %v1929
        %2058 = vst [vmem:[%s261 + $0x398] sm:$0xff] %v1930
        %2059 = vst [vmem:[%s261 + $0x3a0] sm:$0xff] %v1931
        %2060 = vst [vmem:[%s261 + $0x3a8] sm:$0xff] %v1932
        %2061 = vst [vmem:[%s261 + $0x3b0] sm:$0xff] %v1933
        %2062 = vst [vmem:[%s261 + $0x3b8] sm:$0xff] %v1934
        %2063 = vst [vmem:[%s261 + $0x3c0] sm:$0xff] %v1935
        %2064 = vst [vmem:[%s261 + $0x3c8] sm:$0xff] %v1936
        %2065 = vst [vmem:[%s261 + $0x3d0] sm:$0xff] %v1937
        %2066 = vst [vmem:[%s261 + $0x3d8] sm:$0xff] %v1938
        %2067 = vst [vmem:[%s261 + $0x3e0] sm:$0xff] %v1939
        %2068 = vst [vmem:[%s261 + $0x3e8] sm:$0xff] %v1940
        %2069 = vst [vmem:[%s261 + $0x3f0] sm:$0xff] %v1941
        %2070 = vst [vmem:[%s261 + $0x3f8] sm:$0xff] %v1942
      $region36: #{generator_forward.25} parent=27 // pred_fallthru
        _
      %s2071 = smul.u32 128, %s20
      %p2072 = scmp.lt.s32.totalorder %s19, 3
      %s2073 = scalar_select %p2072, %s19, 3
      %p2074 = scmp.lt.s32.totalorder %s2071, 255
      %s2075 = scalar_select %p2074, %s2071, 255
      %p2076 = scmp.lt.s32.totalorder %s21, 0
      %s2077 = scalar_select %p2076, %s21, 0
      %s2078 = sadd.s32 %s2077, %s2075
      %s2079 = smul.addr %s2073, 256
      %s2080 = sadd.s32 %s2078, %s2079
      %s2081 = smul.addr %s2080, 8
      %s2082 = scalar_lea.vmem %s2, %s2081
      // Predicated region
      $region37: #{generator_forward.25} parent=27 // pred_check
        %p2083 = pneg %p121
      $region38: #{generator_forward.25} parent=27 // pred_check_branch
        %2085 = sbr.rel (%p2083) target = $region40
      $region39: #{generator_forward.25} parent=27 // pred_region
        %s2086 = smul.u32 128, %s20
      $region40: #{generator_forward.25} parent=27 // pred_fallthru
        _
    $region28: #{generator_forward.25} parent=5 // pred_fallthru
      _
    %p2087 = scmp.le.s32.totalorder 2, %s8
    // Predicated region
    $region41: #{generator_forward.25} parent=5 // pred_check
      %p2088 = pneg %p2087
    $region42: #{generator_forward.25} parent=5 // pred_check_branch
      %2090 = sbr.rel (%p2088) target = $region44
    $region43: #{generator_forward.25} parent=5 // pred_region
      %s2091 = ssub.s32 %s8, 2
      // Predicated region
      $region45: #{generator_forward.25} parent=43 // pred_check
        %p2092 = pneg %p127
      $region46: #{generator_forward.25} parent=43 // pred_check_branch
        %2094 = sbr.rel (%p2092) target = $region48
      $region47: #{generator_forward.25} parent=43 // pred_region
        %s2095 = smul.u32 128, %s24
        %p2096 = scmp.lt.s32.totalorder %s23, 3
        %s2097 = scalar_select %p2096, %s23, 3
        %p2098 = scmp.lt.s32.totalorder %s2095, 255
        %s2099 = scalar_select %p2098, %s2095, 255
        %p2100 = scmp.lt.s32.totalorder %s25, 0
        %s2101 = scalar_select %p2100, %s25, 0
        %s2102 = sadd.s32 %s2101, %s2099
        %s2103 = smul.addr %s2097, 256
        %s2104 = sadd.s32 %s2102, %s2103
        %s2105 = smul.addr %s2104, 8
        %s2106 = scalar_lea.vmem %s2, %s2105
      $region48: #{generator_forward.25} parent=43 // pred_fallthru
        _
    $region44: #{generator_forward.25} parent=5 // pred_fallthru
      _
  $region6: #{generator_forward.25} parent=0 // loop_footer
    %s12 = sadd.s32 1, %s8
  $region7: #{generator_forward.25} parent=0 // loop_footer_branch
    %7 = sbr.rel target = $region3
  $region8: #{generator_forward.25} parent=0 // loop_exit
    _

</llo_original>
